<compile_context>
chip_gen: v7x
topology: tpu7x:2x2x1
jax: 0.10.0
libtpu: 0.0.40
codegen_flags: <defaults>
</compile_context>

<pallas_src>
import jax
import jax.numpy as jnp
from jax.experimental import pallas as pl
from jax.experimental.pallas import tpu as pltpu

# ---- config (mirrors the module's args) ----
VOCAB = 64       # len(dictionary)
VPAD = 128       # vocab padded to a full 128-lane tile
EMSIZE = 16      # config.emsize
NHID = 32        # config.nhid
NLAYERS = 1      # config.nlayers (single layer)
B = 2            # batch
T1 = 8           # encoder sequence length (batch_sentence1)
T2 = 6           # decoder sequence length (batch_sentence2)
NEG = -1e30


def _vmem():
    return pl.BlockSpec(memory_space=pltpu.MemorySpace.VMEM)


# ----------------------------- fused forward kernel -----------------------------
def seq2seq_kernel(emb1_ref, emb2_ref, onehot_ref, mask_ref,
                   wih_enc_ref, whh_enc_ref, b_enc_ref, fmask_ref,
                   wih_dec_e_ref, wih_dec_h_ref, whh_dec_ref, b_dec_ref,
                   w_ctx_ref, w_dch_ref, b_out_ref, w_fin_ref, b_fin_ref,
                   loss_ref, enc_ref):
    H = NHID

    # ---------------- encoder: both directions fused ----------------
    # One input-projection matmul for every timestep and both directions:
    # (T1*B, E) @ (E, 8H) -> (T1*B, 8H)   (256-wide gate block -> full v6e/v7x MXU pass)
    gx_enc = (jnp.dot(emb1_ref[...], wih_enc_ref[...],
                      preferred_element_type=jnp.float32) + b_enc_ref[...])
    fmask = fmask_ref[...]                 # (1, 8H): 1.0 on forward-direction gate columns
    bmask = 1.0 - fmask
    whh_enc = whh_enc_ref[...]             # (2H, 8H) block-diagonal recurrent weights

    h_cat = jnp.zeros((B, 2 * H), jnp.float32)     # [h_fwd | h_bwd]
    c_cat = jnp.zeros((B, 2 * H), jnp.float32)
    outs_f = [None] * T1
    outs_b = [None] * T1
    for t in range(T1):                            # unrolled: static trip count, tiny state
        rt = T1 - 1 - t
        # forward direction consumes token t, backward direction consumes token rt
        gx = (gx_enc[t * B:(t + 1) * B, :] * fmask
              + gx_enc[rt * B:(rt + 1) * B, :] * bmask)
        gates = gx + jnp.dot(h_cat, whh_enc, preferred_element_type=jnp.float32)  # (B, 8H)
        i = jax.nn.sigmoid(gates[:, 0:2 * H])      # [i_f | i_b]   (PyTorch order i,f,g,o)
        f = jax.nn.sigmoid(gates[:, 2 * H:4 * H])
        g = jnp.tanh(gates[:, 4 * H:6 * H])
        o = jax.nn.sigmoid(gates[:, 6 * H:8 * H])
        c_cat = f * c_cat + i * g
        h_cat = o * jnp.tanh(c_cat)
        outs_f[t] = h_cat[:, :H]
        outs_b[rt] = h_cat[:, H:]

    # bidirection post-processing: mean of the two direction outputs / final states
    for t in range(T1):
        enc_ref[:, t:t + 1, :] = (0.5 * (outs_f[t] + outs_b[t]))[:, None, :]
    enc = enc_ref[...]                                      # (B, T1, H)
    dec_h = 0.5 * (h_cat[:, :H] + h_cat[:, H:])
    dec_c = 0.5 * (c_cat[:, :H] + c_cat[:, H:])

    # ---------------- decoder + attention + masked NLL ----------------
    # decoder input (embedding) projections for all steps in one matmul
    gx_dec = (jnp.dot(emb2_ref[...], wih_dec_e_ref[...],
                      preferred_element_type=jnp.float32) + b_dec_ref[...])   # ((T2-1)*B, 4H)
    wih_dec_h = wih_dec_h_ref[...]
    whh_dec = whh_dec_ref[...]
    w_ctx = w_ctx_ref[...]
    w_dch = w_dch_ref[...]
    b_out = b_out_ref[...]
    w_fin = w_fin_ref[...]
    b_fin = b_fin_ref[...]

    context = jnp.zeros((B, H), jnp.float32)
    loss_acc = jnp.zeros((1, 1), jnp.float32)
    for idx in range(T2 - 1):                       # unrolled decoder recurrence
        # LSTM cell; input [emb; context] realized as two accumulating dots (no concat)
        gates = (gx_dec[idx * B:(idx + 1) * B, :]
                 + jnp.dot(context, wih_dec_h, preferred_element_type=jnp.float32)
                 + jnp.dot(dec_h, whh_dec, preferred_element_type=jnp.float32))   # (B, 4H)
        i = jax.nn.sigmoid(gates[:, 0:H])
        f = jax.nn.sigmoid(gates[:, H:2 * H])
        g = jnp.tanh(gates[:, 2 * H:3 * H])
        o = jax.nn.sigmoid(gates[:, 3 * H:4 * H])
        dec_c = f * dec_c + i * g
        dec_h = o * jnp.tanh(dec_c)

        # Luong dot attention on the MXU (batched dots, flash-attention style)
        s = jnp.einsum('bqd,bkd->bqk', dec_h[:, None, :], enc,
                       preferred_element_type=jnp.float32)           # (B, 1, T1)
        s = s - jnp.max(s, axis=-1, keepdims=True)
        p = jnp.exp(s)
        attn = p * pl.reciprocal(jnp.sum(p, axis=-1, keepdims=True), approx=True)
        context = jnp.einsum('bqk,bkd->bqd', attn, enc,
                             preferred_element_type=jnp.float32)[:, 0, :]   # (B, H)

        # tanh(Linear([context; dec_h])) -> Linear -> log_softmax (no concat, padded lanes)
        hid = jnp.tanh(jnp.dot(context, w_ctx, preferred_element_type=jnp.float32)
                       + jnp.dot(dec_h, w_dch, preferred_element_type=jnp.float32)
                       + b_out)                                       # (B, H)
        logits = jnp.dot(hid, w_fin, preferred_element_type=jnp.float32) + b_fin  # (B, VPAD)
        m = jnp.max(logits, axis=1, keepdims=True)
        lse = m + jnp.log(jnp.sum(jnp.exp(logits - m), axis=1, keepdims=True))
        logp = logits - lse

        # masked NLL for this step: -gather(logp, target) via padded one-hot
        picked = jnp.sum(logp * onehot_ref[idx * B:(idx + 1) * B, :],
                         axis=1, keepdims=True)                       # (B, 1)
        maskv = mask_ref[idx * B:(idx + 1) * B, :]                    # (B, 1)
        total = jnp.sum(-picked * maskv, keepdims=True)               # (1, 1)
        cnt = jnp.sum(maskv, keepdims=True)
        loss_acc = loss_acc + total / jnp.maximum(cnt, 1.0)

    loss_ref[...] = loss_acc


# ---------------- weight plumbing: merge the two encoder directions ----------------
def _merge_bidir_weights(enc_f, enc_b):
    """Interleave gate columns [i_f,i_b,f_f,f_b,g_f,g_b,o_f,o_b] and build the
    block-diagonal recurrent matrix so both directions run as one 256-wide matmul."""
    H = NHID
    z = jnp.zeros((H, H), jnp.float32)
    cols_ih, cols_b, rows_f, rows_b = [], [], [], []
    for k in range(4):                       # PyTorch gate order i, f, g, o
        sl = slice(k * H, (k + 1) * H)
        cols_ih += [enc_f["wihT"][:, sl], enc_b["wihT"][:, sl]]
        cols_b += [enc_f["b"][:, sl], enc_b["b"][:, sl]]
        rows_f += [enc_f["whhT"][:, sl], z]
        rows_b += [z, enc_b["whhT"][:, sl]]
    wih_m = jnp.concatenate(cols_ih, axis=1)                              # (E, 8H)
    b_m = jnp.concatenate(cols_b, axis=1)                                 # (1, 8H)
    whh_m = jnp.concatenate([jnp.concatenate(rows_f, axis=1),
                             jnp.concatenate(rows_b, axis=1)], axis=0)    # (2H, 8H)
    fmask = jnp.tile(jnp.concatenate([jnp.ones((1, H), jnp.float32),
                                      jnp.zeros((1, H), jnp.float32)], axis=1), (1, 4))
    return wih_m, whh_m, b_m, fmask


# ---------------- parameter init (deterministic, synthetic) ----------------
def init_params(key):
    ks = jax.random.split(key, 16)
    s = 1.0 / jnp.sqrt(NHID)

    def u(k, shape):
        return jax.random.uniform(k, shape, jnp.float32, -s, s)

    p = {}
    p["embedding"] = jax.random.normal(ks[0], (VOCAB, EMSIZE), jnp.float32) * 0.1
    # encoder (bidirectional LSTM, 1 layer): forward + backward direction
    p["enc_f"] = dict(wihT=u(ks[1], (EMSIZE, 4 * NHID)), whhT=u(ks[2], (NHID, 4 * NHID)),
                      b=u(ks[3], (1, 4 * NHID)))
    p["enc_b"] = dict(wihT=u(ks[4], (EMSIZE, 4 * NHID)), whhT=u(ks[5], (NHID, 4 * NHID)),
                      b=u(ks[6], (1, 4 * NHID)))
    # decoder LSTM, input = emsize + nhid
    p["dec"] = dict(wihT=u(ks[7], (EMSIZE + NHID, 4 * NHID)),
                    whhT=u(ks[8], (NHID, 4 * NHID)), b=u(ks[9], (1, 4 * NHID)))
    # attention head: Linear(2H -> H) then Linear(H -> V)
    p["attn"] = dict(w_outT=u(ks[10], (2 * NHID, NHID)), b_out=u(ks[11], (1, NHID)),
                     w_finT=u(ks[12], (NHID, VOCAB)), b_fin=u(ks[13], (1, VOCAB)))
    return p


# ---------------- forward (mirrors Sequence2Sequence.forward) ----------------
def seq2seq_forward(params, sent1, sent2, length):
    emb_tbl = params["embedding"]
    # TODO(synk): embedding lookup (row gather) kept in plain JAX; dropout omitted (p=0 / eval).
    emb1 = jnp.take(emb_tbl, sent1, axis=0)                              # (B, T1, E)
    emb1_tm = jnp.transpose(emb1, (1, 0, 2)).reshape(T1 * B, EMSIZE)
    emb2 = jnp.take(emb_tbl, sent2[:, :-1], axis=0)                      # (B, T2-1, E)
    emb2_tm = jnp.transpose(emb2, (1, 0, 2)).reshape((T2 - 1) * B, EMSIZE)

    # targets as vocab-padded one-hot rows; loss mask per (step, batch)
    onehot = jax.nn.one_hot(sent2[:, 1:], VPAD, dtype=jnp.float32)       # (B, T2-1, VPAD)
    onehot_tm = jnp.transpose(onehot, (1, 0, 2)).reshape((T2 - 1) * B, VPAD)
    steps = jnp.arange(T2 - 1, dtype=jnp.int32)
    maskv = (steps[:, None] < length[None, :]).astype(jnp.float32).reshape((T2 - 1) * B, 1)

    # weight plumbing (once per call, outside the kernel)
    wih_m, whh_m, b_m, fmask = _merge_bidir_weights(params["enc_f"], params["enc_b"])
    wih_dec = params["dec"]["wihT"]
    wih_dec_e, wih_dec_h = wih_dec[:EMSIZE], wih_dec[EMSIZE:]
    w_out = params["attn"]["w_outT"]
    w_ctx, w_dch = w_out[:NHID], w_out[NHID:]
    w_fin = jnp.pad(params["attn"]["w_finT"], ((0, 0), (0, VPAD - VOCAB)))
    b_fin = jnp.concatenate([params["attn"]["b_fin"],
                             jnp.full((1, VPAD - VOCAB), NEG, jnp.float32)], axis=1)

    loss = pl.pallas_call(
        seq2seq_kernel,
        out_shape=jax.ShapeDtypeStruct((1, 1), jnp.float32),
        in_specs=[_vmem()] * 17,
        out_specs=_vmem(),
        scratch_shapes=[pltpu.VMEM((B, T1, NHID), jnp.float32)],
    )(emb1_tm, emb2_tm, onehot_tm, maskv,
      wih_m, whh_m, b_m, fmask,
      wih_dec_e, wih_dec_h, params["dec"]["whhT"], params["dec"]["b"],
      w_ctx, w_dch, params["attn"]["b_out"], w_fin, b_fin)
    return loss[0, 0]


if __name__ == "__main__":
    key = jax.random.PRNGKey(0)
    k_p, k_s1, k_s2 = jax.random.split(key, 3)
    params = init_params(k_p)
    sent1 = jax.random.randint(k_s1, (B, T1), 0, VOCAB, dtype=jnp.int32)
    sent2 = jax.random.randint(k_s2, (B, T2), 0, VOCAB, dtype=jnp.int32)
    length = jnp.array([T2 - 1, 3], dtype=jnp.int32)   # lengths for loss masking

    loss = jax.jit(seq2seq_forward)(params, sent1, sent2, length)
    jax.block_until_ready(loss)
    assert loss.shape == () and jnp.isfinite(loss)
    print("KERNEL_OK")
</pallas_src>

<mosaic_0001>
module attributes {stable_mosaic.version = 11 : i64} {
  func.func @seq2seq_kernel(%arg0: memref<16x16xf32, #tpu.memory_space<vmem>>, %arg1: memref<10x16xf32, #tpu.memory_space<vmem>>, %arg2: memref<10x128xf32, #tpu.memory_space<vmem>>, %arg3: memref<10x1xf32, #tpu.memory_space<vmem>>, %arg4: memref<16x256xf32, #tpu.memory_space<vmem>>, %arg5: memref<64x256xf32, #tpu.memory_space<vmem>>, %arg6: memref<1x256xf32, #tpu.memory_space<vmem>>, %arg7: memref<1x256xf32, #tpu.memory_space<vmem>>, %arg8: memref<16x128xf32, #tpu.memory_space<vmem>>, %arg9: memref<32x128xf32, #tpu.memory_space<vmem>>, %arg10: memref<32x128xf32, #tpu.memory_space<vmem>>, %arg11: memref<1x128xf32, #tpu.memory_space<vmem>>, %arg12: memref<32x32xf32, #tpu.memory_space<vmem>>, %arg13: memref<32x32xf32, #tpu.memory_space<vmem>>, %arg14: memref<1x32xf32, #tpu.memory_space<vmem>>, %arg15: memref<32x128xf32, #tpu.memory_space<vmem>>, %arg16: memref<1x128xf32, #tpu.memory_space<vmem>>, %arg17: memref<1x1xf32, #tpu.memory_space<vmem>>, %arg18: memref<2x8x32xf32, #tpu.memory_space<vmem>>) attributes {dimension_semantics = [], scalar_prefetch = 0 : i64, scratch_operands = 1 : i64, tpu.core_type = #tpu.core_type<tc>} {
    %c0 = arith.constant 0 : index
    %c0_0 = arith.constant 0 : index
    %0 = vector.load %arg0[%c0, %c0_0] : memref<16x16xf32, #tpu.memory_space<vmem>>, vector<16x16xf32>
    %c0_1 = arith.constant 0 : index
    %c0_2 = arith.constant 0 : index
    %1 = vector.load %arg4[%c0_1, %c0_2] : memref<16x256xf32, #tpu.memory_space<vmem>>, vector<16x256xf32>
    %cst = arith.constant dense<0.000000e+00> : vector<16x256xf32>
    %2 = tpu.matmul %0, %1, %cst {dimension_numbers = #tpu.dot_dimension_numbers<[1], [0], [0], [1], [0, 0, 1, 1], [], []>} : vector<16x16xf32>, vector<16x256xf32>, vector<16x256xf32> -> vector<16x256xf32>
    %c0_3 = arith.constant 0 : index
    %c0_4 = arith.constant 0 : index
    %3 = vector.load %arg6[%c0_3, %c0_4] : memref<1x256xf32, #tpu.memory_space<vmem>>, vector<1x256xf32>
    %4 = vector.broadcast %3 : vector<1x256xf32> to vector<16x256xf32>
    %5 = arith.addf %2, %4 : vector<16x256xf32>
    %c0_5 = arith.constant 0 : index
    %c0_6 = arith.constant 0 : index
    %6 = vector.load %arg7[%c0_5, %c0_6] : memref<1x256xf32, #tpu.memory_space<vmem>>, vector<1x256xf32>
    %cst_7 = arith.constant 1.000000e+00 : f32
    %7 = vector.broadcast %cst_7 : f32 to vector<1x256xf32>
    %8 = arith.subf %7, %6 : vector<1x256xf32>
    %c0_8 = arith.constant 0 : index
    %c0_9 = arith.constant 0 : index
    %9 = vector.load %arg5[%c0_8, %c0_9] : memref<64x256xf32, #tpu.memory_space<vmem>>, vector<64x256xf32>
    %cst_10 = arith.constant 0.000000e+00 : f32
    %10 = vector.broadcast %cst_10 : f32 to vector<2x64xf32>
    %cst_11 = arith.constant 0.000000e+00 : f32
    %11 = vector.broadcast %cst_11 : f32 to vector<2x64xf32>
    %12 = vector.extract_strided_slice %5 {offsets = [0, 0], sizes = [2, 256], strides = [1, 1]} : vector<16x256xf32> to vector<2x256xf32>
    %13 = vector.broadcast %6 : vector<1x256xf32> to vector<2x256xf32>
    %14 = arith.mulf %12, %13 : vector<2x256xf32>
    %15 = vector.extract_strided_slice %5 {offsets = [14, 0], sizes = [2, 256], strides = [1, 1]} : vector<16x256xf32> to vector<2x256xf32>
    %16 = vector.broadcast %8 : vector<1x256xf32> to vector<2x256xf32>
    %17 = arith.mulf %15, %16 : vector<2x256xf32>
    %18 = arith.addf %14, %17 : vector<2x256xf32>
    %cst_12 = arith.constant dense<0.000000e+00> : vector<2x256xf32>
    %19 = tpu.matmul %10, %9, %cst_12 {dimension_numbers = #tpu.dot_dimension_numbers<[1], [0], [0], [1], [0, 0, 1, 1], [], []>} : vector<2x64xf32>, vector<64x256xf32>, vector<2x256xf32> -> vector<2x256xf32>
    %20 = arith.addf %18, %19 : vector<2x256xf32>
    %21 = vector.extract_strided_slice %20 {offsets = [0, 0], sizes = [2, 64], strides = [1, 1]} : vector<2x256xf32> to vector<2x64xf32>
    %22 = arith.negf %21 : vector<2x64xf32>
    %23 = math.exp %22 : vector<2x64xf32>
    %cst_13 = arith.constant 1.000000e+00 : f32
    %24 = vector.broadcast %cst_13 : f32 to vector<2x64xf32>
    %25 = arith.addf %24, %23 : vector<2x64xf32>
    %26 = arith.divf %24, %25 : vector<2x64xf32>
    %27 = vector.extract_strided_slice %20 {offsets = [0, 64], sizes = [2, 64], strides = [1, 1]} : vector<2x256xf32> to vector<2x64xf32>
    %28 = arith.negf %27 : vector<2x64xf32>
    %29 = math.exp %28 : vector<2x64xf32>
    %cst_14 = arith.constant 1.000000e+00 : f32
    %30 = vector.broadcast %cst_14 : f32 to vector<2x64xf32>
    %31 = arith.addf %30, %29 : vector<2x64xf32>
    %32 = arith.divf %30, %31 : vector<2x64xf32>
    %33 = vector.extract_strided_slice %20 {offsets = [0, 128], sizes = [2, 64], strides = [1, 1]} : vector<2x256xf32> to vector<2x64xf32>
    %34 = math.tanh %33 : vector<2x64xf32>
    %35 = vector.extract_strided_slice %20 {offsets = [0, 192], sizes = [2, 64], strides = [1, 1]} : vector<2x256xf32> to vector<2x64xf32>
    %36 = arith.negf %35 : vector<2x64xf32>
    %37 = math.exp %36 : vector<2x64xf32>
    %cst_15 = arith.constant 1.000000e+00 : f32
    %38 = vector.broadcast %cst_15 : f32 to vector<2x64xf32>
    %39 = arith.addf %38, %37 : vector<2x64xf32>
    %40 = arith.divf %38, %39 : vector<2x64xf32>
    %41 = arith.mulf %32, %11 : vector<2x64xf32>
    %42 = arith.mulf %26, %34 : vector<2x64xf32>
    %43 = arith.addf %41, %42 : vector<2x64xf32>
    %44 = math.tanh %43 : vector<2x64xf32>
    %45 = arith.mulf %40, %44 : vector<2x64xf32>
    %46 = vector.extract_strided_slice %45 {offsets = [0, 0], sizes = [2, 32], strides = [1, 1]} : vector<2x64xf32> to vector<2x32xf32>
    %47 = vector.extract_strided_slice %45 {offsets = [0, 32], sizes = [2, 32], strides = [1, 1]} : vector<2x64xf32> to vector<2x32xf32>
    %48 = vector.extract_strided_slice %5 {offsets = [2, 0], sizes = [2, 256], strides = [1, 1]} : vector<16x256xf32> to vector<2x256xf32>
    %49 = vector.broadcast %6 : vector<1x256xf32> to vector<2x256xf32>
    %50 = arith.mulf %48, %49 : vector<2x256xf32>
    %51 = vector.extract_strided_slice %5 {offsets = [12, 0], sizes = [2, 256], strides = [1, 1]} : vector<16x256xf32> to vector<2x256xf32>
    %52 = vector.broadcast %8 : vector<1x256xf32> to vector<2x256xf32>
    %53 = arith.mulf %51, %52 : vector<2x256xf32>
    %54 = arith.addf %50, %53 : vector<2x256xf32>
    %cst_16 = arith.constant dense<0.000000e+00> : vector<2x256xf32>
    %55 = tpu.matmul %45, %9, %cst_16 {dimension_numbers = #tpu.dot_dimension_numbers<[1], [0], [0], [1], [0, 0, 1, 1], [], []>} : vector<2x64xf32>, vector<64x256xf32>, vector<2x256xf32> -> vector<2x256xf32>
    %56 = arith.addf %54, %55 : vector<2x256xf32>
    %57 = vector.extract_strided_slice %56 {offsets = [0, 0], sizes = [2, 64], strides = [1, 1]} : vector<2x256xf32> to vector<2x64xf32>
    %58 = arith.negf %57 : vector<2x64xf32>
    %59 = math.exp %58 : vector<2x64xf32>
    %cst_17 = arith.constant 1.000000e+00 : f32
    %60 = vector.broadcast %cst_17 : f32 to vector<2x64xf32>
    %61 = arith.addf %60, %59 : vector<2x64xf32>
    %62 = arith.divf %60, %61 : vector<2x64xf32>
    %63 = vector.extract_strided_slice %56 {offsets = [0, 64], sizes = [2, 64], strides = [1, 1]} : vector<2x256xf32> to vector<2x64xf32>
    %64 = arith.negf %63 : vector<2x64xf32>
    %65 = math.exp %64 : vector<2x64xf32>
    %cst_18 = arith.constant 1.000000e+00 : f32
    %66 = vector.broadcast %cst_18 : f32 to vector<2x64xf32>
    %67 = arith.addf %66, %65 : vector<2x64xf32>
    %68 = arith.divf %66, %67 : vector<2x64xf32>
    %69 = vector.extract_strided_slice %56 {offsets = [0, 128], sizes = [2, 64], strides = [1, 1]} : vector<2x256xf32> to vector<2x64xf32>
    %70 = math.tanh %69 : vector<2x64xf32>
    %71 = vector.extract_strided_slice %56 {offsets = [0, 192], sizes = [2, 64], strides = [1, 1]} : vector<2x256xf32> to vector<2x64xf32>
    %72 = arith.negf %71 : vector<2x64xf32>
    %73 = math.exp %72 : vector<2x64xf32>
    %cst_19 = arith.constant 1.000000e+00 : f32
    %74 = vector.broadcast %cst_19 : f32 to vector<2x64xf32>
    %75 = arith.addf %74, %73 : vector<2x64xf32>
    %76 = arith.divf %74, %75 : vector<2x64xf32>
    %77 = arith.mulf %68, %43 : vector<2x64xf32>
    %78 = arith.mulf %62, %70 : vector<2x64xf32>
    %79 = arith.addf %77, %78 : vector<2x64xf32>
    %80 = math.tanh %79 : vector<2x64xf32>
    %81 = arith.mulf %76, %80 : vector<2x64xf32>
    %82 = vector.extract_strided_slice %81 {offsets = [0, 0], sizes = [2, 32], strides = [1, 1]} : vector<2x64xf32> to vector<2x32xf32>
    %83 = vector.extract_strided_slice %81 {offsets = [0, 32], sizes = [2, 32], strides = [1, 1]} : vector<2x64xf32> to vector<2x32xf32>
    %84 = vector.extract_strided_slice %5 {offsets = [4, 0], sizes = [2, 256], strides = [1, 1]} : vector<16x256xf32> to vector<2x256xf32>
    %85 = vector.broadcast %6 : vector<1x256xf32> to vector<2x256xf32>
    %86 = arith.mulf %84, %85 : vector<2x256xf32>
    %87 = vector.extract_strided_slice %5 {offsets = [10, 0], sizes = [2, 256], strides = [1, 1]} : vector<16x256xf32> to vector<2x256xf32>
    %88 = vector.broadcast %8 : vector<1x256xf32> to vector<2x256xf32>
    %89 = arith.mulf %87, %88 : vector<2x256xf32>
    %90 = arith.addf %86, %89 : vector<2x256xf32>
    %cst_20 = arith.constant dense<0.000000e+00> : vector<2x256xf32>
    %91 = tpu.matmul %81, %9, %cst_20 {dimension_numbers = #tpu.dot_dimension_numbers<[1], [0], [0], [1], [0, 0, 1, 1], [], []>} : vector<2x64xf32>, vector<64x256xf32>, vector<2x256xf32> -> vector<2x256xf32>
    %92 = arith.addf %90, %91 : vector<2x256xf32>
    %93 = vector.extract_strided_slice %92 {offsets = [0, 0], sizes = [2, 64], strides = [1, 1]} : vector<2x256xf32> to vector<2x64xf32>
    %94 = arith.negf %93 : vector<2x64xf32>
    %95 = math.exp %94 : vector<2x64xf32>
    %cst_21 = arith.constant 1.000000e+00 : f32
    %96 = vector.broadcast %cst_21 : f32 to vector<2x64xf32>
    %97 = arith.addf %96, %95 : vector<2x64xf32>
    %98 = arith.divf %96, %97 : vector<2x64xf32>
    %99 = vector.extract_strided_slice %92 {offsets = [0, 64], sizes = [2, 64], strides = [1, 1]} : vector<2x256xf32> to vector<2x64xf32>
    %100 = arith.negf %99 : vector<2x64xf32>
    %101 = math.exp %100 : vector<2x64xf32>
    %cst_22 = arith.constant 1.000000e+00 : f32
    %102 = vector.broadcast %cst_22 : f32 to vector<2x64xf32>
    %103 = arith.addf %102, %101 : vector<2x64xf32>
    %104 = arith.divf %102, %103 : vector<2x64xf32>
    %105 = vector.extract_strided_slice %92 {offsets = [0, 128], sizes = [2, 64], strides = [1, 1]} : vector<2x256xf32> to vector<2x64xf32>
    %106 = math.tanh %105 : vector<2x64xf32>
    %107 = vector.extract_strided_slice %92 {offsets = [0, 192], sizes = [2, 64], strides = [1, 1]} : vector<2x256xf32> to vector<2x64xf32>
    %108 = arith.negf %107 : vector<2x64xf32>
    %109 = math.exp %108 : vector<2x64xf32>
    %cst_23 = arith.constant 1.000000e+00 : f32
    %110 = vector.broadcast %cst_23 : f32 to vector<2x64xf32>
    %111 = arith.addf %110, %109 : vector<2x64xf32>
    %112 = arith.divf %110, %111 : vector<2x64xf32>
    %113 = arith.mulf %104, %79 : vector<2x64xf32>
    %114 = arith.mulf %98, %106 : vector<2x64xf32>
    %115 = arith.addf %113, %114 : vector<2x64xf32>
    %116 = math.tanh %115 : vector<2x64xf32>
    %117 = arith.mulf %112, %116 : vector<2x64xf32>
    %118 = vector.extract_strided_slice %117 {offsets = [0, 0], sizes = [2, 32], strides = [1, 1]} : vector<2x64xf32> to vector<2x32xf32>
    %119 = vector.extract_strided_slice %117 {offsets = [0, 32], sizes = [2, 32], strides = [1, 1]} : vector<2x64xf32> to vector<2x32xf32>
    %120 = vector.extract_strided_slice %5 {offsets = [6, 0], sizes = [2, 256], strides = [1, 1]} : vector<16x256xf32> to vector<2x256xf32>
    %121 = vector.broadcast %6 : vector<1x256xf32> to vector<2x256xf32>
    %122 = arith.mulf %120, %121 : vector<2x256xf32>
    %123 = vector.extract_strided_slice %5 {offsets = [8, 0], sizes = [2, 256], strides = [1, 1]} : vector<16x256xf32> to vector<2x256xf32>
    %124 = vector.broadcast %8 : vector<1x256xf32> to vector<2x256xf32>
    %125 = arith.mulf %123, %124 : vector<2x256xf32>
    %126 = arith.addf %122, %125 : vector<2x256xf32>
    %cst_24 = arith.constant dense<0.000000e+00> : vector<2x256xf32>
    %127 = tpu.matmul %117, %9, %cst_24 {dimension_numbers = #tpu.dot_dimension_numbers<[1], [0], [0], [1], [0, 0, 1, 1], [], []>} : vector<2x64xf32>, vector<64x256xf32>, vector<2x256xf32> -> vector<2x256xf32>
    %128 = arith.addf %126, %127 : vector<2x256xf32>
    %129 = vector.extract_strided_slice %128 {offsets = [0, 0], sizes = [2, 64], strides = [1, 1]} : vector<2x256xf32> to vector<2x64xf32>
    %130 = arith.negf %129 : vector<2x64xf32>
    %131 = math.exp %130 : vector<2x64xf32>
    %cst_25 = arith.constant 1.000000e+00 : f32
    %132 = vector.broadcast %cst_25 : f32 to vector<2x64xf32>
    %133 = arith.addf %132, %131 : vector<2x64xf32>
    %134 = arith.divf %132, %133 : vector<2x64xf32>
    %135 = vector.extract_strided_slice %128 {offsets = [0, 64], sizes = [2, 64], strides = [1, 1]} : vector<2x256xf32> to vector<2x64xf32>
    %136 = arith.negf %135 : vector<2x64xf32>
    %137 = math.exp %136 : vector<2x64xf32>
    %cst_26 = arith.constant 1.000000e+00 : f32
    %138 = vector.broadcast %cst_26 : f32 to vector<2x64xf32>
    %139 = arith.addf %138, %137 : vector<2x64xf32>
    %140 = arith.divf %138, %139 : vector<2x64xf32>
    %141 = vector.extract_strided_slice %128 {offsets = [0, 128], sizes = [2, 64], strides = [1, 1]} : vector<2x256xf32> to vector<2x64xf32>
    %142 = math.tanh %141 : vector<2x64xf32>
    %143 = vector.extract_strided_slice %128 {offsets = [0, 192], sizes = [2, 64], strides = [1, 1]} : vector<2x256xf32> to vector<2x64xf32>
    %144 = arith.negf %143 : vector<2x64xf32>
    %145 = math.exp %144 : vector<2x64xf32>
    %cst_27 = arith.constant 1.000000e+00 : f32
    %146 = vector.broadcast %cst_27 : f32 to vector<2x64xf32>
    %147 = arith.addf %146, %145 : vector<2x64xf32>
    %148 = arith.divf %146, %147 : vector<2x64xf32>
    %149 = arith.mulf %140, %115 : vector<2x64xf32>
    %150 = arith.mulf %134, %142 : vector<2x64xf32>
    %151 = arith.addf %149, %150 : vector<2x64xf32>
    %152 = math.tanh %151 : vector<2x64xf32>
    %153 = arith.mulf %148, %152 : vector<2x64xf32>
    %154 = vector.extract_strided_slice %153 {offsets = [0, 0], sizes = [2, 32], strides = [1, 1]} : vector<2x64xf32> to vector<2x32xf32>
    %155 = vector.extract_strided_slice %153 {offsets = [0, 32], sizes = [2, 32], strides = [1, 1]} : vector<2x64xf32> to vector<2x32xf32>
    %156 = vector.extract_strided_slice %5 {offsets = [8, 0], sizes = [2, 256], strides = [1, 1]} : vector<16x256xf32> to vector<2x256xf32>
    %157 = vector.broadcast %6 : vector<1x256xf32> to vector<2x256xf32>
    %158 = arith.mulf %156, %157 : vector<2x256xf32>
    %159 = vector.extract_strided_slice %5 {offsets = [6, 0], sizes = [2, 256], strides = [1, 1]} : vector<16x256xf32> to vector<2x256xf32>
    %160 = vector.broadcast %8 : vector<1x256xf32> to vector<2x256xf32>
    %161 = arith.mulf %159, %160 : vector<2x256xf32>
    %162 = arith.addf %158, %161 : vector<2x256xf32>
    %cst_28 = arith.constant dense<0.000000e+00> : vector<2x256xf32>
    %163 = tpu.matmul %153, %9, %cst_28 {dimension_numbers = #tpu.dot_dimension_numbers<[1], [0], [0], [1], [0, 0, 1, 1], [], []>} : vector<2x64xf32>, vector<64x256xf32>, vector<2x256xf32> -> vector<2x256xf32>
    %164 = arith.addf %162, %163 : vector<2x256xf32>
    %165 = vector.extract_strided_slice %164 {offsets = [0, 0], sizes = [2, 64], strides = [1, 1]} : vector<2x256xf32> to vector<2x64xf32>
    %166 = arith.negf %165 : vector<2x64xf32>
    %167 = math.exp %166 : vector<2x64xf32>
    %cst_29 = arith.constant 1.000000e+00 : f32
    %168 = vector.broadcast %cst_29 : f32 to vector<2x64xf32>
    %169 = arith.addf %168, %167 : vector<2x64xf32>
    %170 = arith.divf %168, %169 : vector<2x64xf32>
    %171 = vector.extract_strided_slice %164 {offsets = [0, 64], sizes = [2, 64], strides = [1, 1]} : vector<2x256xf32> to vector<2x64xf32>
    %172 = arith.negf %171 : vector<2x64xf32>
    %173 = math.exp %172 : vector<2x64xf32>
    %cst_30 = arith.constant 1.000000e+00 : f32
    %174 = vector.broadcast %cst_30 : f32 to vector<2x64xf32>
    %175 = arith.addf %174, %173 : vector<2x64xf32>
    %176 = arith.divf %174, %175 : vector<2x64xf32>
    %177 = vector.extract_strided_slice %164 {offsets = [0, 128], sizes = [2, 64], strides = [1, 1]} : vector<2x256xf32> to vector<2x64xf32>
    %178 = math.tanh %177 : vector<2x64xf32>
    %179 = vector.extract_strided_slice %164 {offsets = [0, 192], sizes = [2, 64], strides = [1, 1]} : vector<2x256xf32> to vector<2x64xf32>
    %180 = arith.negf %179 : vector<2x64xf32>
    %181 = math.exp %180 : vector<2x64xf32>
    %cst_31 = arith.constant 1.000000e+00 : f32
    %182 = vector.broadcast %cst_31 : f32 to vector<2x64xf32>
    %183 = arith.addf %182, %181 : vector<2x64xf32>
    %184 = arith.divf %182, %183 : vector<2x64xf32>
    %185 = arith.mulf %176, %151 : vector<2x64xf32>
    %186 = arith.mulf %170, %178 : vector<2x64xf32>
    %187 = arith.addf %185, %186 : vector<2x64xf32>
    %188 = math.tanh %187 : vector<2x64xf32>
    %189 = arith.mulf %184, %188 : vector<2x64xf32>
    %190 = vector.extract_strided_slice %189 {offsets = [0, 0], sizes = [2, 32], strides = [1, 1]} : vector<2x64xf32> to vector<2x32xf32>
    %191 = vector.extract_strided_slice %189 {offsets = [0, 32], sizes = [2, 32], strides = [1, 1]} : vector<2x64xf32> to vector<2x32xf32>
    %192 = vector.extract_strided_slice %5 {offsets = [10, 0], sizes = [2, 256], strides = [1, 1]} : vector<16x256xf32> to vector<2x256xf32>
    %193 = vector.broadcast %6 : vector<1x256xf32> to vector<2x256xf32>
    %194 = arith.mulf %192, %193 : vector<2x256xf32>
    %195 = vector.extract_strided_slice %5 {offsets = [4, 0], sizes = [2, 256], strides = [1, 1]} : vector<16x256xf32> to vector<2x256xf32>
    %196 = vector.broadcast %8 : vector<1x256xf32> to vector<2x256xf32>
    %197 = arith.mulf %195, %196 : vector<2x256xf32>
    %198 = arith.addf %194, %197 : vector<2x256xf32>
    %cst_32 = arith.constant dense<0.000000e+00> : vector<2x256xf32>
    %199 = tpu.matmul %189, %9, %cst_32 {dimension_numbers = #tpu.dot_dimension_numbers<[1], [0], [0], [1], [0, 0, 1, 1], [], []>} : vector<2x64xf32>, vector<64x256xf32>, vector<2x256xf32> -> vector<2x256xf32>
    %200 = arith.addf %198, %199 : vector<2x256xf32>
    %201 = vector.extract_strided_slice %200 {offsets = [0, 0], sizes = [2, 64], strides = [1, 1]} : vector<2x256xf32> to vector<2x64xf32>
    %202 = arith.negf %201 : vector<2x64xf32>
    %203 = math.exp %202 : vector<2x64xf32>
    %cst_33 = arith.constant 1.000000e+00 : f32
    %204 = vector.broadcast %cst_33 : f32 to vector<2x64xf32>
    %205 = arith.addf %204, %203 : vector<2x64xf32>
    %206 = arith.divf %204, %205 : vector<2x64xf32>
    %207 = vector.extract_strided_slice %200 {offsets = [0, 64], sizes = [2, 64], strides = [1, 1]} : vector<2x256xf32> to vector<2x64xf32>
    %208 = arith.negf %207 : vector<2x64xf32>
    %209 = math.exp %208 : vector<2x64xf32>
    %cst_34 = arith.constant 1.000000e+00 : f32
    %210 = vector.broadcast %cst_34 : f32 to vector<2x64xf32>
    %211 = arith.addf %210, %209 : vector<2x64xf32>
    %212 = arith.divf %210, %211 : vector<2x64xf32>
    %213 = vector.extract_strided_slice %200 {offsets = [0, 128], sizes = [2, 64], strides = [1, 1]} : vector<2x256xf32> to vector<2x64xf32>
    %214 = math.tanh %213 : vector<2x64xf32>
    %215 = vector.extract_strided_slice %200 {offsets = [0, 192], sizes = [2, 64], strides = [1, 1]} : vector<2x256xf32> to vector<2x64xf32>
    %216 = arith.negf %215 : vector<2x64xf32>
    %217 = math.exp %216 : vector<2x64xf32>
    %cst_35 = arith.constant 1.000000e+00 : f32
    %218 = vector.broadcast %cst_35 : f32 to vector<2x64xf32>
    %219 = arith.addf %218, %217 : vector<2x64xf32>
    %220 = arith.divf %218, %219 : vector<2x64xf32>
    %221 = arith.mulf %212, %187 : vector<2x64xf32>
    %222 = arith.mulf %206, %214 : vector<2x64xf32>
    %223 = arith.addf %221, %222 : vector<2x64xf32>
    %224 = math.tanh %223 : vector<2x64xf32>
    %225 = arith.mulf %220, %224 : vector<2x64xf32>
    %226 = vector.extract_strided_slice %225 {offsets = [0, 0], sizes = [2, 32], strides = [1, 1]} : vector<2x64xf32> to vector<2x32xf32>
    %227 = vector.extract_strided_slice %225 {offsets = [0, 32], sizes = [2, 32], strides = [1, 1]} : vector<2x64xf32> to vector<2x32xf32>
    %228 = vector.extract_strided_slice %5 {offsets = [12, 0], sizes = [2, 256], strides = [1, 1]} : vector<16x256xf32> to vector<2x256xf32>
    %229 = vector.broadcast %6 : vector<1x256xf32> to vector<2x256xf32>
    %230 = arith.mulf %228, %229 : vector<2x256xf32>
    %231 = vector.extract_strided_slice %5 {offsets = [2, 0], sizes = [2, 256], strides = [1, 1]} : vector<16x256xf32> to vector<2x256xf32>
    %232 = vector.broadcast %8 : vector<1x256xf32> to vector<2x256xf32>
    %233 = arith.mulf %231, %232 : vector<2x256xf32>
    %234 = arith.addf %230, %233 : vector<2x256xf32>
    %cst_36 = arith.constant dense<0.000000e+00> : vector<2x256xf32>
    %235 = tpu.matmul %225, %9, %cst_36 {dimension_numbers = #tpu.dot_dimension_numbers<[1], [0], [0], [1], [0, 0, 1, 1], [], []>} : vector<2x64xf32>, vector<64x256xf32>, vector<2x256xf32> -> vector<2x256xf32>
    %236 = arith.addf %234, %235 : vector<2x256xf32>
    %237 = vector.extract_strided_slice %236 {offsets = [0, 0], sizes = [2, 64], strides = [1, 1]} : vector<2x256xf32> to vector<2x64xf32>
    %238 = arith.negf %237 : vector<2x64xf32>
    %239 = math.exp %238 : vector<2x64xf32>
    %cst_37 = arith.constant 1.000000e+00 : f32
    %240 = vector.broadcast %cst_37 : f32 to vector<2x64xf32>
    %241 = arith.addf %240, %239 : vector<2x64xf32>
    %242 = arith.divf %240, %241 : vector<2x64xf32>
    %243 = vector.extract_strided_slice %236 {offsets = [0, 64], sizes = [2, 64], strides = [1, 1]} : vector<2x256xf32> to vector<2x64xf32>
    %244 = arith.negf %243 : vector<2x64xf32>
    %245 = math.exp %244 : vector<2x64xf32>
    %cst_38 = arith.constant 1.000000e+00 : f32
    %246 = vector.broadcast %cst_38 : f32 to vector<2x64xf32>
    %247 = arith.addf %246, %245 : vector<2x64xf32>
    %248 = arith.divf %246, %247 : vector<2x64xf32>
    %249 = vector.extract_strided_slice %236 {offsets = [0, 128], sizes = [2, 64], strides = [1, 1]} : vector<2x256xf32> to vector<2x64xf32>
    %250 = math.tanh %249 : vector<2x64xf32>
    %251 = vector.extract_strided_slice %236 {offsets = [0, 192], sizes = [2, 64], strides = [1, 1]} : vector<2x256xf32> to vector<2x64xf32>
    %252 = arith.negf %251 : vector<2x64xf32>
    %253 = math.exp %252 : vector<2x64xf32>
    %cst_39 = arith.constant 1.000000e+00 : f32
    %254 = vector.broadcast %cst_39 : f32 to vector<2x64xf32>
    %255 = arith.addf %254, %253 : vector<2x64xf32>
    %256 = arith.divf %254, %255 : vector<2x64xf32>
    %257 = arith.mulf %248, %223 : vector<2x64xf32>
    %258 = arith.mulf %242, %250 : vector<2x64xf32>
    %259 = arith.addf %257, %258 : vector<2x64xf32>
    %260 = math.tanh %259 : vector<2x64xf32>
    %261 = arith.mulf %256, %260 : vector<2x64xf32>
    %262 = vector.extract_strided_slice %261 {offsets = [0, 0], sizes = [2, 32], strides = [1, 1]} : vector<2x64xf32> to vector<2x32xf32>
    %263 = vector.extract_strided_slice %261 {offsets = [0, 32], sizes = [2, 32], strides = [1, 1]} : vector<2x64xf32> to vector<2x32xf32>
    %264 = vector.extract_strided_slice %5 {offsets = [14, 0], sizes = [2, 256], strides = [1, 1]} : vector<16x256xf32> to vector<2x256xf32>
    %265 = vector.broadcast %6 : vector<1x256xf32> to vector<2x256xf32>
    %266 = arith.mulf %264, %265 : vector<2x256xf32>
    %267 = vector.extract_strided_slice %5 {offsets = [0, 0], sizes = [2, 256], strides = [1, 1]} : vector<16x256xf32> to vector<2x256xf32>
    %268 = vector.broadcast %8 : vector<1x256xf32> to vector<2x256xf32>
    %269 = arith.mulf %267, %268 : vector<2x256xf32>
    %270 = arith.addf %266, %269 : vector<2x256xf32>
    %cst_40 = arith.constant dense<0.000000e+00> : vector<2x256xf32>
    %271 = tpu.matmul %261, %9, %cst_40 {dimension_numbers = #tpu.dot_dimension_numbers<[1], [0], [0], [1], [0, 0, 1, 1], [], []>} : vector<2x64xf32>, vector<64x256xf32>, vector<2x256xf32> -> vector<2x256xf32>
    %272 = arith.addf %270, %271 : vector<2x256xf32>
    %273 = vector.extract_strided_slice %272 {offsets = [0, 0], sizes = [2, 64], strides = [1, 1]} : vector<2x256xf32> to vector<2x64xf32>
    %274 = arith.negf %273 : vector<2x64xf32>
    %275 = math.exp %274 : vector<2x64xf32>
    %cst_41 = arith.constant 1.000000e+00 : f32
    %276 = vector.broadcast %cst_41 : f32 to vector<2x64xf32>
    %277 = arith.addf %276, %275 : vector<2x64xf32>
    %278 = arith.divf %276, %277 : vector<2x64xf32>
    %279 = vector.extract_strided_slice %272 {offsets = [0, 64], sizes = [2, 64], strides = [1, 1]} : vector<2x256xf32> to vector<2x64xf32>
    %280 = arith.negf %279 : vector<2x64xf32>
    %281 = math.exp %280 : vector<2x64xf32>
    %cst_42 = arith.constant 1.000000e+00 : f32
    %282 = vector.broadcast %cst_42 : f32 to vector<2x64xf32>
    %283 = arith.addf %282, %281 : vector<2x64xf32>
    %284 = arith.divf %282, %283 : vector<2x64xf32>
    %285 = vector.extract_strided_slice %272 {offsets = [0, 128], sizes = [2, 64], strides = [1, 1]} : vector<2x256xf32> to vector<2x64xf32>
    %286 = math.tanh %285 : vector<2x64xf32>
    %287 = vector.extract_strided_slice %272 {offsets = [0, 192], sizes = [2, 64], strides = [1, 1]} : vector<2x256xf32> to vector<2x64xf32>
    %288 = arith.negf %287 : vector<2x64xf32>
    %289 = math.exp %288 : vector<2x64xf32>
    %cst_43 = arith.constant 1.000000e+00 : f32
    %290 = vector.broadcast %cst_43 : f32 to vector<2x64xf32>
    %291 = arith.addf %290, %289 : vector<2x64xf32>
    %292 = arith.divf %290, %291 : vector<2x64xf32>
    %293 = arith.mulf %284, %259 : vector<2x64xf32>
    %294 = arith.mulf %278, %286 : vector<2x64xf32>
    %295 = arith.addf %293, %294 : vector<2x64xf32>
    %296 = math.tanh %295 : vector<2x64xf32>
    %297 = arith.mulf %292, %296 : vector<2x64xf32>
    %298 = vector.extract_strided_slice %297 {offsets = [0, 0], sizes = [2, 32], strides = [1, 1]} : vector<2x64xf32> to vector<2x32xf32>
    %299 = vector.extract_strided_slice %297 {offsets = [0, 32], sizes = [2, 32], strides = [1, 1]} : vector<2x64xf32> to vector<2x32xf32>
    %300 = arith.addf %46, %299 : vector<2x32xf32>
    %cst_44 = arith.constant 5.000000e-01 : f32
    %301 = vector.broadcast %cst_44 : f32 to vector<2x32xf32>
    %302 = arith.mulf %301, %300 : vector<2x32xf32>
    %303 = vector.shape_cast %302 : vector<2x32xf32> to vector<2x1x32xf32>
    %c0_45 = arith.constant 0 : index
    %c0_46 = arith.constant 0 : index
    %c0_47 = arith.constant 0 : index
    %304 = vector.load %arg18[%c0_45, %c0_46, %c0_47] : memref<2x8x32xf32, #tpu.memory_space<vmem>>, vector<2x1x32xf32>
    tpu.vector_store %arg18[%c0_45, %c0_46, %c0_47], %303 {strides = array<i32>} : memref<2x8x32xf32, #tpu.memory_space<vmem>>, vector<2x1x32xf32>,
    %305 = arith.addf %82, %263 : vector<2x32xf32>
    %cst_48 = arith.constant 5.000000e-01 : f32
    %306 = vector.broadcast %cst_48 : f32 to vector<2x32xf32>
    %307 = arith.mulf %306, %305 : vector<2x32xf32>
    %308 = vector.shape_cast %307 : vector<2x32xf32> to vector<2x1x32xf32>
    %c0_49 = arith.constant 0 : index
    %c1 = arith.constant 1 : index
    %c0_50 = arith.constant 0 : index
    %309 = vector.load %arg18[%c0_49, %c1, %c0_50] : memref<2x8x32xf32, #tpu.memory_space<vmem>>, vector<2x1x32xf32>
    tpu.vector_store %arg18[%c0_49, %c1, %c0_50], %308 {strides = array<i32>} : memref<2x8x32xf32, #tpu.memory_space<vmem>>, vector<2x1x32xf32>,
    %310 = arith.addf %118, %227 : vector<2x32xf32>
    %cst_51 = arith.constant 5.000000e-01 : f32
    %311 = vector.broadcast %cst_51 : f32 to vector<2x32xf32>
    %312 = arith.mulf %311, %310 : vector<2x32xf32>
    %313 = vector.shape_cast %312 : vector<2x32xf32> to vector<2x1x32xf32>
    %c0_52 = arith.constant 0 : index
    %c2 = arith.constant 2 : index
    %c0_53 = arith.constant 0 : index
    %314 = vector.load %arg18[%c0_52, %c2, %c0_53] : memref<2x8x32xf32, #tpu.memory_space<vmem>>, vector<2x1x32xf32>
    tpu.vector_store %arg18[%c0_52, %c2, %c0_53], %313 {strides = array<i32>} : memref<2x8x32xf32, #tpu.memory_space<vmem>>, vector<2x1x32xf32>,
    %315 = arith.addf %154, %191 : vector<2x32xf32>
    %cst_54 = arith.constant 5.000000e-01 : f32
    %316 = vector.broadcast %cst_54 : f32 to vector<2x32xf32>
    %317 = arith.mulf %316, %315 : vector<2x32xf32>
    %318 = vector.shape_cast %317 : vector<2x32xf32> to vector<2x1x32xf32>
    %c0_55 = arith.constant 0 : index
    %c3 = arith.constant 3 : index
    %c0_56 = arith.constant 0 : index
    %319 = vector.load %arg18[%c0_55, %c3, %c0_56] : memref<2x8x32xf32, #tpu.memory_space<vmem>>, vector<2x1x32xf32>
    tpu.vector_store %arg18[%c0_55, %c3, %c0_56], %318 {strides = array<i32>} : memref<2x8x32xf32, #tpu.memory_space<vmem>>, vector<2x1x32xf32>,
    %320 = arith.addf %190, %155 : vector<2x32xf32>
    %cst_57 = arith.constant 5.000000e-01 : f32
    %321 = vector.broadcast %cst_57 : f32 to vector<2x32xf32>
    %322 = arith.mulf %321, %320 : vector<2x32xf32>
    %323 = vector.shape_cast %322 : vector<2x32xf32> to vector<2x1x32xf32>
    %c0_58 = arith.constant 0 : index
    %c4 = arith.constant 4 : index
    %c0_59 = arith.constant 0 : index
    %324 = vector.load %arg18[%c0_58, %c4, %c0_59] : memref<2x8x32xf32, #tpu.memory_space<vmem>>, vector<2x1x32xf32>
    tpu.vector_store %arg18[%c0_58, %c4, %c0_59], %323 {strides = array<i32>} : memref<2x8x32xf32, #tpu.memory_space<vmem>>, vector<2x1x32xf32>,
    %325 = arith.addf %226, %119 : vector<2x32xf32>
    %cst_60 = arith.constant 5.000000e-01 : f32
    %326 = vector.broadcast %cst_60 : f32 to vector<2x32xf32>
    %327 = arith.mulf %326, %325 : vector<2x32xf32>
    %328 = vector.shape_cast %327 : vector<2x32xf32> to vector<2x1x32xf32>
    %c0_61 = arith.constant 0 : index
    %c5 = arith.constant 5 : index
    %c0_62 = arith.constant 0 : index
    %329 = vector.load %arg18[%c0_61, %c5, %c0_62] : memref<2x8x32xf32, #tpu.memory_space<vmem>>, vector<2x1x32xf32>
    tpu.vector_store %arg18[%c0_61, %c5, %c0_62], %328 {strides = array<i32>} : memref<2x8x32xf32, #tpu.memory_space<vmem>>, vector<2x1x32xf32>,
    %330 = arith.addf %262, %83 : vector<2x32xf32>
    %cst_63 = arith.constant 5.000000e-01 : f32
    %331 = vector.broadcast %cst_63 : f32 to vector<2x32xf32>
    %332 = arith.mulf %331, %330 : vector<2x32xf32>
    %333 = vector.shape_cast %332 : vector<2x32xf32> to vector<2x1x32xf32>
    %c0_64 = arith.constant 0 : index
    %c6 = arith.constant 6 : index
    %c0_65 = arith.constant 0 : index
    %334 = vector.load %arg18[%c0_64, %c6, %c0_65] : memref<2x8x32xf32, #tpu.memory_space<vmem>>, vector<2x1x32xf32>
    tpu.vector_store %arg18[%c0_64, %c6, %c0_65], %333 {strides = array<i32>} : memref<2x8x32xf32, #tpu.memory_space<vmem>>, vector<2x1x32xf32>,
    %335 = arith.addf %298, %47 : vector<2x32xf32>
    %cst_66 = arith.constant 5.000000e-01 : f32
    %336 = vector.broadcast %cst_66 : f32 to vector<2x32xf32>
    %337 = arith.mulf %336, %335 : vector<2x32xf32>
    %338 = vector.shape_cast %337 : vector<2x32xf32> to vector<2x1x32xf32>
    %c0_67 = arith.constant 0 : index
    %c7 = arith.constant 7 : index
    %c0_68 = arith.constant 0 : index
    %339 = vector.load %arg18[%c0_67, %c7, %c0_68] : memref<2x8x32xf32, #tpu.memory_space<vmem>>, vector<2x1x32xf32>
    tpu.vector_store %arg18[%c0_67, %c7, %c0_68], %338 {strides = array<i32>} : memref<2x8x32xf32, #tpu.memory_space<vmem>>, vector<2x1x32xf32>,
    %c0_69 = arith.constant 0 : index
    %c0_70 = arith.constant 0 : index
    %c0_71 = arith.constant 0 : index
    %340 = vector.load %arg18[%c0_69, %c0_70, %c0_71] : memref<2x8x32xf32, #tpu.memory_space<vmem>>, vector<2x8x32xf32>
    %341 = vector.extract_strided_slice %297 {offsets = [0, 0], sizes = [2, 32], strides = [1, 1]} : vector<2x64xf32> to vector<2x32xf32>
    %342 = vector.extract_strided_slice %297 {offsets = [0, 32], sizes = [2, 32], strides = [1, 1]} : vector<2x64xf32> to vector<2x32xf32>
    %343 = arith.addf %341, %342 : vector<2x32xf32>
    %cst_72 = arith.constant 5.000000e-01 : f32
    %344 = vector.broadcast %cst_72 : f32 to vector<2x32xf32>
    %345 = arith.mulf %344, %343 : vector<2x32xf32>
    %346 = vector.extract_strided_slice %295 {offsets = [0, 0], sizes = [2, 32], strides = [1, 1]} : vector<2x64xf32> to vector<2x32xf32>
    %347 = vector.extract_strided_slice %295 {offsets = [0, 32], sizes = [2, 32], strides = [1, 1]} : vector<2x64xf32> to vector<2x32xf32>
    %348 = arith.addf %346, %347 : vector<2x32xf32>
    %cst_73 = arith.constant 5.000000e-01 : f32
    %349 = vector.broadcast %cst_73 : f32 to vector<2x32xf32>
    %350 = arith.mulf %349, %348 : vector<2x32xf32>
    %c0_74 = arith.constant 0 : index
    %c0_75 = arith.constant 0 : index
    %351 = vector.load %arg1[%c0_74, %c0_75] : memref<10x16xf32, #tpu.memory_space<vmem>>, vector<10x16xf32>
    %c0_76 = arith.constant 0 : index
    %c0_77 = arith.constant 0 : index
    %352 = vector.load %arg8[%c0_76, %c0_77] : memref<16x128xf32, #tpu.memory_space<vmem>>, vector<16x128xf32>
    %cst_78 = arith.constant dense<0.000000e+00> : vector<10x128xf32>
    %353 = tpu.matmul %351, %352, %cst_78 {dimension_numbers = #tpu.dot_dimension_numbers<[1], [0], [0], [1], [0, 0, 1, 1], [], []>} : vector<10x16xf32>, vector<16x128xf32>, vector<10x128xf32> -> vector<10x128xf32>
    %c0_79 = arith.constant 0 : index
    %c0_80 = arith.constant 0 : index
    %354 = vector.load %arg11[%c0_79, %c0_80] : memref<1x128xf32, #tpu.memory_space<vmem>>, vector<1x128xf32>
    %355 = vector.broadcast %354 : vector<1x128xf32> to vector<10x128xf32>
    %356 = arith.addf %353, %355 : vector<10x128xf32>
    %c0_81 = arith.constant 0 : index
    %c0_82 = arith.constant 0 : index
    %357 = vector.load %arg9[%c0_81, %c0_82] : memref<32x128xf32, #tpu.memory_space<vmem>>, vector<32x128xf32>
    %c0_83 = arith.constant 0 : index
    %c0_84 = arith.constant 0 : index
    %358 = vector.load %arg10[%c0_83, %c0_84] : memref<32x128xf32, #tpu.memory_space<vmem>>, vector<32x128xf32>
    %c0_85 = arith.constant 0 : index
    %c0_86 = arith.constant 0 : index
    %359 = vector.load %arg12[%c0_85, %c0_86] : memref<32x32xf32, #tpu.memory_space<vmem>>, vector<32x32xf32>
    %c0_87 = arith.constant 0 : index
    %c0_88 = arith.constant 0 : index
    %360 = vector.load %arg13[%c0_87, %c0_88] : memref<32x32xf32, #tpu.memory_space<vmem>>, vector<32x32xf32>
    %c0_89 = arith.constant 0 : index
    %c0_90 = arith.constant 0 : index
    %361 = vector.load %arg14[%c0_89, %c0_90] : memref<1x32xf32, #tpu.memory_space<vmem>>, vector<1x32xf32>
    %c0_91 = arith.constant 0 : index
    %c0_92 = arith.constant 0 : index
    %362 = vector.load %arg15[%c0_91, %c0_92] : memref<32x128xf32, #tpu.memory_space<vmem>>, vector<32x128xf32>
    %c0_93 = arith.constant 0 : index
    %c0_94 = arith.constant 0 : index
    %363 = vector.load %arg16[%c0_93, %c0_94] : memref<1x128xf32, #tpu.memory_space<vmem>>, vector<1x128xf32>
    %cst_95 = arith.constant 0.000000e+00 : f32
    %364 = vector.broadcast %cst_95 : f32 to vector<2x32xf32>
    %cst_96 = arith.constant 0.000000e+00 : f32
    %365 = vector.broadcast %cst_96 : f32 to vector<1x1xf32>
    %366 = vector.extract_strided_slice %356 {offsets = [0, 0], sizes = [2, 128], strides = [1, 1]} : vector<10x128xf32> to vector<2x128xf32>
    %cst_97 = arith.constant dense<0.000000e+00> : vector<2x128xf32>
    %367 = tpu.matmul %364, %357, %cst_97 {dimension_numbers = #tpu.dot_dimension_numbers<[1], [0], [0], [1], [0, 0, 1, 1], [], []>} : vector<2x32xf32>, vector<32x128xf32>, vector<2x128xf32> -> vector<2x128xf32>
    %368 = arith.addf %366, %367 : vector<2x128xf32>
    %cst_98 = arith.constant dense<0.000000e+00> : vector<2x128xf32>
    %369 = tpu.matmul %345, %358, %cst_98 {dimension_numbers = #tpu.dot_dimension_numbers<[1], [0], [0], [1], [0, 0, 1, 1], [], []>} : vector<2x32xf32>, vector<32x128xf32>, vector<2x128xf32> -> vector<2x128xf32>
    %370 = arith.addf %368, %369 : vector<2x128xf32>
    %371 = vector.extract_strided_slice %370 {offsets = [0, 0], sizes = [2, 32], strides = [1, 1]} : vector<2x128xf32> to vector<2x32xf32>
    %372 = arith.negf %371 : vector<2x32xf32>
    %373 = math.exp %372 : vector<2x32xf32>
    %cst_99 = arith.constant 1.000000e+00 : f32
    %374 = vector.broadcast %cst_99 : f32 to vector<2x32xf32>
    %375 = arith.addf %374, %373 : vector<2x32xf32>
    %376 = arith.divf %374, %375 : vector<2x32xf32>
    %377 = vector.extract_strided_slice %370 {offsets = [0, 32], sizes = [2, 32], strides = [1, 1]} : vector<2x128xf32> to vector<2x32xf32>
    %378 = arith.negf %377 : vector<2x32xf32>
    %379 = math.exp %378 : vector<2x32xf32>
    %cst_100 = arith.constant 1.000000e+00 : f32
    %380 = vector.broadcast %cst_100 : f32 to vector<2x32xf32>
    %381 = arith.addf %380, %379 : vector<2x32xf32>
    %382 = arith.divf %380, %381 : vector<2x32xf32>
    %383 = vector.extract_strided_slice %370 {offsets = [0, 64], sizes = [2, 32], strides = [1, 1]} : vector<2x128xf32> to vector<2x32xf32>
    %384 = math.tanh %383 : vector<2x32xf32>
    %385 = vector.extract_strided_slice %370 {offsets = [0, 96], sizes = [2, 32], strides = [1, 1]} : vector<2x128xf32> to vector<2x32xf32>
    %386 = arith.negf %385 : vector<2x32xf32>
    %387 = math.exp %386 : vector<2x32xf32>
    %cst_101 = arith.constant 1.000000e+00 : f32
    %388 = vector.broadcast %cst_101 : f32 to vector<2x32xf32>
    %389 = arith.addf %388, %387 : vector<2x32xf32>
    %390 = arith.divf %388, %389 : vector<2x32xf32>
    %391 = arith.mulf %382, %350 : vector<2x32xf32>
    %392 = arith.mulf %376, %384 : vector<2x32xf32>
    %393 = arith.addf %391, %392 : vector<2x32xf32>
    %394 = math.tanh %393 : vector<2x32xf32>
    %395 = arith.mulf %390, %394 : vector<2x32xf32>
    %396 = vector.shape_cast %395 : vector<2x32xf32> to vector<2x1x32xf32>
    "tpu.trace_start"() <{level = 10 : i32, message = "bqd,bkd->bqk"}> : () -> ()
    %cst_102 = arith.constant dense<0.000000e+00> : vector<2x1x8xf32>
    %397 = tpu.matmul %396, %340, %cst_102 {dimension_numbers = #tpu.dot_dimension_numbers<[2], [2], [1], [1], [0, 0, 0, 1, 1, 1], [0], [0]>} : vector<2x1x32xf32>, vector<2x8x32xf32>, vector<2x1x8xf32> -> vector<2x1x8xf32>
    "tpu.trace_stop"() : () -> ()
    %cst_103 = arith.constant dense<0xFF800000> : vector<2x1xf32>
    %398 = vector.multi_reduction <maximumf>, %397, %cst_103 [2] : vector<2x1x8xf32> to vector<2x1xf32>
    %399 = vector.shape_cast %398 : vector<2x1xf32> to vector<2x1x1xf32>
    %400 = vector.broadcast %399 : vector<2x1x1xf32> to vector<2x1x8xf32>
    %401 = arith.subf %397, %400 : vector<2x1x8xf32>
    %402 = math.exp %401 : vector<2x1x8xf32>
    %cst_104 = arith.constant dense<0.000000e+00> : vector<2x1xf32>
    %403 = vector.multi_reduction <add>, %402, %cst_104 [2] : vector<2x1x8xf32> to vector<2x1xf32>
    %404 = vector.shape_cast %403 : vector<2x1xf32> to vector<2x1x1xf32>
    %405 = tpu.reciprocal %404 {approx = true} : vector<2x1x1xf32> -> vector<2x1x1xf32>
    %406 = vector.broadcast %405 : vector<2x1x1xf32> to vector<2x1x8xf32>
    %407 = arith.mulf %402, %406 : vector<2x1x8xf32>
    "tpu.trace_start"() <{level = 10 : i32, message = "bqk,bkd->bqd"}> : () -> ()
    %cst_105 = arith.constant dense<0.000000e+00> : vector<2x1x32xf32>
    %408 = tpu.matmul %407, %340, %cst_105 {dimension_numbers = #tpu.dot_dimension_numbers<[2], [1], [1], [2], [0, 0, 0, 1, 1, 2], [0], [0]>} : vector<2x1x8xf32>, vector<2x8x32xf32>, vector<2x1x32xf32> -> vector<2x1x32xf32>
    "tpu.trace_stop"() : () -> ()
    %409 = vector.shape_cast %408 : vector<2x1x32xf32> to vector<2x32xf32>
    %cst_106 = arith.constant dense<0.000000e+00> : vector<2x32xf32>
    %410 = tpu.matmul %409, %359, %cst_106 {dimension_numbers = #tpu.dot_dimension_numbers<[1], [0], [0], [1], [0, 0, 1, 1], [], []>} : vector<2x32xf32>, vector<32x32xf32>, vector<2x32xf32> -> vector<2x32xf32>
    %cst_107 = arith.constant dense<0.000000e+00> : vector<2x32xf32>
    %411 = tpu.matmul %395, %360, %cst_107 {dimension_numbers = #tpu.dot_dimension_numbers<[1], [0], [0], [1], [0, 0, 1, 1], [], []>} : vector<2x32xf32>, vector<32x32xf32>, vector<2x32xf32> -> vector<2x32xf32>
    %412 = arith.addf %410, %411 : vector<2x32xf32>
    %413 = vector.broadcast %361 : vector<1x32xf32> to vector<2x32xf32>
    %414 = arith.addf %412, %413 : vector<2x32xf32>
    %415 = math.tanh %414 : vector<2x32xf32>
    %cst_108 = arith.constant dense<0.000000e+00> : vector<2x128xf32>
    %416 = tpu.matmul %415, %362, %cst_108 {dimension_numbers = #tpu.dot_dimension_numbers<[1], [0], [0], [1], [0, 0, 1, 1], [], []>} : vector<2x32xf32>, vector<32x128xf32>, vector<2x128xf32> -> vector<2x128xf32>
    %417 = vector.broadcast %363 : vector<1x128xf32> to vector<2x128xf32>
    %418 = arith.addf %416, %417 : vector<2x128xf32>
    %cst_109 = arith.constant dense<0xFF800000> : vector<2xf32>
    %419 = vector.multi_reduction <maximumf>, %418, %cst_109 [1] : vector<2x128xf32> to vector<2xf32>
    %420 = vector.shape_cast %419 : vector<2xf32> to vector<2x1xf32>
    %421 = vector.broadcast %420 : vector<2x1xf32> to vector<2x128xf32>
    %422 = arith.subf %418, %421 : vector<2x128xf32>
    %423 = math.exp %422 : vector<2x128xf32>
    %cst_110 = arith.constant dense<0.000000e+00> : vector<2xf32>
    %424 = vector.multi_reduction <add>, %423, %cst_110 [1] : vector<2x128xf32> to vector<2xf32>
    %425 = vector.shape_cast %424 : vector<2xf32> to vector<2x1xf32>
    %426 = math.log %425 : vector<2x1xf32>
    %427 = arith.addf %420, %426 : vector<2x1xf32>
    %428 = vector.broadcast %427 : vector<2x1xf32> to vector<2x128xf32>
    %429 = arith.subf %418, %428 : vector<2x128xf32>
    %c0_111 = arith.constant 0 : index
    %c0_112 = arith.constant 0 : index
    %430 = vector.load %arg2[%c0_111, %c0_112] : memref<10x128xf32, #tpu.memory_space<vmem>>, vector<2x128xf32>
    %431 = arith.mulf %429, %430 : vector<2x128xf32>
    %cst_113 = arith.constant dense<0.000000e+00> : vector<2xf32>
    %432 = vector.multi_reduction <add>, %431, %cst_113 [1] : vector<2x128xf32> to vector<2xf32>
    %433 = vector.shape_cast %432 : vector<2xf32> to vector<2x1xf32>
    %c0_114 = arith.constant 0 : index
    %c0_115 = arith.constant 0 : index
    %434 = vector.load %arg3[%c0_114, %c0_115] : memref<10x1xf32, #tpu.memory_space<vmem>>, vector<2x1xf32>
    %cst_116 = arith.constant 0.000000e+00 : f32
    %435 = vector.broadcast %cst_116 : f32 to vector<2x1xf32>
    %436 = arith.subf %435, %433 : vector<2x1xf32>
    %437 = arith.mulf %436, %434 : vector<2x1xf32>
    %438 = vector.shape_cast %437 : vector<2x1xf32> to vector<1x2x1xf32>
    %cst_117 = arith.constant dense<0.000000e+00> : vector<1xf32>
    %439 = vector.multi_reduction <add>, %438, %cst_117 [1, 2] : vector<1x2x1xf32> to vector<1xf32>
    %440 = vector.shape_cast %439 : vector<1xf32> to vector<1x1x1xf32>
    %441 = vector.extract %440[0, 0, 0] : f32 from vector<1x1x1xf32>
    %442 = vector.broadcast %441 : f32 to vector<1x1xf32>
    %443 = vector.shape_cast %434 : vector<2x1xf32> to vector<1x2x1xf32>
    %cst_118 = arith.constant dense<0.000000e+00> : vector<1xf32>
    %444 = vector.multi_reduction <add>, %443, %cst_118 [1, 2] : vector<1x2x1xf32> to vector<1xf32>
    %445 = vector.shape_cast %444 : vector<1xf32> to vector<1x1x1xf32>
    %446 = vector.extract %445[0, 0, 0] : f32 from vector<1x1x1xf32>
    %447 = vector.broadcast %446 : f32 to vector<1x1xf32>
    %cst_119 = arith.constant 1.000000e+00 : f32
    %448 = vector.broadcast %cst_119 : f32 to vector<1x1xf32>
    %449 = arith.maximumf %447, %448 : vector<1x1xf32>
    %450 = arith.divf %442, %449 : vector<1x1xf32>
    %451 = arith.addf %365, %450 : vector<1x1xf32>
    %452 = vector.extract_strided_slice %356 {offsets = [2, 0], sizes = [2, 128], strides = [1, 1]} : vector<10x128xf32> to vector<2x128xf32>
    %cst_120 = arith.constant dense<0.000000e+00> : vector<2x128xf32>
    %453 = tpu.matmul %409, %357, %cst_120 {dimension_numbers = #tpu.dot_dimension_numbers<[1], [0], [0], [1], [0, 0, 1, 1], [], []>} : vector<2x32xf32>, vector<32x128xf32>, vector<2x128xf32> -> vector<2x128xf32>
    %454 = arith.addf %452, %453 : vector<2x128xf32>
    %cst_121 = arith.constant dense<0.000000e+00> : vector<2x128xf32>
    %455 = tpu.matmul %395, %358, %cst_121 {dimension_numbers = #tpu.dot_dimension_numbers<[1], [0], [0], [1], [0, 0, 1, 1], [], []>} : vector<2x32xf32>, vector<32x128xf32>, vector<2x128xf32> -> vector<2x128xf32>
    %456 = arith.addf %454, %455 : vector<2x128xf32>
    %457 = vector.extract_strided_slice %456 {offsets = [0, 0], sizes = [2, 32], strides = [1, 1]} : vector<2x128xf32> to vector<2x32xf32>
    %458 = arith.negf %457 : vector<2x32xf32>
    %459 = math.exp %458 : vector<2x32xf32>
    %cst_122 = arith.constant 1.000000e+00 : f32
    %460 = vector.broadcast %cst_122 : f32 to vector<2x32xf32>
    %461 = arith.addf %460, %459 : vector<2x32xf32>
    %462 = arith.divf %460, %461 : vector<2x32xf32>
    %463 = vector.extract_strided_slice %456 {offsets = [0, 32], sizes = [2, 32], strides = [1, 1]} : vector<2x128xf32> to vector<2x32xf32>
    %464 = arith.negf %463 : vector<2x32xf32>
    %465 = math.exp %464 : vector<2x32xf32>
    %cst_123 = arith.constant 1.000000e+00 : f32
    %466 = vector.broadcast %cst_123 : f32 to vector<2x32xf32>
    %467 = arith.addf %466, %465 : vector<2x32xf32>
    %468 = arith.divf %466, %467 : vector<2x32xf32>
    %469 = vector.extract_strided_slice %456 {offsets = [0, 64], sizes = [2, 32], strides = [1, 1]} : vector<2x128xf32> to vector<2x32xf32>
    %470 = math.tanh %469 : vector<2x32xf32>
    %471 = vector.extract_strided_slice %456 {offsets = [0, 96], sizes = [2, 32], strides = [1, 1]} : vector<2x128xf32> to vector<2x32xf32>
    %472 = arith.negf %471 : vector<2x32xf32>
    %473 = math.exp %472 : vector<2x32xf32>
    %cst_124 = arith.constant 1.000000e+00 : f32
    %474 = vector.broadcast %cst_124 : f32 to vector<2x32xf32>
    %475 = arith.addf %474, %473 : vector<2x32xf32>
    %476 = arith.divf %474, %475 : vector<2x32xf32>
    %477 = arith.mulf %468, %393 : vector<2x32xf32>
    %478 = arith.mulf %462, %470 : vector<2x32xf32>
    %479 = arith.addf %477, %478 : vector<2x32xf32>
    %480 = math.tanh %479 : vector<2x32xf32>
    %481 = arith.mulf %476, %480 : vector<2x32xf32>
    %482 = vector.shape_cast %481 : vector<2x32xf32> to vector<2x1x32xf32>
    "tpu.trace_start"() <{level = 10 : i32, message = "bqd,bkd->bqk"}> : () -> ()
    %cst_125 = arith.constant dense<0.000000e+00> : vector<2x1x8xf32>
    %483 = tpu.matmul %482, %340, %cst_125 {dimension_numbers = #tpu.dot_dimension_numbers<[2], [2], [1], [1], [0, 0, 0, 1, 1, 1], [0], [0]>} : vector<2x1x32xf32>, vector<2x8x32xf32>, vector<2x1x8xf32> -> vector<2x1x8xf32>
    "tpu.trace_stop"() : () -> ()
    %cst_126 = arith.constant dense<0xFF800000> : vector<2x1xf32>
    %484 = vector.multi_reduction <maximumf>, %483, %cst_126 [2] : vector<2x1x8xf32> to vector<2x1xf32>
    %485 = vector.shape_cast %484 : vector<2x1xf32> to vector<2x1x1xf32>
    %486 = vector.broadcast %485 : vector<2x1x1xf32> to vector<2x1x8xf32>
    %487 = arith.subf %483, %486 : vector<2x1x8xf32>
    %488 = math.exp %487 : vector<2x1x8xf32>
    %cst_127 = arith.constant dense<0.000000e+00> : vector<2x1xf32>
    %489 = vector.multi_reduction <add>, %488, %cst_127 [2] : vector<2x1x8xf32> to vector<2x1xf32>
    %490 = vector.shape_cast %489 : vector<2x1xf32> to vector<2x1x1xf32>
    %491 = tpu.reciprocal %490 {approx = true} : vector<2x1x1xf32> -> vector<2x1x1xf32>
    %492 = vector.broadcast %491 : vector<2x1x1xf32> to vector<2x1x8xf32>
    %493 = arith.mulf %488, %492 : vector<2x1x8xf32>
    "tpu.trace_start"() <{level = 10 : i32, message = "bqk,bkd->bqd"}> : () -> ()
    %cst_128 = arith.constant dense<0.000000e+00> : vector<2x1x32xf32>
    %494 = tpu.matmul %493, %340, %cst_128 {dimension_numbers = #tpu.dot_dimension_numbers<[2], [1], [1], [2], [0, 0, 0, 1, 1, 2], [0], [0]>} : vector<2x1x8xf32>, vector<2x8x32xf32>, vector<2x1x32xf32> -> vector<2x1x32xf32>
    "tpu.trace_stop"() : () -> ()
    %495 = vector.shape_cast %494 : vector<2x1x32xf32> to vector<2x32xf32>
    %cst_129 = arith.constant dense<0.000000e+00> : vector<2x32xf32>
    %496 = tpu.matmul %495, %359, %cst_129 {dimension_numbers = #tpu.dot_dimension_numbers<[1], [0], [0], [1], [0, 0, 1, 1], [], []>} : vector<2x32xf32>, vector<32x32xf32>, vector<2x32xf32> -> vector<2x32xf32>
    %cst_130 = arith.constant dense<0.000000e+00> : vector<2x32xf32>
    %497 = tpu.matmul %481, %360, %cst_130 {dimension_numbers = #tpu.dot_dimension_numbers<[1], [0], [0], [1], [0, 0, 1, 1], [], []>} : vector<2x32xf32>, vector<32x32xf32>, vector<2x32xf32> -> vector<2x32xf32>
    %498 = arith.addf %496, %497 : vector<2x32xf32>
    %499 = vector.broadcast %361 : vector<1x32xf32> to vector<2x32xf32>
    %500 = arith.addf %498, %499 : vector<2x32xf32>
    %501 = math.tanh %500 : vector<2x32xf32>
    %cst_131 = arith.constant dense<0.000000e+00> : vector<2x128xf32>
    %502 = tpu.matmul %501, %362, %cst_131 {dimension_numbers = #tpu.dot_dimension_numbers<[1], [0], [0], [1], [0, 0, 1, 1], [], []>} : vector<2x32xf32>, vector<32x128xf32>, vector<2x128xf32> -> vector<2x128xf32>
    %503 = vector.broadcast %363 : vector<1x128xf32> to vector<2x128xf32>
    %504 = arith.addf %502, %503 : vector<2x128xf32>
    %cst_132 = arith.constant dense<0xFF800000> : vector<2xf32>
    %505 = vector.multi_reduction <maximumf>, %504, %cst_132 [1] : vector<2x128xf32> to vector<2xf32>
    %506 = vector.shape_cast %505 : vector<2xf32> to vector<2x1xf32>
    %507 = vector.broadcast %506 : vector<2x1xf32> to vector<2x128xf32>
    %508 = arith.subf %504, %507 : vector<2x128xf32>
    %509 = math.exp %508 : vector<2x128xf32>
    %cst_133 = arith.constant dense<0.000000e+00> : vector<2xf32>
    %510 = vector.multi_reduction <add>, %509, %cst_133 [1] : vector<2x128xf32> to vector<2xf32>
    %511 = vector.shape_cast %510 : vector<2xf32> to vector<2x1xf32>
    %512 = math.log %511 : vector<2x1xf32>
    %513 = arith.addf %506, %512 : vector<2x1xf32>
    %514 = vector.broadcast %513 : vector<2x1xf32> to vector<2x128xf32>
    %515 = arith.subf %504, %514 : vector<2x128xf32>
    %c2_134 = arith.constant 2 : index
    %c0_135 = arith.constant 0 : index
    %516 = vector.load %arg2[%c2_134, %c0_135] : memref<10x128xf32, #tpu.memory_space<vmem>>, vector<2x128xf32>
    %517 = arith.mulf %515, %516 : vector<2x128xf32>
    %cst_136 = arith.constant dense<0.000000e+00> : vector<2xf32>
    %518 = vector.multi_reduction <add>, %517, %cst_136 [1] : vector<2x128xf32> to vector<2xf32>
    %519 = vector.shape_cast %518 : vector<2xf32> to vector<2x1xf32>
    %c2_137 = arith.constant 2 : index
    %c0_138 = arith.constant 0 : index
    %520 = vector.load %arg3[%c2_137, %c0_138] : memref<10x1xf32, #tpu.memory_space<vmem>>, vector<2x1xf32>
    %cst_139 = arith.constant 0.000000e+00 : f32
    %521 = vector.broadcast %cst_139 : f32 to vector<2x1xf32>
    %522 = arith.subf %521, %519 : vector<2x1xf32>
    %523 = arith.mulf %522, %520 : vector<2x1xf32>
    %524 = vector.shape_cast %523 : vector<2x1xf32> to vector<1x2x1xf32>
    %cst_140 = arith.constant dense<0.000000e+00> : vector<1xf32>
    %525 = vector.multi_reduction <add>, %524, %cst_140 [1, 2] : vector<1x2x1xf32> to vector<1xf32>
    %526 = vector.shape_cast %525 : vector<1xf32> to vector<1x1x1xf32>
    %527 = vector.extract %526[0, 0, 0] : f32 from vector<1x1x1xf32>
    %528 = vector.broadcast %527 : f32 to vector<1x1xf32>
    %529 = vector.shape_cast %520 : vector<2x1xf32> to vector<1x2x1xf32>
    %cst_141 = arith.constant dense<0.000000e+00> : vector<1xf32>
    %530 = vector.multi_reduction <add>, %529, %cst_141 [1, 2] : vector<1x2x1xf32> to vector<1xf32>
    %531 = vector.shape_cast %530 : vector<1xf32> to vector<1x1x1xf32>
    %532 = vector.extract %531[0, 0, 0] : f32 from vector<1x1x1xf32>
    %533 = vector.broadcast %532 : f32 to vector<1x1xf32>
    %cst_142 = arith.constant 1.000000e+00 : f32
    %534 = vector.broadcast %cst_142 : f32 to vector<1x1xf32>
    %535 = arith.maximumf %533, %534 : vector<1x1xf32>
    %536 = arith.divf %528, %535 : vector<1x1xf32>
    %537 = arith.addf %451, %536 : vector<1x1xf32>
    %538 = vector.extract_strided_slice %356 {offsets = [4, 0], sizes = [2, 128], strides = [1, 1]} : vector<10x128xf32> to vector<2x128xf32>
    %cst_143 = arith.constant dense<0.000000e+00> : vector<2x128xf32>
    %539 = tpu.matmul %495, %357, %cst_143 {dimension_numbers = #tpu.dot_dimension_numbers<[1], [0], [0], [1], [0, 0, 1, 1], [], []>} : vector<2x32xf32>, vector<32x128xf32>, vector<2x128xf32> -> vector<2x128xf32>
    %540 = arith.addf %538, %539 : vector<2x128xf32>
    %cst_144 = arith.constant dense<0.000000e+00> : vector<2x128xf32>
    %541 = tpu.matmul %481, %358, %cst_144 {dimension_numbers = #tpu.dot_dimension_numbers<[1], [0], [0], [1], [0, 0, 1, 1], [], []>} : vector<2x32xf32>, vector<32x128xf32>, vector<2x128xf32> -> vector<2x128xf32>
    %542 = arith.addf %540, %541 : vector<2x128xf32>
    %543 = vector.extract_strided_slice %542 {offsets = [0, 0], sizes = [2, 32], strides = [1, 1]} : vector<2x128xf32> to vector<2x32xf32>
    %544 = arith.negf %543 : vector<2x32xf32>
    %545 = math.exp %544 : vector<2x32xf32>
    %cst_145 = arith.constant 1.000000e+00 : f32
    %546 = vector.broadcast %cst_145 : f32 to vector<2x32xf32>
    %547 = arith.addf %546, %545 : vector<2x32xf32>
    %548 = arith.divf %546, %547 : vector<2x32xf32>
    %549 = vector.extract_strided_slice %542 {offsets = [0, 32], sizes = [2, 32], strides = [1, 1]} : vector<2x128xf32> to vector<2x32xf32>
    %550 = arith.negf %549 : vector<2x32xf32>
    %551 = math.exp %550 : vector<2x32xf32>
    %cst_146 = arith.constant 1.000000e+00 : f32
    %552 = vector.broadcast %cst_146 : f32 to vector<2x32xf32>
    %553 = arith.addf %552, %551 : vector<2x32xf32>
    %554 = arith.divf %552, %553 : vector<2x32xf32>
    %555 = vector.extract_strided_slice %542 {offsets = [0, 64], sizes = [2, 32], strides = [1, 1]} : vector<2x128xf32> to vector<2x32xf32>
    %556 = math.tanh %555 : vector<2x32xf32>
    %557 = vector.extract_strided_slice %542 {offsets = [0, 96], sizes = [2, 32], strides = [1, 1]} : vector<2x128xf32> to vector<2x32xf32>
    %558 = arith.negf %557 : vector<2x32xf32>
    %559 = math.exp %558 : vector<2x32xf32>
    %cst_147 = arith.constant 1.000000e+00 : f32
    %560 = vector.broadcast %cst_147 : f32 to vector<2x32xf32>
    %561 = arith.addf %560, %559 : vector<2x32xf32>
    %562 = arith.divf %560, %561 : vector<2x32xf32>
    %563 = arith.mulf %554, %479 : vector<2x32xf32>
    %564 = arith.mulf %548, %556 : vector<2x32xf32>
    %565 = arith.addf %563, %564 : vector<2x32xf32>
    %566 = math.tanh %565 : vector<2x32xf32>
    %567 = arith.mulf %562, %566 : vector<2x32xf32>
    %568 = vector.shape_cast %567 : vector<2x32xf32> to vector<2x1x32xf32>
    "tpu.trace_start"() <{level = 10 : i32, message = "bqd,bkd->bqk"}> : () -> ()
    %cst_148 = arith.constant dense<0.000000e+00> : vector<2x1x8xf32>
    %569 = tpu.matmul %568, %340, %cst_148 {dimension_numbers = #tpu.dot_dimension_numbers<[2], [2], [1], [1], [0, 0, 0, 1, 1, 1], [0], [0]>} : vector<2x1x32xf32>, vector<2x8x32xf32>, vector<2x1x8xf32> -> vector<2x1x8xf32>
    "tpu.trace_stop"() : () -> ()
    %cst_149 = arith.constant dense<0xFF800000> : vector<2x1xf32>
    %570 = vector.multi_reduction <maximumf>, %569, %cst_149 [2] : vector<2x1x8xf32> to vector<2x1xf32>
    %571 = vector.shape_cast %570 : vector<2x1xf32> to vector<2x1x1xf32>
    %572 = vector.broadcast %571 : vector<2x1x1xf32> to vector<2x1x8xf32>
    %573 = arith.subf %569, %572 : vector<2x1x8xf32>
    %574 = math.exp %573 : vector<2x1x8xf32>
    %cst_150 = arith.constant dense<0.000000e+00> : vector<2x1xf32>
    %575 = vector.multi_reduction <add>, %574, %cst_150 [2] : vector<2x1x8xf32> to vector<2x1xf32>
    %576 = vector.shape_cast %575 : vector<2x1xf32> to vector<2x1x1xf32>
    %577 = tpu.reciprocal %576 {approx = true} : vector<2x1x1xf32> -> vector<2x1x1xf32>
    %578 = vector.broadcast %577 : vector<2x1x1xf32> to vector<2x1x8xf32>
    %579 = arith.mulf %574, %578 : vector<2x1x8xf32>
    "tpu.trace_start"() <{level = 10 : i32, message = "bqk,bkd->bqd"}> : () -> ()
    %cst_151 = arith.constant dense<0.000000e+00> : vector<2x1x32xf32>
    %580 = tpu.matmul %579, %340, %cst_151 {dimension_numbers = #tpu.dot_dimension_numbers<[2], [1], [1], [2], [0, 0, 0, 1, 1, 2], [0], [0]>} : vector<2x1x8xf32>, vector<2x8x32xf32>, vector<2x1x32xf32> -> vector<2x1x32xf32>
    "tpu.trace_stop"() : () -> ()
    %581 = vector.shape_cast %580 : vector<2x1x32xf32> to vector<2x32xf32>
    %cst_152 = arith.constant dense<0.000000e+00> : vector<2x32xf32>
    %582 = tpu.matmul %581, %359, %cst_152 {dimension_numbers = #tpu.dot_dimension_numbers<[1], [0], [0], [1], [0, 0, 1, 1], [], []>} : vector<2x32xf32>, vector<32x32xf32>, vector<2x32xf32> -> vector<2x32xf32>
    %cst_153 = arith.constant dense<0.000000e+00> : vector<2x32xf32>
    %583 = tpu.matmul %567, %360, %cst_153 {dimension_numbers = #tpu.dot_dimension_numbers<[1], [0], [0], [1], [0, 0, 1, 1], [], []>} : vector<2x32xf32>, vector<32x32xf32>, vector<2x32xf32> -> vector<2x32xf32>
    %584 = arith.addf %582, %583 : vector<2x32xf32>
    %585 = vector.broadcast %361 : vector<1x32xf32> to vector<2x32xf32>
    %586 = arith.addf %584, %585 : vector<2x32xf32>
    %587 = math.tanh %586 : vector<2x32xf32>
    %cst_154 = arith.constant dense<0.000000e+00> : vector<2x128xf32>
    %588 = tpu.matmul %587, %362, %cst_154 {dimension_numbers = #tpu.dot_dimension_numbers<[1], [0], [0], [1], [0, 0, 1, 1], [], []>} : vector<2x32xf32>, vector<32x128xf32>, vector<2x128xf32> -> vector<2x128xf32>
    %589 = vector.broadcast %363 : vector<1x128xf32> to vector<2x128xf32>
    %590 = arith.addf %588, %589 : vector<2x128xf32>
    %cst_155 = arith.constant dense<0xFF800000> : vector<2xf32>
    %591 = vector.multi_reduction <maximumf>, %590, %cst_155 [1] : vector<2x128xf32> to vector<2xf32>
    %592 = vector.shape_cast %591 : vector<2xf32> to vector<2x1xf32>
    %593 = vector.broadcast %592 : vector<2x1xf32> to vector<2x128xf32>
    %594 = arith.subf %590, %593 : vector<2x128xf32>
    %595 = math.exp %594 : vector<2x128xf32>
    %cst_156 = arith.constant dense<0.000000e+00> : vector<2xf32>
    %596 = vector.multi_reduction <add>, %595, %cst_156 [1] : vector<2x128xf32> to vector<2xf32>
    %597 = vector.shape_cast %596 : vector<2xf32> to vector<2x1xf32>
    %598 = math.log %597 : vector<2x1xf32>
    %599 = arith.addf %592, %598 : vector<2x1xf32>
    %600 = vector.broadcast %599 : vector<2x1xf32> to vector<2x128xf32>
    %601 = arith.subf %590, %600 : vector<2x128xf32>
    %c4_157 = arith.constant 4 : index
    %c0_158 = arith.constant 0 : index
    %602 = vector.load %arg2[%c4_157, %c0_158] : memref<10x128xf32, #tpu.memory_space<vmem>>, vector<2x128xf32>
    %603 = arith.mulf %601, %602 : vector<2x128xf32>
    %cst_159 = arith.constant dense<0.000000e+00> : vector<2xf32>
    %604 = vector.multi_reduction <add>, %603, %cst_159 [1] : vector<2x128xf32> to vector<2xf32>
    %605 = vector.shape_cast %604 : vector<2xf32> to vector<2x1xf32>
    %c4_160 = arith.constant 4 : index
    %c0_161 = arith.constant 0 : index
    %606 = vector.load %arg3[%c4_160, %c0_161] : memref<10x1xf32, #tpu.memory_space<vmem>>, vector<2x1xf32>
    %cst_162 = arith.constant 0.000000e+00 : f32
    %607 = vector.broadcast %cst_162 : f32 to vector<2x1xf32>
    %608 = arith.subf %607, %605 : vector<2x1xf32>
    %609 = arith.mulf %608, %606 : vector<2x1xf32>
    %610 = vector.shape_cast %609 : vector<2x1xf32> to vector<1x2x1xf32>
    %cst_163 = arith.constant dense<0.000000e+00> : vector<1xf32>
    %611 = vector.multi_reduction <add>, %610, %cst_163 [1, 2] : vector<1x2x1xf32> to vector<1xf32>
    %612 = vector.shape_cast %611 : vector<1xf32> to vector<1x1x1xf32>
    %613 = vector.extract %612[0, 0, 0] : f32 from vector<1x1x1xf32>
    %614 = vector.broadcast %613 : f32 to vector<1x1xf32>
    %615 = vector.shape_cast %606 : vector<2x1xf32> to vector<1x2x1xf32>
    %cst_164 = arith.constant dense<0.000000e+00> : vector<1xf32>
    %616 = vector.multi_reduction <add>, %615, %cst_164 [1, 2] : vector<1x2x1xf32> to vector<1xf32>
    %617 = vector.shape_cast %616 : vector<1xf32> to vector<1x1x1xf32>
    %618 = vector.extract %617[0, 0, 0] : f32 from vector<1x1x1xf32>
    %619 = vector.broadcast %618 : f32 to vector<1x1xf32>
    %cst_165 = arith.constant 1.000000e+00 : f32
    %620 = vector.broadcast %cst_165 : f32 to vector<1x1xf32>
    %621 = arith.maximumf %619, %620 : vector<1x1xf32>
    %622 = arith.divf %614, %621 : vector<1x1xf32>
    %623 = arith.addf %537, %622 : vector<1x1xf32>
    %624 = vector.extract_strided_slice %356 {offsets = [6, 0], sizes = [2, 128], strides = [1, 1]} : vector<10x128xf32> to vector<2x128xf32>
    %cst_166 = arith.constant dense<0.000000e+00> : vector<2x128xf32>
    %625 = tpu.matmul %581, %357, %cst_166 {dimension_numbers = #tpu.dot_dimension_numbers<[1], [0], [0], [1], [0, 0, 1, 1], [], []>} : vector<2x32xf32>, vector<32x128xf32>, vector<2x128xf32> -> vector<2x128xf32>
    %626 = arith.addf %624, %625 : vector<2x128xf32>
    %cst_167 = arith.constant dense<0.000000e+00> : vector<2x128xf32>
    %627 = tpu.matmul %567, %358, %cst_167 {dimension_numbers = #tpu.dot_dimension_numbers<[1], [0], [0], [1], [0, 0, 1, 1], [], []>} : vector<2x32xf32>, vector<32x128xf32>, vector<2x128xf32> -> vector<2x128xf32>
    %628 = arith.addf %626, %627 : vector<2x128xf32>
    %629 = vector.extract_strided_slice %628 {offsets = [0, 0], sizes = [2, 32], strides = [1, 1]} : vector<2x128xf32> to vector<2x32xf32>
    %630 = arith.negf %629 : vector<2x32xf32>
    %631 = math.exp %630 : vector<2x32xf32>
    %cst_168 = arith.constant 1.000000e+00 : f32
    %632 = vector.broadcast %cst_168 : f32 to vector<2x32xf32>
    %633 = arith.addf %632, %631 : vector<2x32xf32>
    %634 = arith.divf %632, %633 : vector<2x32xf32>
    %635 = vector.extract_strided_slice %628 {offsets = [0, 32], sizes = [2, 32], strides = [1, 1]} : vector<2x128xf32> to vector<2x32xf32>
    %636 = arith.negf %635 : vector<2x32xf32>
    %637 = math.exp %636 : vector<2x32xf32>
    %cst_169 = arith.constant 1.000000e+00 : f32
    %638 = vector.broadcast %cst_169 : f32 to vector<2x32xf32>
    %639 = arith.addf %638, %637 : vector<2x32xf32>
    %640 = arith.divf %638, %639 : vector<2x32xf32>
    %641 = vector.extract_strided_slice %628 {offsets = [0, 64], sizes = [2, 32], strides = [1, 1]} : vector<2x128xf32> to vector<2x32xf32>
    %642 = math.tanh %641 : vector<2x32xf32>
    %643 = vector.extract_strided_slice %628 {offsets = [0, 96], sizes = [2, 32], strides = [1, 1]} : vector<2x128xf32> to vector<2x32xf32>
    %644 = arith.negf %643 : vector<2x32xf32>
    %645 = math.exp %644 : vector<2x32xf32>
    %cst_170 = arith.constant 1.000000e+00 : f32
    %646 = vector.broadcast %cst_170 : f32 to vector<2x32xf32>
    %647 = arith.addf %646, %645 : vector<2x32xf32>
    %648 = arith.divf %646, %647 : vector<2x32xf32>
    %649 = arith.mulf %640, %565 : vector<2x32xf32>
    %650 = arith.mulf %634, %642 : vector<2x32xf32>
    %651 = arith.addf %649, %650 : vector<2x32xf32>
    %652 = math.tanh %651 : vector<2x32xf32>
    %653 = arith.mulf %648, %652 : vector<2x32xf32>
    %654 = vector.shape_cast %653 : vector<2x32xf32> to vector<2x1x32xf32>
    "tpu.trace_start"() <{level = 10 : i32, message = "bqd,bkd->bqk"}> : () -> ()
    %cst_171 = arith.constant dense<0.000000e+00> : vector<2x1x8xf32>
    %655 = tpu.matmul %654, %340, %cst_171 {dimension_numbers = #tpu.dot_dimension_numbers<[2], [2], [1], [1], [0, 0, 0, 1, 1, 1], [0], [0]>} : vector<2x1x32xf32>, vector<2x8x32xf32>, vector<2x1x8xf32> -> vector<2x1x8xf32>
    "tpu.trace_stop"() : () -> ()
    %cst_172 = arith.constant dense<0xFF800000> : vector<2x1xf32>
    %656 = vector.multi_reduction <maximumf>, %655, %cst_172 [2] : vector<2x1x8xf32> to vector<2x1xf32>
    %657 = vector.shape_cast %656 : vector<2x1xf32> to vector<2x1x1xf32>
    %658 = vector.broadcast %657 : vector<2x1x1xf32> to vector<2x1x8xf32>
    %659 = arith.subf %655, %658 : vector<2x1x8xf32>
    %660 = math.exp %659 : vector<2x1x8xf32>
    %cst_173 = arith.constant dense<0.000000e+00> : vector<2x1xf32>
    %661 = vector.multi_reduction <add>, %660, %cst_173 [2] : vector<2x1x8xf32> to vector<2x1xf32>
    %662 = vector.shape_cast %661 : vector<2x1xf32> to vector<2x1x1xf32>
    %663 = tpu.reciprocal %662 {approx = true} : vector<2x1x1xf32> -> vector<2x1x1xf32>
    %664 = vector.broadcast %663 : vector<2x1x1xf32> to vector<2x1x8xf32>
    %665 = arith.mulf %660, %664 : vector<2x1x8xf32>
    "tpu.trace_start"() <{level = 10 : i32, message = "bqk,bkd->bqd"}> : () -> ()
    %cst_174 = arith.constant dense<0.000000e+00> : vector<2x1x32xf32>
    %666 = tpu.matmul %665, %340, %cst_174 {dimension_numbers = #tpu.dot_dimension_numbers<[2], [1], [1], [2], [0, 0, 0, 1, 1, 2], [0], [0]>} : vector<2x1x8xf32>, vector<2x8x32xf32>, vector<2x1x32xf32> -> vector<2x1x32xf32>
    "tpu.trace_stop"() : () -> ()
    %667 = vector.shape_cast %666 : vector<2x1x32xf32> to vector<2x32xf32>
    %cst_175 = arith.constant dense<0.000000e+00> : vector<2x32xf32>
    %668 = tpu.matmul %667, %359, %cst_175 {dimension_numbers = #tpu.dot_dimension_numbers<[1], [0], [0], [1], [0, 0, 1, 1], [], []>} : vector<2x32xf32>, vector<32x32xf32>, vector<2x32xf32> -> vector<2x32xf32>
    %cst_176 = arith.constant dense<0.000000e+00> : vector<2x32xf32>
    %669 = tpu.matmul %653, %360, %cst_176 {dimension_numbers = #tpu.dot_dimension_numbers<[1], [0], [0], [1], [0, 0, 1, 1], [], []>} : vector<2x32xf32>, vector<32x32xf32>, vector<2x32xf32> -> vector<2x32xf32>
    %670 = arith.addf %668, %669 : vector<2x32xf32>
    %671 = vector.broadcast %361 : vector<1x32xf32> to vector<2x32xf32>
    %672 = arith.addf %670, %671 : vector<2x32xf32>
    %673 = math.tanh %672 : vector<2x32xf32>
    %cst_177 = arith.constant dense<0.000000e+00> : vector<2x128xf32>
    %674 = tpu.matmul %673, %362, %cst_177 {dimension_numbers = #tpu.dot_dimension_numbers<[1], [0], [0], [1], [0, 0, 1, 1], [], []>} : vector<2x32xf32>, vector<32x128xf32>, vector<2x128xf32> -> vector<2x128xf32>
    %675 = vector.broadcast %363 : vector<1x128xf32> to vector<2x128xf32>
    %676 = arith.addf %674, %675 : vector<2x128xf32>
    %cst_178 = arith.constant dense<0xFF800000> : vector<2xf32>
    %677 = vector.multi_reduction <maximumf>, %676, %cst_178 [1] : vector<2x128xf32> to vector<2xf32>
    %678 = vector.shape_cast %677 : vector<2xf32> to vector<2x1xf32>
    %679 = vector.broadcast %678 : vector<2x1xf32> to vector<2x128xf32>
    %680 = arith.subf %676, %679 : vector<2x128xf32>
    %681 = math.exp %680 : vector<2x128xf32>
    %cst_179 = arith.constant dense<0.000000e+00> : vector<2xf32>
    %682 = vector.multi_reduction <add>, %681, %cst_179 [1] : vector<2x128xf32> to vector<2xf32>
    %683 = vector.shape_cast %682 : vector<2xf32> to vector<2x1xf32>
    %684 = math.log %683 : vector<2x1xf32>
    %685 = arith.addf %678, %684 : vector<2x1xf32>
    %686 = vector.broadcast %685 : vector<2x1xf32> to vector<2x128xf32>
    %687 = arith.subf %676, %686 : vector<2x128xf32>
    %c6_180 = arith.constant 6 : index
    %c0_181 = arith.constant 0 : index
    %688 = vector.load %arg2[%c6_180, %c0_181] : memref<10x128xf32, #tpu.memory_space<vmem>>, vector<2x128xf32>
    %689 = arith.mulf %687, %688 : vector<2x128xf32>
    %cst_182 = arith.constant dense<0.000000e+00> : vector<2xf32>
    %690 = vector.multi_reduction <add>, %689, %cst_182 [1] : vector<2x128xf32> to vector<2xf32>
    %691 = vector.shape_cast %690 : vector<2xf32> to vector<2x1xf32>
    %c6_183 = arith.constant 6 : index
    %c0_184 = arith.constant 0 : index
    %692 = vector.load %arg3[%c6_183, %c0_184] : memref<10x1xf32, #tpu.memory_space<vmem>>, vector<2x1xf32>
    %cst_185 = arith.constant 0.000000e+00 : f32
    %693 = vector.broadcast %cst_185 : f32 to vector<2x1xf32>
    %694 = arith.subf %693, %691 : vector<2x1xf32>
    %695 = arith.mulf %694, %692 : vector<2x1xf32>
    %696 = vector.shape_cast %695 : vector<2x1xf32> to vector<1x2x1xf32>
    %cst_186 = arith.constant dense<0.000000e+00> : vector<1xf32>
    %697 = vector.multi_reduction <add>, %696, %cst_186 [1, 2] : vector<1x2x1xf32> to vector<1xf32>
    %698 = vector.shape_cast %697 : vector<1xf32> to vector<1x1x1xf32>
    %699 = vector.extract %698[0, 0, 0] : f32 from vector<1x1x1xf32>
    %700 = vector.broadcast %699 : f32 to vector<1x1xf32>
    %701 = vector.shape_cast %692 : vector<2x1xf32> to vector<1x2x1xf32>
    %cst_187 = arith.constant dense<0.000000e+00> : vector<1xf32>
    %702 = vector.multi_reduction <add>, %701, %cst_187 [1, 2] : vector<1x2x1xf32> to vector<1xf32>
    %703 = vector.shape_cast %702 : vector<1xf32> to vector<1x1x1xf32>
    %704 = vector.extract %703[0, 0, 0] : f32 from vector<1x1x1xf32>
    %705 = vector.broadcast %704 : f32 to vector<1x1xf32>
    %cst_188 = arith.constant 1.000000e+00 : f32
    %706 = vector.broadcast %cst_188 : f32 to vector<1x1xf32>
    %707 = arith.maximumf %705, %706 : vector<1x1xf32>
    %708 = arith.divf %700, %707 : vector<1x1xf32>
    %709 = arith.addf %623, %708 : vector<1x1xf32>
    %710 = vector.extract_strided_slice %356 {offsets = [8, 0], sizes = [2, 128], strides = [1, 1]} : vector<10x128xf32> to vector<2x128xf32>
    %cst_189 = arith.constant dense<0.000000e+00> : vector<2x128xf32>
    %711 = tpu.matmul %667, %357, %cst_189 {dimension_numbers = #tpu.dot_dimension_numbers<[1], [0], [0], [1], [0, 0, 1, 1], [], []>} : vector<2x32xf32>, vector<32x128xf32>, vector<2x128xf32> -> vector<2x128xf32>
    %712 = arith.addf %710, %711 : vector<2x128xf32>
    %cst_190 = arith.constant dense<0.000000e+00> : vector<2x128xf32>
    %713 = tpu.matmul %653, %358, %cst_190 {dimension_numbers = #tpu.dot_dimension_numbers<[1], [0], [0], [1], [0, 0, 1, 1], [], []>} : vector<2x32xf32>, vector<32x128xf32>, vector<2x128xf32> -> vector<2x128xf32>
    %714 = arith.addf %712, %713 : vector<2x128xf32>
    %715 = vector.extract_strided_slice %714 {offsets = [0, 0], sizes = [2, 32], strides = [1, 1]} : vector<2x128xf32> to vector<2x32xf32>
    %716 = arith.negf %715 : vector<2x32xf32>
    %717 = math.exp %716 : vector<2x32xf32>
    %cst_191 = arith.constant 1.000000e+00 : f32
    %718 = vector.broadcast %cst_191 : f32 to vector<2x32xf32>
    %719 = arith.addf %718, %717 : vector<2x32xf32>
    %720 = arith.divf %718, %719 : vector<2x32xf32>
    %721 = vector.extract_strided_slice %714 {offsets = [0, 32], sizes = [2, 32], strides = [1, 1]} : vector<2x128xf32> to vector<2x32xf32>
    %722 = arith.negf %721 : vector<2x32xf32>
    %723 = math.exp %722 : vector<2x32xf32>
    %cst_192 = arith.constant 1.000000e+00 : f32
    %724 = vector.broadcast %cst_192 : f32 to vector<2x32xf32>
    %725 = arith.addf %724, %723 : vector<2x32xf32>
    %726 = arith.divf %724, %725 : vector<2x32xf32>
    %727 = vector.extract_strided_slice %714 {offsets = [0, 64], sizes = [2, 32], strides = [1, 1]} : vector<2x128xf32> to vector<2x32xf32>
    %728 = math.tanh %727 : vector<2x32xf32>
    %729 = vector.extract_strided_slice %714 {offsets = [0, 96], sizes = [2, 32], strides = [1, 1]} : vector<2x128xf32> to vector<2x32xf32>
    %730 = arith.negf %729 : vector<2x32xf32>
    %731 = math.exp %730 : vector<2x32xf32>
    %cst_193 = arith.constant 1.000000e+00 : f32
    %732 = vector.broadcast %cst_193 : f32 to vector<2x32xf32>
    %733 = arith.addf %732, %731 : vector<2x32xf32>
    %734 = arith.divf %732, %733 : vector<2x32xf32>
    %735 = arith.mulf %726, %651 : vector<2x32xf32>
    %736 = arith.mulf %720, %728 : vector<2x32xf32>
    %737 = arith.addf %735, %736 : vector<2x32xf32>
    %738 = math.tanh %737 : vector<2x32xf32>
    %739 = arith.mulf %734, %738 : vector<2x32xf32>
    %740 = vector.shape_cast %739 : vector<2x32xf32> to vector<2x1x32xf32>
    "tpu.trace_start"() <{level = 10 : i32, message = "bqd,bkd->bqk"}> : () -> ()
    %cst_194 = arith.constant dense<0.000000e+00> : vector<2x1x8xf32>
    %741 = tpu.matmul %740, %340, %cst_194 {dimension_numbers = #tpu.dot_dimension_numbers<[2], [2], [1], [1], [0, 0, 0, 1, 1, 1], [0], [0]>} : vector<2x1x32xf32>, vector<2x8x32xf32>, vector<2x1x8xf32> -> vector<2x1x8xf32>
    "tpu.trace_stop"() : () -> ()
    %cst_195 = arith.constant dense<0xFF800000> : vector<2x1xf32>
    %742 = vector.multi_reduction <maximumf>, %741, %cst_195 [2] : vector<2x1x8xf32> to vector<2x1xf32>
    %743 = vector.shape_cast %742 : vector<2x1xf32> to vector<2x1x1xf32>
    %744 = vector.broadcast %743 : vector<2x1x1xf32> to vector<2x1x8xf32>
    %745 = arith.subf %741, %744 : vector<2x1x8xf32>
    %746 = math.exp %745 : vector<2x1x8xf32>
    %cst_196 = arith.constant dense<0.000000e+00> : vector<2x1xf32>
    %747 = vector.multi_reduction <add>, %746, %cst_196 [2] : vector<2x1x8xf32> to vector<2x1xf32>
    %748 = vector.shape_cast %747 : vector<2x1xf32> to vector<2x1x1xf32>
    %749 = tpu.reciprocal %748 {approx = true} : vector<2x1x1xf32> -> vector<2x1x1xf32>
    %750 = vector.broadcast %749 : vector<2x1x1xf32> to vector<2x1x8xf32>
    %751 = arith.mulf %746, %750 : vector<2x1x8xf32>
    "tpu.trace_start"() <{level = 10 : i32, message = "bqk,bkd->bqd"}> : () -> ()
    %cst_197 = arith.constant dense<0.000000e+00> : vector<2x1x32xf32>
    %752 = tpu.matmul %751, %340, %cst_197 {dimension_numbers = #tpu.dot_dimension_numbers<[2], [1], [1], [2], [0, 0, 0, 1, 1, 2], [0], [0]>} : vector<2x1x8xf32>, vector<2x8x32xf32>, vector<2x1x32xf32> -> vector<2x1x32xf32>
    "tpu.trace_stop"() : () -> ()
    %753 = vector.shape_cast %752 : vector<2x1x32xf32> to vector<2x32xf32>
    %cst_198 = arith.constant dense<0.000000e+00> : vector<2x32xf32>
    %754 = tpu.matmul %753, %359, %cst_198 {dimension_numbers = #tpu.dot_dimension_numbers<[1], [0], [0], [1], [0, 0, 1, 1], [], []>} : vector<2x32xf32>, vector<32x32xf32>, vector<2x32xf32> -> vector<2x32xf32>
    %cst_199 = arith.constant dense<0.000000e+00> : vector<2x32xf32>
    %755 = tpu.matmul %739, %360, %cst_199 {dimension_numbers = #tpu.dot_dimension_numbers<[1], [0], [0], [1], [0, 0, 1, 1], [], []>} : vector<2x32xf32>, vector<32x32xf32>, vector<2x32xf32> -> vector<2x32xf32>
    %756 = arith.addf %754, %755 : vector<2x32xf32>
    %757 = vector.broadcast %361 : vector<1x32xf32> to vector<2x32xf32>
    %758 = arith.addf %756, %757 : vector<2x32xf32>
    %759 = math.tanh %758 : vector<2x32xf32>
    %cst_200 = arith.constant dense<0.000000e+00> : vector<2x128xf32>
    %760 = tpu.matmul %759, %362, %cst_200 {dimension_numbers = #tpu.dot_dimension_numbers<[1], [0], [0], [1], [0, 0, 1, 1], [], []>} : vector<2x32xf32>, vector<32x128xf32>, vector<2x128xf32> -> vector<2x128xf32>
    %761 = vector.broadcast %363 : vector<1x128xf32> to vector<2x128xf32>
    %762 = arith.addf %760, %761 : vector<2x128xf32>
    %cst_201 = arith.constant dense<0xFF800000> : vector<2xf32>
    %763 = vector.multi_reduction <maximumf>, %762, %cst_201 [1] : vector<2x128xf32> to vector<2xf32>
    %764 = vector.shape_cast %763 : vector<2xf32> to vector<2x1xf32>
    %765 = vector.broadcast %764 : vector<2x1xf32> to vector<2x128xf32>
    %766 = arith.subf %762, %765 : vector<2x128xf32>
    %767 = math.exp %766 : vector<2x128xf32>
    %cst_202 = arith.constant dense<0.000000e+00> : vector<2xf32>
    %768 = vector.multi_reduction <add>, %767, %cst_202 [1] : vector<2x128xf32> to vector<2xf32>
    %769 = vector.shape_cast %768 : vector<2xf32> to vector<2x1xf32>
    %770 = math.log %769 : vector<2x1xf32>
    %771 = arith.addf %764, %770 : vector<2x1xf32>
    %772 = vector.broadcast %771 : vector<2x1xf32> to vector<2x128xf32>
    %773 = arith.subf %762, %772 : vector<2x128xf32>
    %c8 = arith.constant 8 : index
    %c0_203 = arith.constant 0 : index
    %774 = vector.load %arg2[%c8, %c0_203] : memref<10x128xf32, #tpu.memory_space<vmem>>, vector<2x128xf32>
    %775 = arith.mulf %773, %774 : vector<2x128xf32>
    %cst_204 = arith.constant dense<0.000000e+00> : vector<2xf32>
    %776 = vector.multi_reduction <add>, %775, %cst_204 [1] : vector<2x128xf32> to vector<2xf32>
    %777 = vector.shape_cast %776 : vector<2xf32> to vector<2x1xf32>
    %c8_205 = arith.constant 8 : index
    %c0_206 = arith.constant 0 : index
    %778 = vector.load %arg3[%c8_205, %c0_206] : memref<10x1xf32, #tpu.memory_space<vmem>>, vector<2x1xf32>
    %cst_207 = arith.constant 0.000000e+00 : f32
    %779 = vector.broadcast %cst_207 : f32 to vector<2x1xf32>
    %780 = arith.subf %779, %777 : vector<2x1xf32>
    %781 = arith.mulf %780, %778 : vector<2x1xf32>
    %782 = vector.shape_cast %781 : vector<2x1xf32> to vector<1x2x1xf32>
    %cst_208 = arith.constant dense<0.000000e+00> : vector<1xf32>
    %783 = vector.multi_reduction <add>, %782, %cst_208 [1, 2] : vector<1x2x1xf32> to vector<1xf32>
    %784 = vector.shape_cast %783 : vector<1xf32> to vector<1x1x1xf32>
    %785 = vector.extract %784[0, 0, 0] : f32 from vector<1x1x1xf32>
    %786 = vector.broadcast %785 : f32 to vector<1x1xf32>
    %787 = vector.shape_cast %778 : vector<2x1xf32> to vector<1x2x1xf32>
    %cst_209 = arith.constant dense<0.000000e+00> : vector<1xf32>
    %788 = vector.multi_reduction <add>, %787, %cst_209 [1, 2] : vector<1x2x1xf32> to vector<1xf32>
    %789 = vector.shape_cast %788 : vector<1xf32> to vector<1x1x1xf32>
    %790 = vector.extract %789[0, 0, 0] : f32 from vector<1x1x1xf32>
    %791 = vector.broadcast %790 : f32 to vector<1x1xf32>
    %cst_210 = arith.constant 1.000000e+00 : f32
    %792 = vector.broadcast %cst_210 : f32 to vector<1x1xf32>
    %793 = arith.maximumf %791, %792 : vector<1x1xf32>
    %794 = arith.divf %786, %793 : vector<1x1xf32>
    %795 = arith.addf %709, %794 : vector<1x1xf32>
    %c0_211 = arith.constant 0 : index
    %c0_212 = arith.constant 0 : index
    %796 = vector.load %arg17[%c0_211, %c0_212] : memref<1x1xf32, #tpu.memory_space<vmem>>, vector<1x1xf32>
    tpu.vector_store %arg17[%c0_211, %c0_212], %795 {strides = array<i32>} : memref<1x1xf32, #tpu.memory_space<vmem>>, vector<1x1xf32>,
    return
  }
}

</mosaic_0001>

<llo_original>
// kernel: seq2seq_forward.1
$region0: #{seq2seq_forward.1}
  #allocation0 [shape = 'u32[]', space=smem, size = 0x4, offset = 0x4, fixed_abs, tag = 'smem constant byte address 0x4 - core index']
  #allocation1 [shape = 'u32[144,128]{1,0:T(1,128)}', space=vmem, size = 0x12000, scoped, tag = 'internal scratch']
  #allocation2 [shape = 'f32[2,8,32]{2,1,0:T(8,128)}', space=vmem, size = 0x2000, scoped, tag = 'scratch operand']
  %s0 = inlined_call_operand.vmem [shape: f32[16,16], index: 0, kind: input, shape index: {}]
  %s1 = inlined_call_operand.vmem [shape: f32[10,16], index: 1, kind: input, shape index: {}]
  %s2 = inlined_call_operand.vmem [shape: f32[10,128], index: 2, kind: input, shape index: {}]
  %s3 = inlined_call_operand.vmem [shape: f32[10,1], index: 3, kind: input, shape index: {}]
  %s4 = inlined_call_operand.vmem [shape: f32[16,256], index: 4, kind: input, shape index: {}]
  %s5 = inlined_call_operand.vmem [shape: f32[64,256], index: 5, kind: input, shape index: {}]
  %s6 = inlined_call_operand.vmem [shape: f32[1,256], index: 6, kind: input, shape index: {}]
  %s7 = inlined_call_operand.vmem [shape: f32[1,256], index: 7, kind: input, shape index: {}]
  %s8 = inlined_call_operand.vmem [shape: f32[16,128], index: 8, kind: input, shape index: {}]
  %s9 = inlined_call_operand.vmem [shape: f32[32,128], index: 9, kind: input, shape index: {}]
  %s10 = inlined_call_operand.vmem [shape: f32[32,128], index: 10, kind: input, shape index: {}]
  %s11 = inlined_call_operand.vmem [shape: f32[1,128], index: 11, kind: input, shape index: {}]
  %s12 = inlined_call_operand.vmem [shape: f32[32,32], index: 12, kind: input, shape index: {}]
  %s13 = inlined_call_operand.vmem [shape: f32[32,32], index: 13, kind: input, shape index: {}]
  %s14 = inlined_call_operand.vmem [shape: f32[1,32], index: 14, kind: input, shape index: {}]
  %s15 = inlined_call_operand.vmem [shape: f32[32,128], index: 15, kind: input, shape index: {}]
  %s16 = inlined_call_operand.vmem [shape: f32[1,128], index: 16, kind: input, shape index: {}]
  %s17 = inlined_call_operand.hbm [shape: f32[1,1], index: 17, kind: output, shape index: {}]
  %s18 = sld [smem:[#allocation0]]
  $region78: #{seq2seq_forward.1} parent=0
    _
  %s20 = ssub.s32 1, %s18
  %s21 = scalar_select 0, %s20, %s18
  $region1: #{seq2seq_forward.1} parent=0
    #allocation3 [shape = 'u8[512]{0}', space=vmem, size = 0x400, scoped, tag = 'output window, operand 0, single buffered']
    #allocation4 [shape = 's32[1]{0}', space=sflag, size = 0x4, scoped, tag = 'scoped memory for seq2seq_forward.1']
    %22 = vsyncpa [#allocation4], 0
    // Predicated region
    $region2: #{seq2seq_forward.1} parent=1 // pred_check
      _
    $region3: #{seq2seq_forward.1} parent=1 // pred_check_branch
      %24 = sbr.rel (0) target = $region5
    $region4: #{seq2seq_forward.1} parent=1 // pred_region
      _
    $region5: #{seq2seq_forward.1} parent=1 // pred_fallthru
      _
    // Predicated region
    $region6: #{seq2seq_forward.1} parent=1 // pred_check
      _
    $region7: #{seq2seq_forward.1} parent=1 // pred_check_branch
      %26 = sbr.rel (0) target = $region9
    $region8: #{seq2seq_forward.1} parent=1 // pred_region
      _
    $region9: #{seq2seq_forward.1} parent=1 // pred_fallthru
      _
    // Predicated region
    $region10: #{seq2seq_forward.1} parent=1 // pred_check
      _
    $region11: #{seq2seq_forward.1} parent=1 // pred_check_branch
      %28 = sbr.rel (0) target = $region13
    $region12: #{seq2seq_forward.1} parent=1 // pred_region
      _
    $region13: #{seq2seq_forward.1} parent=1 // pred_fallthru
      _
    // Predicated region
    $region14: #{seq2seq_forward.1} parent=1 // pred_check
      _
    $region15: #{seq2seq_forward.1} parent=1 // pred_check_branch
      %30 = sbr.rel (0) target = $region17
    $region16: #{seq2seq_forward.1} parent=1 // pred_region
      _
    $region17: #{seq2seq_forward.1} parent=1 // pred_fallthru
      _
    // Predicated region
    $region18: #{seq2seq_forward.1} parent=1 // pred_check
      _
    $region19: #{seq2seq_forward.1} parent=1 // pred_check_branch
      %32 = sbr.rel (0) target = $region21
    $region20: #{seq2seq_forward.1} parent=1 // pred_region
      _
    $region21: #{seq2seq_forward.1} parent=1 // pred_fallthru
      _
    // Predicated region
    $region22: #{seq2seq_forward.1} parent=1 // pred_check
      _
    $region23: #{seq2seq_forward.1} parent=1 // pred_check_branch
      %34 = sbr.rel (0) target = $region25
    $region24: #{seq2seq_forward.1} parent=1 // pred_region
      _
    $region25: #{seq2seq_forward.1} parent=1 // pred_fallthru
      _
    // Predicated region
    $region26: #{seq2seq_forward.1} parent=1 // pred_check
      _
    $region27: #{seq2seq_forward.1} parent=1 // pred_check_branch
      %36 = sbr.rel (0) target = $region29
    $region28: #{seq2seq_forward.1} parent=1 // pred_region
      _
    $region29: #{seq2seq_forward.1} parent=1 // pred_fallthru
      _
    // Predicated region
    $region30: #{seq2seq_forward.1} parent=1 // pred_check
      _
    $region31: #{seq2seq_forward.1} parent=1 // pred_check_branch
      %38 = sbr.rel (0) target = $region33
    $region32: #{seq2seq_forward.1} parent=1 // pred_region
      _
    $region33: #{seq2seq_forward.1} parent=1 // pred_fallthru
      _
    // Predicated region
    $region34: #{seq2seq_forward.1} parent=1 // pred_check
      _
    $region35: #{seq2seq_forward.1} parent=1 // pred_check_branch
      %40 = sbr.rel (0) target = $region37
    $region36: #{seq2seq_forward.1} parent=1 // pred_region
      _
    $region37: #{seq2seq_forward.1} parent=1 // pred_fallthru
      _
    // Predicated region
    $region38: #{seq2seq_forward.1} parent=1 // pred_check
      _
    $region39: #{seq2seq_forward.1} parent=1 // pred_check_branch
      %42 = sbr.rel (0) target = $region41
    $region40: #{seq2seq_forward.1} parent=1 // pred_region
      _
    $region41: #{seq2seq_forward.1} parent=1 // pred_fallthru
      _
    // Predicated region
    $region42: #{seq2seq_forward.1} parent=1 // pred_check
      _
    $region43: #{seq2seq_forward.1} parent=1 // pred_check_branch
      %44 = sbr.rel (0) target = $region45
    $region44: #{seq2seq_forward.1} parent=1 // pred_region
      _
    $region45: #{seq2seq_forward.1} parent=1 // pred_fallthru
      _
    // Predicated region
    $region46: #{seq2seq_forward.1} parent=1 // pred_check
      _
    $region47: #{seq2seq_forward.1} parent=1 // pred_check_branch
      %46 = sbr.rel (0) target = $region49
    $region48: #{seq2seq_forward.1} parent=1 // pred_region
      _
    $region49: #{seq2seq_forward.1} parent=1 // pred_fallthru
      _
    // Predicated region
    $region50: #{seq2seq_forward.1} parent=1 // pred_check
      _
    $region51: #{seq2seq_forward.1} parent=1 // pred_check_branch
      %48 = sbr.rel (0) target = $region53
    $region52: #{seq2seq_forward.1} parent=1 // pred_region
      _
    $region53: #{seq2seq_forward.1} parent=1 // pred_fallthru
      _
    // Predicated region
    $region54: #{seq2seq_forward.1} parent=1 // pred_check
      _
    $region55: #{seq2seq_forward.1} parent=1 // pred_check_branch
      %50 = sbr.rel (0) target = $region57
    $region56: #{seq2seq_forward.1} parent=1 // pred_region
      _
    $region57: #{seq2seq_forward.1} parent=1 // pred_fallthru
      _
    // Predicated region
    $region58: #{seq2seq_forward.1} parent=1 // pred_check
      _
    $region59: #{seq2seq_forward.1} parent=1 // pred_check_branch
      %52 = sbr.rel (0) target = $region61
    $region60: #{seq2seq_forward.1} parent=1 // pred_region
      _
    $region61: #{seq2seq_forward.1} parent=1 // pred_fallthru
      _
    // Predicated region
    $region62: #{seq2seq_forward.1} parent=1 // pred_check
      _
    $region63: #{seq2seq_forward.1} parent=1 // pred_check_branch
      %54 = sbr.rel (0) target = $region65
    $region64: #{seq2seq_forward.1} parent=1 // pred_region
      _
    $region65: #{seq2seq_forward.1} parent=1 // pred_fallthru
      _
    // Predicated region
    $region66: #{seq2seq_forward.1} parent=1 // pred_check
      _
    $region67: #{seq2seq_forward.1} parent=1 // pred_check_branch
      %56 = sbr.rel (0) target = $region69
    $region68: #{seq2seq_forward.1} parent=1 // pred_region
      _
    $region69: #{seq2seq_forward.1} parent=1 // pred_fallthru
      _
    %v57 = vld [vmem:[%s0] sm:$0xff]
    %v58 = vld [vmem:[%s0 + $0x8] sm:$0xff]
    %v59 = vld [vmem:[%s4] sm:$0xff]
    %v60 = vld [vmem:[%s4 + $0x8] sm:$0xff]
    %v61 = vld [vmem:[%s4 + $0x10] sm:$0xff]
    %v62 = vld [vmem:[%s4 + $0x18] sm:$0xff]
    %v63 = vld [vmem:[%s6] sm:$0x3]
    %v65 = vlaneseq
    %v66 = vshrl.u32 %v65, 7
    %v67 = vsub.s32 0, %v66
    %v68 = vrot.slane %v63, %v67
    %v69 = vlaneseq
    %v70 = vshrl.u32 %v69, 7
    %v71 = vsub.s32 1, %v70
    %v72 = vrot.slane %v63, %v71
    %vm75 = vcmask 130048
    %v77 = vsel %vm75, %v57, 0
    %v80 = vsel %vm75, %v58, 0
    %82 = vmatprep.subr.mxu0 %v60
    %83 = vmatpush1.msra.mxu0 %v59
    %84 = vmatprep.subr.mxu0 %v62
    %85 = vmatpush1.msra.mxu0 %v61
    %86 = vmatprep.subr.mxu0 0.0
    %87 = vmatpush1.msra.mxu0 0.0
    %88 = vmatprep.subr.mxu0 0.0
    %89 = vmatpush1.msra.mxu0 0.0
    %90 = vmatprep.subr.mxu0 0.0
    %91 = vmatpush1.msra.mxu0 0.0
    %92 = vmatprep.subr.mxu0 0.0
    %93 = vmatpush1.msra.mxu0 0.0
    %94 = vmatprep.subr.mxu0 0.0
    %95 = vmatpush1.msra.mxu0 0.0
    %96 = vmatprep.subr.mxu0 0.0
    %97 = vmatpush1.msra.mxu0 0.0
    %98 = vmatprep.subr.mxu0 0.0
    %99 = vmatpush1.msra.mxu0 0.0
    %100 = vmatprep.subr.mxu0 0.0
    %101 = vmatpush1.msra.mxu0 0.0
    %102 = vmatprep.subr.mxu0 0.0
    %103 = vmatpush1.msra.mxu0 0.0
    %104 = vmatprep.subr.mxu0 0.0
    %105 = vmatpush1.msra.mxu0 0.0
    %106 = vmatprep.subr.mxu0 0.0
    %107 = vmatpush1.msra.mxu0 0.0
    %108 = vmatprep.subr.mxu0 0.0
    %109 = vmatpush1.msra.mxu0 0.0
    %110 = vmatprep.subr.mxu0 0.0
    %111 = vmatpush1.msra.mxu0 0.0
    %112 = vmatprep.subr.mxu0 0.0
    %113 = vmatpush1.msra.mxu0 0.0
    %114 = vmatprep.subr.mxu0 0.0
    %115 = vmatpush1.msra.mxu0 0.0
    %116 = vmatprep.subr.mxu0 0.0
    %117 = vmatpush1.msra.mxu0 0.0
    %118 = vmatprep.subr.mxu0 0.0
    %119 = vmatpush1.msra.mxu0 0.0
    %120 = vmatprep.subr.mxu0 0.0
    %121 = vmatpush1.msra.mxu0 0.0
    %122 = vmatprep.subr.mxu0 0.0
    %123 = vmatpush1.msra.mxu0 0.0
    %124 = vmatprep.subr.mxu0 0.0
    %125 = vmatpush1.msra.mxu0 0.0
    %126 = vmatprep.subr.mxu0 0.0
    %127 = vmatpush1.msra.mxu0 0.0
    %128 = vmatprep.subr.mxu0 0.0
    %129 = vmatpush1.msra.mxu0 0.0
    %130 = vmatprep.subr.mxu0 0.0
    %131 = vmatpush1.msra.mxu0 0.0
    %132 = vmatprep.subr.mxu0 0.0
    %133 = vmatpush1.msra.mxu0 0.0
    %134 = vmatprep.subr.mxu0 0.0
    %135 = vmatpush1.msra.mxu0 0.0
    %136 = vmatprep.subr.mxu0 0.0
    %137 = vmatpush1.msra.mxu0 0.0
    %138 = vmatprep.subr.mxu0 0.0
    %139 = vmatpush1.msra.mxu0 0.0
    %140 = vmatprep.subr.mxu0 0.0
    %141 = vmatpush1.msra.mxu0 0.0
    %142 = vmatprep.subr.mxu0 0.0
    %143 = vmatpush1.msra.mxu0 0.0
    %144 = vmatprep.subr.mxu0 0.0
    %145 = vmatpush1.msra.mxu0 0.0
    %146 = vmatprep.mubr.f32.mxu0 0.0
    %147 = vmatmul.mubr.f32.gmra.mrb[0].mxu0 %v77
    %v148 = vpop.f32.mrb[0].mxu0
    %v149 = vadd.f32 %v68, %v148
    %v150 = vpop.f32.mrb[0].mxu0
    %v151 = vadd.f32 %v72, %v150
    %152 = vmatprep.mubr.f32.mxu0 0.0
    %153 = vmatmul.mubr.f32.gmra.mrb[0].mxu0 %v80
    %v154 = vpop.f32.mrb[0].mxu0
    %v155 = vadd.f32 %v68, %v154
    %v156 = vpop.f32.mrb[0].mxu0
    %v157 = vadd.f32 %v72, %v156
    %158 = vdwg.mxu0
    %v159 = vld [vmem:[%s7] sm:$0x3]
    %v160 = vsub.f32 1.0, %v159
    %v161 = vld [vmem:[%s5] sm:$0xff]
    %v162 = vld [vmem:[%s5 + $0x8] sm:$0xff]
    %v163 = vld [vmem:[%s5 + $0x10] sm:$0xff]
    %v164 = vld [vmem:[%s5 + $0x18] sm:$0xff]
    %v165 = vld [vmem:[%s5 + $0x20] sm:$0xff]
    %v166 = vld [vmem:[%s5 + $0x28] sm:$0xff]
    %v167 = vld [vmem:[%s5 + $0x30] sm:$0xff]
    %v168 = vld [vmem:[%s5 + $0x38] sm:$0xff]
    %v169 = vld [vmem:[%s5 + $0x40] sm:$0xff]
    %v170 = vld [vmem:[%s5 + $0x48] sm:$0xff]
    %v171 = vld [vmem:[%s5 + $0x50] sm:$0xff]
    %v172 = vld [vmem:[%s5 + $0x58] sm:$0xff]
    %v173 = vld [vmem:[%s5 + $0x60] sm:$0xff]
    %v174 = vld [vmem:[%s5 + $0x68] sm:$0xff]
    %v175 = vld [vmem:[%s5 + $0x70] sm:$0xff]
    %v176 = vld [vmem:[%s5 + $0x78] sm:$0xff]
    %v178 = vlaneseq
    %v179 = vshrl.u32 %v178, 7
    %v180 = vsub.s32 0, %v179
    %v181 = vrot.slane %v159, %v180
    %v182 = vlaneseq
    %v183 = vshrl.u32 %v182, 7
    %v184 = vsub.s32 1, %v183
    %v185 = vrot.slane %v159, %v184
    %v188 = vmul.f32 %v149, %v181
    %v189 = vmul.f32 %v151, %v185
    %v191 = vlaneseq
    %v192 = vshrl.u32 %v191, 7
    %v193 = vsub.s32 0, %v192
    %v194 = vrot.slane %v160, %v193
    %v195 = vlaneseq
    %v196 = vshrl.u32 %v195, 7
    %v197 = vsub.s32 1, %v196
    %v198 = vrot.slane %v160, %v197
    %v201 = vmul.f32 %v155, %v194
    %v202 = vmul.f32 %v157, %v198
    %v205 = vrot.slane %v201, 6
    %v206 = vrot.slane %v202, 6
    %v209 = vadd.f32 %v188, %v205
    %v210 = vadd.f32 %v189, %v206
    %vm211 = vcmask 523264
    %v213 = vsel %vm211, 0.0, 0
    %215 = vmatprep.subr.mxu0 %v162
    %216 = vmatpush1.msra.mxu0 %v161
    %217 = vmatprep.subr.mxu0 %v164
    %218 = vmatpush1.msra.mxu0 %v163
    %219 = vmatprep.subr.mxu0 %v166
    %220 = vmatpush1.msra.mxu0 %v165
    %221 = vmatprep.subr.mxu0 %v168
    %222 = vmatpush1.msra.mxu0 %v167
    %223 = vmatprep.subr.mxu0 %v170
    %224 = vmatpush1.msra.mxu0 %v169
    %225 = vmatprep.subr.mxu0 %v172
    %226 = vmatpush1.msra.mxu0 %v171
    %227 = vmatprep.subr.mxu0 %v174
    %228 = vmatpush1.msra.mxu0 %v173
    %229 = vmatprep.subr.mxu0 %v176
    %230 = vmatpush1.msra.mxu0 %v175
    %231 = vmatprep.subr.mxu0 0.0
    %232 = vmatpush1.msra.mxu0 0.0
    %233 = vmatprep.subr.mxu0 0.0
    %234 = vmatpush1.msra.mxu0 0.0
    %235 = vmatprep.subr.mxu0 0.0
    %236 = vmatpush1.msra.mxu0 0.0
    %237 = vmatprep.subr.mxu0 0.0
    %238 = vmatpush1.msra.mxu0 0.0
    %239 = vmatprep.subr.mxu0 0.0
    %240 = vmatpush1.msra.mxu0 0.0
    %241 = vmatprep.subr.mxu0 0.0
    %242 = vmatpush1.msra.mxu0 0.0
    %243 = vmatprep.subr.mxu0 0.0
    %244 = vmatpush1.msra.mxu0 0.0
    %245 = vmatprep.subr.mxu0 0.0
    %246 = vmatpush1.msra.mxu0 0.0
    %247 = vmatprep.subr.mxu0 0.0
    %248 = vmatpush1.msra.mxu0 0.0
    %249 = vmatprep.subr.mxu0 0.0
    %250 = vmatpush1.msra.mxu0 0.0
    %251 = vmatprep.subr.mxu0 0.0
    %252 = vmatpush1.msra.mxu0 0.0
    %253 = vmatprep.subr.mxu0 0.0
    %254 = vmatpush1.msra.mxu0 0.0
    %255 = vmatprep.subr.mxu0 0.0
    %256 = vmatpush1.msra.mxu0 0.0
    %257 = vmatprep.subr.mxu0 0.0
    %258 = vmatpush1.msra.mxu0 0.0
    %259 = vmatprep.subr.mxu0 0.0
    %260 = vmatpush1.msra.mxu0 0.0
    %261 = vmatprep.subr.mxu0 0.0
    %262 = vmatpush1.msra.mxu0 0.0
    %263 = vmatprep.subr.mxu0 0.0
    %264 = vmatpush1.msra.mxu0 0.0
    %265 = vmatprep.subr.mxu0 0.0
    %266 = vmatpush1.msra.mxu0 0.0
    %267 = vmatprep.subr.mxu0 0.0
    %268 = vmatpush1.msra.mxu0 0.0
    %269 = vmatprep.subr.mxu0 0.0
    %270 = vmatpush1.msra.mxu0 0.0
    %271 = vmatprep.subr.mxu0 0.0
    %272 = vmatpush1.msra.mxu0 0.0
    %273 = vmatprep.subr.mxu0 0.0
    %274 = vmatpush1.msra.mxu0 0.0
    %275 = vmatprep.subr.mxu0 0.0
    %276 = vmatpush1.msra.mxu0 0.0
    %277 = vmatprep.subr.mxu0 0.0
    %278 = vmatpush1.msra.mxu0 0.0
    %279 = vmatprep.mubr.f32.mxu0 0.0
    %280 = vmatmul.mubr.f32.gmra.mrb[0].mxu0 %v213
    %v281 = vpop.f32.mrb[0].mxu0
    %v282 = vadd.f32 0.0, %v281
    %v283 = vpop.f32.mrb[0].mxu0
    %v284 = vadd.f32 0.0, %v283
    %285 = vdwg.mxu0
    %v286 = vadd.f32 %v209, %v282
    %v287 = vadd.f32 %v210, %v284
    %v288 = vxor.u32 %v286, 2147483648
    %v289 = vmul.f32 %v288, 1.442695
    %v290 = vpow.pop %v289
    %v291 = vadd.f32 %v290, 1.0
    %v292 = vrcp.pop %v291
    %v293 = vmul.f32 1.0, %v292
    %v294 = vtanh.pop %v287
    %v295 = vxor.u32 %v287, 2147483648
    %v296 = vmul.f32 %v295, 1.442695
    %v297 = vpow.pop %v296
    %v298 = vadd.f32 %v297, 1.0
    %v299 = vrcp.pop %v298
    %v300 = vmul.f32 1.0, %v299
    %v301 = vmul.f32 %v293, 0.0
    %v302 = vmul.f32 %v293, %v294
    %304 = vrot.lane.b32.xlu0 %v302, 64
    %v305 = vpop.permute.xlu0 %304
    %v307 = vadd.f32 %v301, %v305
    %v308 = vtanh.pop %v307
    %v309 = vmul.f32 %v300, %v308
    %v310 = vrot.slane %v201, 2
    %v311 = vrot.slane %v202, 2
    %v314 = vadd.f32 %v188, %v310
    %v315 = vadd.f32 %v189, %v311
    %317 = vrot.lane.b32.xlu0 %v309, 64
    %v318 = vpop.permute.xlu0 %317
    %v319 = vsel %vm211, %v318, 0
    %321 = vmatprep.subr.mxu0 %v162
    %322 = vmatpush1.msra.mxu0 %v161
    %323 = vmatprep.subr.mxu0 %v164
    %324 = vmatpush1.msra.mxu0 %v163
    %325 = vmatprep.subr.mxu0 %v166
    %326 = vmatpush1.msra.mxu0 %v165
    %327 = vmatprep.subr.mxu0 %v168
    %328 = vmatpush1.msra.mxu0 %v167
    %329 = vmatprep.subr.mxu0 %v170
    %330 = vmatpush1.msra.mxu0 %v169
    %331 = vmatprep.subr.mxu0 %v172
    %332 = vmatpush1.msra.mxu0 %v171
    %333 = vmatprep.subr.mxu0 %v174
    %334 = vmatpush1.msra.mxu0 %v173
    %335 = vmatprep.subr.mxu0 %v176
    %336 = vmatpush1.msra.mxu0 %v175
    %337 = vmatprep.subr.mxu0 0.0
    %338 = vmatpush1.msra.mxu0 0.0
    %339 = vmatprep.subr.mxu0 0.0
    %340 = vmatpush1.msra.mxu0 0.0
    %341 = vmatprep.subr.mxu0 0.0
    %342 = vmatpush1.msra.mxu0 0.0
    %343 = vmatprep.subr.mxu0 0.0
    %344 = vmatpush1.msra.mxu0 0.0
    %345 = vmatprep.subr.mxu0 0.0
    %346 = vmatpush1.msra.mxu0 0.0
    %347 = vmatprep.subr.mxu0 0.0
    %348 = vmatpush1.msra.mxu0 0.0
    %349 = vmatprep.subr.mxu0 0.0
    %350 = vmatpush1.msra.mxu0 0.0
    %351 = vmatprep.subr.mxu0 0.0
    %352 = vmatpush1.msra.mxu0 0.0
    %353 = vmatprep.subr.mxu0 0.0
    %354 = vmatpush1.msra.mxu0 0.0
    %355 = vmatprep.subr.mxu0 0.0
    %356 = vmatpush1.msra.mxu0 0.0
    %357 = vmatprep.subr.mxu0 0.0
    %358 = vmatpush1.msra.mxu0 0.0
    %359 = vmatprep.subr.mxu0 0.0
    %360 = vmatpush1.msra.mxu0 0.0
    %361 = vmatprep.subr.mxu0 0.0
    %362 = vmatpush1.msra.mxu0 0.0
    %363 = vmatprep.subr.mxu0 0.0
    %364 = vmatpush1.msra.mxu0 0.0
    %365 = vmatprep.subr.mxu0 0.0
    %366 = vmatpush1.msra.mxu0 0.0
    %367 = vmatprep.subr.mxu0 0.0
    %368 = vmatpush1.msra.mxu0 0.0
    %369 = vmatprep.subr.mxu0 0.0
    %370 = vmatpush1.msra.mxu0 0.0
    %371 = vmatprep.subr.mxu0 0.0
    %372 = vmatpush1.msra.mxu0 0.0
    %373 = vmatprep.subr.mxu0 0.0
    %374 = vmatpush1.msra.mxu0 0.0
    %375 = vmatprep.subr.mxu0 0.0
    %376 = vmatpush1.msra.mxu0 0.0
    %377 = vmatprep.subr.mxu0 0.0
    %378 = vmatpush1.msra.mxu0 0.0
    %379 = vmatprep.subr.mxu0 0.0
    %380 = vmatpush1.msra.mxu0 0.0
    %381 = vmatprep.subr.mxu0 0.0
    %382 = vmatpush1.msra.mxu0 0.0
    %383 = vmatprep.subr.mxu0 0.0
    %384 = vmatpush1.msra.mxu0 0.0
    %385 = vmatprep.mubr.f32.mxu0 0.0
    %386 = vmatmul.mubr.f32.gmra.mrb[0].mxu0 %v319
    %v387 = vpop.f32.mrb[0].mxu0
    %v388 = vadd.f32 0.0, %v387
    %v389 = vpop.f32.mrb[0].mxu0
    %v390 = vadd.f32 0.0, %v389
    %391 = vdwg.mxu0
    %v394 = vrot.slane %v388, 6
    %v395 = vrot.slane %v390, 6
    %v398 = vadd.f32 %v314, %v394
    %v399 = vadd.f32 %v315, %v395
    %v400 = vxor.u32 %v398, 2147483648
    %v401 = vmul.f32 %v400, 1.442695
    %v402 = vpow.pop %v401
    %v403 = vadd.f32 %v402, 1.0
    %v404 = vrcp.pop %v403
    %v405 = vmul.f32 1.0, %v404
    %v406 = vtanh.pop %v399
    %v407 = vxor.u32 %v399, 2147483648
    %v408 = vmul.f32 %v407, 1.442695
    %v409 = vpow.pop %v408
    %v410 = vadd.f32 %v409, 1.0
    %v411 = vrcp.pop %v410
    %v412 = vmul.f32 1.0, %v411
    %v414 = vrot.slane %v307, 6
    %v416 = vmul.f32 %v405, %v414
    %v417 = vmul.f32 %v405, %v406
    %419 = vrot.lane.b32.xlu0 %v417, 64
    %v420 = vpop.permute.xlu0 %419
    %v422 = vadd.f32 %v416, %v420
    %v423 = vtanh.pop %v422
    %v424 = vmul.f32 %v412, %v423
    %v426 = vrot.slane %v424, 2
    %427 = vrot.lane.b32.xlu0 %v426, 64
    %v428 = vpop.permute.xlu0 %427
    %v429 = vsel %vm211, %v428, 0
    %431 = vmatprep.subr.mxu0 %v162
    %432 = vmatpush1.msra.mxu0 %v161
    %433 = vmatprep.subr.mxu0 %v164
    %434 = vmatpush1.msra.mxu0 %v163
    %435 = vmatprep.subr.mxu0 %v166
    %436 = vmatpush1.msra.mxu0 %v165
    %437 = vmatprep.subr.mxu0 %v168
    %438 = vmatpush1.msra.mxu0 %v167
    %439 = vmatprep.subr.mxu0 %v170
    %440 = vmatpush1.msra.mxu0 %v169
    %441 = vmatprep.subr.mxu0 %v172
    %442 = vmatpush1.msra.mxu0 %v171
    %443 = vmatprep.subr.mxu0 %v174
    %444 = vmatpush1.msra.mxu0 %v173
    %445 = vmatprep.subr.mxu0 %v176
    %446 = vmatpush1.msra.mxu0 %v175
    %447 = vmatprep.subr.mxu0 0.0
    %448 = vmatpush1.msra.mxu0 0.0
    %449 = vmatprep.subr.mxu0 0.0
    %450 = vmatpush1.msra.mxu0 0.0
    %451 = vmatprep.subr.mxu0 0.0
    %452 = vmatpush1.msra.mxu0 0.0
    %453 = vmatprep.subr.mxu0 0.0
    %454 = vmatpush1.msra.mxu0 0.0
    %455 = vmatprep.subr.mxu0 0.0
    %456 = vmatpush1.msra.mxu0 0.0
    %457 = vmatprep.subr.mxu0 0.0
    %458 = vmatpush1.msra.mxu0 0.0
    %459 = vmatprep.subr.mxu0 0.0
    %460 = vmatpush1.msra.mxu0 0.0
    %461 = vmatprep.subr.mxu0 0.0
    %462 = vmatpush1.msra.mxu0 0.0
    %463 = vmatprep.subr.mxu0 0.0
    %464 = vmatpush1.msra.mxu0 0.0
    %465 = vmatprep.subr.mxu0 0.0
    %466 = vmatpush1.msra.mxu0 0.0
    %467 = vmatprep.subr.mxu0 0.0
    %468 = vmatpush1.msra.mxu0 0.0
    %469 = vmatprep.subr.mxu0 0.0
    %470 = vmatpush1.msra.mxu0 0.0
    %471 = vmatprep.subr.mxu0 0.0
    %472 = vmatpush1.msra.mxu0 0.0
    %473 = vmatprep.subr.mxu0 0.0
    %474 = vmatpush1.msra.mxu0 0.0
    %475 = vmatprep.subr.mxu0 0.0
    %476 = vmatpush1.msra.mxu0 0.0
    %477 = vmatprep.subr.mxu0 0.0
    %478 = vmatpush1.msra.mxu0 0.0
    %479 = vmatprep.subr.mxu0 0.0
    %480 = vmatpush1.msra.mxu0 0.0
    %481 = vmatprep.subr.mxu0 0.0
    %482 = vmatpush1.msra.mxu0 0.0
    %483 = vmatprep.subr.mxu0 0.0
    %484 = vmatpush1.msra.mxu0 0.0
    %485 = vmatprep.subr.mxu0 0.0
    %486 = vmatpush1.msra.mxu0 0.0
    %487 = vmatprep.subr.mxu0 0.0
    %488 = vmatpush1.msra.mxu0 0.0
    %489 = vmatprep.subr.mxu0 0.0
    %490 = vmatpush1.msra.mxu0 0.0
    %491 = vmatprep.subr.mxu0 0.0
    %492 = vmatpush1.msra.mxu0 0.0
    %493 = vmatprep.subr.mxu0 0.0
    %494 = vmatpush1.msra.mxu0 0.0
    %495 = vmatprep.mubr.f32.mxu0 0.0
    %496 = vmatmul.mubr.f32.gmra.mrb[0].mxu0 %v429
    %v497 = vpop.f32.mrb[0].mxu0
    %v498 = vadd.f32 0.0, %v497
    %v499 = vpop.f32.mrb[0].mxu0
    %v500 = vadd.f32 0.0, %v499
    %501 = vdwg.mxu0
    %v504 = vrot.slane %v498, 4
    %v505 = vrot.slane %v500, 4
    %v508 = vadd.f32 %v209, %v504
    %v509 = vadd.f32 %v210, %v505
    %v510 = vxor.u32 %v508, 2147483648
    %v511 = vmul.f32 %v510, 1.442695
    %v512 = vpow.pop %v511
    %v513 = vadd.f32 %v512, 1.0
    %v514 = vrcp.pop %v513
    %v515 = vmul.f32 1.0, %v514
    %v516 = vtanh.pop %v509
    %v517 = vxor.u32 %v509, 2147483648
    %v518 = vmul.f32 %v517, 1.442695
    %v519 = vpow.pop %v518
    %v520 = vadd.f32 %v519, 1.0
    %v521 = vrcp.pop %v520
    %v522 = vmul.f32 1.0, %v521
    %v524 = vrot.slane %v422, 6
    %v526 = vmul.f32 %v515, %v524
    %v527 = vmul.f32 %v515, %v516
    %529 = vrot.lane.b32.xlu0 %v527, 64
    %v530 = vpop.permute.xlu0 %529
    %v532 = vadd.f32 %v526, %v530
    %v533 = vtanh.pop %v532
    %v534 = vmul.f32 %v522, %v533
    %v536 = vrot.slane %v534, 4
    %537 = vrot.lane.b32.xlu0 %v536, 64
    %v538 = vpop.permute.xlu0 %537
    %v539 = vsel %vm211, %v538, 0
    %541 = vmatprep.subr.mxu0 %v162
    %542 = vmatpush1.msra.mxu0 %v161
    %543 = vmatprep.subr.mxu0 %v164
    %544 = vmatpush1.msra.mxu0 %v163
    %545 = vmatprep.subr.mxu0 %v166
    %546 = vmatpush1.msra.mxu0 %v165
    %547 = vmatprep.subr.mxu0 %v168
    %548 = vmatpush1.msra.mxu0 %v167
    %549 = vmatprep.subr.mxu0 %v170
    %550 = vmatpush1.msra.mxu0 %v169
    %551 = vmatprep.subr.mxu0 %v172
    %552 = vmatpush1.msra.mxu0 %v171
    %553 = vmatprep.subr.mxu0 %v174
    %554 = vmatpush1.msra.mxu0 %v173
    %555 = vmatprep.subr.mxu0 %v176
    %556 = vmatpush1.msra.mxu0 %v175
    %557 = vmatprep.subr.mxu0 0.0
    %558 = vmatpush1.msra.mxu0 0.0
    %559 = vmatprep.subr.mxu0 0.0
    %560 = vmatpush1.msra.mxu0 0.0
    %561 = vmatprep.subr.mxu0 0.0
    %562 = vmatpush1.msra.mxu0 0.0
    %563 = vmatprep.subr.mxu0 0.0
    %564 = vmatpush1.msra.mxu0 0.0
    %565 = vmatprep.subr.mxu0 0.0
    %566 = vmatpush1.msra.mxu0 0.0
    %567 = vmatprep.subr.mxu0 0.0
    %568 = vmatpush1.msra.mxu0 0.0
    %569 = vmatprep.subr.mxu0 0.0
    %570 = vmatpush1.msra.mxu0 0.0
    %571 = vmatprep.subr.mxu0 0.0
    %572 = vmatpush1.msra.mxu0 0.0
    %573 = vmatprep.subr.mxu0 0.0
    %574 = vmatpush1.msra.mxu0 0.0
    %575 = vmatprep.subr.mxu0 0.0
    %576 = vmatpush1.msra.mxu0 0.0
    %577 = vmatprep.subr.mxu0 0.0
    %578 = vmatpush1.msra.mxu0 0.0
    %579 = vmatprep.subr.mxu0 0.0
    %580 = vmatpush1.msra.mxu0 0.0
    %581 = vmatprep.subr.mxu0 0.0
    %582 = vmatpush1.msra.mxu0 0.0
    %583 = vmatprep.subr.mxu0 0.0
    %584 = vmatpush1.msra.mxu0 0.0
    %585 = vmatprep.subr.mxu0 0.0
    %586 = vmatpush1.msra.mxu0 0.0
    %587 = vmatprep.subr.mxu0 0.0
    %588 = vmatpush1.msra.mxu0 0.0
    %589 = vmatprep.subr.mxu0 0.0
    %590 = vmatpush1.msra.mxu0 0.0
    %591 = vmatprep.subr.mxu0 0.0
    %592 = vmatpush1.msra.mxu0 0.0
    %593 = vmatprep.subr.mxu0 0.0
    %594 = vmatpush1.msra.mxu0 0.0
    %595 = vmatprep.subr.mxu0 0.0
    %596 = vmatpush1.msra.mxu0 0.0
    %597 = vmatprep.subr.mxu0 0.0
    %598 = vmatpush1.msra.mxu0 0.0
    %599 = vmatprep.subr.mxu0 0.0
    %600 = vmatpush1.msra.mxu0 0.0
    %601 = vmatprep.subr.mxu0 0.0
    %602 = vmatpush1.msra.mxu0 0.0
    %603 = vmatprep.subr.mxu0 0.0
    %604 = vmatpush1.msra.mxu0 0.0
    %605 = vmatprep.mubr.f32.mxu0 0.0
    %606 = vmatmul.mubr.f32.gmra.mrb[0].mxu0 %v539
    %v607 = vpop.f32.mrb[0].mxu0
    %v608 = vadd.f32 0.0, %v607
    %v609 = vpop.f32.mrb[0].mxu0
    %v610 = vadd.f32 0.0, %v609
    %611 = vdwg.mxu0
    %v614 = vrot.slane %v608, 2
    %v615 = vrot.slane %v610, 2
    %v618 = vadd.f32 %v314, %v614
    %v619 = vadd.f32 %v315, %v615
    %v620 = vxor.u32 %v618, 2147483648
    %v621 = vmul.f32 %v620, 1.442695
    %v622 = vpow.pop %v621
    %v623 = vadd.f32 %v622, 1.0
    %v624 = vrcp.pop %v623
    %v625 = vmul.f32 1.0, %v624
    %v626 = vtanh.pop %v619
    %v627 = vxor.u32 %v619, 2147483648
    %v628 = vmul.f32 %v627, 1.442695
    %v629 = vpow.pop %v628
    %v630 = vadd.f32 %v629, 1.0
    %v631 = vrcp.pop %v630
    %v632 = vmul.f32 1.0, %v631
    %v634 = vrot.slane %v532, 6
    %v636 = vmul.f32 %v625, %v634
    %v637 = vmul.f32 %v625, %v626
    %639 = vrot.lane.b32.xlu0 %v637, 64
    %v640 = vpop.permute.xlu0 %639
    %v642 = vadd.f32 %v636, %v640
    %v643 = vtanh.pop %v642
    %v644 = vmul.f32 %v632, %v643
    %v645 = vmul.f32 %v155, %v181
    %v646 = vmul.f32 %v157, %v185
    %v647 = vmul.f32 %v149, %v194
    %v648 = vmul.f32 %v151, %v198
    %v651 = vrot.slane %v647, 6
    %v652 = vrot.slane %v648, 6
    %v655 = vadd.f32 %v645, %v651
    %v656 = vadd.f32 %v646, %v652
    %v658 = vrot.slane %v644, 6
    %659 = vrot.lane.b32.xlu0 %v658, 64
    %v660 = vpop.permute.xlu0 %659
    %v661 = vsel %vm211, %v660, 0
    %663 = vmatprep.subr.mxu0 %v162
    %664 = vmatpush1.msra.mxu0 %v161
    %665 = vmatprep.subr.mxu0 %v164
    %666 = vmatpush1.msra.mxu0 %v163
    %667 = vmatprep.subr.mxu0 %v166
    %668 = vmatpush1.msra.mxu0 %v165
    %669 = vmatprep.subr.mxu0 %v168
    %670 = vmatpush1.msra.mxu0 %v167
    %671 = vmatprep.subr.mxu0 %v170
    %672 = vmatpush1.msra.mxu0 %v169
    %673 = vmatprep.subr.mxu0 %v172
    %674 = vmatpush1.msra.mxu0 %v171
    %675 = vmatprep.subr.mxu0 %v174
    %676 = vmatpush1.msra.mxu0 %v173
    %677 = vmatprep.subr.mxu0 %v176
    %678 = vmatpush1.msra.mxu0 %v175
    %679 = vmatprep.subr.mxu0 0.0
    %680 = vmatpush1.msra.mxu0 0.0
    %681 = vmatprep.subr.mxu0 0.0
    %682 = vmatpush1.msra.mxu0 0.0
    %683 = vmatprep.subr.mxu0 0.0
    %684 = vmatpush1.msra.mxu0 0.0
    %685 = vmatprep.subr.mxu0 0.0
    %686 = vmatpush1.msra.mxu0 0.0
    %687 = vmatprep.subr.mxu0 0.0
    %688 = vmatpush1.msra.mxu0 0.0
    %689 = vmatprep.subr.mxu0 0.0
    %690 = vmatpush1.msra.mxu0 0.0
    %691 = vmatprep.subr.mxu0 0.0
    %692 = vmatpush1.msra.mxu0 0.0
    %693 = vmatprep.subr.mxu0 0.0
    %694 = vmatpush1.msra.mxu0 0.0
    %695 = vmatprep.subr.mxu0 0.0
    %696 = vmatpush1.msra.mxu0 0.0
    %697 = vmatprep.subr.mxu0 0.0
    %698 = vmatpush1.msra.mxu0 0.0
    %699 = vmatprep.subr.mxu0 0.0
    %700 = vmatpush1.msra.mxu0 0.0
    %701 = vmatprep.subr.mxu0 0.0
    %702 = vmatpush1.msra.mxu0 0.0
    %703 = vmatprep.subr.mxu0 0.0
    %704 = vmatpush1.msra.mxu0 0.0
    %705 = vmatprep.subr.mxu0 0.0
    %706 = vmatpush1.msra.mxu0 0.0
    %707 = vmatprep.subr.mxu0 0.0
    %708 = vmatpush1.msra.mxu0 0.0
    %709 = vmatprep.subr.mxu0 0.0
    %710 = vmatpush1.msra.mxu0 0.0
    %711 = vmatprep.subr.mxu0 0.0
    %712 = vmatpush1.msra.mxu0 0.0
    %713 = vmatprep.subr.mxu0 0.0
    %714 = vmatpush1.msra.mxu0 0.0
    %715 = vmatprep.subr.mxu0 0.0
    %716 = vmatpush1.msra.mxu0 0.0
    %717 = vmatprep.subr.mxu0 0.0
    %718 = vmatpush1.msra.mxu0 0.0
    %719 = vmatprep.subr.mxu0 0.0
    %720 = vmatpush1.msra.mxu0 0.0
    %721 = vmatprep.subr.mxu0 0.0
    %722 = vmatpush1.msra.mxu0 0.0
    %723 = vmatprep.subr.mxu0 0.0
    %724 = vmatpush1.msra.mxu0 0.0
    %725 = vmatprep.subr.mxu0 0.0
    %726 = vmatpush1.msra.mxu0 0.0
    %727 = vmatprep.mubr.f32.mxu0 0.0
    %728 = vmatmul.mubr.f32.gmra.mrb[0].mxu0 %v661
    %v729 = vpop.f32.mrb[0].mxu0
    %v730 = vadd.f32 0.0, %v729
    %v731 = vpop.f32.mrb[0].mxu0
    %v732 = vadd.f32 0.0, %v731
    %733 = vdwg.mxu0
    %v734 = vadd.f32 %v655, %v730
    %v735 = vadd.f32 %v656, %v732
    %v736 = vxor.u32 %v734, 2147483648
    %v737 = vmul.f32 %v736, 1.442695
    %v738 = vpow.pop %v737
    %v739 = vadd.f32 %v738, 1.0
    %v740 = vrcp.pop %v739
    %v741 = vmul.f32 1.0, %v740
    %v742 = vtanh.pop %v735
    %v743 = vxor.u32 %v735, 2147483648
    %v744 = vmul.f32 %v743, 1.442695
    %v745 = vpow.pop %v744
    %v746 = vadd.f32 %v745, 1.0
    %v747 = vrcp.pop %v746
    %v748 = vmul.f32 1.0, %v747
    %v750 = vrot.slane %v642, 6
    %v752 = vmul.f32 %v741, %v750
    %v753 = vmul.f32 %v741, %v742
    %755 = vrot.lane.b32.xlu0 %v753, 64
    %v756 = vpop.permute.xlu0 %755
    %v758 = vadd.f32 %v752, %v756
    %v759 = vtanh.pop %v758
    %v760 = vmul.f32 %v748, %v759
    %v761 = vrot.slane %v647, 2
    %v762 = vrot.slane %v648, 2
    %v765 = vadd.f32 %v645, %v761
    %v766 = vadd.f32 %v646, %v762
    %768 = vrot.lane.b32.xlu0 %v760, 64
    %v769 = vpop.permute.xlu0 %768
    %v770 = vsel %vm211, %v769, 0
    %772 = vmatprep.subr.mxu0 %v162
    %773 = vmatpush1.msra.mxu0 %v161
    %774 = vmatprep.subr.mxu0 %v164
    %775 = vmatpush1.msra.mxu0 %v163
    %776 = vmatprep.subr.mxu0 %v166
    %777 = vmatpush1.msra.mxu0 %v165
    %778 = vmatprep.subr.mxu0 %v168
    %779 = vmatpush1.msra.mxu0 %v167
    %780 = vmatprep.subr.mxu0 %v170
    %781 = vmatpush1.msra.mxu0 %v169
    %782 = vmatprep.subr.mxu0 %v172
    %783 = vmatpush1.msra.mxu0 %v171
    %784 = vmatprep.subr.mxu0 %v174
    %785 = vmatpush1.msra.mxu0 %v173
    %786 = vmatprep.subr.mxu0 %v176
    %787 = vmatpush1.msra.mxu0 %v175
    %788 = vmatprep.subr.mxu0 0.0
    %789 = vmatpush1.msra.mxu0 0.0
    %790 = vmatprep.subr.mxu0 0.0
    %791 = vmatpush1.msra.mxu0 0.0
    %792 = vmatprep.subr.mxu0 0.0
    %793 = vmatpush1.msra.mxu0 0.0
    %794 = vmatprep.subr.mxu0 0.0
    %795 = vmatpush1.msra.mxu0 0.0
    %796 = vmatprep.subr.mxu0 0.0
    %797 = vmatpush1.msra.mxu0 0.0
    %798 = vmatprep.subr.mxu0 0.0
    %799 = vmatpush1.msra.mxu0 0.0
    %800 = vmatprep.subr.mxu0 0.0
    %801 = vmatpush1.msra.mxu0 0.0
    %802 = vmatprep.subr.mxu0 0.0
    %803 = vmatpush1.msra.mxu0 0.0
    %804 = vmatprep.subr.mxu0 0.0
    %805 = vmatpush1.msra.mxu0 0.0
    %806 = vmatprep.subr.mxu0 0.0
    %807 = vmatpush1.msra.mxu0 0.0
    %808 = vmatprep.subr.mxu0 0.0
    %809 = vmatpush1.msra.mxu0 0.0
    %810 = vmatprep.subr.mxu0 0.0
    %811 = vmatpush1.msra.mxu0 0.0
    %812 = vmatprep.subr.mxu0 0.0
    %813 = vmatpush1.msra.mxu0 0.0
    %814 = vmatprep.subr.mxu0 0.0
    %815 = vmatpush1.msra.mxu0 0.0
    %816 = vmatprep.subr.mxu0 0.0
    %817 = vmatpush1.msra.mxu0 0.0
    %818 = vmatprep.subr.mxu0 0.0
    %819 = vmatpush1.msra.mxu0 0.0
    %820 = vmatprep.subr.mxu0 0.0
    %821 = vmatpush1.msra.mxu0 0.0
    %822 = vmatprep.subr.mxu0 0.0
    %823 = vmatpush1.msra.mxu0 0.0
    %824 = vmatprep.subr.mxu0 0.0
    %825 = vmatpush1.msra.mxu0 0.0
    %826 = vmatprep.subr.mxu0 0.0
    %827 = vmatpush1.msra.mxu0 0.0
    %828 = vmatprep.subr.mxu0 0.0
    %829 = vmatpush1.msra.mxu0 0.0
    %830 = vmatprep.subr.mxu0 0.0
    %831 = vmatpush1.msra.mxu0 0.0
    %832 = vmatprep.subr.mxu0 0.0
    %833 = vmatpush1.msra.mxu0 0.0
    %834 = vmatprep.subr.mxu0 0.0
    %835 = vmatpush1.msra.mxu0 0.0
    %836 = vmatprep.mubr.f32.mxu0 0.0
    %837 = vmatmul.mubr.f32.gmra.mrb[0].mxu0 %v770
    %v838 = vpop.f32.mrb[0].mxu0
    %v839 = vadd.f32 0.0, %v838
    %v840 = vpop.f32.mrb[0].mxu0
    %v841 = vadd.f32 0.0, %v840
    %842 = vdwg.mxu0
    %v845 = vrot.slane %v839, 6
    %v846 = vrot.slane %v841, 6
    %v849 = vadd.f32 %v765, %v845
    %v850 = vadd.f32 %v766, %v846
    %v851 = vxor.u32 %v849, 2147483648
    %v852 = vmul.f32 %v851, 1.442695
    %v853 = vpow.pop %v852
    %v854 = vadd.f32 %v853, 1.0
    %v855 = vrcp.pop %v854
    %v856 = vmul.f32 1.0, %v855
    %v857 = vtanh.pop %v850
    %v858 = vxor.u32 %v850, 2147483648
    %v859 = vmul.f32 %v858, 1.442695
    %v860 = vpow.pop %v859
    %v861 = vadd.f32 %v860, 1.0
    %v862 = vrcp.pop %v861
    %v863 = vmul.f32 1.0, %v862
    %v865 = vrot.slane %v758, 6
    %v867 = vmul.f32 %v856, %v865
    %v868 = vmul.f32 %v856, %v857
    %870 = vrot.lane.b32.xlu0 %v868, 64
    %v871 = vpop.permute.xlu0 %870
    %v873 = vadd.f32 %v867, %v871
    %v874 = vtanh.pop %v873
    %v875 = vmul.f32 %v863, %v874
    %v877 = vrot.slane %v875, 2
    %878 = vrot.lane.b32.xlu0 %v877, 64
    %v879 = vpop.permute.xlu0 %878
    %v880 = vsel %vm211, %v879, 0
    %882 = vmatprep.subr.mxu0 %v162
    %883 = vmatpush1.msra.mxu0 %v161
    %884 = vmatprep.subr.mxu0 %v164
    %885 = vmatpush1.msra.mxu0 %v163
    %886 = vmatprep.subr.mxu0 %v166
    %887 = vmatpush1.msra.mxu0 %v165
    %888 = vmatprep.subr.mxu0 %v168
    %889 = vmatpush1.msra.mxu0 %v167
    %890 = vmatprep.subr.mxu0 %v170
    %891 = vmatpush1.msra.mxu0 %v169
    %892 = vmatprep.subr.mxu0 %v172
    %893 = vmatpush1.msra.mxu0 %v171
    %894 = vmatprep.subr.mxu0 %v174
    %895 = vmatpush1.msra.mxu0 %v173
    %896 = vmatprep.subr.mxu0 %v176
    %897 = vmatpush1.msra.mxu0 %v175
    %898 = vmatprep.subr.mxu0 0.0
    %899 = vmatpush1.msra.mxu0 0.0
    %900 = vmatprep.subr.mxu0 0.0
    %901 = vmatpush1.msra.mxu0 0.0
    %902 = vmatprep.subr.mxu0 0.0
    %903 = vmatpush1.msra.mxu0 0.0
    %904 = vmatprep.subr.mxu0 0.0
    %905 = vmatpush1.msra.mxu0 0.0
    %906 = vmatprep.subr.mxu0 0.0
    %907 = vmatpush1.msra.mxu0 0.0
    %908 = vmatprep.subr.mxu0 0.0
    %909 = vmatpush1.msra.mxu0 0.0
    %910 = vmatprep.subr.mxu0 0.0
    %911 = vmatpush1.msra.mxu0 0.0
    %912 = vmatprep.subr.mxu0 0.0
    %913 = vmatpush1.msra.mxu0 0.0
    %914 = vmatprep.subr.mxu0 0.0
    %915 = vmatpush1.msra.mxu0 0.0
    %916 = vmatprep.subr.mxu0 0.0
    %917 = vmatpush1.msra.mxu0 0.0
    %918 = vmatprep.subr.mxu0 0.0
    %919 = vmatpush1.msra.mxu0 0.0
    %920 = vmatprep.subr.mxu0 0.0
    %921 = vmatpush1.msra.mxu0 0.0
    %922 = vmatprep.subr.mxu0 0.0
    %923 = vmatpush1.msra.mxu0 0.0
    %924 = vmatprep.subr.mxu0 0.0
    %925 = vmatpush1.msra.mxu0 0.0
    %926 = vmatprep.subr.mxu0 0.0
    %927 = vmatpush1.msra.mxu0 0.0
    %928 = vmatprep.subr.mxu0 0.0
    %929 = vmatpush1.msra.mxu0 0.0
    %930 = vmatprep.subr.mxu0 0.0
    %931 = vmatpush1.msra.mxu0 0.0
    %932 = vmatprep.subr.mxu0 0.0
    %933 = vmatpush1.msra.mxu0 0.0
    %934 = vmatprep.subr.mxu0 0.0
    %935 = vmatpush1.msra.mxu0 0.0
    %936 = vmatprep.subr.mxu0 0.0
    %937 = vmatpush1.msra.mxu0 0.0
    %938 = vmatprep.subr.mxu0 0.0
    %939 = vmatpush1.msra.mxu0 0.0
    %940 = vmatprep.subr.mxu0 0.0
    %941 = vmatpush1.msra.mxu0 0.0
    %942 = vmatprep.subr.mxu0 0.0
    %943 = vmatpush1.msra.mxu0 0.0
    %944 = vmatprep.subr.mxu0 0.0
    %945 = vmatpush1.msra.mxu0 0.0
    %946 = vmatprep.mubr.f32.mxu0 0.0
    %947 = vmatmul.mubr.f32.gmra.mrb[0].mxu0 %v880
    %v948 = vpop.f32.mrb[0].mxu0
    %v949 = vadd.f32 0.0, %v948
    %v950 = vpop.f32.mrb[0].mxu0
    %v951 = vadd.f32 0.0, %v950
    %952 = vdwg.mxu0
    %v955 = vrot.slane %v949, 4
    %v956 = vrot.slane %v951, 4
    %v959 = vadd.f32 %v655, %v955
    %v960 = vadd.f32 %v656, %v956
    %v961 = vxor.u32 %v959, 2147483648
    %v962 = vmul.f32 %v961, 1.442695
    %v963 = vpow.pop %v962
    %v964 = vadd.f32 %v963, 1.0
    %v965 = vrcp.pop %v964
    %v966 = vmul.f32 1.0, %v965
    %v967 = vtanh.pop %v960
    %v968 = vxor.u32 %v960, 2147483648
    %v969 = vmul.f32 %v968, 1.442695
    %v970 = vpow.pop %v969
    %v971 = vadd.f32 %v970, 1.0
    %v972 = vrcp.pop %v971
    %v973 = vmul.f32 1.0, %v972
    %v975 = vrot.slane %v873, 6
    %v977 = vmul.f32 %v966, %v975
    %v978 = vmul.f32 %v966, %v967
    %980 = vrot.lane.b32.xlu0 %v978, 64
    %v981 = vpop.permute.xlu0 %980
    %v983 = vadd.f32 %v977, %v981
    %v984 = vtanh.pop %v983
    %v985 = vmul.f32 %v973, %v984
    %v987 = vrot.slane %v985, 4
    %988 = vrot.lane.b32.xlu0 %v987, 64
    %v989 = vpop.permute.xlu0 %988
    %v990 = vsel %vm211, %v989, 0
    %992 = vmatprep.subr.mxu0 %v162
    %993 = vmatpush1.msra.mxu0 %v161
    %994 = vmatprep.subr.mxu0 %v164
    %995 = vmatpush1.msra.mxu0 %v163
    %996 = vmatprep.subr.mxu0 %v166
    %997 = vmatpush1.msra.mxu0 %v165
    %998 = vmatprep.subr.mxu0 %v168
    %999 = vmatpush1.msra.mxu0 %v167
    %1000 = vmatprep.subr.mxu0 %v170
    %1001 = vmatpush1.msra.mxu0 %v169
    %1002 = vmatprep.subr.mxu0 %v172
    %1003 = vmatpush1.msra.mxu0 %v171
    %1004 = vmatprep.subr.mxu0 %v174
    %1005 = vmatpush1.msra.mxu0 %v173
    %1006 = vmatprep.subr.mxu0 %v176
    %1007 = vmatpush1.msra.mxu0 %v175
    %1008 = vmatprep.subr.mxu0 0.0
    %1009 = vmatpush1.msra.mxu0 0.0
    %1010 = vmatprep.subr.mxu0 0.0
    %1011 = vmatpush1.msra.mxu0 0.0
    %1012 = vmatprep.subr.mxu0 0.0
    %1013 = vmatpush1.msra.mxu0 0.0
    %1014 = vmatprep.subr.mxu0 0.0
    %1015 = vmatpush1.msra.mxu0 0.0
    %1016 = vmatprep.subr.mxu0 0.0
    %1017 = vmatpush1.msra.mxu0 0.0
    %1018 = vmatprep.subr.mxu0 0.0
    %1019 = vmatpush1.msra.mxu0 0.0
    %1020 = vmatprep.subr.mxu0 0.0
    %1021 = vmatpush1.msra.mxu0 0.0
    %1022 = vmatprep.subr.mxu0 0.0
    %1023 = vmatpush1.msra.mxu0 0.0
    %1024 = vmatprep.subr.mxu0 0.0
    %1025 = vmatpush1.msra.mxu0 0.0
    %1026 = vmatprep.subr.mxu0 0.0
    %1027 = vmatpush1.msra.mxu0 0.0
    %1028 = vmatprep.subr.mxu0 0.0
    %1029 = vmatpush1.msra.mxu0 0.0
    %1030 = vmatprep.subr.mxu0 0.0
    %1031 = vmatpush1.msra.mxu0 0.0
    %1032 = vmatprep.subr.mxu0 0.0
    %1033 = vmatpush1.msra.mxu0 0.0
    %1034 = vmatprep.subr.mxu0 0.0
    %1035 = vmatpush1.msra.mxu0 0.0
    %1036 = vmatprep.subr.mxu0 0.0
    %1037 = vmatpush1.msra.mxu0 0.0
    %1038 = vmatprep.subr.mxu0 0.0
    %1039 = vmatpush1.msra.mxu0 0.0
    %1040 = vmatprep.subr.mxu0 0.0
    %1041 = vmatpush1.msra.mxu0 0.0
    %1042 = vmatprep.subr.mxu0 0.0
    %1043 = vmatpush1.msra.mxu0 0.0
    %1044 = vmatprep.subr.mxu0 0.0
    %1045 = vmatpush1.msra.mxu0 0.0
    %1046 = vmatprep.subr.mxu0 0.0
    %1047 = vmatpush1.msra.mxu0 0.0
    %1048 = vmatprep.subr.mxu0 0.0
    %1049 = vmatpush1.msra.mxu0 0.0
    %1050 = vmatprep.subr.mxu0 0.0
    %1051 = vmatpush1.msra.mxu0 0.0
    %1052 = vmatprep.subr.mxu0 0.0
    %1053 = vmatpush1.msra.mxu0 0.0
    %1054 = vmatprep.subr.mxu0 0.0
    %1055 = vmatpush1.msra.mxu0 0.0
    %1056 = vmatprep.mubr.f32.mxu0 0.0
    %1057 = vmatmul.mubr.f32.gmra.mrb[0].mxu0 %v990
    %v1058 = vpop.f32.mrb[0].mxu0
    %v1059 = vadd.f32 0.0, %v1058
    %v1060 = vpop.f32.mrb[0].mxu0
    %v1061 = vadd.f32 0.0, %v1060
    %1062 = vdwg.mxu0
    %v1065 = vrot.slane %v1059, 2
    %v1066 = vrot.slane %v1061, 2
    %v1069 = vadd.f32 %v765, %v1065
    %v1070 = vadd.f32 %v766, %v1066
    %v1071 = vxor.u32 %v1069, 2147483648
    %v1072 = vmul.f32 %v1071, 1.442695
    %v1073 = vpow.pop %v1072
    %v1074 = vadd.f32 %v1073, 1.0
    %v1075 = vrcp.pop %v1074
    %v1076 = vmul.f32 1.0, %v1075
    %v1077 = vtanh.pop %v1070
    %v1078 = vxor.u32 %v1070, 2147483648
    %v1079 = vmul.f32 %v1078, 1.442695
    %v1080 = vpow.pop %v1079
    %v1081 = vadd.f32 %v1080, 1.0
    %v1082 = vrcp.pop %v1081
    %v1083 = vmul.f32 1.0, %v1082
    %v1085 = vrot.slane %v983, 6
    %v1087 = vmul.f32 %v1076, %v1085
    %v1088 = vmul.f32 %v1076, %v1077
    %1090 = vrot.lane.b32.xlu0 %v1088, 64
    %v1091 = vpop.permute.xlu0 %1090
    %v1093 = vadd.f32 %v1087, %v1091
    %v1094 = vtanh.pop %v1093
    %v1095 = vmul.f32 %v1083, %v1094
    %v1097 = vrot.slane %v1095, 6
    %1098 = vrot.lane.b32.xlu0 %v1097, 96
    %v1099 = vpop.permute.xlu0 %1098
    %v1101 = vadd.f32 %v309, %v1099
    %v1102 = vmul.f32 %v1101, 0.5
    %v1105 = vunpack.c.l.s4 1966171168
    %v1106 = vunpack.c.0.s8 %v1105
    %v1107 = vlaneseq
    %v1108 = vshrl.u32 %v1107, 7
    %v1109 = vsub.s32 %v1106, %v1108
    %v1110 = vrot.slane %v1102, %v1109
    %v1111 = vcombine.high %v1110, %v1110
    %v1113 = vunpack.c.l.s4 1966171168
    %v1114 = vunpack.c.0.s8 %v1113
    %v1115 = vlaneseq
    %v1116 = vshrl.u32 %v1115, 7
    %v1117 = vsub.s32 %v1114, %v1116
    %v1118 = vrot.slane %v1110, %v1117
    %v1120 = vunpack.c.l.s4 1966171168
    %v1121 = vunpack.c.0.s8 %v1120
    %v1122 = vlaneseq
    %v1123 = vshrl.u32 %v1122, 7
    %v1124 = vsub.s32 %v1121, %v1123
    %v1125 = vrot.slane %v1111, %v1124
    %v1126 = vlaneseq
    %v1127 = vshrl.u32 %v1126, 7
    %v1128 = vsub.s32 0, %v1127
    %v1129 = vrot.slane %v1118, %v1128
    %v1130 = vlaneseq
    %v1131 = vshrl.u32 %v1130, 7
    %v1132 = vsub.s32 0, %v1131
    %v1133 = vrot.slane %v1125, %v1132
    %1134 = vrot.lane.b32.xlu0 %v1129, 64
    %v1135 = vpop.permute.xlu0 %1134
    %1136 = vrot.lane.b32.xlu0 %v1133, 64
    %v1137 = vpop.permute.xlu0 %1136
    %vm1140 = vcmask 253952
    %1141 = vst.msk [vmem:[#allocation2] sm:$0x1] %vm1140, %v1135
    %1142 = vst.msk [vmem:[#allocation2 + $0x8] sm:$0x1] %vm1140, %v1137
    %v1143 = vrot.slane %v985, 2
    %1144 = vrot.lane.b32.xlu0 %v1143, 96
    %v1145 = vpop.permute.xlu0 %1144
    %v1147 = vadd.f32 %v424, %v1145
    %v1148 = vmul.f32 %v1147, 0.5
    %v1151 = vunpack.c.l.s4 1966171168
    %v1152 = vunpack.c.0.s8 %v1151
    %v1153 = vlaneseq
    %v1154 = vshrl.u32 %v1153, 7
    %v1155 = vsub.s32 %v1152, %v1154
    %v1156 = vrot.slane %v1148, %v1155
    %v1157 = vcombine.high %v1156, %v1156
    %v1159 = vunpack.c.l.s4 1966171168
    %v1160 = vunpack.c.0.s8 %v1159
    %v1161 = vlaneseq
    %v1162 = vshrl.u32 %v1161, 7
    %v1163 = vsub.s32 %v1160, %v1162
    %v1164 = vrot.slane %v1156, %v1163
    %v1166 = vunpack.c.l.s4 1966171168
    %v1167 = vunpack.c.0.s8 %v1166
    %v1168 = vlaneseq
    %v1169 = vshrl.u32 %v1168, 7
    %v1170 = vsub.s32 %v1167, %v1169
    %v1171 = vrot.slane %v1157, %v1170
    %v1172 = vcombine.high %v1164, %v1164
    %v1173 = vcombine.high %v1171, %v1171
    %v1174 = vlaneseq
    %v1175 = vshrl.u32 %v1174, 7
    %v1176 = vsub.s32 0, %v1175
    %v1177 = vrot.slane %v1172, %v1176
    %v1178 = vlaneseq
    %v1179 = vshrl.u32 %v1178, 7
    %v1180 = vsub.s32 0, %v1179
    %v1181 = vrot.slane %v1173, %v1180
    %1182 = vrot.lane.b32.xlu0 %v1177, 64
    %v1183 = vpop.permute.xlu0 %1182
    %1184 = vrot.lane.b32.xlu0 %v1181, 64
    %v1185 = vpop.permute.xlu0 %1184
    %1188 = vst.msk [vmem:[#allocation2 + $0x1] sm:$0x1] %vm1140, %v1183
    %1189 = vst.msk [vmem:[#allocation2 + $0x9] sm:$0x1] %vm1140, %v1185
    %v1190 = vrot.slane %v875, 6
    %1191 = vrot.lane.b32.xlu0 %v1190, 96
    %v1192 = vpop.permute.xlu0 %1191
    %v1194 = vadd.f32 %v534, %v1192
    %v1195 = vmul.f32 %v1194, 0.5
    %v1197 = vcombine.high %v1195, %v1195
    %v1199 = vunpack.c.l.s4 1966171168
    %v1200 = vunpack.c.0.s8 %v1199
    %v1201 = vlaneseq
    %v1202 = vshrl.u32 %v1201, 7
    %v1203 = vsub.s32 %v1200, %v1202
    %v1204 = vrot.slane %v1197, %v1203
    %v1205 = vcombine.high %v1204, %v1204
    %v1207 = vunpack.c.l.s4 1966171168
    %v1208 = vunpack.c.0.s8 %v1207
    %v1209 = vlaneseq
    %v1210 = vshrl.u32 %v1209, 7
    %v1211 = vsub.s32 %v1208, %v1210
    %v1212 = vrot.slane %v1204, %v1211
    %v1214 = vunpack.c.l.s4 1966171168
    %v1215 = vunpack.c.0.s8 %v1214
    %v1216 = vlaneseq
    %v1217 = vshrl.u32 %v1216, 7
    %v1218 = vsub.s32 %v1215, %v1217
    %v1219 = vrot.slane %v1205, %v1218
    %v1220 = vlaneseq
    %v1221 = vshrl.u32 %v1220, 7
    %v1222 = vsub.s32 0, %v1221
    %v1223 = vrot.slane %v1212, %v1222
    %v1224 = vlaneseq
    %v1225 = vshrl.u32 %v1224, 7
    %v1226 = vsub.s32 0, %v1225
    %v1227 = vrot.slane %v1219, %v1226
    %1228 = vrot.lane.b32.xlu0 %v1223, 64
    %v1229 = vpop.permute.xlu0 %1228
    %1230 = vrot.lane.b32.xlu0 %v1227, 64
    %v1231 = vpop.permute.xlu0 %1230
    %1234 = vst.msk [vmem:[#allocation2 + $0x2] sm:$0x1] %vm1140, %v1229
    %1235 = vst.msk [vmem:[#allocation2 + $0xa] sm:$0x1] %vm1140, %v1231
    %v1236 = vrot.slane %v760, 2
    %1237 = vrot.lane.b32.xlu0 %v1236, 96
    %v1238 = vpop.permute.xlu0 %1237
    %v1240 = vadd.f32 %v644, %v1238
    %v1241 = vmul.f32 %v1240, 0.5
    %v1243 = vcombine.high %v1241, %v1241
    %v1245 = vunpack.c.l.s4 1966171168
    %v1246 = vunpack.c.0.s8 %v1245
    %v1247 = vlaneseq
    %v1248 = vshrl.u32 %v1247, 7
    %v1249 = vsub.s32 %v1246, %v1248
    %v1250 = vrot.slane %v1243, %v1249
    %v1251 = vcombine.high %v1250, %v1250
    %v1253 = vunpack.c.l.s4 1966171168
    %v1254 = vunpack.c.0.s8 %v1253
    %v1255 = vlaneseq
    %v1256 = vshrl.u32 %v1255, 7
    %v1257 = vsub.s32 %v1254, %v1256
    %v1258 = vrot.slane %v1250, %v1257
    %v1260 = vunpack.c.l.s4 1966171168
    %v1261 = vunpack.c.0.s8 %v1260
    %v1262 = vlaneseq
    %v1263 = vshrl.u32 %v1262, 7
    %v1264 = vsub.s32 %v1261, %v1263
    %v1265 = vrot.slane %v1251, %v1264
    %v1266 = vcombine.high %v1258, %v1258
    %v1267 = vcombine.high %v1265, %v1265
    %v1268 = vlaneseq
    %v1269 = vshrl.u32 %v1268, 7
    %v1270 = vsub.s32 0, %v1269
    %v1271 = vrot.slane %v1266, %v1270
    %v1272 = vlaneseq
    %v1273 = vshrl.u32 %v1272, 7
    %v1274 = vsub.s32 0, %v1273
    %v1275 = vrot.slane %v1267, %v1274
    %1276 = vrot.lane.b32.xlu0 %v1271, 64
    %v1277 = vpop.permute.xlu0 %1276
    %1278 = vrot.lane.b32.xlu0 %v1275, 64
    %v1279 = vpop.permute.xlu0 %1278
    %1282 = vst.msk [vmem:[#allocation2 + $0x3] sm:$0x1] %vm1140, %v1277
    %1283 = vst.msk [vmem:[#allocation2 + $0xb] sm:$0x1] %vm1140, %v1279
    %1284 = vrot.lane.b32.xlu0 %v658, 96
    %v1285 = vpop.permute.xlu0 %1284
    %v1287 = vadd.f32 %v760, %v1285
    %v1288 = vmul.f32 %v1287, 0.5
    %v1291 = vunpack.c.l.s4 1966171168
    %v1292 = vunpack.c.0.s8 %v1291
    %v1293 = vlaneseq
    %v1294 = vshrl.u32 %v1293, 7
    %v1295 = vsub.s32 %v1292, %v1294
    %v1296 = vrot.slane %v1288, %v1295
    %v1297 = vcombine.high %v1296, %v1296
    %v1299 = vunpack.c.l.s4 1966171168
    %v1300 = vunpack.c.0.s8 %v1299
    %v1301 = vlaneseq
    %v1302 = vshrl.u32 %v1301, 7
    %v1303 = vsub.s32 %v1300, %v1302
    %v1304 = vrot.slane %v1296, %v1303
    %v1306 = vunpack.c.l.s4 1966171168
    %v1307 = vunpack.c.0.s8 %v1306
    %v1308 = vlaneseq
    %v1309 = vshrl.u32 %v1308, 7
    %v1310 = vsub.s32 %v1307, %v1309
    %v1311 = vrot.slane %v1297, %v1310
    %v1312 = vlaneseq
    %v1313 = vshrl.u32 %v1312, 7
    %v1314 = vsub.s32 0, %v1313
    %v1315 = vrot.slane %v1304, %v1314
    %v1316 = vlaneseq
    %v1317 = vshrl.u32 %v1316, 7
    %v1318 = vsub.s32 0, %v1317
    %v1319 = vrot.slane %v1311, %v1318
    %1320 = vrot.lane.b32.xlu0 %v1315, 64
    %v1321 = vpop.permute.xlu0 %1320
    %1322 = vrot.lane.b32.xlu0 %v1319, 64
    %v1323 = vpop.permute.xlu0 %1322
    %1326 = vst.msk [vmem:[#allocation2 + $0x4] sm:$0x1] %vm1140, %v1321
    %1327 = vst.msk [vmem:[#allocation2 + $0xc] sm:$0x1] %vm1140, %v1323
    %v1328 = vrot.slane %v534, 2
    %1329 = vrot.lane.b32.xlu0 %v1328, 96
    %v1330 = vpop.permute.xlu0 %1329
    %v1332 = vadd.f32 %v875, %v1330
    %v1333 = vmul.f32 %v1332, 0.5
    %v1336 = vunpack.c.l.s4 1966171168
    %v1337 = vunpack.c.0.s8 %v1336
    %v1338 = vlaneseq
    %v1339 = vshrl.u32 %v1338, 7
    %v1340 = vsub.s32 %v1337, %v1339
    %v1341 = vrot.slane %v1333, %v1340
    %v1342 = vcombine.high %v1341, %v1341
    %v1344 = vunpack.c.l.s4 1966171168
    %v1345 = vunpack.c.0.s8 %v1344
    %v1346 = vlaneseq
    %v1347 = vshrl.u32 %v1346, 7
    %v1348 = vsub.s32 %v1345, %v1347
    %v1349 = vrot.slane %v1341, %v1348
    %v1351 = vunpack.c.l.s4 1966171168
    %v1352 = vunpack.c.0.s8 %v1351
    %v1353 = vlaneseq
    %v1354 = vshrl.u32 %v1353, 7
    %v1355 = vsub.s32 %v1352, %v1354
    %v1356 = vrot.slane %v1342, %v1355
    %v1357 = vcombine.high %v1349, %v1349
    %v1358 = vcombine.high %v1356, %v1356
    %v1359 = vlaneseq
    %v1360 = vshrl.u32 %v1359, 7
    %v1361 = vsub.s32 0, %v1360
    %v1362 = vrot.slane %v1357, %v1361
    %v1363 = vlaneseq
    %v1364 = vshrl.u32 %v1363, 7
    %v1365 = vsub.s32 0, %v1364
    %v1366 = vrot.slane %v1358, %v1365
    %1367 = vrot.lane.b32.xlu0 %v1362, 64
    %v1368 = vpop.permute.xlu0 %1367
    %1369 = vrot.lane.b32.xlu0 %v1366, 64
    %v1370 = vpop.permute.xlu0 %1369
    %1373 = vst.msk [vmem:[#allocation2 + $0x5] sm:$0x1] %vm1140, %v1368
    %1374 = vst.msk [vmem:[#allocation2 + $0xd] sm:$0x1] %vm1140, %v1370
    %v1375 = vrot.slane %v424, 6
    %1376 = vrot.lane.b32.xlu0 %v1375, 96
    %v1377 = vpop.permute.xlu0 %1376
    %v1379 = vadd.f32 %v985, %v1377
    %v1380 = vmul.f32 %v1379, 0.5
    %v1382 = vcombine.high %v1380, %v1380
    %v1384 = vunpack.c.l.s4 1966171168
    %v1385 = vunpack.c.0.s8 %v1384
    %v1386 = vlaneseq
    %v1387 = vshrl.u32 %v1386, 7
    %v1388 = vsub.s32 %v1385, %v1387
    %v1389 = vrot.slane %v1382, %v1388
    %v1390 = vcombine.high %v1389, %v1389
    %v1392 = vunpack.c.l.s4 1966171168
    %v1393 = vunpack.c.0.s8 %v1392
    %v1394 = vlaneseq
    %v1395 = vshrl.u32 %v1394, 7
    %v1396 = vsub.s32 %v1393, %v1395
    %v1397 = vrot.slane %v1389, %v1396
    %v1399 = vunpack.c.l.s4 1966171168
    %v1400 = vunpack.c.0.s8 %v1399
    %v1401 = vlaneseq
    %v1402 = vshrl.u32 %v1401, 7
    %v1403 = vsub.s32 %v1400, %v1402
    %v1404 = vrot.slane %v1390, %v1403
    %v1405 = vlaneseq
    %v1406 = vshrl.u32 %v1405, 7
    %v1407 = vsub.s32 0, %v1406
    %v1408 = vrot.slane %v1397, %v1407
    %v1409 = vlaneseq
    %v1410 = vshrl.u32 %v1409, 7
    %v1411 = vsub.s32 0, %v1410
    %v1412 = vrot.slane %v1404, %v1411
    %1413 = vrot.lane.b32.xlu0 %v1408, 64
    %v1414 = vpop.permute.xlu0 %1413
    %1415 = vrot.lane.b32.xlu0 %v1412, 64
    %v1416 = vpop.permute.xlu0 %1415
    %1419 = vst.msk [vmem:[#allocation2 + $0x6] sm:$0x1] %vm1140, %v1414
    %1420 = vst.msk [vmem:[#allocation2 + $0xe] sm:$0x1] %vm1140, %v1416
    %v1421 = vrot.slane %v309, 2
    %1422 = vrot.lane.b32.xlu0 %v1421, 96
    %v1423 = vpop.permute.xlu0 %1422
    %v1425 = vadd.f32 %v1095, %v1423
    %v1426 = vmul.f32 %v1425, 0.5
    %v1428 = vcombine.high %v1426, %v1426
    %v1430 = vunpack.c.l.s4 1966171168
    %v1431 = vunpack.c.0.s8 %v1430
    %v1432 = vlaneseq
    %v1433 = vshrl.u32 %v1432, 7
    %v1434 = vsub.s32 %v1431, %v1433
    %v1435 = vrot.slane %v1428, %v1434
    %v1436 = vcombine.high %v1435, %v1435
    %v1438 = vunpack.c.l.s4 1966171168
    %v1439 = vunpack.c.0.s8 %v1438
    %v1440 = vlaneseq
    %v1441 = vshrl.u32 %v1440, 7
    %v1442 = vsub.s32 %v1439, %v1441
    %v1443 = vrot.slane %v1435, %v1442
    %v1445 = vunpack.c.l.s4 1966171168
    %v1446 = vunpack.c.0.s8 %v1445
    %v1447 = vlaneseq
    %v1448 = vshrl.u32 %v1447, 7
    %v1449 = vsub.s32 %v1446, %v1448
    %v1450 = vrot.slane %v1436, %v1449
    %v1451 = vcombine.high %v1443, %v1443
    %v1452 = vcombine.high %v1450, %v1450
    %v1453 = vlaneseq
    %v1454 = vshrl.u32 %v1453, 7
    %v1455 = vsub.s32 0, %v1454
    %v1456 = vrot.slane %v1451, %v1455
    %v1457 = vlaneseq
    %v1458 = vshrl.u32 %v1457, 7
    %v1459 = vsub.s32 0, %v1458
    %v1460 = vrot.slane %v1452, %v1459
    %1461 = vrot.lane.b32.xlu0 %v1456, 64
    %v1462 = vpop.permute.xlu0 %1461
    %1463 = vrot.lane.b32.xlu0 %v1460, 64
    %v1464 = vpop.permute.xlu0 %1463
    %1467 = vst.msk [vmem:[#allocation2 + $0x7] sm:$0x1] %vm1140, %v1462
    %1468 = vst.msk [vmem:[#allocation2 + $0xf] sm:$0x1] %vm1140, %v1464
    %v1469 = vld [vmem:[#allocation2] sm:$0xff]
    %v1470 = vld [vmem:[#allocation2 + $0x8] sm:$0xff]
    %1471 = vrot.lane.b32.xlu0 %v1095, 96
    %v1472 = vpop.permute.xlu0 %1471
    %v1474 = vadd.f32 %v1095, %v1472
    %v1475 = vmul.f32 %v1474, 0.5
    %1477 = vrot.lane.b32.xlu0 %v1093, 96
    %v1478 = vpop.permute.xlu0 %1477
    %v1480 = vadd.f32 %v1093, %v1478
    %v1481 = vmul.f32 %v1480, 0.5
    %v1482 = vld [vmem:[%s1] sm:$0xff]
    %v1483 = vld [vmem:[%s1 + $0x8] sm:$0x3]
    %v1484 = vld [vmem:[%s8] sm:$0xff]
    %v1485 = vld [vmem:[%s8 + $0x8] sm:$0xff]
    %v1486 = vld [vmem:[%s11] sm:$0x1]
    %v1488 = vlaneseq
    %v1489 = vshrl.u32 %v1488, 7
    %v1490 = vsub.s32 0, %v1489
    %v1491 = vrot.slane %v1486, %v1490
    %v1494 = vsel %vm75, %v1482, 0
    %v1497 = vsel %vm75, %v1483, 0
    %1499 = vmatprep.subr.mxu0 0.0
    %1500 = vmatpush1.msra.mxu0 %v1484
    %1501 = vmatprep.subr.mxu0 0.0
    %1502 = vmatpush1.msra.mxu0 %v1485
    %1503 = vmatprep.subr.mxu0 0.0
    %1504 = vmatpush1.msra.mxu0 0.0
    %1505 = vmatprep.subr.mxu0 0.0
    %1506 = vmatpush1.msra.mxu0 0.0
    %1507 = vmatprep.subr.mxu0 0.0
    %1508 = vmatpush1.msra.mxu0 0.0
    %1509 = vmatprep.subr.mxu0 0.0
    %1510 = vmatpush1.msra.mxu0 0.0
    %1511 = vmatprep.subr.mxu0 0.0
    %1512 = vmatpush1.msra.mxu0 0.0
    %1513 = vmatprep.subr.mxu0 0.0
    %1514 = vmatpush1.msra.mxu0 0.0
    %1515 = vmatprep.subr.mxu0 0.0
    %1516 = vmatpush1.msra.mxu0 0.0
    %1517 = vmatprep.subr.mxu0 0.0
    %1518 = vmatpush1.msra.mxu0 0.0
    %1519 = vmatprep.subr.mxu0 0.0
    %1520 = vmatpush1.msra.mxu0 0.0
    %1521 = vmatprep.subr.mxu0 0.0
    %1522 = vmatpush1.msra.mxu0 0.0
    %1523 = vmatprep.subr.mxu0 0.0
    %1524 = vmatpush1.msra.mxu0 0.0
    %1525 = vmatprep.subr.mxu0 0.0
    %1526 = vmatpush1.msra.mxu0 0.0
    %1527 = vmatprep.subr.mxu0 0.0
    %1528 = vmatpush1.msra.mxu0 0.0
    %1529 = vmatprep.subr.mxu0 0.0
    %1530 = vmatpush1.msra.mxu0 0.0
    %1531 = vmatprep.subr.mxu0 0.0
    %1532 = vmatpush1.msra.mxu0 0.0
    %1533 = vmatprep.subr.mxu0 0.0
    %1534 = vmatpush1.msra.mxu0 0.0
    %1535 = vmatprep.subr.mxu0 0.0
    %1536 = vmatpush1.msra.mxu0 0.0
    %1537 = vmatprep.subr.mxu0 0.0
    %1538 = vmatpush1.msra.mxu0 0.0
    %1539 = vmatprep.subr.mxu0 0.0
    %1540 = vmatpush1.msra.mxu0 0.0
    %1541 = vmatprep.subr.mxu0 0.0
    %1542 = vmatpush1.msra.mxu0 0.0
    %1543 = vmatprep.subr.mxu0 0.0
    %1544 = vmatpush1.msra.mxu0 0.0
    %1545 = vmatprep.subr.mxu0 0.0
    %1546 = vmatpush1.msra.mxu0 0.0
    %1547 = vmatprep.subr.mxu0 0.0
    %1548 = vmatpush1.msra.mxu0 0.0
    %1549 = vmatprep.subr.mxu0 0.0
    %1550 = vmatpush1.msra.mxu0 0.0
    %1551 = vmatprep.subr.mxu0 0.0
    %1552 = vmatpush1.msra.mxu0 0.0
    %1553 = vmatprep.subr.mxu0 0.0
    %1554 = vmatpush1.msra.mxu0 0.0
    %1555 = vmatprep.subr.mxu0 0.0
    %1556 = vmatpush1.msra.mxu0 0.0
    %1557 = vmatprep.subr.mxu0 0.0
    %1558 = vmatpush1.msra.mxu0 0.0
    %1559 = vmatprep.subr.mxu0 0.0
    %1560 = vmatpush1.msra.mxu0 0.0
    %1561 = vmatprep.subr.mxu0 0.0
    %1562 = vmatpush1.msra.mxu0 0.0
    %1563 = vmatprep.mubr.f32.mxu0 0.0
    %1564 = vmatmul.mubr.f32.gmra.mrb[0].mxu0 %v1494
    %v1565 = vpop.f32.mrb[0].mxu0
    %v1566 = vadd.f32 %v1491, %v1565
    %v1567 = vpop.f32.mrb[0].mxu0
    %1568 = vmatprep.mubr.f32.mxu0 0.0
    %1569 = vmatmul.mubr.f32.gmra.mrb[0].mxu0 %v1497
    %v1570 = vpop.f32.mrb[0].mxu0
    %v1571 = vadd.f32 %v1491, %v1570
    %v1572 = vpop.f32.mrb[0].mxu0
    %1573 = vdwg.mxu0
    %v1574 = vld [vmem:[%s9] sm:$0xff]
    %v1575 = vld [vmem:[%s9 + $0x8] sm:$0xff]
    %v1576 = vld [vmem:[%s9 + $0x10] sm:$0xff]
    %v1577 = vld [vmem:[%s9 + $0x18] sm:$0xff]
    %v1578 = vld [vmem:[%s10] sm:$0xff]
    %v1579 = vld [vmem:[%s10 + $0x8] sm:$0xff]
    %v1580 = vld [vmem:[%s10 + $0x10] sm:$0xff]
    %v1581 = vld [vmem:[%s10 + $0x18] sm:$0xff]
    %v1582 = vld [vmem:[%s12] sm:$0xff]
    %v1583 = vld [vmem:[%s12 + $0x8] sm:$0xff]
    %v1584 = vld [vmem:[%s12 + $0x10] sm:$0xff]
    %v1585 = vld [vmem:[%s12 + $0x18] sm:$0xff]
    %v1586 = vld [vmem:[%s13] sm:$0xff]
    %v1587 = vld [vmem:[%s13 + $0x8] sm:$0xff]
    %v1588 = vld [vmem:[%s13 + $0x10] sm:$0xff]
    %v1589 = vld [vmem:[%s13 + $0x18] sm:$0xff]
    %v1590 = vld [vmem:[%s14] sm:$0x1]
    %v1591 = vld [vmem:[%s15] sm:$0xff]
    %v1592 = vld [vmem:[%s15 + $0x8] sm:$0xff]
    %v1593 = vld [vmem:[%s15 + $0x10] sm:$0xff]
    %v1594 = vld [vmem:[%s15 + $0x18] sm:$0xff]
    %v1595 = vld [vmem:[%s16] sm:$0x1]
    %vm1596 = vcmask 261120
    %v1597 = vsel %vm1596, 0.0, 0
    %1599 = vmatprep.subr.mxu0 0.0
    %1600 = vmatpush1.msra.mxu0 %v1574
    %1601 = vmatprep.subr.mxu0 0.0
    %1602 = vmatpush1.msra.mxu0 %v1575
    %1603 = vmatprep.subr.mxu0 0.0
    %1604 = vmatpush1.msra.mxu0 %v1576
    %1605 = vmatprep.subr.mxu0 0.0
    %1606 = vmatpush1.msra.mxu0 %v1577
    %1607 = vmatprep.subr.mxu0 0.0
    %1608 = vmatpush1.msra.mxu0 0.0
    %1609 = vmatprep.subr.mxu0 0.0
    %1610 = vmatpush1.msra.mxu0 0.0
    %1611 = vmatprep.subr.mxu0 0.0
    %1612 = vmatpush1.msra.mxu0 0.0
    %1613 = vmatprep.subr.mxu0 0.0
    %1614 = vmatpush1.msra.mxu0 0.0
    %1615 = vmatprep.subr.mxu0 0.0
    %1616 = vmatpush1.msra.mxu0 0.0
    %1617 = vmatprep.subr.mxu0 0.0
    %1618 = vmatpush1.msra.mxu0 0.0
    %1619 = vmatprep.subr.mxu0 0.0
    %1620 = vmatpush1.msra.mxu0 0.0
    %1621 = vmatprep.subr.mxu0 0.0
    %1622 = vmatpush1.msra.mxu0 0.0
    %1623 = vmatprep.subr.mxu0 0.0
    %1624 = vmatpush1.msra.mxu0 0.0
    %1625 = vmatprep.subr.mxu0 0.0
    %1626 = vmatpush1.msra.mxu0 0.0
    %1627 = vmatprep.subr.mxu0 0.0
    %1628 = vmatpush1.msra.mxu0 0.0
    %1629 = vmatprep.subr.mxu0 0.0
    %1630 = vmatpush1.msra.mxu0 0.0
    %1631 = vmatprep.subr.mxu0 0.0
    %1632 = vmatpush1.msra.mxu0 0.0
    %1633 = vmatprep.subr.mxu0 0.0
    %1634 = vmatpush1.msra.mxu0 0.0
    %1635 = vmatprep.subr.mxu0 0.0
    %1636 = vmatpush1.msra.mxu0 0.0
    %1637 = vmatprep.subr.mxu0 0.0
    %1638 = vmatpush1.msra.mxu0 0.0
    %1639 = vmatprep.subr.mxu0 0.0
    %1640 = vmatpush1.msra.mxu0 0.0
    %1641 = vmatprep.subr.mxu0 0.0
    %1642 = vmatpush1.msra.mxu0 0.0
    %1643 = vmatprep.subr.mxu0 0.0
    %1644 = vmatpush1.msra.mxu0 0.0
    %1645 = vmatprep.subr.mxu0 0.0
    %1646 = vmatpush1.msra.mxu0 0.0
    %1647 = vmatprep.subr.mxu0 0.0
    %1648 = vmatpush1.msra.mxu0 0.0
    %1649 = vmatprep.subr.mxu0 0.0
    %1650 = vmatpush1.msra.mxu0 0.0
    %1651 = vmatprep.subr.mxu0 0.0
    %1652 = vmatpush1.msra.mxu0 0.0
    %1653 = vmatprep.subr.mxu0 0.0
    %1654 = vmatpush1.msra.mxu0 0.0
    %1655 = vmatprep.subr.mxu0 0.0
    %1656 = vmatpush1.msra.mxu0 0.0
    %1657 = vmatprep.subr.mxu0 0.0
    %1658 = vmatpush1.msra.mxu0 0.0
    %1659 = vmatprep.subr.mxu0 0.0
    %1660 = vmatpush1.msra.mxu0 0.0
    %1661 = vmatprep.subr.mxu0 0.0
    %1662 = vmatpush1.msra.mxu0 0.0
    %1663 = vmatprep.mubr.f32.mxu0 0.0
    %1664 = vmatmul.mubr.f32.gmra.mrb[0].mxu0 %v1597
    %v1665 = vpop.f32.mrb[0].mxu0
    %v1666 = vadd.f32 0.0, %v1665
    %v1667 = vpop.f32.mrb[0].mxu0
    %1668 = vdwg.mxu0
    %v1669 = vadd.f32 %v1566, %v1666
    %v1671 = vrot.slane %v1475, 6
    %1672 = vrot.lane.b32.xlu0 %v1671, 64
    %v1673 = vpop.permute.xlu0 %1672
    %v1674 = vsel %vm1596, %v1673, 0
    %1676 = vmatprep.subr.mxu0 0.0
    %1677 = vmatpush1.msra.mxu0 %v1578
    %1678 = vmatprep.subr.mxu0 0.0
    %1679 = vmatpush1.msra.mxu0 %v1579
    %1680 = vmatprep.subr.mxu0 0.0
    %1681 = vmatpush1.msra.mxu0 %v1580
    %1682 = vmatprep.subr.mxu0 0.0
    %1683 = vmatpush1.msra.mxu0 %v1581
    %1684 = vmatprep.subr.mxu0 0.0
    %1685 = vmatpush1.msra.mxu0 0.0
    %1686 = vmatprep.subr.mxu0 0.0
    %1687 = vmatpush1.msra.mxu0 0.0
    %1688 = vmatprep.subr.mxu0 0.0
    %1689 = vmatpush1.msra.mxu0 0.0
    %1690 = vmatprep.subr.mxu0 0.0
    %1691 = vmatpush1.msra.mxu0 0.0
    %1692 = vmatprep.subr.mxu0 0.0
    %1693 = vmatpush1.msra.mxu0 0.0
    %1694 = vmatprep.subr.mxu0 0.0
    %1695 = vmatpush1.msra.mxu0 0.0
    %1696 = vmatprep.subr.mxu0 0.0
    %1697 = vmatpush1.msra.mxu0 0.0
    %1698 = vmatprep.subr.mxu0 0.0
    %1699 = vmatpush1.msra.mxu0 0.0
    %1700 = vmatprep.subr.mxu0 0.0
    %1701 = vmatpush1.msra.mxu0 0.0
    %1702 = vmatprep.subr.mxu0 0.0
    %1703 = vmatpush1.msra.mxu0 0.0
    %1704 = vmatprep.subr.mxu0 0.0
    %1705 = vmatpush1.msra.mxu0 0.0
    %1706 = vmatprep.subr.mxu0 0.0
    %1707 = vmatpush1.msra.mxu0 0.0
    %1708 = vmatprep.subr.mxu0 0.0
    %1709 = vmatpush1.msra.mxu0 0.0
    %1710 = vmatprep.subr.mxu0 0.0
    %1711 = vmatpush1.msra.mxu0 0.0
    %1712 = vmatprep.subr.mxu0 0.0
    %1713 = vmatpush1.msra.mxu0 0.0
    %1714 = vmatprep.subr.mxu0 0.0
    %1715 = vmatpush1.msra.mxu0 0.0
    %1716 = vmatprep.subr.mxu0 0.0
    %1717 = vmatpush1.msra.mxu0 0.0
    %1718 = vmatprep.subr.mxu0 0.0
    %1719 = vmatpush1.msra.mxu0 0.0
    %1720 = vmatprep.subr.mxu0 0.0
    %1721 = vmatpush1.msra.mxu0 0.0
    %1722 = vmatprep.subr.mxu0 0.0
    %1723 = vmatpush1.msra.mxu0 0.0
    %1724 = vmatprep.subr.mxu0 0.0
    %1725 = vmatpush1.msra.mxu0 0.0
    %1726 = vmatprep.subr.mxu0 0.0
    %1727 = vmatpush1.msra.mxu0 0.0
    %1728 = vmatprep.subr.mxu0 0.0
    %1729 = vmatpush1.msra.mxu0 0.0
    %1730 = vmatprep.subr.mxu0 0.0
    %1731 = vmatpush1.msra.mxu0 0.0
    %1732 = vmatprep.subr.mxu0 0.0
    %1733 = vmatpush1.msra.mxu0 0.0
    %1734 = vmatprep.subr.mxu0 0.0
    %1735 = vmatpush1.msra.mxu0 0.0
    %1736 = vmatprep.subr.mxu0 0.0
    %1737 = vmatpush1.msra.mxu0 0.0
    %1738 = vmatprep.subr.mxu0 0.0
    %1739 = vmatpush1.msra.mxu0 0.0
    %1740 = vmatprep.mubr.f32.mxu0 0.0
    %1741 = vmatmul.mubr.f32.gmra.mrb[0].mxu0 %v1674
    %v1742 = vpop.f32.mrb[0].mxu0
    %v1743 = vadd.f32 0.0, %v1742
    %v1744 = vpop.f32.mrb[0].mxu0
    %1745 = vdwg.mxu0
    %v1746 = vadd.f32 %v1669, %v1743
    %v1747 = vxor.u32 %v1746, 2147483648
    %v1748 = vmul.f32 %v1747, 1.442695
    %v1749 = vpow.pop %v1748
    %v1750 = vadd.f32 %v1749, 1.0
    %v1751 = vrcp.pop %v1750
    %v1752 = vmul.f32 1.0, %v1751
    %v1753 = vtanh.pop %v1746
    %v1755 = vrot.slane %v1481, 6
    %1756 = vrot.lane.b32.xlu0 %v1755, 96
    %v1757 = vpop.permute.xlu0 %1756
    %v1759 = vmul.f32 %v1752, %v1757
    %1761 = vrot.lane.b32.xlu0 %v1753, 64
    %v1762 = vpop.permute.xlu0 %1761
    %v1764 = vmul.f32 %v1752, %v1762
    %1766 = vrot.lane.b32.xlu0 %v1764, 32
    %v1767 = vpop.permute.xlu0 %1766
    %v1769 = vadd.f32 %v1759, %v1767
    %v1770 = vtanh.pop %v1769
    %1772 = vrot.lane.b32.xlu0 %v1770, 64
    %v1773 = vpop.permute.xlu0 %1772
    %v1775 = vmul.f32 %v1752, %v1773
    %v1778 = vunpack.c.l.s4 1966171168
    %v1779 = vunpack.c.0.s8 %v1778
    %v1780 = vlaneseq
    %v1781 = vshrl.u32 %v1780, 7
    %v1782 = vsub.s32 %v1779, %v1781
    %v1783 = vrot.slane %v1775, %v1782
    %v1784 = vcombine.high %v1783, %v1783
    %v1786 = vunpack.c.l.s4 1966171168
    %v1787 = vunpack.c.0.s8 %v1786
    %v1788 = vlaneseq
    %v1789 = vshrl.u32 %v1788, 7
    %v1790 = vsub.s32 %v1787, %v1789
    %v1791 = vrot.slane %v1783, %v1790
    %v1793 = vunpack.c.l.s4 1966171168
    %v1794 = vunpack.c.0.s8 %v1793
    %v1795 = vlaneseq
    %v1796 = vshrl.u32 %v1795, 7
    %v1797 = vsub.s32 %v1794, %v1796
    %v1798 = vrot.slane %v1784, %v1797
    %v1799 = vlaneseq
    %v1800 = vshrl.u32 %v1799, 7
    %v1801 = vsub.s32 0, %v1800
    %v1802 = vrot.slane %v1791, %v1801
    %1803 = vrot.lane.b32.xlu0 %v1802, 32
    %v1804 = vpop.permute.xlu0 %1803
    %v1805 = vsel %vm1596, %v1804, 0
    %v1808 = vsel %vm1596, %v1469, 0
    %1810 = vmatprep.subr.mxu0 0.0
    %1811 = vmatpush1.xpose.msra.mxu0 %v1808
    %1812 = vmatprep.subr.mxu0 0.0
    %1813 = vmatpush1.xpose.msra.mxu0 0.0
    %1814 = vmatprep.subr.mxu0 0.0
    %1815 = vmatpush1.xpose.msra.mxu0 0.0
    %1816 = vmatprep.subr.mxu0 0.0
    %1817 = vmatpush1.xpose.msra.mxu0 0.0
    %1818 = vmatprep.subr.mxu0 0.0
    %1819 = vmatpush1.xpose.msra.mxu0 0.0
    %1820 = vmatprep.subr.mxu0 0.0
    %1821 = vmatpush1.xpose.msra.mxu0 0.0
    %1822 = vmatprep.subr.mxu0 0.0
    %1823 = vmatpush1.xpose.msra.mxu0 0.0
    %1824 = vmatprep.subr.mxu0 0.0
    %1825 = vmatpush1.xpose.msra.mxu0 0.0
    %1826 = vmatprep.subr.mxu0 0.0
    %1827 = vmatpush1.xpose.msra.mxu0 0.0
    %1828 = vmatprep.subr.mxu0 0.0
    %1829 = vmatpush1.xpose.msra.mxu0 0.0
    %1830 = vmatprep.subr.mxu0 0.0
    %1831 = vmatpush1.xpose.msra.mxu0 0.0
    %1832 = vmatprep.subr.mxu0 0.0
    %1833 = vmatpush1.xpose.msra.mxu0 0.0
    %1834 = vmatprep.subr.mxu0 0.0
    %1835 = vmatpush1.xpose.msra.mxu0 0.0
    %1836 = vmatprep.subr.mxu0 0.0
    %1837 = vmatpush1.xpose.msra.mxu0 0.0
    %1838 = vmatprep.subr.mxu0 0.0
    %1839 = vmatpush1.xpose.msra.mxu0 0.0
    %1840 = vmatprep.subr.mxu0 0.0
    %1841 = vmatpush1.xpose.msra.mxu0 0.0
    %1842 = vmatprep.subr.mxu0 0.0
    %1843 = vmatpush1.xpose.msra.mxu0 0.0
    %1844 = vmatprep.subr.mxu0 0.0
    %1845 = vmatpush1.xpose.msra.mxu0 0.0
    %1846 = vmatprep.subr.mxu0 0.0
    %1847 = vmatpush1.xpose.msra.mxu0 0.0
    %1848 = vmatprep.subr.mxu0 0.0
    %1849 = vmatpush1.xpose.msra.mxu0 0.0
    %1850 = vmatprep.subr.mxu0 0.0
    %1851 = vmatpush1.xpose.msra.mxu0 0.0
    %1852 = vmatprep.subr.mxu0 0.0
    %1853 = vmatpush1.xpose.msra.mxu0 0.0
    %1854 = vmatprep.subr.mxu0 0.0
    %1855 = vmatpush1.xpose.msra.mxu0 0.0
    %1856 = vmatprep.subr.mxu0 0.0
    %1857 = vmatpush1.xpose.msra.mxu0 0.0
    %1858 = vmatprep.subr.mxu0 0.0
    %1859 = vmatpush1.xpose.msra.mxu0 0.0
    %1860 = vmatprep.subr.mxu0 0.0
    %1861 = vmatpush1.xpose.msra.mxu0 0.0
    %1862 = vmatprep.subr.mxu0 0.0
    %1863 = vmatpush1.xpose.msra.mxu0 0.0
    %1864 = vmatprep.subr.mxu0 0.0
    %1865 = vmatpush1.xpose.msra.mxu0 0.0
    %1866 = vmatprep.subr.mxu0 0.0
    %1867 = vmatpush1.xpose.msra.mxu0 0.0
    %1868 = vmatprep.subr.mxu0 0.0
    %1869 = vmatpush1.xpose.msra.mxu0 0.0
    %1870 = vmatprep.subr.mxu0 0.0
    %1871 = vmatpush1.xpose.msra.mxu0 0.0
    %1872 = vmatprep.subr.mxu0 0.0
    %1873 = vmatpush1.xpose.msra.mxu0 0.0
    %1874 = vmatprep.mubr.f32.mxu0 0.0
    %1875 = vmatmul.mubr.f32.gmra.mrb[0].mxu0 %v1805
    %v1876 = vpop.f32.mrb[0].mxu0
    %v1877 = vadd.f32 0.0, %v1876
    %v1878 = vpop.f32.mrb[0].mxu0
    %1879 = vdwg.mxu0
    %v1880 = vlaneseq
    %v1881 = vshrl.u32 %v1880, 7
    %v1882 = vsub.s32 0, %v1881
    %v1883 = vrot.slane %v1798, %v1882
    %1884 = vrot.lane.b32.xlu0 %v1883, 32
    %v1885 = vpop.permute.xlu0 %1884
    %v1886 = vsel %vm1596, %v1885, 0
    %v1889 = vsel %vm1596, %v1470, 0
    %1891 = vmatprep.subr.mxu0 0.0
    %1892 = vmatpush1.xpose.msra.mxu0 %v1889
    %1893 = vmatprep.subr.mxu0 0.0
    %1894 = vmatpush1.xpose.msra.mxu0 0.0
    %1895 = vmatprep.subr.mxu0 0.0
    %1896 = vmatpush1.xpose.msra.mxu0 0.0
    %1897 = vmatprep.subr.mxu0 0.0
    %1898 = vmatpush1.xpose.msra.mxu0 0.0
    %1899 = vmatprep.subr.mxu0 0.0
    %1900 = vmatpush1.xpose.msra.mxu0 0.0
    %1901 = vmatprep.subr.mxu0 0.0
    %1902 = vmatpush1.xpose.msra.mxu0 0.0
    %1903 = vmatprep.subr.mxu0 0.0
    %1904 = vmatpush1.xpose.msra.mxu0 0.0
    %1905 = vmatprep.subr.mxu0 0.0
    %1906 = vmatpush1.xpose.msra.mxu0 0.0
    %1907 = vmatprep.subr.mxu0 0.0
    %1908 = vmatpush1.xpose.msra.mxu0 0.0
    %1909 = vmatprep.subr.mxu0 0.0
    %1910 = vmatpush1.xpose.msra.mxu0 0.0
    %1911 = vmatprep.subr.mxu0 0.0
    %1912 = vmatpush1.xpose.msra.mxu0 0.0
    %1913 = vmatprep.subr.mxu0 0.0
    %1914 = vmatpush1.xpose.msra.mxu0 0.0
    %1915 = vmatprep.subr.mxu0 0.0
    %1916 = vmatpush1.xpose.msra.mxu0 0.0
    %1917 = vmatprep.subr.mxu0 0.0
    %1918 = vmatpush1.xpose.msra.mxu0 0.0
    %1919 = vmatprep.subr.mxu0 0.0
    %1920 = vmatpush1.xpose.msra.mxu0 0.0
    %1921 = vmatprep.subr.mxu0 0.0
    %1922 = vmatpush1.xpose.msra.mxu0 0.0
    %1923 = vmatprep.subr.mxu0 0.0
    %1924 = vmatpush1.xpose.msra.mxu0 0.0
    %1925 = vmatprep.subr.mxu0 0.0
    %1926 = vmatpush1.xpose.msra.mxu0 0.0
    %1927 = vmatprep.subr.mxu0 0.0
    %1928 = vmatpush1.xpose.msra.mxu0 0.0
    %1929 = vmatprep.subr.mxu0 0.0
    %1930 = vmatpush1.xpose.msra.mxu0 0.0
    %1931 = vmatprep.subr.mxu0 0.0
    %1932 = vmatpush1.xpose.msra.mxu0 0.0
    %1933 = vmatprep.subr.mxu0 0.0
    %1934 = vmatpush1.xpose.msra.mxu0 0.0
    %1935 = vmatprep.subr.mxu0 0.0
    %1936 = vmatpush1.xpose.msra.mxu0 0.0
    %1937 = vmatprep.subr.mxu0 0.0
    %1938 = vmatpush1.xpose.msra.mxu0 0.0
    %1939 = vmatprep.subr.mxu0 0.0
    %1940 = vmatpush1.xpose.msra.mxu0 0.0
    %1941 = vmatprep.subr.mxu0 0.0
    %1942 = vmatpush1.xpose.msra.mxu0 0.0
    %1943 = vmatprep.subr.mxu0 0.0
    %1944 = vmatpush1.xpose.msra.mxu0 0.0
    %1945 = vmatprep.subr.mxu0 0.0
    %1946 = vmatpush1.xpose.msra.mxu0 0.0
    %1947 = vmatprep.subr.mxu0 0.0
    %1948 = vmatpush1.xpose.msra.mxu0 0.0
    %1949 = vmatprep.subr.mxu0 0.0
    %1950 = vmatpush1.xpose.msra.mxu0 0.0
    %1951 = vmatprep.subr.mxu0 0.0
    %1952 = vmatpush1.xpose.msra.mxu0 0.0
    %1953 = vmatprep.subr.mxu0 0.0
    %1954 = vmatpush1.xpose.msra.mxu0 0.0
    %1955 = vmatprep.mubr.f32.mxu0 0.0
    %1956 = vmatmul.mubr.f32.gmra.mrb[0].mxu0 %v1886
    %v1957 = vpop.f32.mrb[0].mxu0
    %v1958 = vadd.f32 0.0, %v1957
    %v1959 = vpop.f32.mrb[0].mxu0
    %1960 = vdwg.mxu0
    %vm1961 = vcmask 57344
    %v1962 = vsel %vm1961, %v1877, -inf
    %1963 = vmax.xlane.f32.xlu0 %v1962
    %v1964 = vpop.xlane.xlu0 %1963
    %v1965 = vsel %vm1961, %v1958, -inf
    %1966 = vmax.xlane.f32.xlu0 %v1965
    %v1967 = vpop.xlane.xlu0 %1966
    %v1968 = vsub.f32 %v1877, %v1964
    %v1969 = vsub.f32 %v1958, %v1967
    %v1970 = vmul.f32 %v1968, 1.442695
    %v1971 = vpow.pop %v1970
    %v1972 = vmul.f32 %v1969, 1.442695
    %v1973 = vpow.pop %v1972
    %v1974 = vsel %vm1961, %v1971, 0.0
    %1975 = vadd.xlane.f32.xlu0 %v1974
    %v1976 = vpop.xlane.xlu0 %1975
    %v1977 = vsel %vm1961, %v1973, 0.0
    %1978 = vadd.xlane.f32.xlu0 %v1977
    %v1979 = vpop.xlane.xlu0 %1978
    %v1980 = vrcp.pop %v1976
    %v1981 = vrcp.pop %v1979
    %v1982 = vmul.f32 %v1971, %v1980
    %v1983 = vmul.f32 %v1973, %v1981
    %vm1984 = vcmask 64512
    %v1986 = vsel %vm1984, %v1982, 0
    %1988 = vmatprep.subr.mxu0 0.0
    %1989 = vmatpush1.msra.mxu0 %v1469
    %1990 = vmatprep.subr.mxu0 0.0
    %1991 = vmatpush1.msra.mxu0 0.0
    %1992 = vmatprep.subr.mxu0 0.0
    %1993 = vmatpush1.msra.mxu0 0.0
    %1994 = vmatprep.subr.mxu0 0.0
    %1995 = vmatpush1.msra.mxu0 0.0
    %1996 = vmatprep.subr.mxu0 0.0
    %1997 = vmatpush1.msra.mxu0 0.0
    %1998 = vmatprep.subr.mxu0 0.0
    %1999 = vmatpush1.msra.mxu0 0.0
    %2000 = vmatprep.subr.mxu0 0.0
    %2001 = vmatpush1.msra.mxu0 0.0
    %2002 = vmatprep.subr.mxu0 0.0
    %2003 = vmatpush1.msra.mxu0 0.0
    %2004 = vmatprep.subr.mxu0 0.0
    %2005 = vmatpush1.msra.mxu0 0.0
    %2006 = vmatprep.subr.mxu0 0.0
    %2007 = vmatpush1.msra.mxu0 0.0
    %2008 = vmatprep.subr.mxu0 0.0
    %2009 = vmatpush1.msra.mxu0 0.0
    %2010 = vmatprep.subr.mxu0 0.0
    %2011 = vmatpush1.msra.mxu0 0.0
    %2012 = vmatprep.subr.mxu0 0.0
    %2013 = vmatpush1.msra.mxu0 0.0
    %2014 = vmatprep.subr.mxu0 0.0
    %2015 = vmatpush1.msra.mxu0 0.0
    %2016 = vmatprep.subr.mxu0 0.0
    %2017 = vmatpush1.msra.mxu0 0.0
    %2018 = vmatprep.subr.mxu0 0.0
    %2019 = vmatpush1.msra.mxu0 0.0
    %2020 = vmatprep.subr.mxu0 0.0
    %2021 = vmatpush1.msra.mxu0 0.0
    %2022 = vmatprep.subr.mxu0 0.0
    %2023 = vmatpush1.msra.mxu0 0.0
    %2024 = vmatprep.subr.mxu0 0.0
    %2025 = vmatpush1.msra.mxu0 0.0
    %2026 = vmatprep.subr.mxu0 0.0
    %2027 = vmatpush1.msra.mxu0 0.0
    %2028 = vmatprep.subr.mxu0 0.0
    %2029 = vmatpush1.msra.mxu0 0.0
    %2030 = vmatprep.subr.mxu0 0.0
    %2031 = vmatpush1.msra.mxu0 0.0
    %2032 = vmatprep.subr.mxu0 0.0
    %2033 = vmatpush1.msra.mxu0 0.0
    %2034 = vmatprep.subr.mxu0 0.0
    %2035 = vmatpush1.msra.mxu0 0.0
    %2036 = vmatprep.subr.mxu0 0.0
    %2037 = vmatpush1.msra.mxu0 0.0
    %2038 = vmatprep.subr.mxu0 0.0
    %2039 = vmatpush1.msra.mxu0 0.0
    %2040 = vmatprep.subr.mxu0 0.0
    %2041 = vmatpush1.msra.mxu0 0.0
    %2042 = vmatprep.subr.mxu0 0.0
    %2043 = vmatpush1.msra.mxu0 0.0
    %2044 = vmatprep.subr.mxu0 0.0
    %2045 = vmatpush1.msra.mxu0 0.0
    %2046 = vmatprep.subr.mxu0 0.0
    %2047 = vmatpush1.msra.mxu0 0.0
    %2048 = vmatprep.subr.mxu0 0.0
    %2049 = vmatpush1.msra.mxu0 0.0
    %2050 = vmatprep.subr.mxu0 0.0
    %2051 = vmatpush1.msra.mxu0 0.0
    %2052 = vmatprep.mubr.f32.mxu0 0.0
    %2053 = vmatmul.mubr.f32.gmra.mrb[0].mxu0 %v1986
    %v2054 = vpop.f32.mrb[0].mxu0
    %v2055 = vadd.f32 0.0, %v2054
    %v2056 = vpop.f32.mrb[0].mxu0
    %2057 = vdwg.mxu0
    %v2059 = vsel %vm1984, %v1983, 0
    %2061 = vmatprep.subr.mxu0 0.0
    %2062 = vmatpush1.msra.mxu0 %v1470
    %2063 = vmatprep.subr.mxu0 0.0
    %2064 = vmatpush1.msra.mxu0 0.0
    %2065 = vmatprep.subr.mxu0 0.0
    %2066 = vmatpush1.msra.mxu0 0.0
    %2067 = vmatprep.subr.mxu0 0.0
    %2068 = vmatpush1.msra.mxu0 0.0
    %2069 = vmatprep.subr.mxu0 0.0
    %2070 = vmatpush1.msra.mxu0 0.0
    %2071 = vmatprep.subr.mxu0 0.0
    %2072 = vmatpush1.msra.mxu0 0.0
    %2073 = vmatprep.subr.mxu0 0.0
    %2074 = vmatpush1.msra.mxu0 0.0
    %2075 = vmatprep.subr.mxu0 0.0
    %2076 = vmatpush1.msra.mxu0 0.0
    %2077 = vmatprep.subr.mxu0 0.0
    %2078 = vmatpush1.msra.mxu0 0.0
    %2079 = vmatprep.subr.mxu0 0.0
    %2080 = vmatpush1.msra.mxu0 0.0
    %2081 = vmatprep.subr.mxu0 0.0
    %2082 = vmatpush1.msra.mxu0 0.0
    %2083 = vmatprep.subr.mxu0 0.0
    %2084 = vmatpush1.msra.mxu0 0.0
    %2085 = vmatprep.subr.mxu0 0.0
    %2086 = vmatpush1.msra.mxu0 0.0
    %2087 = vmatprep.subr.mxu0 0.0
    %2088 = vmatpush1.msra.mxu0 0.0
    %2089 = vmatprep.subr.mxu0 0.0
    %2090 = vmatpush1.msra.mxu0 0.0
    %2091 = vmatprep.subr.mxu0 0.0
    %2092 = vmatpush1.msra.mxu0 0.0
    %2093 = vmatprep.subr.mxu0 0.0
    %2094 = vmatpush1.msra.mxu0 0.0
    %2095 = vmatprep.subr.mxu0 0.0
    %2096 = vmatpush1.msra.mxu0 0.0
    %2097 = vmatprep.subr.mxu0 0.0
    %2098 = vmatpush1.msra.mxu0 0.0
    %2099 = vmatprep.subr.mxu0 0.0
    %2100 = vmatpush1.msra.mxu0 0.0
    %2101 = vmatprep.subr.mxu0 0.0
    %2102 = vmatpush1.msra.mxu0 0.0
    %2103 = vmatprep.subr.mxu0 0.0
    %2104 = vmatpush1.msra.mxu0 0.0
    %2105 = vmatprep.subr.mxu0 0.0
    %2106 = vmatpush1.msra.mxu0 0.0
    %2107 = vmatprep.subr.mxu0 0.0
    %2108 = vmatpush1.msra.mxu0 0.0
    %2109 = vmatprep.subr.mxu0 0.0
    %2110 = vmatpush1.msra.mxu0 0.0
    %2111 = vmatprep.subr.mxu0 0.0
    %2112 = vmatpush1.msra.mxu0 0.0
    %2113 = vmatprep.subr.mxu0 0.0
    %2114 = vmatpush1.msra.mxu0 0.0
    %2115 = vmatprep.subr.mxu0 0.0
    %2116 = vmatpush1.msra.mxu0 0.0
    %2117 = vmatprep.subr.mxu0 0.0
    %2118 = vmatpush1.msra.mxu0 0.0
    %2119 = vmatprep.subr.mxu0 0.0
    %2120 = vmatpush1.msra.mxu0 0.0
    %2121 = vmatprep.subr.mxu0 0.0
    %2122 = vmatpush1.msra.mxu0 0.0
    %2123 = vmatprep.subr.mxu0 0.0
    %2124 = vmatpush1.msra.mxu0 0.0
    %2125 = vmatprep.mubr.f32.mxu0 0.0
    %2126 = vmatmul.mubr.f32.gmra.mrb[0].mxu0 %v2059
    %v2127 = vpop.f32.mrb[0].mxu0
    %v2128 = vadd.f32 0.0, %v2127
    %v2129 = vpop.f32.mrb[0].mxu0
    %2130 = vdwg.mxu0
    %2131 = vrot.lane.b32.xlu0 %v1775, 32
    %v2132 = vpop.permute.xlu0 %2131
    %v2133 = vsel %vm1596, %v2132, 0
    %2135 = vmatprep.subr.mxu0 0.0
    %2136 = vmatpush1.msra.mxu0 %v1586
    %2137 = vmatprep.subr.mxu0 0.0
    %2138 = vmatpush1.msra.mxu0 %v1587
    %2139 = vmatprep.subr.mxu0 0.0
    %2140 = vmatpush1.msra.mxu0 %v1588
    %2141 = vmatprep.subr.mxu0 0.0
    %2142 = vmatpush1.msra.mxu0 %v1589
    %2143 = vmatprep.subr.mxu0 0.0
    %2144 = vmatpush1.msra.mxu0 0.0
    %2145 = vmatprep.subr.mxu0 0.0
    %2146 = vmatpush1.msra.mxu0 0.0
    %2147 = vmatprep.subr.mxu0 0.0
    %2148 = vmatpush1.msra.mxu0 0.0
    %2149 = vmatprep.subr.mxu0 0.0
    %2150 = vmatpush1.msra.mxu0 0.0
    %2151 = vmatprep.subr.mxu0 0.0
    %2152 = vmatpush1.msra.mxu0 0.0
    %2153 = vmatprep.subr.mxu0 0.0
    %2154 = vmatpush1.msra.mxu0 0.0
    %2155 = vmatprep.subr.mxu0 0.0
    %2156 = vmatpush1.msra.mxu0 0.0
    %2157 = vmatprep.subr.mxu0 0.0
    %2158 = vmatpush1.msra.mxu0 0.0
    %2159 = vmatprep.subr.mxu0 0.0
    %2160 = vmatpush1.msra.mxu0 0.0
    %2161 = vmatprep.subr.mxu0 0.0
    %2162 = vmatpush1.msra.mxu0 0.0
    %2163 = vmatprep.subr.mxu0 0.0
    %2164 = vmatpush1.msra.mxu0 0.0
    %2165 = vmatprep.subr.mxu0 0.0
    %2166 = vmatpush1.msra.mxu0 0.0
    %2167 = vmatprep.subr.mxu0 0.0
    %2168 = vmatpush1.msra.mxu0 0.0
    %2169 = vmatprep.subr.mxu0 0.0
    %2170 = vmatpush1.msra.mxu0 0.0
    %2171 = vmatprep.subr.mxu0 0.0
    %2172 = vmatpush1.msra.mxu0 0.0
    %2173 = vmatprep.subr.mxu0 0.0
    %2174 = vmatpush1.msra.mxu0 0.0
    %2175 = vmatprep.subr.mxu0 0.0
    %2176 = vmatpush1.msra.mxu0 0.0
    %2177 = vmatprep.subr.mxu0 0.0
    %2178 = vmatpush1.msra.mxu0 0.0
    %2179 = vmatprep.subr.mxu0 0.0
    %2180 = vmatpush1.msra.mxu0 0.0
    %2181 = vmatprep.subr.mxu0 0.0
    %2182 = vmatpush1.msra.mxu0 0.0
    %2183 = vmatprep.subr.mxu0 0.0
    %2184 = vmatpush1.msra.mxu0 0.0
    %2185 = vmatprep.subr.mxu0 0.0
    %2186 = vmatpush1.msra.mxu0 0.0
    %2187 = vmatprep.subr.mxu0 0.0
    %2188 = vmatpush1.msra.mxu0 0.0
    %2189 = vmatprep.subr.mxu0 0.0
    %2190 = vmatpush1.msra.mxu0 0.0
    %2191 = vmatprep.subr.mxu0 0.0
    %2192 = vmatpush1.msra.mxu0 0.0
    %2193 = vmatprep.subr.mxu0 0.0
    %2194 = vmatpush1.msra.mxu0 0.0
    %2195 = vmatprep.subr.mxu0 0.0
    %2196 = vmatpush1.msra.mxu0 0.0
    %2197 = vmatprep.subr.mxu0 0.0
    %2198 = vmatpush1.msra.mxu0 0.0
    %2199 = vmatprep.mubr.f32.mxu0 0.0
    %2200 = vmatmul.mubr.f32.gmra.mrb[0].mxu0 %v2133
    %v2201 = vpop.f32.mrb[0].mxu0
    %v2202 = vadd.f32 0.0, %v2201
    %v2203 = vpop.f32.mrb[0].mxu0
    %2204 = vdwg.mxu0
    %v2207 = vrot.slane %v2128, 7
    %vm2208 = vcmask 1041409
    %v2209 = vsel %vm2208, %v2207, %v2055
    %v2210 = vsel %vm1596, %v2209, 0
    %2212 = vmatprep.subr.mxu0 0.0
    %2213 = vmatpush1.msra.mxu0 %v1582
    %2214 = vmatprep.subr.mxu0 0.0
    %2215 = vmatpush1.msra.mxu0 %v1583
    %2216 = vmatprep.subr.mxu0 0.0
    %2217 = vmatpush1.msra.mxu0 %v1584
    %2218 = vmatprep.subr.mxu0 0.0
    %2219 = vmatpush1.msra.mxu0 %v1585
    %2220 = vmatprep.subr.mxu0 0.0
    %2221 = vmatpush1.msra.mxu0 0.0
    %2222 = vmatprep.subr.mxu0 0.0
    %2223 = vmatpush1.msra.mxu0 0.0
    %2224 = vmatprep.subr.mxu0 0.0
    %2225 = vmatpush1.msra.mxu0 0.0
    %2226 = vmatprep.subr.mxu0 0.0
    %2227 = vmatpush1.msra.mxu0 0.0
    %2228 = vmatprep.subr.mxu0 0.0
    %2229 = vmatpush1.msra.mxu0 0.0
    %2230 = vmatprep.subr.mxu0 0.0
    %2231 = vmatpush1.msra.mxu0 0.0
    %2232 = vmatprep.subr.mxu0 0.0
    %2233 = vmatpush1.msra.mxu0 0.0
    %2234 = vmatprep.subr.mxu0 0.0
    %2235 = vmatpush1.msra.mxu0 0.0
    %2236 = vmatprep.subr.mxu0 0.0
    %2237 = vmatpush1.msra.mxu0 0.0
    %2238 = vmatprep.subr.mxu0 0.0
    %2239 = vmatpush1.msra.mxu0 0.0
    %2240 = vmatprep.subr.mxu0 0.0
    %2241 = vmatpush1.msra.mxu0 0.0
    %2242 = vmatprep.subr.mxu0 0.0
    %2243 = vmatpush1.msra.mxu0 0.0
    %2244 = vmatprep.subr.mxu0 0.0
    %2245 = vmatpush1.msra.mxu0 0.0
    %2246 = vmatprep.subr.mxu0 0.0
    %2247 = vmatpush1.msra.mxu0 0.0
    %2248 = vmatprep.subr.mxu0 0.0
    %2249 = vmatpush1.msra.mxu0 0.0
    %2250 = vmatprep.subr.mxu0 0.0
    %2251 = vmatpush1.msra.mxu0 0.0
    %2252 = vmatprep.subr.mxu0 0.0
    %2253 = vmatpush1.msra.mxu0 0.0
    %2254 = vmatprep.subr.mxu0 0.0
    %2255 = vmatpush1.msra.mxu0 0.0
    %2256 = vmatprep.subr.mxu0 0.0
    %2257 = vmatpush1.msra.mxu0 0.0
    %2258 = vmatprep.subr.mxu0 0.0
    %2259 = vmatpush1.msra.mxu0 0.0
    %2260 = vmatprep.subr.mxu0 0.0
    %2261 = vmatpush1.msra.mxu0 0.0
    %2262 = vmatprep.subr.mxu0 0.0
    %2263 = vmatpush1.msra.mxu0 0.0
    %2264 = vmatprep.subr.mxu0 0.0
    %2265 = vmatpush1.msra.mxu0 0.0
    %2266 = vmatprep.subr.mxu0 0.0
    %2267 = vmatpush1.msra.mxu0 0.0
    %2268 = vmatprep.subr.mxu0 0.0
    %2269 = vmatpush1.msra.mxu0 0.0
    %2270 = vmatprep.subr.mxu0 0.0
    %2271 = vmatpush1.msra.mxu0 0.0
    %2272 = vmatprep.subr.mxu0 0.0
    %2273 = vmatpush1.msra.mxu0 0.0
    %2274 = vmatprep.subr.mxu0 0.0
    %2275 = vmatpush1.msra.mxu0 0.0
    %2276 = vmatprep.mubr.f32.mxu0 0.0
    %2277 = vmatmul.mubr.f32.gmra.mrb[0].mxu0 %v2210
    %v2278 = vpop.f32.mrb[0].mxu0
    %v2279 = vadd.f32 %v2202, %v2278
    %v2280 = vpop.f32.mrb[0].mxu0
    %2281 = vdwg.mxu0
    %v2283 = vlaneseq
    %v2284 = vshrl.u32 %v2283, 7
    %v2285 = vsub.s32 0, %v2284
    %v2286 = vrot.slane %v1590, %v2285
    %v2288 = vadd.f32 %v2279, %v2286
    %v2289 = vtanh.pop %v2288
    %v2291 = vlaneseq
    %v2292 = vshrl.u32 %v2291, 7
    %v2293 = vsub.s32 0, %v2292
    %v2294 = vrot.slane %v1595, %v2293
    %v2297 = vsel %vm1596, %v2289, 0
    %2299 = vmatprep.subr.mxu0 0.0
    %2300 = vmatpush1.msra.mxu0 %v1591
    %2301 = vmatprep.subr.mxu0 0.0
    %2302 = vmatpush1.msra.mxu0 %v1592
    %2303 = vmatprep.subr.mxu0 0.0
    %2304 = vmatpush1.msra.mxu0 %v1593
    %2305 = vmatprep.subr.mxu0 0.0
    %2306 = vmatpush1.msra.mxu0 %v1594
    %2307 = vmatprep.subr.mxu0 0.0
    %2308 = vmatpush1.msra.mxu0 0.0
    %2309 = vmatprep.subr.mxu0 0.0
    %2310 = vmatpush1.msra.mxu0 0.0
    %2311 = vmatprep.subr.mxu0 0.0
    %2312 = vmatpush1.msra.mxu0 0.0
    %2313 = vmatprep.subr.mxu0 0.0
    %2314 = vmatpush1.msra.mxu0 0.0
    %2315 = vmatprep.subr.mxu0 0.0
    %2316 = vmatpush1.msra.mxu0 0.0
    %2317 = vmatprep.subr.mxu0 0.0
    %2318 = vmatpush1.msra.mxu0 0.0
    %2319 = vmatprep.subr.mxu0 0.0
    %2320 = vmatpush1.msra.mxu0 0.0
    %2321 = vmatprep.subr.mxu0 0.0
    %2322 = vmatpush1.msra.mxu0 0.0
    %2323 = vmatprep.subr.mxu0 0.0
    %2324 = vmatpush1.msra.mxu0 0.0
    %2325 = vmatprep.subr.mxu0 0.0
    %2326 = vmatpush1.msra.mxu0 0.0
    %2327 = vmatprep.subr.mxu0 0.0
    %2328 = vmatpush1.msra.mxu0 0.0
    %2329 = vmatprep.subr.mxu0 0.0
    %2330 = vmatpush1.msra.mxu0 0.0
    %2331 = vmatprep.subr.mxu0 0.0
    %2332 = vmatpush1.msra.mxu0 0.0
    %2333 = vmatprep.subr.mxu0 0.0
    %2334 = vmatpush1.msra.mxu0 0.0
    %2335 = vmatprep.subr.mxu0 0.0
    %2336 = vmatpush1.msra.mxu0 0.0
    %2337 = vmatprep.subr.mxu0 0.0
    %2338 = vmatpush1.msra.mxu0 0.0
    %2339 = vmatprep.subr.mxu0 0.0
    %2340 = vmatpush1.msra.mxu0 0.0
    %2341 = vmatprep.subr.mxu0 0.0
    %2342 = vmatpush1.msra.mxu0 0.0
    %2343 = vmatprep.subr.mxu0 0.0
    %2344 = vmatpush1.msra.mxu0 0.0
    %2345 = vmatprep.subr.mxu0 0.0
    %2346 = vmatpush1.msra.mxu0 0.0
    %2347 = vmatprep.subr.mxu0 0.0
    %2348 = vmatpush1.msra.mxu0 0.0
    %2349 = vmatprep.subr.mxu0 0.0
    %2350 = vmatpush1.msra.mxu0 0.0
    %2351 = vmatprep.subr.mxu0 0.0
    %2352 = vmatpush1.msra.mxu0 0.0
    %2353 = vmatprep.subr.mxu0 0.0
    %2354 = vmatpush1.msra.mxu0 0.0
    %2355 = vmatprep.subr.mxu0 0.0
    %2356 = vmatpush1.msra.mxu0 0.0
    %2357 = vmatprep.subr.mxu0 0.0
    %2358 = vmatpush1.msra.mxu0 0.0
    %2359 = vmatprep.subr.mxu0 0.0
    %2360 = vmatpush1.msra.mxu0 0.0
    %2361 = vmatprep.subr.mxu0 0.0
    %2362 = vmatpush1.msra.mxu0 0.0
    %2363 = vmatprep.mubr.f32.mxu0 0.0
    %2364 = vmatmul.mubr.f32.gmra.mrb[0].mxu0 %v2297
    %v2365 = vpop.f32.mrb[0].mxu0
    %v2366 = vadd.f32 %v2294, %v2365
    %v2367 = vpop.f32.mrb[0].mxu0
    %2368 = vdwg.mxu0
    %vm2369 = vcmask 1041408
    %v2370 = vsel %vm2369, %v2366, -inf
    %2371 = vmax.xlane.f32.xlu0 %v2370
    %v2372 = vpop.xlane.xlu0 %2371
    %v2373 = vsub.f32 %v2366, %v2372
    %v2374 = vmul.f32 %v2373, 1.442695
    %v2375 = vpow.pop %v2374
    %v2376 = vsel %vm2369, %v2375, 0.0
    %2377 = vadd.xlane.f32.xlu0 %v2376
    %v2378 = vpop.xlane.xlu0 %2377
    %v2379 = vlog2.pop %v2378
    %v2380 = vmul.f32 %v2379, 0.6931472
    %v2381 = vadd.f32 %v2372, %v2380
    %v2382 = vsub.f32 %v2366, %v2381
    %v2383 = vld [vmem:[%s2] sm:$0x3]
    %v2384 = vmul.f32 %v2382, %v2383
    %v2385 = vsel %vm2369, %v2384, 0.0
    %2386 = vadd.xlane.f32.xlu0 %v2385
    %v2387 = vpop.xlane.xlu0 %2386
    %v2388 = vld [vmem:[%s3] sm:$0x3]
    %v2389 = vsub.f32 0.0, %v2387
    %v2390 = vmul.f32 %v2389, %v2388
    %vm2391 = vcmask 1024
    %v2392 = vsel %vm2391, %v2390, 0.0
    %2393 = vadd.xlane.f32.xlu0 %v2392
    %v2394 = vpop.xlane.xlu0 %2393
    %v2395 = vrot.slane %v2394, 4
    %v2396 = vadd.f32 %v2394, %v2395
    %v2397 = vrot.slane %v2396, 2
    %v2398 = vadd.f32 %v2396, %v2397
    %v2399 = vrot.slane %v2398, 1
    %v2400 = vadd.f32 %v2398, %v2399
    %s2401 = vtos %v2400
    %v2402 = vstv %s2401
    %v2403 = vsel %vm2391, %v2388, 0.0
    %2404 = vadd.xlane.f32.xlu0 %v2403
    %v2405 = vpop.xlane.xlu0 %2404
    %v2406 = vrot.slane %v2405, 4
    %v2407 = vadd.f32 %v2405, %v2406
    %v2408 = vrot.slane %v2407, 2
    %v2409 = vadd.f32 %v2407, %v2408
    %v2410 = vrot.slane %v2409, 1
    %v2411 = vadd.f32 %v2409, %v2410
    %s2412 = vtos %v2411
    %v2413 = vstv %s2412
    %v2414 = vmax.f32 %v2413, 1.0
    %v2415 = vrcp.pop %v2414
    %v2416 = vmul.f32 %v2402, %v2415
    %v2417 = vadd.f32 %v2416, 0.0
    %2418 = vmatprep.subr.mxu0 0.0
    %2419 = vmatpush1.msra.mxu0 %v1574
    %2420 = vmatprep.subr.mxu0 0.0
    %2421 = vmatpush1.msra.mxu0 %v1575
    %2422 = vmatprep.subr.mxu0 0.0
    %2423 = vmatpush1.msra.mxu0 %v1576
    %2424 = vmatprep.subr.mxu0 0.0
    %2425 = vmatpush1.msra.mxu0 %v1577
    %2426 = vmatprep.subr.mxu0 0.0
    %2427 = vmatpush1.msra.mxu0 0.0
    %2428 = vmatprep.subr.mxu0 0.0
    %2429 = vmatpush1.msra.mxu0 0.0
    %2430 = vmatprep.subr.mxu0 0.0
    %2431 = vmatpush1.msra.mxu0 0.0
    %2432 = vmatprep.subr.mxu0 0.0
    %2433 = vmatpush1.msra.mxu0 0.0
    %2434 = vmatprep.subr.mxu0 0.0
    %2435 = vmatpush1.msra.mxu0 0.0
    %2436 = vmatprep.subr.mxu0 0.0
    %2437 = vmatpush1.msra.mxu0 0.0
    %2438 = vmatprep.subr.mxu0 0.0
    %2439 = vmatpush1.msra.mxu0 0.0
    %2440 = vmatprep.subr.mxu0 0.0
    %2441 = vmatpush1.msra.mxu0 0.0
    %2442 = vmatprep.subr.mxu0 0.0
    %2443 = vmatpush1.msra.mxu0 0.0
    %2444 = vmatprep.subr.mxu0 0.0
    %2445 = vmatpush1.msra.mxu0 0.0
    %2446 = vmatprep.subr.mxu0 0.0
    %2447 = vmatpush1.msra.mxu0 0.0
    %2448 = vmatprep.subr.mxu0 0.0
    %2449 = vmatpush1.msra.mxu0 0.0
    %2450 = vmatprep.subr.mxu0 0.0
    %2451 = vmatpush1.msra.mxu0 0.0
    %2452 = vmatprep.subr.mxu0 0.0
    %2453 = vmatpush1.msra.mxu0 0.0
    %2454 = vmatprep.subr.mxu0 0.0
    %2455 = vmatpush1.msra.mxu0 0.0
    %2456 = vmatprep.subr.mxu0 0.0
    %2457 = vmatpush1.msra.mxu0 0.0
    %2458 = vmatprep.subr.mxu0 0.0
    %2459 = vmatpush1.msra.mxu0 0.0
    %2460 = vmatprep.subr.mxu0 0.0
    %2461 = vmatpush1.msra.mxu0 0.0
    %2462 = vmatprep.subr.mxu0 0.0
    %2463 = vmatpush1.msra.mxu0 0.0
    %2464 = vmatprep.subr.mxu0 0.0
    %2465 = vmatpush1.msra.mxu0 0.0
    %2466 = vmatprep.subr.mxu0 0.0
    %2467 = vmatpush1.msra.mxu0 0.0
    %2468 = vmatprep.subr.mxu0 0.0
    %2469 = vmatpush1.msra.mxu0 0.0
    %2470 = vmatprep.subr.mxu0 0.0
    %2471 = vmatpush1.msra.mxu0 0.0
    %2472 = vmatprep.subr.mxu0 0.0
    %2473 = vmatpush1.msra.mxu0 0.0
    %2474 = vmatprep.subr.mxu0 0.0
    %2475 = vmatpush1.msra.mxu0 0.0
    %2476 = vmatprep.subr.mxu0 0.0
    %2477 = vmatpush1.msra.mxu0 0.0
    %2478 = vmatprep.subr.mxu0 0.0
    %2479 = vmatpush1.msra.mxu0 0.0
    %2480 = vmatprep.subr.mxu0 0.0
    %2481 = vmatpush1.msra.mxu0 0.0
    %2482 = vmatprep.mubr.f32.mxu0 0.0
    %2483 = vmatmul.mubr.f32.gmra.mrb[0].mxu0 %v2210
    %v2484 = vpop.f32.mrb[0].mxu0
    %v2485 = vadd.f32 0.0, %v2484
    %v2486 = vpop.f32.mrb[0].mxu0
    %2487 = vdwg.mxu0
    %v2489 = vrot.slane %v2485, 6
    %v2491 = vadd.f32 %v1566, %v2489
    %2492 = vmatprep.subr.mxu0 0.0
    %2493 = vmatpush1.msra.mxu0 %v1578
    %2494 = vmatprep.subr.mxu0 0.0
    %2495 = vmatpush1.msra.mxu0 %v1579
    %2496 = vmatprep.subr.mxu0 0.0
    %2497 = vmatpush1.msra.mxu0 %v1580
    %2498 = vmatprep.subr.mxu0 0.0
    %2499 = vmatpush1.msra.mxu0 %v1581
    %2500 = vmatprep.subr.mxu0 0.0
    %2501 = vmatpush1.msra.mxu0 0.0
    %2502 = vmatprep.subr.mxu0 0.0
    %2503 = vmatpush1.msra.mxu0 0.0
    %2504 = vmatprep.subr.mxu0 0.0
    %2505 = vmatpush1.msra.mxu0 0.0
    %2506 = vmatprep.subr.mxu0 0.0
    %2507 = vmatpush1.msra.mxu0 0.0
    %2508 = vmatprep.subr.mxu0 0.0
    %2509 = vmatpush1.msra.mxu0 0.0
    %2510 = vmatprep.subr.mxu0 0.0
    %2511 = vmatpush1.msra.mxu0 0.0
    %2512 = vmatprep.subr.mxu0 0.0
    %2513 = vmatpush1.msra.mxu0 0.0
    %2514 = vmatprep.subr.mxu0 0.0
    %2515 = vmatpush1.msra.mxu0 0.0
    %2516 = vmatprep.subr.mxu0 0.0
    %2517 = vmatpush1.msra.mxu0 0.0
    %2518 = vmatprep.subr.mxu0 0.0
    %2519 = vmatpush1.msra.mxu0 0.0
    %2520 = vmatprep.subr.mxu0 0.0
    %2521 = vmatpush1.msra.mxu0 0.0
    %2522 = vmatprep.subr.mxu0 0.0
    %2523 = vmatpush1.msra.mxu0 0.0
    %2524 = vmatprep.subr.mxu0 0.0
    %2525 = vmatpush1.msra.mxu0 0.0
    %2526 = vmatprep.subr.mxu0 0.0
    %2527 = vmatpush1.msra.mxu0 0.0
    %2528 = vmatprep.subr.mxu0 0.0
    %2529 = vmatpush1.msra.mxu0 0.0
    %2530 = vmatprep.subr.mxu0 0.0
    %2531 = vmatpush1.msra.mxu0 0.0
    %2532 = vmatprep.subr.mxu0 0.0
    %2533 = vmatpush1.msra.mxu0 0.0
    %2534 = vmatprep.subr.mxu0 0.0
    %2535 = vmatpush1.msra.mxu0 0.0
    %2536 = vmatprep.subr.mxu0 0.0
    %2537 = vmatpush1.msra.mxu0 0.0
    %2538 = vmatprep.subr.mxu0 0.0
    %2539 = vmatpush1.msra.mxu0 0.0
    %2540 = vmatprep.subr.mxu0 0.0
    %2541 = vmatpush1.msra.mxu0 0.0
    %2542 = vmatprep.subr.mxu0 0.0
    %2543 = vmatpush1.msra.mxu0 0.0
    %2544 = vmatprep.subr.mxu0 0.0
    %2545 = vmatpush1.msra.mxu0 0.0
    %2546 = vmatprep.subr.mxu0 0.0
    %2547 = vmatpush1.msra.mxu0 0.0
    %2548 = vmatprep.subr.mxu0 0.0
    %2549 = vmatpush1.msra.mxu0 0.0
    %2550 = vmatprep.subr.mxu0 0.0
    %2551 = vmatpush1.msra.mxu0 0.0
    %2552 = vmatprep.subr.mxu0 0.0
    %2553 = vmatpush1.msra.mxu0 0.0
    %2554 = vmatprep.subr.mxu0 0.0
    %2555 = vmatpush1.msra.mxu0 0.0
    %2556 = vmatprep.mubr.f32.mxu0 0.0
    %2557 = vmatmul.mubr.f32.gmra.mrb[0].mxu0 %v2133
    %v2558 = vpop.f32.mrb[0].mxu0
    %v2559 = vadd.f32 0.0, %v2558
    %v2560 = vpop.f32.mrb[0].mxu0
    %2561 = vdwg.mxu0
    %v2563 = vrot.slane %v2559, 6
    %v2565 = vadd.f32 %v2491, %v2563
    %v2566 = vxor.u32 %v2565, 2147483648
    %v2567 = vmul.f32 %v2566, 1.442695
    %v2568 = vpow.pop %v2567
    %v2569 = vadd.f32 %v2568, 1.0
    %v2570 = vrcp.pop %v2569
    %v2571 = vmul.f32 1.0, %v2570
    %v2572 = vtanh.pop %v2565
    %v2574 = vrot.slane %v1769, 6
    %v2576 = vmul.f32 %v2571, %v2574
    %2578 = vrot.lane.b32.xlu0 %v2572, 64
    %v2579 = vpop.permute.xlu0 %2578
    %v2581 = vmul.f32 %v2571, %v2579
    %2583 = vrot.lane.b32.xlu0 %v2581, 32
    %v2584 = vpop.permute.xlu0 %2583
    %v2586 = vadd.f32 %v2576, %v2584
    %v2587 = vtanh.pop %v2586
    %2589 = vrot.lane.b32.xlu0 %v2587, 64
    %v2590 = vpop.permute.xlu0 %2589
    %v2592 = vmul.f32 %v2571, %v2590
    %v2595 = vunpack.c.l.s4 1966171168
    %v2596 = vunpack.c.0.s8 %v2595
    %v2597 = vlaneseq
    %v2598 = vshrl.u32 %v2597, 7
    %v2599 = vsub.s32 %v2596, %v2598
    %v2600 = vrot.slane %v2592, %v2599
    %v2601 = vcombine.high %v2600, %v2600
    %v2603 = vunpack.c.l.s4 1966171168
    %v2604 = vunpack.c.0.s8 %v2603
    %v2605 = vlaneseq
    %v2606 = vshrl.u32 %v2605, 7
    %v2607 = vsub.s32 %v2604, %v2606
    %v2608 = vrot.slane %v2600, %v2607
    %v2610 = vunpack.c.l.s4 1966171168
    %v2611 = vunpack.c.0.s8 %v2610
    %v2612 = vlaneseq
    %v2613 = vshrl.u32 %v2612, 7
    %v2614 = vsub.s32 %v2611, %v2613
    %v2615 = vrot.slane %v2601, %v2614
    %v2616 = vcombine.high %v2608, %v2608
    %v2617 = vcombine.high %v2615, %v2615
    %v2618 = vlaneseq
    %v2619 = vshrl.u32 %v2618, 7
    %v2620 = vsub.s32 0, %v2619
    %v2621 = vrot.slane %v2616, %v2620
    %2622 = vrot.lane.b32.xlu0 %v2621, 32
    %v2623 = vpop.permute.xlu0 %2622
    %v2624 = vsel %vm1596, %v2623, 0
    %2626 = vmatprep.subr.mxu0 0.0
    %2627 = vmatpush1.xpose.msra.mxu0 %v1808
    %2628 = vmatprep.subr.mxu0 0.0
    %2629 = vmatpush1.xpose.msra.mxu0 0.0
    %2630 = vmatprep.subr.mxu0 0.0
    %2631 = vmatpush1.xpose.msra.mxu0 0.0
    %2632 = vmatprep.subr.mxu0 0.0
    %2633 = vmatpush1.xpose.msra.mxu0 0.0
    %2634 = vmatprep.subr.mxu0 0.0
    %2635 = vmatpush1.xpose.msra.mxu0 0.0
    %2636 = vmatprep.subr.mxu0 0.0
    %2637 = vmatpush1.xpose.msra.mxu0 0.0
    %2638 = vmatprep.subr.mxu0 0.0
    %2639 = vmatpush1.xpose.msra.mxu0 0.0
    %2640 = vmatprep.subr.mxu0 0.0
    %2641 = vmatpush1.xpose.msra.mxu0 0.0
    %2642 = vmatprep.subr.mxu0 0.0
    %2643 = vmatpush1.xpose.msra.mxu0 0.0
    %2644 = vmatprep.subr.mxu0 0.0
    %2645 = vmatpush1.xpose.msra.mxu0 0.0
    %2646 = vmatprep.subr.mxu0 0.0
    %2647 = vmatpush1.xpose.msra.mxu0 0.0
    %2648 = vmatprep.subr.mxu0 0.0
    %2649 = vmatpush1.xpose.msra.mxu0 0.0
    %2650 = vmatprep.subr.mxu0 0.0
    %2651 = vmatpush1.xpose.msra.mxu0 0.0
    %2652 = vmatprep.subr.mxu0 0.0
    %2653 = vmatpush1.xpose.msra.mxu0 0.0
    %2654 = vmatprep.subr.mxu0 0.0
    %2655 = vmatpush1.xpose.msra.mxu0 0.0
    %2656 = vmatprep.subr.mxu0 0.0
    %2657 = vmatpush1.xpose.msra.mxu0 0.0
    %2658 = vmatprep.subr.mxu0 0.0
    %2659 = vmatpush1.xpose.msra.mxu0 0.0
    %2660 = vmatprep.subr.mxu0 0.0
    %2661 = vmatpush1.xpose.msra.mxu0 0.0
    %2662 = vmatprep.subr.mxu0 0.0
    %2663 = vmatpush1.xpose.msra.mxu0 0.0
    %2664 = vmatprep.subr.mxu0 0.0
    %2665 = vmatpush1.xpose.msra.mxu0 0.0
    %2666 = vmatprep.subr.mxu0 0.0
    %2667 = vmatpush1.xpose.msra.mxu0 0.0
    %2668 = vmatprep.subr.mxu0 0.0
    %2669 = vmatpush1.xpose.msra.mxu0 0.0
    %2670 = vmatprep.subr.mxu0 0.0
    %2671 = vmatpush1.xpose.msra.mxu0 0.0
    %2672 = vmatprep.subr.mxu0 0.0
    %2673 = vmatpush1.xpose.msra.mxu0 0.0
    %2674 = vmatprep.subr.mxu0 0.0
    %2675 = vmatpush1.xpose.msra.mxu0 0.0
    %2676 = vmatprep.subr.mxu0 0.0
    %2677 = vmatpush1.xpose.msra.mxu0 0.0
    %2678 = vmatprep.subr.mxu0 0.0
    %2679 = vmatpush1.xpose.msra.mxu0 0.0
    %2680 = vmatprep.subr.mxu0 0.0
    %2681 = vmatpush1.xpose.msra.mxu0 0.0
    %2682 = vmatprep.subr.mxu0 0.0
    %2683 = vmatpush1.xpose.msra.mxu0 0.0
    %2684 = vmatprep.subr.mxu0 0.0
    %2685 = vmatpush1.xpose.msra.mxu0 0.0
    %2686 = vmatprep.subr.mxu0 0.0
    %2687 = vmatpush1.xpose.msra.mxu0 0.0
    %2688 = vmatprep.subr.mxu0 0.0
    %2689 = vmatpush1.xpose.msra.mxu0 0.0
    %2690 = vmatprep.mubr.f32.mxu0 0.0
    %2691 = vmatmul.mubr.f32.gmra.mrb[0].mxu0 %v2624
    %v2692 = vpop.f32.mrb[0].mxu0
    %v2693 = vadd.f32 0.0, %v2692
    %v2694 = vpop.f32.mrb[0].mxu0
    %2695 = vdwg.mxu0
    %v2696 = vlaneseq
    %v2697 = vshrl.u32 %v2696, 7
    %v2698 = vsub.s32 0, %v2697
    %v2699 = vrot.slane %v2617, %v2698
    %2700 = vrot.lane.b32.xlu0 %v2699, 32
    %v2701 = vpop.permute.xlu0 %2700
    %v2702 = vsel %vm1596, %v2701, 0
    %2704 = vmatprep.subr.mxu0 0.0
    %2705 = vmatpush1.xpose.msra.mxu0 %v1889
    %2706 = vmatprep.subr.mxu0 0.0
    %2707 = vmatpush1.xpose.msra.mxu0 0.0
    %2708 = vmatprep.subr.mxu0 0.0
    %2709 = vmatpush1.xpose.msra.mxu0 0.0
    %2710 = vmatprep.subr.mxu0 0.0
    %2711 = vmatpush1.xpose.msra.mxu0 0.0
    %2712 = vmatprep.subr.mxu0 0.0
    %2713 = vmatpush1.xpose.msra.mxu0 0.0
    %2714 = vmatprep.subr.mxu0 0.0
    %2715 = vmatpush1.xpose.msra.mxu0 0.0
    %2716 = vmatprep.subr.mxu0 0.0
    %2717 = vmatpush1.xpose.msra.mxu0 0.0
    %2718 = vmatprep.subr.mxu0 0.0
    %2719 = vmatpush1.xpose.msra.mxu0 0.0
    %2720 = vmatprep.subr.mxu0 0.0
    %2721 = vmatpush1.xpose.msra.mxu0 0.0
    %2722 = vmatprep.subr.mxu0 0.0
    %2723 = vmatpush1.xpose.msra.mxu0 0.0
    %2724 = vmatprep.subr.mxu0 0.0
    %2725 = vmatpush1.xpose.msra.mxu0 0.0
    %2726 = vmatprep.subr.mxu0 0.0
    %2727 = vmatpush1.xpose.msra.mxu0 0.0
    %2728 = vmatprep.subr.mxu0 0.0
    %2729 = vmatpush1.xpose.msra.mxu0 0.0
    %2730 = vmatprep.subr.mxu0 0.0
    %2731 = vmatpush1.xpose.msra.mxu0 0.0
    %2732 = vmatprep.subr.mxu0 0.0
    %2733 = vmatpush1.xpose.msra.mxu0 0.0
    %2734 = vmatprep.subr.mxu0 0.0
    %2735 = vmatpush1.xpose.msra.mxu0 0.0
    %2736 = vmatprep.subr.mxu0 0.0
    %2737 = vmatpush1.xpose.msra.mxu0 0.0
    %2738 = vmatprep.subr.mxu0 0.0
    %2739 = vmatpush1.xpose.msra.mxu0 0.0
    %2740 = vmatprep.subr.mxu0 0.0
    %2741 = vmatpush1.xpose.msra.mxu0 0.0
    %2742 = vmatprep.subr.mxu0 0.0
    %2743 = vmatpush1.xpose.msra.mxu0 0.0
    %2744 = vmatprep.subr.mxu0 0.0
    %2745 = vmatpush1.xpose.msra.mxu0 0.0
    %2746 = vmatprep.subr.mxu0 0.0
    %2747 = vmatpush1.xpose.msra.mxu0 0.0
    %2748 = vmatprep.subr.mxu0 0.0
    %2749 = vmatpush1.xpose.msra.mxu0 0.0
    %2750 = vmatprep.subr.mxu0 0.0
    %2751 = vmatpush1.xpose.msra.mxu0 0.0
    %2752 = vmatprep.subr.mxu0 0.0
    %2753 = vmatpush1.xpose.msra.mxu0 0.0
    %2754 = vmatprep.subr.mxu0 0.0
    %2755 = vmatpush1.xpose.msra.mxu0 0.0
    %2756 = vmatprep.subr.mxu0 0.0
    %2757 = vmatpush1.xpose.msra.mxu0 0.0
    %2758 = vmatprep.subr.mxu0 0.0
    %2759 = vmatpush1.xpose.msra.mxu0 0.0
    %2760 = vmatprep.subr.mxu0 0.0
    %2761 = vmatpush1.xpose.msra.mxu0 0.0
    %2762 = vmatprep.subr.mxu0 0.0
    %2763 = vmatpush1.xpose.msra.mxu0 0.0
    %2764 = vmatprep.subr.mxu0 0.0
    %2765 = vmatpush1.xpose.msra.mxu0 0.0
    %2766 = vmatprep.subr.mxu0 0.0
    %2767 = vmatpush1.xpose.msra.mxu0 0.0
    %2768 = vmatprep.mubr.f32.mxu0 0.0
    %2769 = vmatmul.mubr.f32.gmra.mrb[0].mxu0 %v2702
    %v2770 = vpop.f32.mrb[0].mxu0
    %v2771 = vadd.f32 0.0, %v2770
    %v2772 = vpop.f32.mrb[0].mxu0
    %2773 = vdwg.mxu0
    %v2774 = vsel %vm1961, %v2693, -inf
    %2775 = vmax.xlane.f32.xlu0 %v2774
    %v2776 = vpop.xlane.xlu0 %2775
    %v2777 = vsel %vm1961, %v2771, -inf
    %2778 = vmax.xlane.f32.xlu0 %v2777
    %v2779 = vpop.xlane.xlu0 %2778
    %v2780 = vsub.f32 %v2693, %v2776
    %v2781 = vsub.f32 %v2771, %v2779
    %v2782 = vmul.f32 %v2780, 1.442695
    %v2783 = vpow.pop %v2782
    %v2784 = vmul.f32 %v2781, 1.442695
    %v2785 = vpow.pop %v2784
    %v2786 = vsel %vm1961, %v2783, 0.0
    %2787 = vadd.xlane.f32.xlu0 %v2786
    %v2788 = vpop.xlane.xlu0 %2787
    %v2789 = vsel %vm1961, %v2785, 0.0
    %2790 = vadd.xlane.f32.xlu0 %v2789
    %v2791 = vpop.xlane.xlu0 %2790
    %v2792 = vrcp.pop %v2788
    %v2793 = vrcp.pop %v2791
    %v2794 = vmul.f32 %v2783, %v2792
    %v2795 = vmul.f32 %v2785, %v2793
    %v2797 = vsel %vm1984, %v2794, 0
    %2799 = vmatprep.subr.mxu0 0.0
    %2800 = vmatpush1.msra.mxu0 %v1469
    %2801 = vmatprep.subr.mxu0 0.0
    %2802 = vmatpush1.msra.mxu0 0.0
    %2803 = vmatprep.subr.mxu0 0.0
    %2804 = vmatpush1.msra.mxu0 0.0
    %2805 = vmatprep.subr.mxu0 0.0
    %2806 = vmatpush1.msra.mxu0 0.0
    %2807 = vmatprep.subr.mxu0 0.0
    %2808 = vmatpush1.msra.mxu0 0.0
    %2809 = vmatprep.subr.mxu0 0.0
    %2810 = vmatpush1.msra.mxu0 0.0
    %2811 = vmatprep.subr.mxu0 0.0
    %2812 = vmatpush1.msra.mxu0 0.0
    %2813 = vmatprep.subr.mxu0 0.0
    %2814 = vmatpush1.msra.mxu0 0.0
    %2815 = vmatprep.subr.mxu0 0.0
    %2816 = vmatpush1.msra.mxu0 0.0
    %2817 = vmatprep.subr.mxu0 0.0
    %2818 = vmatpush1.msra.mxu0 0.0
    %2819 = vmatprep.subr.mxu0 0.0
    %2820 = vmatpush1.msra.mxu0 0.0
    %2821 = vmatprep.subr.mxu0 0.0
    %2822 = vmatpush1.msra.mxu0 0.0
    %2823 = vmatprep.subr.mxu0 0.0
    %2824 = vmatpush1.msra.mxu0 0.0
    %2825 = vmatprep.subr.mxu0 0.0
    %2826 = vmatpush1.msra.mxu0 0.0
    %2827 = vmatprep.subr.mxu0 0.0
    %2828 = vmatpush1.msra.mxu0 0.0
    %2829 = vmatprep.subr.mxu0 0.0
    %2830 = vmatpush1.msra.mxu0 0.0
    %2831 = vmatprep.subr.mxu0 0.0
    %2832 = vmatpush1.msra.mxu0 0.0
    %2833 = vmatprep.subr.mxu0 0.0
    %2834 = vmatpush1.msra.mxu0 0.0
    %2835 = vmatprep.subr.mxu0 0.0
    %2836 = vmatpush1.msra.mxu0 0.0
    %2837 = vmatprep.subr.mxu0 0.0
    %2838 = vmatpush1.msra.mxu0 0.0
    %2839 = vmatprep.subr.mxu0 0.0
    %2840 = vmatpush1.msra.mxu0 0.0
    %2841 = vmatprep.subr.mxu0 0.0
    %2842 = vmatpush1.msra.mxu0 0.0
    %2843 = vmatprep.subr.mxu0 0.0
    %2844 = vmatpush1.msra.mxu0 0.0
    %2845 = vmatprep.subr.mxu0 0.0
    %2846 = vmatpush1.msra.mxu0 0.0
    %2847 = vmatprep.subr.mxu0 0.0
    %2848 = vmatpush1.msra.mxu0 0.0
    %2849 = vmatprep.subr.mxu0 0.0
    %2850 = vmatpush1.msra.mxu0 0.0
    %2851 = vmatprep.subr.mxu0 0.0
    %2852 = vmatpush1.msra.mxu0 0.0
    %2853 = vmatprep.subr.mxu0 0.0
    %2854 = vmatpush1.msra.mxu0 0.0
    %2855 = vmatprep.subr.mxu0 0.0
    %2856 = vmatpush1.msra.mxu0 0.0
    %2857 = vmatprep.subr.mxu0 0.0
    %2858 = vmatpush1.msra.mxu0 0.0
    %2859 = vmatprep.subr.mxu0 0.0
    %2860 = vmatpush1.msra.mxu0 0.0
    %2861 = vmatprep.subr.mxu0 0.0
    %2862 = vmatpush1.msra.mxu0 0.0
    %2863 = vmatprep.mubr.f32.mxu0 0.0
    %2864 = vmatmul.mubr.f32.gmra.mrb[0].mxu0 %v2797
    %v2865 = vpop.f32.mrb[0].mxu0
    %v2866 = vadd.f32 0.0, %v2865
    %v2867 = vpop.f32.mrb[0].mxu0
    %2868 = vdwg.mxu0
    %v2870 = vsel %vm1984, %v2795, 0
    %2872 = vmatprep.subr.mxu0 0.0
    %2873 = vmatpush1.msra.mxu0 %v1470
    %2874 = vmatprep.subr.mxu0 0.0
    %2875 = vmatpush1.msra.mxu0 0.0
    %2876 = vmatprep.subr.mxu0 0.0
    %2877 = vmatpush1.msra.mxu0 0.0
    %2878 = vmatprep.subr.mxu0 0.0
    %2879 = vmatpush1.msra.mxu0 0.0
    %2880 = vmatprep.subr.mxu0 0.0
    %2881 = vmatpush1.msra.mxu0 0.0
    %2882 = vmatprep.subr.mxu0 0.0
    %2883 = vmatpush1.msra.mxu0 0.0
    %2884 = vmatprep.subr.mxu0 0.0
    %2885 = vmatpush1.msra.mxu0 0.0
    %2886 = vmatprep.subr.mxu0 0.0
    %2887 = vmatpush1.msra.mxu0 0.0
    %2888 = vmatprep.subr.mxu0 0.0
    %2889 = vmatpush1.msra.mxu0 0.0
    %2890 = vmatprep.subr.mxu0 0.0
    %2891 = vmatpush1.msra.mxu0 0.0
    %2892 = vmatprep.subr.mxu0 0.0
    %2893 = vmatpush1.msra.mxu0 0.0
    %2894 = vmatprep.subr.mxu0 0.0
    %2895 = vmatpush1.msra.mxu0 0.0
    %2896 = vmatprep.subr.mxu0 0.0
    %2897 = vmatpush1.msra.mxu0 0.0
    %2898 = vmatprep.subr.mxu0 0.0
    %2899 = vmatpush1.msra.mxu0 0.0
    %2900 = vmatprep.subr.mxu0 0.0
    %2901 = vmatpush1.msra.mxu0 0.0
    %2902 = vmatprep.subr.mxu0 0.0
    %2903 = vmatpush1.msra.mxu0 0.0
    %2904 = vmatprep.subr.mxu0 0.0
    %2905 = vmatpush1.msra.mxu0 0.0
    %2906 = vmatprep.subr.mxu0 0.0
    %2907 = vmatpush1.msra.mxu0 0.0
    %2908 = vmatprep.subr.mxu0 0.0
    %2909 = vmatpush1.msra.mxu0 0.0
    %2910 = vmatprep.subr.mxu0 0.0
    %2911 = vmatpush1.msra.mxu0 0.0
    %2912 = vmatprep.subr.mxu0 0.0
    %2913 = vmatpush1.msra.mxu0 0.0
    %2914 = vmatprep.subr.mxu0 0.0
    %2915 = vmatpush1.msra.mxu0 0.0
    %2916 = vmatprep.subr.mxu0 0.0
    %2917 = vmatpush1.msra.mxu0 0.0
    %2918 = vmatprep.subr.mxu0 0.0
    %2919 = vmatpush1.msra.mxu0 0.0
    %2920 = vmatprep.subr.mxu0 0.0
    %2921 = vmatpush1.msra.mxu0 0.0
    %2922 = vmatprep.subr.mxu0 0.0
    %2923 = vmatpush1.msra.mxu0 0.0
    %2924 = vmatprep.subr.mxu0 0.0
    %2925 = vmatpush1.msra.mxu0 0.0
    %2926 = vmatprep.subr.mxu0 0.0
    %2927 = vmatpush1.msra.mxu0 0.0
    %2928 = vmatprep.subr.mxu0 0.0
    %2929 = vmatpush1.msra.mxu0 0.0
    %2930 = vmatprep.subr.mxu0 0.0
    %2931 = vmatpush1.msra.mxu0 0.0
    %2932 = vmatprep.subr.mxu0 0.0
    %2933 = vmatpush1.msra.mxu0 0.0
    %2934 = vmatprep.subr.mxu0 0.0
    %2935 = vmatpush1.msra.mxu0 0.0
    %2936 = vmatprep.mubr.f32.mxu0 0.0
    %2937 = vmatmul.mubr.f32.gmra.mrb[0].mxu0 %v2870
    %v2938 = vpop.f32.mrb[0].mxu0
    %v2939 = vadd.f32 0.0, %v2938
    %v2940 = vpop.f32.mrb[0].mxu0
    %2941 = vdwg.mxu0
    %v2942 = vrot.slane %v2592, 2
    %2943 = vrot.lane.b32.xlu0 %v2942, 32
    %v2944 = vpop.permute.xlu0 %2943
    %v2945 = vsel %vm1596, %v2944, 0
    %2947 = vmatprep.subr.mxu0 0.0
    %2948 = vmatpush1.msra.mxu0 %v1586
    %2949 = vmatprep.subr.mxu0 0.0
    %2950 = vmatpush1.msra.mxu0 %v1587
    %2951 = vmatprep.subr.mxu0 0.0
    %2952 = vmatpush1.msra.mxu0 %v1588
    %2953 = vmatprep.subr.mxu0 0.0
    %2954 = vmatpush1.msra.mxu0 %v1589
    %2955 = vmatprep.subr.mxu0 0.0
    %2956 = vmatpush1.msra.mxu0 0.0
    %2957 = vmatprep.subr.mxu0 0.0
    %2958 = vmatpush1.msra.mxu0 0.0
    %2959 = vmatprep.subr.mxu0 0.0
    %2960 = vmatpush1.msra.mxu0 0.0
    %2961 = vmatprep.subr.mxu0 0.0
    %2962 = vmatpush1.msra.mxu0 0.0
    %2963 = vmatprep.subr.mxu0 0.0
    %2964 = vmatpush1.msra.mxu0 0.0
    %2965 = vmatprep.subr.mxu0 0.0
    %2966 = vmatpush1.msra.mxu0 0.0
    %2967 = vmatprep.subr.mxu0 0.0
    %2968 = vmatpush1.msra.mxu0 0.0
    %2969 = vmatprep.subr.mxu0 0.0
    %2970 = vmatpush1.msra.mxu0 0.0
    %2971 = vmatprep.subr.mxu0 0.0
    %2972 = vmatpush1.msra.mxu0 0.0
    %2973 = vmatprep.subr.mxu0 0.0
    %2974 = vmatpush1.msra.mxu0 0.0
    %2975 = vmatprep.subr.mxu0 0.0
    %2976 = vmatpush1.msra.mxu0 0.0
    %2977 = vmatprep.subr.mxu0 0.0
    %2978 = vmatpush1.msra.mxu0 0.0
    %2979 = vmatprep.subr.mxu0 0.0
    %2980 = vmatpush1.msra.mxu0 0.0
    %2981 = vmatprep.subr.mxu0 0.0
    %2982 = vmatpush1.msra.mxu0 0.0
    %2983 = vmatprep.subr.mxu0 0.0
    %2984 = vmatpush1.msra.mxu0 0.0
    %2985 = vmatprep.subr.mxu0 0.0
    %2986 = vmatpush1.msra.mxu0 0.0
    %2987 = vmatprep.subr.mxu0 0.0
    %2988 = vmatpush1.msra.mxu0 0.0
    %2989 = vmatprep.subr.mxu0 0.0
    %2990 = vmatpush1.msra.mxu0 0.0
    %2991 = vmatprep.subr.mxu0 0.0
    %2992 = vmatpush1.msra.mxu0 0.0
    %2993 = vmatprep.subr.mxu0 0.0
    %2994 = vmatpush1.msra.mxu0 0.0
    %2995 = vmatprep.subr.mxu0 0.0
    %2996 = vmatpush1.msra.mxu0 0.0
    %2997 = vmatprep.subr.mxu0 0.0
    %2998 = vmatpush1.msra.mxu0 0.0
    %2999 = vmatprep.subr.mxu0 0.0
    %3000 = vmatpush1.msra.mxu0 0.0
    %3001 = vmatprep.subr.mxu0 0.0
    %3002 = vmatpush1.msra.mxu0 0.0
    %3003 = vmatprep.subr.mxu0 0.0
    %3004 = vmatpush1.msra.mxu0 0.0
    %3005 = vmatprep.subr.mxu0 0.0
    %3006 = vmatpush1.msra.mxu0 0.0
    %3007 = vmatprep.subr.mxu0 0.0
    %3008 = vmatpush1.msra.mxu0 0.0
    %3009 = vmatprep.subr.mxu0 0.0
    %3010 = vmatpush1.msra.mxu0 0.0
    %3011 = vmatprep.mubr.f32.mxu0 0.0
    %3012 = vmatmul.mubr.f32.gmra.mrb[0].mxu0 %v2945
    %v3013 = vpop.f32.mrb[0].mxu0
    %v3014 = vadd.f32 0.0, %v3013
    %v3015 = vpop.f32.mrb[0].mxu0
    %3016 = vdwg.mxu0
    %v3019 = vrot.slane %v2939, 7
    %v3020 = vsel %vm2208, %v3019, %v2866
    %v3021 = vsel %vm1596, %v3020, 0
    %3023 = vmatprep.subr.mxu0 0.0
    %3024 = vmatpush1.msra.mxu0 %v1582
    %3025 = vmatprep.subr.mxu0 0.0
    %3026 = vmatpush1.msra.mxu0 %v1583
    %3027 = vmatprep.subr.mxu0 0.0
    %3028 = vmatpush1.msra.mxu0 %v1584
    %3029 = vmatprep.subr.mxu0 0.0
    %3030 = vmatpush1.msra.mxu0 %v1585
    %3031 = vmatprep.subr.mxu0 0.0
    %3032 = vmatpush1.msra.mxu0 0.0
    %3033 = vmatprep.subr.mxu0 0.0
    %3034 = vmatpush1.msra.mxu0 0.0
    %3035 = vmatprep.subr.mxu0 0.0
    %3036 = vmatpush1.msra.mxu0 0.0
    %3037 = vmatprep.subr.mxu0 0.0
    %3038 = vmatpush1.msra.mxu0 0.0
    %3039 = vmatprep.subr.mxu0 0.0
    %3040 = vmatpush1.msra.mxu0 0.0
    %3041 = vmatprep.subr.mxu0 0.0
    %3042 = vmatpush1.msra.mxu0 0.0
    %3043 = vmatprep.subr.mxu0 0.0
    %3044 = vmatpush1.msra.mxu0 0.0
    %3045 = vmatprep.subr.mxu0 0.0
    %3046 = vmatpush1.msra.mxu0 0.0
    %3047 = vmatprep.subr.mxu0 0.0
    %3048 = vmatpush1.msra.mxu0 0.0
    %3049 = vmatprep.subr.mxu0 0.0
    %3050 = vmatpush1.msra.mxu0 0.0
    %3051 = vmatprep.subr.mxu0 0.0
    %3052 = vmatpush1.msra.mxu0 0.0
    %3053 = vmatprep.subr.mxu0 0.0
    %3054 = vmatpush1.msra.mxu0 0.0
    %3055 = vmatprep.subr.mxu0 0.0
    %3056 = vmatpush1.msra.mxu0 0.0
    %3057 = vmatprep.subr.mxu0 0.0
    %3058 = vmatpush1.msra.mxu0 0.0
    %3059 = vmatprep.subr.mxu0 0.0
    %3060 = vmatpush1.msra.mxu0 0.0
    %3061 = vmatprep.subr.mxu0 0.0
    %3062 = vmatpush1.msra.mxu0 0.0
    %3063 = vmatprep.subr.mxu0 0.0
    %3064 = vmatpush1.msra.mxu0 0.0
    %3065 = vmatprep.subr.mxu0 0.0
    %3066 = vmatpush1.msra.mxu0 0.0
    %3067 = vmatprep.subr.mxu0 0.0
    %3068 = vmatpush1.msra.mxu0 0.0
    %3069 = vmatprep.subr.mxu0 0.0
    %3070 = vmatpush1.msra.mxu0 0.0
    %3071 = vmatprep.subr.mxu0 0.0
    %3072 = vmatpush1.msra.mxu0 0.0
    %3073 = vmatprep.subr.mxu0 0.0
    %3074 = vmatpush1.msra.mxu0 0.0
    %3075 = vmatprep.subr.mxu0 0.0
    %3076 = vmatpush1.msra.mxu0 0.0
    %3077 = vmatprep.subr.mxu0 0.0
    %3078 = vmatpush1.msra.mxu0 0.0
    %3079 = vmatprep.subr.mxu0 0.0
    %3080 = vmatpush1.msra.mxu0 0.0
    %3081 = vmatprep.subr.mxu0 0.0
    %3082 = vmatpush1.msra.mxu0 0.0
    %3083 = vmatprep.subr.mxu0 0.0
    %3084 = vmatpush1.msra.mxu0 0.0
    %3085 = vmatprep.subr.mxu0 0.0
    %3086 = vmatpush1.msra.mxu0 0.0
    %3087 = vmatprep.mubr.f32.mxu0 0.0
    %3088 = vmatmul.mubr.f32.gmra.mrb[0].mxu0 %v3021
    %v3089 = vpop.f32.mrb[0].mxu0
    %v3090 = vadd.f32 %v3014, %v3089
    %v3091 = vpop.f32.mrb[0].mxu0
    %3092 = vdwg.mxu0
    %v3093 = vadd.f32 %v3090, %v2286
    %v3094 = vtanh.pop %v3093
    %v3096 = vsel %vm1596, %v3094, 0
    %3098 = vmatprep.subr.mxu0 0.0
    %3099 = vmatpush1.msra.mxu0 %v1591
    %3100 = vmatprep.subr.mxu0 0.0
    %3101 = vmatpush1.msra.mxu0 %v1592
    %3102 = vmatprep.subr.mxu0 0.0
    %3103 = vmatpush1.msra.mxu0 %v1593
    %3104 = vmatprep.subr.mxu0 0.0
    %3105 = vmatpush1.msra.mxu0 %v1594
    %3106 = vmatprep.subr.mxu0 0.0
    %3107 = vmatpush1.msra.mxu0 0.0
    %3108 = vmatprep.subr.mxu0 0.0
    %3109 = vmatpush1.msra.mxu0 0.0
    %3110 = vmatprep.subr.mxu0 0.0
    %3111 = vmatpush1.msra.mxu0 0.0
    %3112 = vmatprep.subr.mxu0 0.0
    %3113 = vmatpush1.msra.mxu0 0.0
    %3114 = vmatprep.subr.mxu0 0.0
    %3115 = vmatpush1.msra.mxu0 0.0
    %3116 = vmatprep.subr.mxu0 0.0
    %3117 = vmatpush1.msra.mxu0 0.0
    %3118 = vmatprep.subr.mxu0 0.0
    %3119 = vmatpush1.msra.mxu0 0.0
    %3120 = vmatprep.subr.mxu0 0.0
    %3121 = vmatpush1.msra.mxu0 0.0
    %3122 = vmatprep.subr.mxu0 0.0
    %3123 = vmatpush1.msra.mxu0 0.0
    %3124 = vmatprep.subr.mxu0 0.0
    %3125 = vmatpush1.msra.mxu0 0.0
    %3126 = vmatprep.subr.mxu0 0.0
    %3127 = vmatpush1.msra.mxu0 0.0
    %3128 = vmatprep.subr.mxu0 0.0
    %3129 = vmatpush1.msra.mxu0 0.0
    %3130 = vmatprep.subr.mxu0 0.0
    %3131 = vmatpush1.msra.mxu0 0.0
    %3132 = vmatprep.subr.mxu0 0.0
    %3133 = vmatpush1.msra.mxu0 0.0
    %3134 = vmatprep.subr.mxu0 0.0
    %3135 = vmatpush1.msra.mxu0 0.0
    %3136 = vmatprep.subr.mxu0 0.0
    %3137 = vmatpush1.msra.mxu0 0.0
    %3138 = vmatprep.subr.mxu0 0.0
    %3139 = vmatpush1.msra.mxu0 0.0
    %3140 = vmatprep.subr.mxu0 0.0
    %3141 = vmatpush1.msra.mxu0 0.0
    %3142 = vmatprep.subr.mxu0 0.0
    %3143 = vmatpush1.msra.mxu0 0.0
    %3144 = vmatprep.subr.mxu0 0.0
    %3145 = vmatpush1.msra.mxu0 0.0
    %3146 = vmatprep.subr.mxu0 0.0
    %3147 = vmatpush1.msra.mxu0 0.0
    %3148 = vmatprep.subr.mxu0 0.0
    %3149 = vmatpush1.msra.mxu0 0.0
    %3150 = vmatprep.subr.mxu0 0.0
    %3151 = vmatpush1.msra.mxu0 0.0
    %3152 = vmatprep.subr.mxu0 0.0
    %3153 = vmatpush1.msra.mxu0 0.0
    %3154 = vmatprep.subr.mxu0 0.0
    %3155 = vmatpush1.msra.mxu0 0.0
    %3156 = vmatprep.subr.mxu0 0.0
    %3157 = vmatpush1.msra.mxu0 0.0
    %3158 = vmatprep.subr.mxu0 0.0
    %3159 = vmatpush1.msra.mxu0 0.0
    %3160 = vmatprep.subr.mxu0 0.0
    %3161 = vmatpush1.msra.mxu0 0.0
    %3162 = vmatprep.mubr.f32.mxu0 0.0
    %3163 = vmatmul.mubr.f32.gmra.mrb[0].mxu0 %v3096
    %v3164 = vpop.f32.mrb[0].mxu0
    %v3165 = vadd.f32 %v2294, %v3164
    %v3166 = vpop.f32.mrb[0].mxu0
    %3167 = vdwg.mxu0
    %v3168 = vsel %vm2369, %v3165, -inf
    %3169 = vmax.xlane.f32.xlu0 %v3168
    %v3170 = vpop.xlane.xlu0 %3169
    %v3171 = vsub.f32 %v3165, %v3170
    %v3172 = vmul.f32 %v3171, 1.442695
    %v3173 = vpow.pop %v3172
    %v3174 = vsel %vm2369, %v3173, 0.0
    %3175 = vadd.xlane.f32.xlu0 %v3174
    %v3176 = vpop.xlane.xlu0 %3175
    %v3177 = vlog2.pop %v3176
    %v3178 = vmul.f32 %v3177, 0.6931472
    %v3179 = vadd.f32 %v3170, %v3178
    %v3180 = vsub.f32 %v3165, %v3179
    %v3181 = vld [vmem:[%s2 + $0x2] sm:$0x3]
    %v3182 = vmul.f32 %v3180, %v3181
    %v3183 = vsel %vm2369, %v3182, 0.0
    %3184 = vadd.xlane.f32.xlu0 %v3183
    %v3185 = vpop.xlane.xlu0 %3184
    %v3186 = vld [vmem:[%s3 + $0x2] sm:$0x3]
    %v3187 = vsub.f32 0.0, %v3185
    %v3188 = vmul.f32 %v3187, %v3186
    %v3189 = vsel %vm2391, %v3188, 0.0
    %3190 = vadd.xlane.f32.xlu0 %v3189
    %v3191 = vpop.xlane.xlu0 %3190
    %v3192 = vrot.slane %v3191, 4
    %v3193 = vadd.f32 %v3191, %v3192
    %v3194 = vrot.slane %v3193, 2
    %v3195 = vadd.f32 %v3193, %v3194
    %v3196 = vrot.slane %v3195, 1
    %v3197 = vadd.f32 %v3195, %v3196
    %s3198 = vtos %v3197
    %v3199 = vstv %s3198
    %v3200 = vsel %vm2391, %v3186, 0.0
    %3201 = vadd.xlane.f32.xlu0 %v3200
    %v3202 = vpop.xlane.xlu0 %3201
    %v3203 = vrot.slane %v3202, 4
    %v3204 = vadd.f32 %v3202, %v3203
    %v3205 = vrot.slane %v3204, 2
    %v3206 = vadd.f32 %v3204, %v3205
    %v3207 = vrot.slane %v3206, 1
    %v3208 = vadd.f32 %v3206, %v3207
    %s3209 = vtos %v3208
    %v3210 = vstv %s3209
    %v3211 = vmax.f32 %v3210, 1.0
    %v3212 = vrcp.pop %v3211
    %v3213 = vmul.f32 %v3199, %v3212
    %v3214 = vadd.f32 %v2417, %v3213
    %3215 = vmatprep.subr.mxu0 0.0
    %3216 = vmatpush1.msra.mxu0 %v1574
    %3217 = vmatprep.subr.mxu0 0.0
    %3218 = vmatpush1.msra.mxu0 %v1575
    %3219 = vmatprep.subr.mxu0 0.0
    %3220 = vmatpush1.msra.mxu0 %v1576
    %3221 = vmatprep.subr.mxu0 0.0
    %3222 = vmatpush1.msra.mxu0 %v1577
    %3223 = vmatprep.subr.mxu0 0.0
    %3224 = vmatpush1.msra.mxu0 0.0
    %3225 = vmatprep.subr.mxu0 0.0
    %3226 = vmatpush1.msra.mxu0 0.0
    %3227 = vmatprep.subr.mxu0 0.0
    %3228 = vmatpush1.msra.mxu0 0.0
    %3229 = vmatprep.subr.mxu0 0.0
    %3230 = vmatpush1.msra.mxu0 0.0
    %3231 = vmatprep.subr.mxu0 0.0
    %3232 = vmatpush1.msra.mxu0 0.0
    %3233 = vmatprep.subr.mxu0 0.0
    %3234 = vmatpush1.msra.mxu0 0.0
    %3235 = vmatprep.subr.mxu0 0.0
    %3236 = vmatpush1.msra.mxu0 0.0
    %3237 = vmatprep.subr.mxu0 0.0
    %3238 = vmatpush1.msra.mxu0 0.0
    %3239 = vmatprep.subr.mxu0 0.0
    %3240 = vmatpush1.msra.mxu0 0.0
    %3241 = vmatprep.subr.mxu0 0.0
    %3242 = vmatpush1.msra.mxu0 0.0
    %3243 = vmatprep.subr.mxu0 0.0
    %3244 = vmatpush1.msra.mxu0 0.0
    %3245 = vmatprep.subr.mxu0 0.0
    %3246 = vmatpush1.msra.mxu0 0.0
    %3247 = vmatprep.subr.mxu0 0.0
    %3248 = vmatpush1.msra.mxu0 0.0
    %3249 = vmatprep.subr.mxu0 0.0
    %3250 = vmatpush1.msra.mxu0 0.0
    %3251 = vmatprep.subr.mxu0 0.0
    %3252 = vmatpush1.msra.mxu0 0.0
    %3253 = vmatprep.subr.mxu0 0.0
    %3254 = vmatpush1.msra.mxu0 0.0
    %3255 = vmatprep.subr.mxu0 0.0
    %3256 = vmatpush1.msra.mxu0 0.0
    %3257 = vmatprep.subr.mxu0 0.0
    %3258 = vmatpush1.msra.mxu0 0.0
    %3259 = vmatprep.subr.mxu0 0.0
    %3260 = vmatpush1.msra.mxu0 0.0
    %3261 = vmatprep.subr.mxu0 0.0
    %3262 = vmatpush1.msra.mxu0 0.0
    %3263 = vmatprep.subr.mxu0 0.0
    %3264 = vmatpush1.msra.mxu0 0.0
    %3265 = vmatprep.subr.mxu0 0.0
    %3266 = vmatpush1.msra.mxu0 0.0
    %3267 = vmatprep.subr.mxu0 0.0
    %3268 = vmatpush1.msra.mxu0 0.0
    %3269 = vmatprep.subr.mxu0 0.0
    %3270 = vmatpush1.msra.mxu0 0.0
    %3271 = vmatprep.subr.mxu0 0.0
    %3272 = vmatpush1.msra.mxu0 0.0
    %3273 = vmatprep.subr.mxu0 0.0
    %3274 = vmatpush1.msra.mxu0 0.0
    %3275 = vmatprep.subr.mxu0 0.0
    %3276 = vmatpush1.msra.mxu0 0.0
    %3277 = vmatprep.subr.mxu0 0.0
    %3278 = vmatpush1.msra.mxu0 0.0
    %3279 = vmatprep.mubr.f32.mxu0 0.0
    %3280 = vmatmul.mubr.f32.gmra.mrb[0].mxu0 %v3021
    %v3281 = vpop.f32.mrb[0].mxu0
    %v3282 = vadd.f32 0.0, %v3281
    %v3283 = vpop.f32.mrb[0].mxu0
    %3284 = vdwg.mxu0
    %v3286 = vrot.slane %v3282, 4
    %v3288 = vadd.f32 %v1566, %v3286
    %3289 = vmatprep.subr.mxu0 0.0
    %3290 = vmatpush1.msra.mxu0 %v1578
    %3291 = vmatprep.subr.mxu0 0.0
    %3292 = vmatpush1.msra.mxu0 %v1579
    %3293 = vmatprep.subr.mxu0 0.0
    %3294 = vmatpush1.msra.mxu0 %v1580
    %3295 = vmatprep.subr.mxu0 0.0
    %3296 = vmatpush1.msra.mxu0 %v1581
    %3297 = vmatprep.subr.mxu0 0.0
    %3298 = vmatpush1.msra.mxu0 0.0
    %3299 = vmatprep.subr.mxu0 0.0
    %3300 = vmatpush1.msra.mxu0 0.0
    %3301 = vmatprep.subr.mxu0 0.0
    %3302 = vmatpush1.msra.mxu0 0.0
    %3303 = vmatprep.subr.mxu0 0.0
    %3304 = vmatpush1.msra.mxu0 0.0
    %3305 = vmatprep.subr.mxu0 0.0
    %3306 = vmatpush1.msra.mxu0 0.0
    %3307 = vmatprep.subr.mxu0 0.0
    %3308 = vmatpush1.msra.mxu0 0.0
    %3309 = vmatprep.subr.mxu0 0.0
    %3310 = vmatpush1.msra.mxu0 0.0
    %3311 = vmatprep.subr.mxu0 0.0
    %3312 = vmatpush1.msra.mxu0 0.0
    %3313 = vmatprep.subr.mxu0 0.0
    %3314 = vmatpush1.msra.mxu0 0.0
    %3315 = vmatprep.subr.mxu0 0.0
    %3316 = vmatpush1.msra.mxu0 0.0
    %3317 = vmatprep.subr.mxu0 0.0
    %3318 = vmatpush1.msra.mxu0 0.0
    %3319 = vmatprep.subr.mxu0 0.0
    %3320 = vmatpush1.msra.mxu0 0.0
    %3321 = vmatprep.subr.mxu0 0.0
    %3322 = vmatpush1.msra.mxu0 0.0
    %3323 = vmatprep.subr.mxu0 0.0
    %3324 = vmatpush1.msra.mxu0 0.0
    %3325 = vmatprep.subr.mxu0 0.0
    %3326 = vmatpush1.msra.mxu0 0.0
    %3327 = vmatprep.subr.mxu0 0.0
    %3328 = vmatpush1.msra.mxu0 0.0
    %3329 = vmatprep.subr.mxu0 0.0
    %3330 = vmatpush1.msra.mxu0 0.0
    %3331 = vmatprep.subr.mxu0 0.0
    %3332 = vmatpush1.msra.mxu0 0.0
    %3333 = vmatprep.subr.mxu0 0.0
    %3334 = vmatpush1.msra.mxu0 0.0
    %3335 = vmatprep.subr.mxu0 0.0
    %3336 = vmatpush1.msra.mxu0 0.0
    %3337 = vmatprep.subr.mxu0 0.0
    %3338 = vmatpush1.msra.mxu0 0.0
    %3339 = vmatprep.subr.mxu0 0.0
    %3340 = vmatpush1.msra.mxu0 0.0
    %3341 = vmatprep.subr.mxu0 0.0
    %3342 = vmatpush1.msra.mxu0 0.0
    %3343 = vmatprep.subr.mxu0 0.0
    %3344 = vmatpush1.msra.mxu0 0.0
    %3345 = vmatprep.subr.mxu0 0.0
    %3346 = vmatpush1.msra.mxu0 0.0
    %3347 = vmatprep.subr.mxu0 0.0
    %3348 = vmatpush1.msra.mxu0 0.0
    %3349 = vmatprep.subr.mxu0 0.0
    %3350 = vmatpush1.msra.mxu0 0.0
    %3351 = vmatprep.subr.mxu0 0.0
    %3352 = vmatpush1.msra.mxu0 0.0
    %3353 = vmatprep.mubr.f32.mxu0 0.0
    %3354 = vmatmul.mubr.f32.gmra.mrb[0].mxu0 %v2945
    %v3355 = vpop.f32.mrb[0].mxu0
    %v3356 = vadd.f32 0.0, %v3355
    %v3357 = vpop.f32.mrb[0].mxu0
    %3358 = vdwg.mxu0
    %v3360 = vrot.slane %v3356, 4
    %v3362 = vadd.f32 %v3288, %v3360
    %v3363 = vxor.u32 %v3362, 2147483648
    %v3364 = vmul.f32 %v3363, 1.442695
    %v3365 = vpow.pop %v3364
    %v3366 = vadd.f32 %v3365, 1.0
    %v3367 = vrcp.pop %v3366
    %v3368 = vmul.f32 1.0, %v3367
    %v3369 = vtanh.pop %v3362
    %v3371 = vrot.slane %v2586, 6
    %v3373 = vmul.f32 %v3368, %v3371
    %3375 = vrot.lane.b32.xlu0 %v3369, 64
    %v3376 = vpop.permute.xlu0 %3375
    %v3378 = vmul.f32 %v3368, %v3376
    %3380 = vrot.lane.b32.xlu0 %v3378, 32
    %v3381 = vpop.permute.xlu0 %3380
    %v3383 = vadd.f32 %v3373, %v3381
    %v3384 = vtanh.pop %v3383
    %3386 = vrot.lane.b32.xlu0 %v3384, 64
    %v3387 = vpop.permute.xlu0 %3386
    %v3389 = vmul.f32 %v3368, %v3387
    %v3391 = vcombine.high %v3389, %v3389
    %v3393 = vunpack.c.l.s4 1966171168
    %v3394 = vunpack.c.0.s8 %v3393
    %v3395 = vlaneseq
    %v3396 = vshrl.u32 %v3395, 7
    %v3397 = vsub.s32 %v3394, %v3396
    %v3398 = vrot.slane %v3391, %v3397
    %v3399 = vcombine.high %v3398, %v3398
    %v3401 = vunpack.c.l.s4 1966171168
    %v3402 = vunpack.c.0.s8 %v3401
    %v3403 = vlaneseq
    %v3404 = vshrl.u32 %v3403, 7
    %v3405 = vsub.s32 %v3402, %v3404
    %v3406 = vrot.slane %v3398, %v3405
    %v3408 = vunpack.c.l.s4 1966171168
    %v3409 = vunpack.c.0.s8 %v3408
    %v3410 = vlaneseq
    %v3411 = vshrl.u32 %v3410, 7
    %v3412 = vsub.s32 %v3409, %v3411
    %v3413 = vrot.slane %v3399, %v3412
    %v3414 = vlaneseq
    %v3415 = vshrl.u32 %v3414, 7
    %v3416 = vsub.s32 0, %v3415
    %v3417 = vrot.slane %v3406, %v3416
    %3418 = vrot.lane.b32.xlu0 %v3417, 32
    %v3419 = vpop.permute.xlu0 %3418
    %v3420 = vsel %vm1596, %v3419, 0
    %3422 = vmatprep.subr.mxu0 0.0
    %3423 = vmatpush1.xpose.msra.mxu0 %v1808
    %3424 = vmatprep.subr.mxu0 0.0
    %3425 = vmatpush1.xpose.msra.mxu0 0.0
    %3426 = vmatprep.subr.mxu0 0.0
    %3427 = vmatpush1.xpose.msra.mxu0 0.0
    %3428 = vmatprep.subr.mxu0 0.0
    %3429 = vmatpush1.xpose.msra.mxu0 0.0
    %3430 = vmatprep.subr.mxu0 0.0
    %3431 = vmatpush1.xpose.msra.mxu0 0.0
    %3432 = vmatprep.subr.mxu0 0.0
    %3433 = vmatpush1.xpose.msra.mxu0 0.0
    %3434 = vmatprep.subr.mxu0 0.0
    %3435 = vmatpush1.xpose.msra.mxu0 0.0
    %3436 = vmatprep.subr.mxu0 0.0
    %3437 = vmatpush1.xpose.msra.mxu0 0.0
    %3438 = vmatprep.subr.mxu0 0.0
    %3439 = vmatpush1.xpose.msra.mxu0 0.0
    %3440 = vmatprep.subr.mxu0 0.0
    %3441 = vmatpush1.xpose.msra.mxu0 0.0
    %3442 = vmatprep.subr.mxu0 0.0
    %3443 = vmatpush1.xpose.msra.mxu0 0.0
    %3444 = vmatprep.subr.mxu0 0.0
    %3445 = vmatpush1.xpose.msra.mxu0 0.0
    %3446 = vmatprep.subr.mxu0 0.0
    %3447 = vmatpush1.xpose.msra.mxu0 0.0
    %3448 = vmatprep.subr.mxu0 0.0
    %3449 = vmatpush1.xpose.msra.mxu0 0.0
    %3450 = vmatprep.subr.mxu0 0.0
    %3451 = vmatpush1.xpose.msra.mxu0 0.0
    %3452 = vmatprep.subr.mxu0 0.0
    %3453 = vmatpush1.xpose.msra.mxu0 0.0
    %3454 = vmatprep.subr.mxu0 0.0
    %3455 = vmatpush1.xpose.msra.mxu0 0.0
    %3456 = vmatprep.subr.mxu0 0.0
    %3457 = vmatpush1.xpose.msra.mxu0 0.0
    %3458 = vmatprep.subr.mxu0 0.0
    %3459 = vmatpush1.xpose.msra.mxu0 0.0
    %3460 = vmatprep.subr.mxu0 0.0
    %3461 = vmatpush1.xpose.msra.mxu0 0.0
    %3462 = vmatprep.subr.mxu0 0.0
    %3463 = vmatpush1.xpose.msra.mxu0 0.0
    %3464 = vmatprep.subr.mxu0 0.0
    %3465 = vmatpush1.xpose.msra.mxu0 0.0
    %3466 = vmatprep.subr.mxu0 0.0
    %3467 = vmatpush1.xpose.msra.mxu0 0.0
    %3468 = vmatprep.subr.mxu0 0.0
    %3469 = vmatpush1.xpose.msra.mxu0 0.0
    %3470 = vmatprep.subr.mxu0 0.0
    %3471 = vmatpush1.xpose.msra.mxu0 0.0
    %3472 = vmatprep.subr.mxu0 0.0
    %3473 = vmatpush1.xpose.msra.mxu0 0.0
    %3474 = vmatprep.subr.mxu0 0.0
    %3475 = vmatpush1.xpose.msra.mxu0 0.0
    %3476 = vmatprep.subr.mxu0 0.0
    %3477 = vmatpush1.xpose.msra.mxu0 0.0
    %3478 = vmatprep.subr.mxu0 0.0
    %3479 = vmatpush1.xpose.msra.mxu0 0.0
    %3480 = vmatprep.subr.mxu0 0.0
    %3481 = vmatpush1.xpose.msra.mxu0 0.0
    %3482 = vmatprep.subr.mxu0 0.0
    %3483 = vmatpush1.xpose.msra.mxu0 0.0
    %3484 = vmatprep.subr.mxu0 0.0
    %3485 = vmatpush1.xpose.msra.mxu0 0.0
    %3486 = vmatprep.mubr.f32.mxu0 0.0
    %3487 = vmatmul.mubr.f32.gmra.mrb[0].mxu0 %v3420
    %v3488 = vpop.f32.mrb[0].mxu0
    %v3489 = vadd.f32 0.0, %v3488
    %v3490 = vpop.f32.mrb[0].mxu0
    %3491 = vdwg.mxu0
    %v3492 = vlaneseq
    %v3493 = vshrl.u32 %v3492, 7
    %v3494 = vsub.s32 0, %v3493
    %v3495 = vrot.slane %v3413, %v3494
    %3496 = vrot.lane.b32.xlu0 %v3495, 32
    %v3497 = vpop.permute.xlu0 %3496
    %v3498 = vsel %vm1596, %v3497, 0
    %3500 = vmatprep.subr.mxu0 0.0
    %3501 = vmatpush1.xpose.msra.mxu0 %v1889
    %3502 = vmatprep.subr.mxu0 0.0
    %3503 = vmatpush1.xpose.msra.mxu0 0.0
    %3504 = vmatprep.subr.mxu0 0.0
    %3505 = vmatpush1.xpose.msra.mxu0 0.0
    %3506 = vmatprep.subr.mxu0 0.0
    %3507 = vmatpush1.xpose.msra.mxu0 0.0
    %3508 = vmatprep.subr.mxu0 0.0
    %3509 = vmatpush1.xpose.msra.mxu0 0.0
    %3510 = vmatprep.subr.mxu0 0.0
    %3511 = vmatpush1.xpose.msra.mxu0 0.0
    %3512 = vmatprep.subr.mxu0 0.0
    %3513 = vmatpush1.xpose.msra.mxu0 0.0
    %3514 = vmatprep.subr.mxu0 0.0
    %3515 = vmatpush1.xpose.msra.mxu0 0.0
    %3516 = vmatprep.subr.mxu0 0.0
    %3517 = vmatpush1.xpose.msra.mxu0 0.0
    %3518 = vmatprep.subr.mxu0 0.0
    %3519 = vmatpush1.xpose.msra.mxu0 0.0
    %3520 = vmatprep.subr.mxu0 0.0
    %3521 = vmatpush1.xpose.msra.mxu0 0.0
    %3522 = vmatprep.subr.mxu0 0.0
    %3523 = vmatpush1.xpose.msra.mxu0 0.0
    %3524 = vmatprep.subr.mxu0 0.0
    %3525 = vmatpush1.xpose.msra.mxu0 0.0
    %3526 = vmatprep.subr.mxu0 0.0
    %3527 = vmatpush1.xpose.msra.mxu0 0.0
    %3528 = vmatprep.subr.mxu0 0.0
    %3529 = vmatpush1.xpose.msra.mxu0 0.0
    %3530 = vmatprep.subr.mxu0 0.0
    %3531 = vmatpush1.xpose.msra.mxu0 0.0
    %3532 = vmatprep.subr.mxu0 0.0
    %3533 = vmatpush1.xpose.msra.mxu0 0.0
    %3534 = vmatprep.subr.mxu0 0.0
    %3535 = vmatpush1.xpose.msra.mxu0 0.0
    %3536 = vmatprep.subr.mxu0 0.0
    %3537 = vmatpush1.xpose.msra.mxu0 0.0
    %3538 = vmatprep.subr.mxu0 0.0
    %3539 = vmatpush1.xpose.msra.mxu0 0.0
    %3540 = vmatprep.subr.mxu0 0.0
    %3541 = vmatpush1.xpose.msra.mxu0 0.0
    %3542 = vmatprep.subr.mxu0 0.0
    %3543 = vmatpush1.xpose.msra.mxu0 0.0
    %3544 = vmatprep.subr.mxu0 0.0
    %3545 = vmatpush1.xpose.msra.mxu0 0.0
    %3546 = vmatprep.subr.mxu0 0.0
    %3547 = vmatpush1.xpose.msra.mxu0 0.0
    %3548 = vmatprep.subr.mxu0 0.0
    %3549 = vmatpush1.xpose.msra.mxu0 0.0
    %3550 = vmatprep.subr.mxu0 0.0
    %3551 = vmatpush1.xpose.msra.mxu0 0.0
    %3552 = vmatprep.subr.mxu0 0.0
    %3553 = vmatpush1.xpose.msra.mxu0 0.0
    %3554 = vmatprep.subr.mxu0 0.0
    %3555 = vmatpush1.xpose.msra.mxu0 0.0
    %3556 = vmatprep.subr.mxu0 0.0
    %3557 = vmatpush1.xpose.msra.mxu0 0.0
    %3558 = vmatprep.subr.mxu0 0.0
    %3559 = vmatpush1.xpose.msra.mxu0 0.0
    %3560 = vmatprep.subr.mxu0 0.0
    %3561 = vmatpush1.xpose.msra.mxu0 0.0
    %3562 = vmatprep.subr.mxu0 0.0
    %3563 = vmatpush1.xpose.msra.mxu0 0.0
    %3564 = vmatprep.mubr.f32.mxu0 0.0
    %3565 = vmatmul.mubr.f32.gmra.mrb[0].mxu0 %v3498
    %v3566 = vpop.f32.mrb[0].mxu0
    %v3567 = vadd.f32 0.0, %v3566
    %v3568 = vpop.f32.mrb[0].mxu0
    %3569 = vdwg.mxu0
    %v3570 = vsel %vm1961, %v3489, -inf
    %3571 = vmax.xlane.f32.xlu0 %v3570
    %v3572 = vpop.xlane.xlu0 %3571
    %v3573 = vsel %vm1961, %v3567, -inf
    %3574 = vmax.xlane.f32.xlu0 %v3573
    %v3575 = vpop.xlane.xlu0 %3574
    %v3576 = vsub.f32 %v3489, %v3572
    %v3577 = vsub.f32 %v3567, %v3575
    %v3578 = vmul.f32 %v3576, 1.442695
    %v3579 = vpow.pop %v3578
    %v3580 = vmul.f32 %v3577, 1.442695
    %v3581 = vpow.pop %v3580
    %v3582 = vsel %vm1961, %v3579, 0.0
    %3583 = vadd.xlane.f32.xlu0 %v3582
    %v3584 = vpop.xlane.xlu0 %3583
    %v3585 = vsel %vm1961, %v3581, 0.0
    %3586 = vadd.xlane.f32.xlu0 %v3585
    %v3587 = vpop.xlane.xlu0 %3586
    %v3588 = vrcp.pop %v3584
    %v3589 = vrcp.pop %v3587
    %v3590 = vmul.f32 %v3579, %v3588
    %v3591 = vmul.f32 %v3581, %v3589
    %v3593 = vsel %vm1984, %v3590, 0
    %3595 = vmatprep.subr.mxu0 0.0
    %3596 = vmatpush1.msra.mxu0 %v1469
    %3597 = vmatprep.subr.mxu0 0.0
    %3598 = vmatpush1.msra.mxu0 0.0
    %3599 = vmatprep.subr.mxu0 0.0
    %3600 = vmatpush1.msra.mxu0 0.0
    %3601 = vmatprep.subr.mxu0 0.0
    %3602 = vmatpush1.msra.mxu0 0.0
    %3603 = vmatprep.subr.mxu0 0.0
    %3604 = vmatpush1.msra.mxu0 0.0
    %3605 = vmatprep.subr.mxu0 0.0
    %3606 = vmatpush1.msra.mxu0 0.0
    %3607 = vmatprep.subr.mxu0 0.0
    %3608 = vmatpush1.msra.mxu0 0.0
    %3609 = vmatprep.subr.mxu0 0.0
    %3610 = vmatpush1.msra.mxu0 0.0
    %3611 = vmatprep.subr.mxu0 0.0
    %3612 = vmatpush1.msra.mxu0 0.0
    %3613 = vmatprep.subr.mxu0 0.0
    %3614 = vmatpush1.msra.mxu0 0.0
    %3615 = vmatprep.subr.mxu0 0.0
    %3616 = vmatpush1.msra.mxu0 0.0
    %3617 = vmatprep.subr.mxu0 0.0
    %3618 = vmatpush1.msra.mxu0 0.0
    %3619 = vmatprep.subr.mxu0 0.0
    %3620 = vmatpush1.msra.mxu0 0.0
    %3621 = vmatprep.subr.mxu0 0.0
    %3622 = vmatpush1.msra.mxu0 0.0
    %3623 = vmatprep.subr.mxu0 0.0
    %3624 = vmatpush1.msra.mxu0 0.0
    %3625 = vmatprep.subr.mxu0 0.0
    %3626 = vmatpush1.msra.mxu0 0.0
    %3627 = vmatprep.subr.mxu0 0.0
    %3628 = vmatpush1.msra.mxu0 0.0
    %3629 = vmatprep.subr.mxu0 0.0
    %3630 = vmatpush1.msra.mxu0 0.0
    %3631 = vmatprep.subr.mxu0 0.0
    %3632 = vmatpush1.msra.mxu0 0.0
    %3633 = vmatprep.subr.mxu0 0.0
    %3634 = vmatpush1.msra.mxu0 0.0
    %3635 = vmatprep.subr.mxu0 0.0
    %3636 = vmatpush1.msra.mxu0 0.0
    %3637 = vmatprep.subr.mxu0 0.0
    %3638 = vmatpush1.msra.mxu0 0.0
    %3639 = vmatprep.subr.mxu0 0.0
    %3640 = vmatpush1.msra.mxu0 0.0
    %3641 = vmatprep.subr.mxu0 0.0
    %3642 = vmatpush1.msra.mxu0 0.0
    %3643 = vmatprep.subr.mxu0 0.0
    %3644 = vmatpush1.msra.mxu0 0.0
    %3645 = vmatprep.subr.mxu0 0.0
    %3646 = vmatpush1.msra.mxu0 0.0
    %3647 = vmatprep.subr.mxu0 0.0
    %3648 = vmatpush1.msra.mxu0 0.0
    %3649 = vmatprep.subr.mxu0 0.0
    %3650 = vmatpush1.msra.mxu0 0.0
    %3651 = vmatprep.subr.mxu0 0.0
    %3652 = vmatpush1.msra.mxu0 0.0
    %3653 = vmatprep.subr.mxu0 0.0
    %3654 = vmatpush1.msra.mxu0 0.0
    %3655 = vmatprep.subr.mxu0 0.0
    %3656 = vmatpush1.msra.mxu0 0.0
    %3657 = vmatprep.subr.mxu0 0.0
    %3658 = vmatpush1.msra.mxu0 0.0
    %3659 = vmatprep.mubr.f32.mxu0 0.0
    %3660 = vmatmul.mubr.f32.gmra.mrb[0].mxu0 %v3593
    %v3661 = vpop.f32.mrb[0].mxu0
    %v3662 = vadd.f32 0.0, %v3661
    %v3663 = vpop.f32.mrb[0].mxu0
    %3664 = vdwg.mxu0
    %v3666 = vsel %vm1984, %v3591, 0
    %3668 = vmatprep.subr.mxu0 0.0
    %3669 = vmatpush1.msra.mxu0 %v1470
    %3670 = vmatprep.subr.mxu0 0.0
    %3671 = vmatpush1.msra.mxu0 0.0
    %3672 = vmatprep.subr.mxu0 0.0
    %3673 = vmatpush1.msra.mxu0 0.0
    %3674 = vmatprep.subr.mxu0 0.0
    %3675 = vmatpush1.msra.mxu0 0.0
    %3676 = vmatprep.subr.mxu0 0.0
    %3677 = vmatpush1.msra.mxu0 0.0
    %3678 = vmatprep.subr.mxu0 0.0
    %3679 = vmatpush1.msra.mxu0 0.0
    %3680 = vmatprep.subr.mxu0 0.0
    %3681 = vmatpush1.msra.mxu0 0.0
    %3682 = vmatprep.subr.mxu0 0.0
    %3683 = vmatpush1.msra.mxu0 0.0
    %3684 = vmatprep.subr.mxu0 0.0
    %3685 = vmatpush1.msra.mxu0 0.0
    %3686 = vmatprep.subr.mxu0 0.0
    %3687 = vmatpush1.msra.mxu0 0.0
    %3688 = vmatprep.subr.mxu0 0.0
    %3689 = vmatpush1.msra.mxu0 0.0
    %3690 = vmatprep.subr.mxu0 0.0
    %3691 = vmatpush1.msra.mxu0 0.0
    %3692 = vmatprep.subr.mxu0 0.0
    %3693 = vmatpush1.msra.mxu0 0.0
    %3694 = vmatprep.subr.mxu0 0.0
    %3695 = vmatpush1.msra.mxu0 0.0
    %3696 = vmatprep.subr.mxu0 0.0
    %3697 = vmatpush1.msra.mxu0 0.0
    %3698 = vmatprep.subr.mxu0 0.0
    %3699 = vmatpush1.msra.mxu0 0.0
    %3700 = vmatprep.subr.mxu0 0.0
    %3701 = vmatpush1.msra.mxu0 0.0
    %3702 = vmatprep.subr.mxu0 0.0
    %3703 = vmatpush1.msra.mxu0 0.0
    %3704 = vmatprep.subr.mxu0 0.0
    %3705 = vmatpush1.msra.mxu0 0.0
    %3706 = vmatprep.subr.mxu0 0.0
    %3707 = vmatpush1.msra.mxu0 0.0
    %3708 = vmatprep.subr.mxu0 0.0
    %3709 = vmatpush1.msra.mxu0 0.0
    %3710 = vmatprep.subr.mxu0 0.0
    %3711 = vmatpush1.msra.mxu0 0.0
    %3712 = vmatprep.subr.mxu0 0.0
    %3713 = vmatpush1.msra.mxu0 0.0
    %3714 = vmatprep.subr.mxu0 0.0
    %3715 = vmatpush1.msra.mxu0 0.0
    %3716 = vmatprep.subr.mxu0 0.0
    %3717 = vmatpush1.msra.mxu0 0.0
    %3718 = vmatprep.subr.mxu0 0.0
    %3719 = vmatpush1.msra.mxu0 0.0
    %3720 = vmatprep.subr.mxu0 0.0
    %3721 = vmatpush1.msra.mxu0 0.0
    %3722 = vmatprep.subr.mxu0 0.0
    %3723 = vmatpush1.msra.mxu0 0.0
    %3724 = vmatprep.subr.mxu0 0.0
    %3725 = vmatpush1.msra.mxu0 0.0
    %3726 = vmatprep.subr.mxu0 0.0
    %3727 = vmatpush1.msra.mxu0 0.0
    %3728 = vmatprep.subr.mxu0 0.0
    %3729 = vmatpush1.msra.mxu0 0.0
    %3730 = vmatprep.subr.mxu0 0.0
    %3731 = vmatpush1.msra.mxu0 0.0
    %3732 = vmatprep.mubr.f32.mxu0 0.0
    %3733 = vmatmul.mubr.f32.gmra.mrb[0].mxu0 %v3666
    %v3734 = vpop.f32.mrb[0].mxu0
    %v3735 = vadd.f32 0.0, %v3734
    %v3736 = vpop.f32.mrb[0].mxu0
    %3737 = vdwg.mxu0
    %v3738 = vrot.slane %v3389, 4
    %3739 = vrot.lane.b32.xlu0 %v3738, 32
    %v3740 = vpop.permute.xlu0 %3739
    %v3741 = vsel %vm1596, %v3740, 0
    %3743 = vmatprep.subr.mxu0 0.0
    %3744 = vmatpush1.msra.mxu0 %v1586
    %3745 = vmatprep.subr.mxu0 0.0
    %3746 = vmatpush1.msra.mxu0 %v1587
    %3747 = vmatprep.subr.mxu0 0.0
    %3748 = vmatpush1.msra.mxu0 %v1588
    %3749 = vmatprep.subr.mxu0 0.0
    %3750 = vmatpush1.msra.mxu0 %v1589
    %3751 = vmatprep.subr.mxu0 0.0
    %3752 = vmatpush1.msra.mxu0 0.0
    %3753 = vmatprep.subr.mxu0 0.0
    %3754 = vmatpush1.msra.mxu0 0.0
    %3755 = vmatprep.subr.mxu0 0.0
    %3756 = vmatpush1.msra.mxu0 0.0
    %3757 = vmatprep.subr.mxu0 0.0
    %3758 = vmatpush1.msra.mxu0 0.0
    %3759 = vmatprep.subr.mxu0 0.0
    %3760 = vmatpush1.msra.mxu0 0.0
    %3761 = vmatprep.subr.mxu0 0.0
    %3762 = vmatpush1.msra.mxu0 0.0
    %3763 = vmatprep.subr.mxu0 0.0
    %3764 = vmatpush1.msra.mxu0 0.0
    %3765 = vmatprep.subr.mxu0 0.0
    %3766 = vmatpush1.msra.mxu0 0.0
    %3767 = vmatprep.subr.mxu0 0.0
    %3768 = vmatpush1.msra.mxu0 0.0
    %3769 = vmatprep.subr.mxu0 0.0
    %3770 = vmatpush1.msra.mxu0 0.0
    %3771 = vmatprep.subr.mxu0 0.0
    %3772 = vmatpush1.msra.mxu0 0.0
    %3773 = vmatprep.subr.mxu0 0.0
    %3774 = vmatpush1.msra.mxu0 0.0
    %3775 = vmatprep.subr.mxu0 0.0
    %3776 = vmatpush1.msra.mxu0 0.0
    %3777 = vmatprep.subr.mxu0 0.0
    %3778 = vmatpush1.msra.mxu0 0.0
    %3779 = vmatprep.subr.mxu0 0.0
    %3780 = vmatpush1.msra.mxu0 0.0
    %3781 = vmatprep.subr.mxu0 0.0
    %3782 = vmatpush1.msra.mxu0 0.0
    %3783 = vmatprep.subr.mxu0 0.0
    %3784 = vmatpush1.msra.mxu0 0.0
    %3785 = vmatprep.subr.mxu0 0.0
    %3786 = vmatpush1.msra.mxu0 0.0
    %3787 = vmatprep.subr.mxu0 0.0
    %3788 = vmatpush1.msra.mxu0 0.0
    %3789 = vmatprep.subr.mxu0 0.0
    %3790 = vmatpush1.msra.mxu0 0.0
    %3791 = vmatprep.subr.mxu0 0.0
    %3792 = vmatpush1.msra.mxu0 0.0
    %3793 = vmatprep.subr.mxu0 0.0
    %3794 = vmatpush1.msra.mxu0 0.0
    %3795 = vmatprep.subr.mxu0 0.0
    %3796 = vmatpush1.msra.mxu0 0.0
    %3797 = vmatprep.subr.mxu0 0.0
    %3798 = vmatpush1.msra.mxu0 0.0
    %3799 = vmatprep.subr.mxu0 0.0
    %3800 = vmatpush1.msra.mxu0 0.0
    %3801 = vmatprep.subr.mxu0 0.0
    %3802 = vmatpush1.msra.mxu0 0.0
    %3803 = vmatprep.subr.mxu0 0.0
    %3804 = vmatpush1.msra.mxu0 0.0
    %3805 = vmatprep.subr.mxu0 0.0
    %3806 = vmatpush1.msra.mxu0 0.0
    %3807 = vmatprep.mubr.f32.mxu0 0.0
    %3808 = vmatmul.mubr.f32.gmra.mrb[0].mxu0 %v3741
    %v3809 = vpop.f32.mrb[0].mxu0
    %v3810 = vadd.f32 0.0, %v3809
    %v3811 = vpop.f32.mrb[0].mxu0
    %3812 = vdwg.mxu0
    %v3815 = vrot.slane %v3735, 7
    %v3816 = vsel %vm2208, %v3815, %v3662
    %v3817 = vsel %vm1596, %v3816, 0
    %3819 = vmatprep.subr.mxu0 0.0
    %3820 = vmatpush1.msra.mxu0 %v1582
    %3821 = vmatprep.subr.mxu0 0.0
    %3822 = vmatpush1.msra.mxu0 %v1583
    %3823 = vmatprep.subr.mxu0 0.0
    %3824 = vmatpush1.msra.mxu0 %v1584
    %3825 = vmatprep.subr.mxu0 0.0
    %3826 = vmatpush1.msra.mxu0 %v1585
    %3827 = vmatprep.subr.mxu0 0.0
    %3828 = vmatpush1.msra.mxu0 0.0
    %3829 = vmatprep.subr.mxu0 0.0
    %3830 = vmatpush1.msra.mxu0 0.0
    %3831 = vmatprep.subr.mxu0 0.0
    %3832 = vmatpush1.msra.mxu0 0.0
    %3833 = vmatprep.subr.mxu0 0.0
    %3834 = vmatpush1.msra.mxu0 0.0
    %3835 = vmatprep.subr.mxu0 0.0
    %3836 = vmatpush1.msra.mxu0 0.0
    %3837 = vmatprep.subr.mxu0 0.0
    %3838 = vmatpush1.msra.mxu0 0.0
    %3839 = vmatprep.subr.mxu0 0.0
    %3840 = vmatpush1.msra.mxu0 0.0
    %3841 = vmatprep.subr.mxu0 0.0
    %3842 = vmatpush1.msra.mxu0 0.0
    %3843 = vmatprep.subr.mxu0 0.0
    %3844 = vmatpush1.msra.mxu0 0.0
    %3845 = vmatprep.subr.mxu0 0.0
    %3846 = vmatpush1.msra.mxu0 0.0
    %3847 = vmatprep.subr.mxu0 0.0
    %3848 = vmatpush1.msra.mxu0 0.0
    %3849 = vmatprep.subr.mxu0 0.0
    %3850 = vmatpush1.msra.mxu0 0.0
    %3851 = vmatprep.subr.mxu0 0.0
    %3852 = vmatpush1.msra.mxu0 0.0
    %3853 = vmatprep.subr.mxu0 0.0
    %3854 = vmatpush1.msra.mxu0 0.0
    %3855 = vmatprep.subr.mxu0 0.0
    %3856 = vmatpush1.msra.mxu0 0.0
    %3857 = vmatprep.subr.mxu0 0.0
    %3858 = vmatpush1.msra.mxu0 0.0
    %3859 = vmatprep.subr.mxu0 0.0
    %3860 = vmatpush1.msra.mxu0 0.0
    %3861 = vmatprep.subr.mxu0 0.0
    %3862 = vmatpush1.msra.mxu0 0.0
    %3863 = vmatprep.subr.mxu0 0.0
    %3864 = vmatpush1.msra.mxu0 0.0
    %3865 = vmatprep.subr.mxu0 0.0
    %3866 = vmatpush1.msra.mxu0 0.0
    %3867 = vmatprep.subr.mxu0 0.0
    %3868 = vmatpush1.msra.mxu0 0.0
    %3869 = vmatprep.subr.mxu0 0.0
    %3870 = vmatpush1.msra.mxu0 0.0
    %3871 = vmatprep.subr.mxu0 0.0
    %3872 = vmatpush1.msra.mxu0 0.0
    %3873 = vmatprep.subr.mxu0 0.0
    %3874 = vmatpush1.msra.mxu0 0.0
    %3875 = vmatprep.subr.mxu0 0.0
    %3876 = vmatpush1.msra.mxu0 0.0
    %3877 = vmatprep.subr.mxu0 0.0
    %3878 = vmatpush1.msra.mxu0 0.0
    %3879 = vmatprep.subr.mxu0 0.0
    %3880 = vmatpush1.msra.mxu0 0.0
    %3881 = vmatprep.subr.mxu0 0.0
    %3882 = vmatpush1.msra.mxu0 0.0
    %3883 = vmatprep.mubr.f32.mxu0 0.0
    %3884 = vmatmul.mubr.f32.gmra.mrb[0].mxu0 %v3817
    %v3885 = vpop.f32.mrb[0].mxu0
    %v3886 = vadd.f32 %v3810, %v3885
    %v3887 = vpop.f32.mrb[0].mxu0
    %3888 = vdwg.mxu0
    %v3889 = vadd.f32 %v3886, %v2286
    %v3890 = vtanh.pop %v3889
    %v3892 = vsel %vm1596, %v3890, 0
    %3894 = vmatprep.subr.mxu0 0.0
    %3895 = vmatpush1.msra.mxu0 %v1591
    %3896 = vmatprep.subr.mxu0 0.0
    %3897 = vmatpush1.msra.mxu0 %v1592
    %3898 = vmatprep.subr.mxu0 0.0
    %3899 = vmatpush1.msra.mxu0 %v1593
    %3900 = vmatprep.subr.mxu0 0.0
    %3901 = vmatpush1.msra.mxu0 %v1594
    %3902 = vmatprep.subr.mxu0 0.0
    %3903 = vmatpush1.msra.mxu0 0.0
    %3904 = vmatprep.subr.mxu0 0.0
    %3905 = vmatpush1.msra.mxu0 0.0
    %3906 = vmatprep.subr.mxu0 0.0
    %3907 = vmatpush1.msra.mxu0 0.0
    %3908 = vmatprep.subr.mxu0 0.0
    %3909 = vmatpush1.msra.mxu0 0.0
    %3910 = vmatprep.subr.mxu0 0.0
    %3911 = vmatpush1.msra.mxu0 0.0
    %3912 = vmatprep.subr.mxu0 0.0
    %3913 = vmatpush1.msra.mxu0 0.0
    %3914 = vmatprep.subr.mxu0 0.0
    %3915 = vmatpush1.msra.mxu0 0.0
    %3916 = vmatprep.subr.mxu0 0.0
    %3917 = vmatpush1.msra.mxu0 0.0
    %3918 = vmatprep.subr.mxu0 0.0
    %3919 = vmatpush1.msra.mxu0 0.0
    %3920 = vmatprep.subr.mxu0 0.0
    %3921 = vmatpush1.msra.mxu0 0.0
    %3922 = vmatprep.subr.mxu0 0.0
    %3923 = vmatpush1.msra.mxu0 0.0
    %3924 = vmatprep.subr.mxu0 0.0
    %3925 = vmatpush1.msra.mxu0 0.0
    %3926 = vmatprep.subr.mxu0 0.0
    %3927 = vmatpush1.msra.mxu0 0.0
    %3928 = vmatprep.subr.mxu0 0.0
    %3929 = vmatpush1.msra.mxu0 0.0
    %3930 = vmatprep.subr.mxu0 0.0
    %3931 = vmatpush1.msra.mxu0 0.0
    %3932 = vmatprep.subr.mxu0 0.0
    %3933 = vmatpush1.msra.mxu0 0.0
    %3934 = vmatprep.subr.mxu0 0.0
    %3935 = vmatpush1.msra.mxu0 0.0
    %3936 = vmatprep.subr.mxu0 0.0
    %3937 = vmatpush1.msra.mxu0 0.0
    %3938 = vmatprep.subr.mxu0 0.0
    %3939 = vmatpush1.msra.mxu0 0.0
    %3940 = vmatprep.subr.mxu0 0.0
    %3941 = vmatpush1.msra.mxu0 0.0
    %3942 = vmatprep.subr.mxu0 0.0
    %3943 = vmatpush1.msra.mxu0 0.0
    %3944 = vmatprep.subr.mxu0 0.0
    %3945 = vmatpush1.msra.mxu0 0.0
    %3946 = vmatprep.subr.mxu0 0.0
    %3947 = vmatpush1.msra.mxu0 0.0
    %3948 = vmatprep.subr.mxu0 0.0
    %3949 = vmatpush1.msra.mxu0 0.0
    %3950 = vmatprep.subr.mxu0 0.0
    %3951 = vmatpush1.msra.mxu0 0.0
    %3952 = vmatprep.subr.mxu0 0.0
    %3953 = vmatpush1.msra.mxu0 0.0
    %3954 = vmatprep.subr.mxu0 0.0
    %3955 = vmatpush1.msra.mxu0 0.0
    %3956 = vmatprep.subr.mxu0 0.0
    %3957 = vmatpush1.msra.mxu0 0.0
    %3958 = vmatprep.mubr.f32.mxu0 0.0
    %3959 = vmatmul.mubr.f32.gmra.mrb[0].mxu0 %v3892
    %v3960 = vpop.f32.mrb[0].mxu0
    %v3961 = vadd.f32 %v2294, %v3960
    %v3962 = vpop.f32.mrb[0].mxu0
    %3963 = vdwg.mxu0
    %v3964 = vsel %vm2369, %v3961, -inf
    %3965 = vmax.xlane.f32.xlu0 %v3964
    %v3966 = vpop.xlane.xlu0 %3965
    %v3967 = vsub.f32 %v3961, %v3966
    %v3968 = vmul.f32 %v3967, 1.442695
    %v3969 = vpow.pop %v3968
    %v3970 = vsel %vm2369, %v3969, 0.0
    %3971 = vadd.xlane.f32.xlu0 %v3970
    %v3972 = vpop.xlane.xlu0 %3971
    %v3973 = vlog2.pop %v3972
    %v3974 = vmul.f32 %v3973, 0.6931472
    %v3975 = vadd.f32 %v3966, %v3974
    %v3976 = vsub.f32 %v3961, %v3975
    %v3977 = vld [vmem:[%s2 + $0x4] sm:$0x3]
    %v3978 = vmul.f32 %v3976, %v3977
    %v3979 = vsel %vm2369, %v3978, 0.0
    %3980 = vadd.xlane.f32.xlu0 %v3979
    %v3981 = vpop.xlane.xlu0 %3980
    %v3982 = vld [vmem:[%s3 + $0x4] sm:$0x3]
    %v3983 = vsub.f32 0.0, %v3981
    %v3984 = vmul.f32 %v3983, %v3982
    %v3985 = vsel %vm2391, %v3984, 0.0
    %3986 = vadd.xlane.f32.xlu0 %v3985
    %v3987 = vpop.xlane.xlu0 %3986
    %v3988 = vrot.slane %v3987, 4
    %v3989 = vadd.f32 %v3987, %v3988
    %v3990 = vrot.slane %v3989, 2
    %v3991 = vadd.f32 %v3989, %v3990
    %v3992 = vrot.slane %v3991, 1
    %v3993 = vadd.f32 %v3991, %v3992
    %s3994 = vtos %v3993
    %v3995 = vstv %s3994
    %v3996 = vsel %vm2391, %v3982, 0.0
    %3997 = vadd.xlane.f32.xlu0 %v3996
    %v3998 = vpop.xlane.xlu0 %3997
    %v3999 = vrot.slane %v3998, 4
    %v4000 = vadd.f32 %v3998, %v3999
    %v4001 = vrot.slane %v4000, 2
    %v4002 = vadd.f32 %v4000, %v4001
    %v4003 = vrot.slane %v4002, 1
    %v4004 = vadd.f32 %v4002, %v4003
    %s4005 = vtos %v4004
    %v4006 = vstv %s4005
    %v4007 = vmax.f32 %v4006, 1.0
    %v4008 = vrcp.pop %v4007
    %v4009 = vmul.f32 %v3995, %v4008
    %v4010 = vadd.f32 %v3214, %v4009
    %4011 = vmatprep.subr.mxu0 0.0
    %4012 = vmatpush1.msra.mxu0 %v1574
    %4013 = vmatprep.subr.mxu0 0.0
    %4014 = vmatpush1.msra.mxu0 %v1575
    %4015 = vmatprep.subr.mxu0 0.0
    %4016 = vmatpush1.msra.mxu0 %v1576
    %4017 = vmatprep.subr.mxu0 0.0
    %4018 = vmatpush1.msra.mxu0 %v1577
    %4019 = vmatprep.subr.mxu0 0.0
    %4020 = vmatpush1.msra.mxu0 0.0
    %4021 = vmatprep.subr.mxu0 0.0
    %4022 = vmatpush1.msra.mxu0 0.0
    %4023 = vmatprep.subr.mxu0 0.0
    %4024 = vmatpush1.msra.mxu0 0.0
    %4025 = vmatprep.subr.mxu0 0.0
    %4026 = vmatpush1.msra.mxu0 0.0
    %4027 = vmatprep.subr.mxu0 0.0
    %4028 = vmatpush1.msra.mxu0 0.0
    %4029 = vmatprep.subr.mxu0 0.0
    %4030 = vmatpush1.msra.mxu0 0.0
    %4031 = vmatprep.subr.mxu0 0.0
    %4032 = vmatpush1.msra.mxu0 0.0
    %4033 = vmatprep.subr.mxu0 0.0
    %4034 = vmatpush1.msra.mxu0 0.0
    %4035 = vmatprep.subr.mxu0 0.0
    %4036 = vmatpush1.msra.mxu0 0.0
    %4037 = vmatprep.subr.mxu0 0.0
    %4038 = vmatpush1.msra.mxu0 0.0
    %4039 = vmatprep.subr.mxu0 0.0
    %4040 = vmatpush1.msra.mxu0 0.0
    %4041 = vmatprep.subr.mxu0 0.0
    %4042 = vmatpush1.msra.mxu0 0.0
    %4043 = vmatprep.subr.mxu0 0.0
    %4044 = vmatpush1.msra.mxu0 0.0
    %4045 = vmatprep.subr.mxu0 0.0
    %4046 = vmatpush1.msra.mxu0 0.0
    %4047 = vmatprep.subr.mxu0 0.0
    %4048 = vmatpush1.msra.mxu0 0.0
    %4049 = vmatprep.subr.mxu0 0.0
    %4050 = vmatpush1.msra.mxu0 0.0
    %4051 = vmatprep.subr.mxu0 0.0
    %4052 = vmatpush1.msra.mxu0 0.0
    %4053 = vmatprep.subr.mxu0 0.0
    %4054 = vmatpush1.msra.mxu0 0.0
    %4055 = vmatprep.subr.mxu0 0.0
    %4056 = vmatpush1.msra.mxu0 0.0
    %4057 = vmatprep.subr.mxu0 0.0
    %4058 = vmatpush1.msra.mxu0 0.0
    %4059 = vmatprep.subr.mxu0 0.0
    %4060 = vmatpush1.msra.mxu0 0.0
    %4061 = vmatprep.subr.mxu0 0.0
    %4062 = vmatpush1.msra.mxu0 0.0
    %4063 = vmatprep.subr.mxu0 0.0
    %4064 = vmatpush1.msra.mxu0 0.0
    %4065 = vmatprep.subr.mxu0 0.0
    %4066 = vmatpush1.msra.mxu0 0.0
    %4067 = vmatprep.subr.mxu0 0.0
    %4068 = vmatpush1.msra.mxu0 0.0
    %4069 = vmatprep.subr.mxu0 0.0
    %4070 = vmatpush1.msra.mxu0 0.0
    %4071 = vmatprep.subr.mxu0 0.0
    %4072 = vmatpush1.msra.mxu0 0.0
    %4073 = vmatprep.subr.mxu0 0.0
    %4074 = vmatpush1.msra.mxu0 0.0
    %4075 = vmatprep.mubr.f32.mxu0 0.0
    %4076 = vmatmul.mubr.f32.gmra.mrb[0].mxu0 %v3817
    %v4077 = vpop.f32.mrb[0].mxu0
    %v4078 = vadd.f32 0.0, %v4077
    %v4079 = vpop.f32.mrb[0].mxu0
    %4080 = vdwg.mxu0
    %v4082 = vrot.slane %v4078, 2
    %v4084 = vadd.f32 %v1566, %v4082
    %4085 = vmatprep.subr.mxu0 0.0
    %4086 = vmatpush1.msra.mxu0 %v1578
    %4087 = vmatprep.subr.mxu0 0.0
    %4088 = vmatpush1.msra.mxu0 %v1579
    %4089 = vmatprep.subr.mxu0 0.0
    %4090 = vmatpush1.msra.mxu0 %v1580
    %4091 = vmatprep.subr.mxu0 0.0
    %4092 = vmatpush1.msra.mxu0 %v1581
    %4093 = vmatprep.subr.mxu0 0.0
    %4094 = vmatpush1.msra.mxu0 0.0
    %4095 = vmatprep.subr.mxu0 0.0
    %4096 = vmatpush1.msra.mxu0 0.0
    %4097 = vmatprep.subr.mxu0 0.0
    %4098 = vmatpush1.msra.mxu0 0.0
    %4099 = vmatprep.subr.mxu0 0.0
    %4100 = vmatpush1.msra.mxu0 0.0
    %4101 = vmatprep.subr.mxu0 0.0
    %4102 = vmatpush1.msra.mxu0 0.0
    %4103 = vmatprep.subr.mxu0 0.0
    %4104 = vmatpush1.msra.mxu0 0.0
    %4105 = vmatprep.subr.mxu0 0.0
    %4106 = vmatpush1.msra.mxu0 0.0
    %4107 = vmatprep.subr.mxu0 0.0
    %4108 = vmatpush1.msra.mxu0 0.0
    %4109 = vmatprep.subr.mxu0 0.0
    %4110 = vmatpush1.msra.mxu0 0.0
    %4111 = vmatprep.subr.mxu0 0.0
    %4112 = vmatpush1.msra.mxu0 0.0
    %4113 = vmatprep.subr.mxu0 0.0
    %4114 = vmatpush1.msra.mxu0 0.0
    %4115 = vmatprep.subr.mxu0 0.0
    %4116 = vmatpush1.msra.mxu0 0.0
    %4117 = vmatprep.subr.mxu0 0.0
    %4118 = vmatpush1.msra.mxu0 0.0
    %4119 = vmatprep.subr.mxu0 0.0
    %4120 = vmatpush1.msra.mxu0 0.0
    %4121 = vmatprep.subr.mxu0 0.0
    %4122 = vmatpush1.msra.mxu0 0.0
    %4123 = vmatprep.subr.mxu0 0.0
    %4124 = vmatpush1.msra.mxu0 0.0
    %4125 = vmatprep.subr.mxu0 0.0
    %4126 = vmatpush1.msra.mxu0 0.0
    %4127 = vmatprep.subr.mxu0 0.0
    %4128 = vmatpush1.msra.mxu0 0.0
    %4129 = vmatprep.subr.mxu0 0.0
    %4130 = vmatpush1.msra.mxu0 0.0
    %4131 = vmatprep.subr.mxu0 0.0
    %4132 = vmatpush1.msra.mxu0 0.0
    %4133 = vmatprep.subr.mxu0 0.0
    %4134 = vmatpush1.msra.mxu0 0.0
    %4135 = vmatprep.subr.mxu0 0.0
    %4136 = vmatpush1.msra.mxu0 0.0
    %4137 = vmatprep.subr.mxu0 0.0
    %4138 = vmatpush1.msra.mxu0 0.0
    %4139 = vmatprep.subr.mxu0 0.0
    %4140 = vmatpush1.msra.mxu0 0.0
    %4141 = vmatprep.subr.mxu0 0.0
    %4142 = vmatpush1.msra.mxu0 0.0
    %4143 = vmatprep.subr.mxu0 0.0
    %4144 = vmatpush1.msra.mxu0 0.0
    %4145 = vmatprep.subr.mxu0 0.0
    %4146 = vmatpush1.msra.mxu0 0.0
    %4147 = vmatprep.subr.mxu0 0.0
    %4148 = vmatpush1.msra.mxu0 0.0
    %4149 = vmatprep.mubr.f32.mxu0 0.0
    %4150 = vmatmul.mubr.f32.gmra.mrb[0].mxu0 %v3741
    %v4151 = vpop.f32.mrb[0].mxu0
    %v4152 = vadd.f32 0.0, %v4151
    %v4153 = vpop.f32.mrb[0].mxu0
    %4154 = vdwg.mxu0
    %v4156 = vrot.slane %v4152, 2
    %v4158 = vadd.f32 %v4084, %v4156
    %v4159 = vxor.u32 %v4158, 2147483648
    %v4160 = vmul.f32 %v4159, 1.442695
    %v4161 = vpow.pop %v4160
    %v4162 = vadd.f32 %v4161, 1.0
    %v4163 = vrcp.pop %v4162
    %v4164 = vmul.f32 1.0, %v4163
    %v4165 = vtanh.pop %v4158
    %v4167 = vrot.slane %v3383, 6
    %v4169 = vmul.f32 %v4164, %v4167
    %4171 = vrot.lane.b32.xlu0 %v4165, 64
    %v4172 = vpop.permute.xlu0 %4171
    %v4174 = vmul.f32 %v4164, %v4172
    %4176 = vrot.lane.b32.xlu0 %v4174, 32
    %v4177 = vpop.permute.xlu0 %4176
    %v4179 = vadd.f32 %v4169, %v4177
    %v4180 = vtanh.pop %v4179
    %4182 = vrot.lane.b32.xlu0 %v4180, 64
    %v4183 = vpop.permute.xlu0 %4182
    %v4185 = vmul.f32 %v4164, %v4183
    %v4187 = vcombine.high %v4185, %v4185
    %v4189 = vunpack.c.l.s4 1966171168
    %v4190 = vunpack.c.0.s8 %v4189
    %v4191 = vlaneseq
    %v4192 = vshrl.u32 %v4191, 7
    %v4193 = vsub.s32 %v4190, %v4192
    %v4194 = vrot.slane %v4187, %v4193
    %v4195 = vcombine.high %v4194, %v4194
    %v4197 = vunpack.c.l.s4 1966171168
    %v4198 = vunpack.c.0.s8 %v4197
    %v4199 = vlaneseq
    %v4200 = vshrl.u32 %v4199, 7
    %v4201 = vsub.s32 %v4198, %v4200
    %v4202 = vrot.slane %v4194, %v4201
    %v4204 = vunpack.c.l.s4 1966171168
    %v4205 = vunpack.c.0.s8 %v4204
    %v4206 = vlaneseq
    %v4207 = vshrl.u32 %v4206, 7
    %v4208 = vsub.s32 %v4205, %v4207
    %v4209 = vrot.slane %v4195, %v4208
    %v4210 = vcombine.high %v4202, %v4202
    %v4211 = vcombine.high %v4209, %v4209
    %v4212 = vlaneseq
    %v4213 = vshrl.u32 %v4212, 7
    %v4214 = vsub.s32 0, %v4213
    %v4215 = vrot.slane %v4210, %v4214
    %4216 = vrot.lane.b32.xlu0 %v4215, 32
    %v4217 = vpop.permute.xlu0 %4216
    %v4218 = vsel %vm1596, %v4217, 0
    %4220 = vmatprep.subr.mxu0 0.0
    %4221 = vmatpush1.xpose.msra.mxu0 %v1808
    %4222 = vmatprep.subr.mxu0 0.0
    %4223 = vmatpush1.xpose.msra.mxu0 0.0
    %4224 = vmatprep.subr.mxu0 0.0
    %4225 = vmatpush1.xpose.msra.mxu0 0.0
    %4226 = vmatprep.subr.mxu0 0.0
    %4227 = vmatpush1.xpose.msra.mxu0 0.0
    %4228 = vmatprep.subr.mxu0 0.0
    %4229 = vmatpush1.xpose.msra.mxu0 0.0
    %4230 = vmatprep.subr.mxu0 0.0
    %4231 = vmatpush1.xpose.msra.mxu0 0.0
    %4232 = vmatprep.subr.mxu0 0.0
    %4233 = vmatpush1.xpose.msra.mxu0 0.0
    %4234 = vmatprep.subr.mxu0 0.0
    %4235 = vmatpush1.xpose.msra.mxu0 0.0
    %4236 = vmatprep.subr.mxu0 0.0
    %4237 = vmatpush1.xpose.msra.mxu0 0.0
    %4238 = vmatprep.subr.mxu0 0.0
    %4239 = vmatpush1.xpose.msra.mxu0 0.0
    %4240 = vmatprep.subr.mxu0 0.0
    %4241 = vmatpush1.xpose.msra.mxu0 0.0
    %4242 = vmatprep.subr.mxu0 0.0
    %4243 = vmatpush1.xpose.msra.mxu0 0.0
    %4244 = vmatprep.subr.mxu0 0.0
    %4245 = vmatpush1.xpose.msra.mxu0 0.0
    %4246 = vmatprep.subr.mxu0 0.0
    %4247 = vmatpush1.xpose.msra.mxu0 0.0
    %4248 = vmatprep.subr.mxu0 0.0
    %4249 = vmatpush1.xpose.msra.mxu0 0.0
    %4250 = vmatprep.subr.mxu0 0.0
    %4251 = vmatpush1.xpose.msra.mxu0 0.0
    %4252 = vmatprep.subr.mxu0 0.0
    %4253 = vmatpush1.xpose.msra.mxu0 0.0
    %4254 = vmatprep.subr.mxu0 0.0
    %4255 = vmatpush1.xpose.msra.mxu0 0.0
    %4256 = vmatprep.subr.mxu0 0.0
    %4257 = vmatpush1.xpose.msra.mxu0 0.0
    %4258 = vmatprep.subr.mxu0 0.0
    %4259 = vmatpush1.xpose.msra.mxu0 0.0
    %4260 = vmatprep.subr.mxu0 0.0
    %4261 = vmatpush1.xpose.msra.mxu0 0.0
    %4262 = vmatprep.subr.mxu0 0.0
    %4263 = vmatpush1.xpose.msra.mxu0 0.0
    %4264 = vmatprep.subr.mxu0 0.0
    %4265 = vmatpush1.xpose.msra.mxu0 0.0
    %4266 = vmatprep.subr.mxu0 0.0
    %4267 = vmatpush1.xpose.msra.mxu0 0.0
    %4268 = vmatprep.subr.mxu0 0.0
    %4269 = vmatpush1.xpose.msra.mxu0 0.0
    %4270 = vmatprep.subr.mxu0 0.0
    %4271 = vmatpush1.xpose.msra.mxu0 0.0
    %4272 = vmatprep.subr.mxu0 0.0
    %4273 = vmatpush1.xpose.msra.mxu0 0.0
    %4274 = vmatprep.subr.mxu0 0.0
    %4275 = vmatpush1.xpose.msra.mxu0 0.0
    %4276 = vmatprep.subr.mxu0 0.0
    %4277 = vmatpush1.xpose.msra.mxu0 0.0
    %4278 = vmatprep.subr.mxu0 0.0
    %4279 = vmatpush1.xpose.msra.mxu0 0.0
    %4280 = vmatprep.subr.mxu0 0.0
    %4281 = vmatpush1.xpose.msra.mxu0 0.0
    %4282 = vmatprep.subr.mxu0 0.0
    %4283 = vmatpush1.xpose.msra.mxu0 0.0
    %4284 = vmatprep.mubr.f32.mxu0 0.0
    %4285 = vmatmul.mubr.f32.gmra.mrb[0].mxu0 %v4218
    %v4286 = vpop.f32.mrb[0].mxu0
    %v4287 = vadd.f32 0.0, %v4286
    %v4288 = vpop.f32.mrb[0].mxu0
    %4289 = vdwg.mxu0
    %v4290 = vlaneseq
    %v4291 = vshrl.u32 %v4290, 7
    %v4292 = vsub.s32 0, %v4291
    %v4293 = vrot.slane %v4211, %v4292
    %4294 = vrot.lane.b32.xlu0 %v4293, 32
    %v4295 = vpop.permute.xlu0 %4294
    %v4296 = vsel %vm1596, %v4295, 0
    %4298 = vmatprep.subr.mxu0 0.0
    %4299 = vmatpush1.xpose.msra.mxu0 %v1889
    %4300 = vmatprep.subr.mxu0 0.0
    %4301 = vmatpush1.xpose.msra.mxu0 0.0
    %4302 = vmatprep.subr.mxu0 0.0
    %4303 = vmatpush1.xpose.msra.mxu0 0.0
    %4304 = vmatprep.subr.mxu0 0.0
    %4305 = vmatpush1.xpose.msra.mxu0 0.0
    %4306 = vmatprep.subr.mxu0 0.0
    %4307 = vmatpush1.xpose.msra.mxu0 0.0
    %4308 = vmatprep.subr.mxu0 0.0
    %4309 = vmatpush1.xpose.msra.mxu0 0.0
    %4310 = vmatprep.subr.mxu0 0.0
    %4311 = vmatpush1.xpose.msra.mxu0 0.0
    %4312 = vmatprep.subr.mxu0 0.0
    %4313 = vmatpush1.xpose.msra.mxu0 0.0
    %4314 = vmatprep.subr.mxu0 0.0
    %4315 = vmatpush1.xpose.msra.mxu0 0.0
    %4316 = vmatprep.subr.mxu0 0.0
    %4317 = vmatpush1.xpose.msra.mxu0 0.0
    %4318 = vmatprep.subr.mxu0 0.0
    %4319 = vmatpush1.xpose.msra.mxu0 0.0
    %4320 = vmatprep.subr.mxu0 0.0
    %4321 = vmatpush1.xpose.msra.mxu0 0.0
    %4322 = vmatprep.subr.mxu0 0.0
    %4323 = vmatpush1.xpose.msra.mxu0 0.0
    %4324 = vmatprep.subr.mxu0 0.0
    %4325 = vmatpush1.xpose.msra.mxu0 0.0
    %4326 = vmatprep.subr.mxu0 0.0
    %4327 = vmatpush1.xpose.msra.mxu0 0.0
    %4328 = vmatprep.subr.mxu0 0.0
    %4329 = vmatpush1.xpose.msra.mxu0 0.0
    %4330 = vmatprep.subr.mxu0 0.0
    %4331 = vmatpush1.xpose.msra.mxu0 0.0
    %4332 = vmatprep.subr.mxu0 0.0
    %4333 = vmatpush1.xpose.msra.mxu0 0.0
    %4334 = vmatprep.subr.mxu0 0.0
    %4335 = vmatpush1.xpose.msra.mxu0 0.0
    %4336 = vmatprep.subr.mxu0 0.0
    %4337 = vmatpush1.xpose.msra.mxu0 0.0
    %4338 = vmatprep.subr.mxu0 0.0
    %4339 = vmatpush1.xpose.msra.mxu0 0.0
    %4340 = vmatprep.subr.mxu0 0.0
    %4341 = vmatpush1.xpose.msra.mxu0 0.0
    %4342 = vmatprep.subr.mxu0 0.0
    %4343 = vmatpush1.xpose.msra.mxu0 0.0
    %4344 = vmatprep.subr.mxu0 0.0
    %4345 = vmatpush1.xpose.msra.mxu0 0.0
    %4346 = vmatprep.subr.mxu0 0.0
    %4347 = vmatpush1.xpose.msra.mxu0 0.0
    %4348 = vmatprep.subr.mxu0 0.0
    %4349 = vmatpush1.xpose.msra.mxu0 0.0
    %4350 = vmatprep.subr.mxu0 0.0
    %4351 = vmatpush1.xpose.msra.mxu0 0.0
    %4352 = vmatprep.subr.mxu0 0.0
    %4353 = vmatpush1.xpose.msra.mxu0 0.0
    %4354 = vmatprep.subr.mxu0 0.0
    %4355 = vmatpush1.xpose.msra.mxu0 0.0
    %4356 = vmatprep.subr.mxu0 0.0
    %4357 = vmatpush1.xpose.msra.mxu0 0.0
    %4358 = vmatprep.subr.mxu0 0.0
    %4359 = vmatpush1.xpose.msra.mxu0 0.0
    %4360 = vmatprep.subr.mxu0 0.0
    %4361 = vmatpush1.xpose.msra.mxu0 0.0
    %4362 = vmatprep.mubr.f32.mxu0 0.0
    %4363 = vmatmul.mubr.f32.gmra.mrb[0].mxu0 %v4296
    %v4364 = vpop.f32.mrb[0].mxu0
    %v4365 = vadd.f32 0.0, %v4364
    %v4366 = vpop.f32.mrb[0].mxu0
    %4367 = vdwg.mxu0
    %v4368 = vsel %vm1961, %v4287, -inf
    %4369 = vmax.xlane.f32.xlu0 %v4368
    %v4370 = vpop.xlane.xlu0 %4369
    %v4371 = vsel %vm1961, %v4365, -inf
    %4372 = vmax.xlane.f32.xlu0 %v4371
    %v4373 = vpop.xlane.xlu0 %4372
    %v4374 = vsub.f32 %v4287, %v4370
    %v4375 = vsub.f32 %v4365, %v4373
    %v4376 = vmul.f32 %v4374, 1.442695
    %v4377 = vpow.pop %v4376
    %v4378 = vmul.f32 %v4375, 1.442695
    %v4379 = vpow.pop %v4378
    %v4380 = vsel %vm1961, %v4377, 0.0
    %4381 = vadd.xlane.f32.xlu0 %v4380
    %v4382 = vpop.xlane.xlu0 %4381
    %v4383 = vsel %vm1961, %v4379, 0.0
    %4384 = vadd.xlane.f32.xlu0 %v4383
    %v4385 = vpop.xlane.xlu0 %4384
    %v4386 = vrcp.pop %v4382
    %v4387 = vrcp.pop %v4385
    %v4388 = vmul.f32 %v4377, %v4386
    %v4389 = vmul.f32 %v4379, %v4387
    %v4391 = vsel %vm1984, %v4388, 0
    %4393 = vmatprep.subr.mxu0 0.0
    %4394 = vmatpush1.msra.mxu0 %v1469
    %4395 = vmatprep.subr.mxu0 0.0
    %4396 = vmatpush1.msra.mxu0 0.0
    %4397 = vmatprep.subr.mxu0 0.0
    %4398 = vmatpush1.msra.mxu0 0.0
    %4399 = vmatprep.subr.mxu0 0.0
    %4400 = vmatpush1.msra.mxu0 0.0
    %4401 = vmatprep.subr.mxu0 0.0
    %4402 = vmatpush1.msra.mxu0 0.0
    %4403 = vmatprep.subr.mxu0 0.0
    %4404 = vmatpush1.msra.mxu0 0.0
    %4405 = vmatprep.subr.mxu0 0.0
    %4406 = vmatpush1.msra.mxu0 0.0
    %4407 = vmatprep.subr.mxu0 0.0
    %4408 = vmatpush1.msra.mxu0 0.0
    %4409 = vmatprep.subr.mxu0 0.0
    %4410 = vmatpush1.msra.mxu0 0.0
    %4411 = vmatprep.subr.mxu0 0.0
    %4412 = vmatpush1.msra.mxu0 0.0
    %4413 = vmatprep.subr.mxu0 0.0
    %4414 = vmatpush1.msra.mxu0 0.0
    %4415 = vmatprep.subr.mxu0 0.0
    %4416 = vmatpush1.msra.mxu0 0.0
    %4417 = vmatprep.subr.mxu0 0.0
    %4418 = vmatpush1.msra.mxu0 0.0
    %4419 = vmatprep.subr.mxu0 0.0
    %4420 = vmatpush1.msra.mxu0 0.0
    %4421 = vmatprep.subr.mxu0 0.0
    %4422 = vmatpush1.msra.mxu0 0.0
    %4423 = vmatprep.subr.mxu0 0.0
    %4424 = vmatpush1.msra.mxu0 0.0
    %4425 = vmatprep.subr.mxu0 0.0
    %4426 = vmatpush1.msra.mxu0 0.0
    %4427 = vmatprep.subr.mxu0 0.0
    %4428 = vmatpush1.msra.mxu0 0.0
    %4429 = vmatprep.subr.mxu0 0.0
    %4430 = vmatpush1.msra.mxu0 0.0
    %4431 = vmatprep.subr.mxu0 0.0
    %4432 = vmatpush1.msra.mxu0 0.0
    %4433 = vmatprep.subr.mxu0 0.0
    %4434 = vmatpush1.msra.mxu0 0.0
    %4435 = vmatprep.subr.mxu0 0.0
    %4436 = vmatpush1.msra.mxu0 0.0
    %4437 = vmatprep.subr.mxu0 0.0
    %4438 = vmatpush1.msra.mxu0 0.0
    %4439 = vmatprep.subr.mxu0 0.0
    %4440 = vmatpush1.msra.mxu0 0.0
    %4441 = vmatprep.subr.mxu0 0.0
    %4442 = vmatpush1.msra.mxu0 0.0
    %4443 = vmatprep.subr.mxu0 0.0
    %4444 = vmatpush1.msra.mxu0 0.0
    %4445 = vmatprep.subr.mxu0 0.0
    %4446 = vmatpush1.msra.mxu0 0.0
    %4447 = vmatprep.subr.mxu0 0.0
    %4448 = vmatpush1.msra.mxu0 0.0
    %4449 = vmatprep.subr.mxu0 0.0
    %4450 = vmatpush1.msra.mxu0 0.0
    %4451 = vmatprep.subr.mxu0 0.0
    %4452 = vmatpush1.msra.mxu0 0.0
    %4453 = vmatprep.subr.mxu0 0.0
    %4454 = vmatpush1.msra.mxu0 0.0
    %4455 = vmatprep.subr.mxu0 0.0
    %4456 = vmatpush1.msra.mxu0 0.0
    %4457 = vmatprep.mubr.f32.mxu0 0.0
    %4458 = vmatmul.mubr.f32.gmra.mrb[0].mxu0 %v4391
    %v4459 = vpop.f32.mrb[0].mxu0
    %v4460 = vadd.f32 0.0, %v4459
    %v4461 = vpop.f32.mrb[0].mxu0
    %4462 = vdwg.mxu0
    %v4464 = vsel %vm1984, %v4389, 0
    %4466 = vmatprep.subr.mxu0 0.0
    %4467 = vmatpush1.msra.mxu0 %v1470
    %4468 = vmatprep.subr.mxu0 0.0
    %4469 = vmatpush1.msra.mxu0 0.0
    %4470 = vmatprep.subr.mxu0 0.0
    %4471 = vmatpush1.msra.mxu0 0.0
    %4472 = vmatprep.subr.mxu0 0.0
    %4473 = vmatpush1.msra.mxu0 0.0
    %4474 = vmatprep.subr.mxu0 0.0
    %4475 = vmatpush1.msra.mxu0 0.0
    %4476 = vmatprep.subr.mxu0 0.0
    %4477 = vmatpush1.msra.mxu0 0.0
    %4478 = vmatprep.subr.mxu0 0.0
    %4479 = vmatpush1.msra.mxu0 0.0
    %4480 = vmatprep.subr.mxu0 0.0
    %4481 = vmatpush1.msra.mxu0 0.0
    %4482 = vmatprep.subr.mxu0 0.0
    %4483 = vmatpush1.msra.mxu0 0.0
    %4484 = vmatprep.subr.mxu0 0.0
    %4485 = vmatpush1.msra.mxu0 0.0
    %4486 = vmatprep.subr.mxu0 0.0
    %4487 = vmatpush1.msra.mxu0 0.0
    %4488 = vmatprep.subr.mxu0 0.0
    %4489 = vmatpush1.msra.mxu0 0.0
    %4490 = vmatprep.subr.mxu0 0.0
    %4491 = vmatpush1.msra.mxu0 0.0
    %4492 = vmatprep.subr.mxu0 0.0
    %4493 = vmatpush1.msra.mxu0 0.0
    %4494 = vmatprep.subr.mxu0 0.0
    %4495 = vmatpush1.msra.mxu0 0.0
    %4496 = vmatprep.subr.mxu0 0.0
    %4497 = vmatpush1.msra.mxu0 0.0
    %4498 = vmatprep.subr.mxu0 0.0
    %4499 = vmatpush1.msra.mxu0 0.0
    %4500 = vmatprep.subr.mxu0 0.0
    %4501 = vmatpush1.msra.mxu0 0.0
    %4502 = vmatprep.subr.mxu0 0.0
    %4503 = vmatpush1.msra.mxu0 0.0
    %4504 = vmatprep.subr.mxu0 0.0
    %4505 = vmatpush1.msra.mxu0 0.0
    %4506 = vmatprep.subr.mxu0 0.0
    %4507 = vmatpush1.msra.mxu0 0.0
    %4508 = vmatprep.subr.mxu0 0.0
    %4509 = vmatpush1.msra.mxu0 0.0
    %4510 = vmatprep.subr.mxu0 0.0
    %4511 = vmatpush1.msra.mxu0 0.0
    %4512 = vmatprep.subr.mxu0 0.0
    %4513 = vmatpush1.msra.mxu0 0.0
    %4514 = vmatprep.subr.mxu0 0.0
    %4515 = vmatpush1.msra.mxu0 0.0
    %4516 = vmatprep.subr.mxu0 0.0
    %4517 = vmatpush1.msra.mxu0 0.0
    %4518 = vmatprep.subr.mxu0 0.0
    %4519 = vmatpush1.msra.mxu0 0.0
    %4520 = vmatprep.subr.mxu0 0.0
    %4521 = vmatpush1.msra.mxu0 0.0
    %4522 = vmatprep.subr.mxu0 0.0
    %4523 = vmatpush1.msra.mxu0 0.0
    %4524 = vmatprep.subr.mxu0 0.0
    %4525 = vmatpush1.msra.mxu0 0.0
    %4526 = vmatprep.subr.mxu0 0.0
    %4527 = vmatpush1.msra.mxu0 0.0
    %4528 = vmatprep.subr.mxu0 0.0
    %4529 = vmatpush1.msra.mxu0 0.0
    %4530 = vmatprep.mubr.f32.mxu0 0.0
    %4531 = vmatmul.mubr.f32.gmra.mrb[0].mxu0 %v4464
    %v4532 = vpop.f32.mrb[0].mxu0
    %v4533 = vadd.f32 0.0, %v4532
    %v4534 = vpop.f32.mrb[0].mxu0
    %4535 = vdwg.mxu0
    %v4536 = vrot.slane %v4185, 6
    %4537 = vrot.lane.b32.xlu0 %v4536, 32
    %v4538 = vpop.permute.xlu0 %4537
    %v4539 = vsel %vm1596, %v4538, 0
    %4541 = vmatprep.subr.mxu0 0.0
    %4542 = vmatpush1.msra.mxu0 %v1586
    %4543 = vmatprep.subr.mxu0 0.0
    %4544 = vmatpush1.msra.mxu0 %v1587
    %4545 = vmatprep.subr.mxu0 0.0
    %4546 = vmatpush1.msra.mxu0 %v1588
    %4547 = vmatprep.subr.mxu0 0.0
    %4548 = vmatpush1.msra.mxu0 %v1589
    %4549 = vmatprep.subr.mxu0 0.0
    %4550 = vmatpush1.msra.mxu0 0.0
    %4551 = vmatprep.subr.mxu0 0.0
    %4552 = vmatpush1.msra.mxu0 0.0
    %4553 = vmatprep.subr.mxu0 0.0
    %4554 = vmatpush1.msra.mxu0 0.0
    %4555 = vmatprep.subr.mxu0 0.0
    %4556 = vmatpush1.msra.mxu0 0.0
    %4557 = vmatprep.subr.mxu0 0.0
    %4558 = vmatpush1.msra.mxu0 0.0
    %4559 = vmatprep.subr.mxu0 0.0
    %4560 = vmatpush1.msra.mxu0 0.0
    %4561 = vmatprep.subr.mxu0 0.0
    %4562 = vmatpush1.msra.mxu0 0.0
    %4563 = vmatprep.subr.mxu0 0.0
    %4564 = vmatpush1.msra.mxu0 0.0
    %4565 = vmatprep.subr.mxu0 0.0
    %4566 = vmatpush1.msra.mxu0 0.0
    %4567 = vmatprep.subr.mxu0 0.0
    %4568 = vmatpush1.msra.mxu0 0.0
    %4569 = vmatprep.subr.mxu0 0.0
    %4570 = vmatpush1.msra.mxu0 0.0
    %4571 = vmatprep.subr.mxu0 0.0
    %4572 = vmatpush1.msra.mxu0 0.0
    %4573 = vmatprep.subr.mxu0 0.0
    %4574 = vmatpush1.msra.mxu0 0.0
    %4575 = vmatprep.subr.mxu0 0.0
    %4576 = vmatpush1.msra.mxu0 0.0
    %4577 = vmatprep.subr.mxu0 0.0
    %4578 = vmatpush1.msra.mxu0 0.0
    %4579 = vmatprep.subr.mxu0 0.0
    %4580 = vmatpush1.msra.mxu0 0.0
    %4581 = vmatprep.subr.mxu0 0.0
    %4582 = vmatpush1.msra.mxu0 0.0
    %4583 = vmatprep.subr.mxu0 0.0
    %4584 = vmatpush1.msra.mxu0 0.0
    %4585 = vmatprep.subr.mxu0 0.0
    %4586 = vmatpush1.msra.mxu0 0.0
    %4587 = vmatprep.subr.mxu0 0.0
    %4588 = vmatpush1.msra.mxu0 0.0
    %4589 = vmatprep.subr.mxu0 0.0
    %4590 = vmatpush1.msra.mxu0 0.0
    %4591 = vmatprep.subr.mxu0 0.0
    %4592 = vmatpush1.msra.mxu0 0.0
    %4593 = vmatprep.subr.mxu0 0.0
    %4594 = vmatpush1.msra.mxu0 0.0
    %4595 = vmatprep.subr.mxu0 0.0
    %4596 = vmatpush1.msra.mxu0 0.0
    %4597 = vmatprep.subr.mxu0 0.0
    %4598 = vmatpush1.msra.mxu0 0.0
    %4599 = vmatprep.subr.mxu0 0.0
    %4600 = vmatpush1.msra.mxu0 0.0
    %4601 = vmatprep.subr.mxu0 0.0
    %4602 = vmatpush1.msra.mxu0 0.0
    %4603 = vmatprep.subr.mxu0 0.0
    %4604 = vmatpush1.msra.mxu0 0.0
    %4605 = vmatprep.mubr.f32.mxu0 0.0
    %4606 = vmatmul.mubr.f32.gmra.mrb[0].mxu0 %v4539
    %v4607 = vpop.f32.mrb[0].mxu0
    %v4608 = vadd.f32 0.0, %v4607
    %v4609 = vpop.f32.mrb[0].mxu0
    %4610 = vdwg.mxu0
    %v4613 = vrot.slane %v4533, 7
    %v4614 = vsel %vm2208, %v4613, %v4460
    %v4615 = vsel %vm1596, %v4614, 0
    %4617 = vmatprep.subr.mxu0 0.0
    %4618 = vmatpush1.msra.mxu0 %v1582
    %4619 = vmatprep.subr.mxu0 0.0
    %4620 = vmatpush1.msra.mxu0 %v1583
    %4621 = vmatprep.subr.mxu0 0.0
    %4622 = vmatpush1.msra.mxu0 %v1584
    %4623 = vmatprep.subr.mxu0 0.0
    %4624 = vmatpush1.msra.mxu0 %v1585
    %4625 = vmatprep.subr.mxu0 0.0
    %4626 = vmatpush1.msra.mxu0 0.0
    %4627 = vmatprep.subr.mxu0 0.0
    %4628 = vmatpush1.msra.mxu0 0.0
    %4629 = vmatprep.subr.mxu0 0.0
    %4630 = vmatpush1.msra.mxu0 0.0
    %4631 = vmatprep.subr.mxu0 0.0
    %4632 = vmatpush1.msra.mxu0 0.0
    %4633 = vmatprep.subr.mxu0 0.0
    %4634 = vmatpush1.msra.mxu0 0.0
    %4635 = vmatprep.subr.mxu0 0.0
    %4636 = vmatpush1.msra.mxu0 0.0
    %4637 = vmatprep.subr.mxu0 0.0
    %4638 = vmatpush1.msra.mxu0 0.0
    %4639 = vmatprep.subr.mxu0 0.0
    %4640 = vmatpush1.msra.mxu0 0.0
    %4641 = vmatprep.subr.mxu0 0.0
    %4642 = vmatpush1.msra.mxu0 0.0
    %4643 = vmatprep.subr.mxu0 0.0
    %4644 = vmatpush1.msra.mxu0 0.0
    %4645 = vmatprep.subr.mxu0 0.0
    %4646 = vmatpush1.msra.mxu0 0.0
    %4647 = vmatprep.subr.mxu0 0.0
    %4648 = vmatpush1.msra.mxu0 0.0
    %4649 = vmatprep.subr.mxu0 0.0
    %4650 = vmatpush1.msra.mxu0 0.0
    %4651 = vmatprep.subr.mxu0 0.0
    %4652 = vmatpush1.msra.mxu0 0.0
    %4653 = vmatprep.subr.mxu0 0.0
    %4654 = vmatpush1.msra.mxu0 0.0
    %4655 = vmatprep.subr.mxu0 0.0
    %4656 = vmatpush1.msra.mxu0 0.0
    %4657 = vmatprep.subr.mxu0 0.0
    %4658 = vmatpush1.msra.mxu0 0.0
    %4659 = vmatprep.subr.mxu0 0.0
    %4660 = vmatpush1.msra.mxu0 0.0
    %4661 = vmatprep.subr.mxu0 0.0
    %4662 = vmatpush1.msra.mxu0 0.0
    %4663 = vmatprep.subr.mxu0 0.0
    %4664 = vmatpush1.msra.mxu0 0.0
    %4665 = vmatprep.subr.mxu0 0.0
    %4666 = vmatpush1.msra.mxu0 0.0
    %4667 = vmatprep.subr.mxu0 0.0
    %4668 = vmatpush1.msra.mxu0 0.0
    %4669 = vmatprep.subr.mxu0 0.0
    %4670 = vmatpush1.msra.mxu0 0.0
    %4671 = vmatprep.subr.mxu0 0.0
    %4672 = vmatpush1.msra.mxu0 0.0
    %4673 = vmatprep.subr.mxu0 0.0
    %4674 = vmatpush1.msra.mxu0 0.0
    %4675 = vmatprep.subr.mxu0 0.0
    %4676 = vmatpush1.msra.mxu0 0.0
    %4677 = vmatprep.subr.mxu0 0.0
    %4678 = vmatpush1.msra.mxu0 0.0
    %4679 = vmatprep.subr.mxu0 0.0
    %4680 = vmatpush1.msra.mxu0 0.0
    %4681 = vmatprep.mubr.f32.mxu0 0.0
    %4682 = vmatmul.mubr.f32.gmra.mrb[0].mxu0 %v4615
    %v4683 = vpop.f32.mrb[0].mxu0
    %v4684 = vadd.f32 %v4608, %v4683
    %v4685 = vpop.f32.mrb[0].mxu0
    %4686 = vdwg.mxu0
    %v4687 = vadd.f32 %v4684, %v2286
    %v4688 = vtanh.pop %v4687
    %v4690 = vsel %vm1596, %v4688, 0
    %4692 = vmatprep.subr.mxu0 0.0
    %4693 = vmatpush1.msra.mxu0 %v1591
    %4694 = vmatprep.subr.mxu0 0.0
    %4695 = vmatpush1.msra.mxu0 %v1592
    %4696 = vmatprep.subr.mxu0 0.0
    %4697 = vmatpush1.msra.mxu0 %v1593
    %4698 = vmatprep.subr.mxu0 0.0
    %4699 = vmatpush1.msra.mxu0 %v1594
    %4700 = vmatprep.subr.mxu0 0.0
    %4701 = vmatpush1.msra.mxu0 0.0
    %4702 = vmatprep.subr.mxu0 0.0
    %4703 = vmatpush1.msra.mxu0 0.0
    %4704 = vmatprep.subr.mxu0 0.0
    %4705 = vmatpush1.msra.mxu0 0.0
    %4706 = vmatprep.subr.mxu0 0.0
    %4707 = vmatpush1.msra.mxu0 0.0
    %4708 = vmatprep.subr.mxu0 0.0
    %4709 = vmatpush1.msra.mxu0 0.0
    %4710 = vmatprep.subr.mxu0 0.0
    %4711 = vmatpush1.msra.mxu0 0.0
    %4712 = vmatprep.subr.mxu0 0.0
    %4713 = vmatpush1.msra.mxu0 0.0
    %4714 = vmatprep.subr.mxu0 0.0
    %4715 = vmatpush1.msra.mxu0 0.0
    %4716 = vmatprep.subr.mxu0 0.0
    %4717 = vmatpush1.msra.mxu0 0.0
    %4718 = vmatprep.subr.mxu0 0.0
    %4719 = vmatpush1.msra.mxu0 0.0
    %4720 = vmatprep.subr.mxu0 0.0
    %4721 = vmatpush1.msra.mxu0 0.0
    %4722 = vmatprep.subr.mxu0 0.0
    %4723 = vmatpush1.msra.mxu0 0.0
    %4724 = vmatprep.subr.mxu0 0.0
    %4725 = vmatpush1.msra.mxu0 0.0
    %4726 = vmatprep.subr.mxu0 0.0
    %4727 = vmatpush1.msra.mxu0 0.0
    %4728 = vmatprep.subr.mxu0 0.0
    %4729 = vmatpush1.msra.mxu0 0.0
    %4730 = vmatprep.subr.mxu0 0.0
    %4731 = vmatpush1.msra.mxu0 0.0
    %4732 = vmatprep.subr.mxu0 0.0
    %4733 = vmatpush1.msra.mxu0 0.0
    %4734 = vmatprep.subr.mxu0 0.0
    %4735 = vmatpush1.msra.mxu0 0.0
    %4736 = vmatprep.subr.mxu0 0.0
    %4737 = vmatpush1.msra.mxu0 0.0
    %4738 = vmatprep.subr.mxu0 0.0
    %4739 = vmatpush1.msra.mxu0 0.0
    %4740 = vmatprep.subr.mxu0 0.0
    %4741 = vmatpush1.msra.mxu0 0.0
    %4742 = vmatprep.subr.mxu0 0.0
    %4743 = vmatpush1.msra.mxu0 0.0
    %4744 = vmatprep.subr.mxu0 0.0
    %4745 = vmatpush1.msra.mxu0 0.0
    %4746 = vmatprep.subr.mxu0 0.0
    %4747 = vmatpush1.msra.mxu0 0.0
    %4748 = vmatprep.subr.mxu0 0.0
    %4749 = vmatpush1.msra.mxu0 0.0
    %4750 = vmatprep.subr.mxu0 0.0
    %4751 = vmatpush1.msra.mxu0 0.0
    %4752 = vmatprep.subr.mxu0 0.0
    %4753 = vmatpush1.msra.mxu0 0.0
    %4754 = vmatprep.subr.mxu0 0.0
    %4755 = vmatpush1.msra.mxu0 0.0
    %4756 = vmatprep.mubr.f32.mxu0 0.0
    %4757 = vmatmul.mubr.f32.gmra.mrb[0].mxu0 %v4690
    %v4758 = vpop.f32.mrb[0].mxu0
    %v4759 = vadd.f32 %v2294, %v4758
    %v4760 = vpop.f32.mrb[0].mxu0
    %4761 = vdwg.mxu0
    %v4762 = vsel %vm2369, %v4759, -inf
    %4763 = vmax.xlane.f32.xlu0 %v4762
    %v4764 = vpop.xlane.xlu0 %4763
    %v4765 = vsub.f32 %v4759, %v4764
    %v4766 = vmul.f32 %v4765, 1.442695
    %v4767 = vpow.pop %v4766
    %v4768 = vsel %vm2369, %v4767, 0.0
    %4769 = vadd.xlane.f32.xlu0 %v4768
    %v4770 = vpop.xlane.xlu0 %4769
    %v4771 = vlog2.pop %v4770
    %v4772 = vmul.f32 %v4771, 0.6931472
    %v4773 = vadd.f32 %v4764, %v4772
    %v4774 = vsub.f32 %v4759, %v4773
    %v4775 = vld [vmem:[%s2 + $0x6] sm:$0x3]
    %v4776 = vmul.f32 %v4774, %v4775
    %v4777 = vsel %vm2369, %v4776, 0.0
    %4778 = vadd.xlane.f32.xlu0 %v4777
    %v4779 = vpop.xlane.xlu0 %4778
    %v4780 = vld [vmem:[%s3 + $0x6] sm:$0x3]
    %v4781 = vsub.f32 0.0, %v4779
    %v4782 = vmul.f32 %v4781, %v4780
    %v4783 = vsel %vm2391, %v4782, 0.0
    %4784 = vadd.xlane.f32.xlu0 %v4783
    %v4785 = vpop.xlane.xlu0 %4784
    %v4786 = vrot.slane %v4785, 4
    %v4787 = vadd.f32 %v4785, %v4786
    %v4788 = vrot.slane %v4787, 2
    %v4789 = vadd.f32 %v4787, %v4788
    %v4790 = vrot.slane %v4789, 1
    %v4791 = vadd.f32 %v4789, %v4790
    %s4792 = vtos %v4791
    %v4793 = vstv %s4792
    %v4794 = vsel %vm2391, %v4780, 0.0
    %4795 = vadd.xlane.f32.xlu0 %v4794
    %v4796 = vpop.xlane.xlu0 %4795
    %v4797 = vrot.slane %v4796, 4
    %v4798 = vadd.f32 %v4796, %v4797
    %v4799 = vrot.slane %v4798, 2
    %v4800 = vadd.f32 %v4798, %v4799
    %v4801 = vrot.slane %v4800, 1
    %v4802 = vadd.f32 %v4800, %v4801
    %s4803 = vtos %v4802
    %v4804 = vstv %s4803
    %v4805 = vmax.f32 %v4804, 1.0
    %v4806 = vrcp.pop %v4805
    %v4807 = vmul.f32 %v4793, %v4806
    %v4808 = vadd.f32 %v4010, %v4807
    %4809 = vmatprep.subr.mxu0 0.0
    %4810 = vmatpush1.msra.mxu0 %v1574
    %4811 = vmatprep.subr.mxu0 0.0
    %4812 = vmatpush1.msra.mxu0 %v1575
    %4813 = vmatprep.subr.mxu0 0.0
    %4814 = vmatpush1.msra.mxu0 %v1576
    %4815 = vmatprep.subr.mxu0 0.0
    %4816 = vmatpush1.msra.mxu0 %v1577
    %4817 = vmatprep.subr.mxu0 0.0
    %4818 = vmatpush1.msra.mxu0 0.0
    %4819 = vmatprep.subr.mxu0 0.0
    %4820 = vmatpush1.msra.mxu0 0.0
    %4821 = vmatprep.subr.mxu0 0.0
    %4822 = vmatpush1.msra.mxu0 0.0
    %4823 = vmatprep.subr.mxu0 0.0
    %4824 = vmatpush1.msra.mxu0 0.0
    %4825 = vmatprep.subr.mxu0 0.0
    %4826 = vmatpush1.msra.mxu0 0.0
    %4827 = vmatprep.subr.mxu0 0.0
    %4828 = vmatpush1.msra.mxu0 0.0
    %4829 = vmatprep.subr.mxu0 0.0
    %4830 = vmatpush1.msra.mxu0 0.0
    %4831 = vmatprep.subr.mxu0 0.0
    %4832 = vmatpush1.msra.mxu0 0.0
    %4833 = vmatprep.subr.mxu0 0.0
    %4834 = vmatpush1.msra.mxu0 0.0
    %4835 = vmatprep.subr.mxu0 0.0
    %4836 = vmatpush1.msra.mxu0 0.0
    %4837 = vmatprep.subr.mxu0 0.0
    %4838 = vmatpush1.msra.mxu0 0.0
    %4839 = vmatprep.subr.mxu0 0.0
    %4840 = vmatpush1.msra.mxu0 0.0
    %4841 = vmatprep.subr.mxu0 0.0
    %4842 = vmatpush1.msra.mxu0 0.0
    %4843 = vmatprep.subr.mxu0 0.0
    %4844 = vmatpush1.msra.mxu0 0.0
    %4845 = vmatprep.subr.mxu0 0.0
    %4846 = vmatpush1.msra.mxu0 0.0
    %4847 = vmatprep.subr.mxu0 0.0
    %4848 = vmatpush1.msra.mxu0 0.0
    %4849 = vmatprep.subr.mxu0 0.0
    %4850 = vmatpush1.msra.mxu0 0.0
    %4851 = vmatprep.subr.mxu0 0.0
    %4852 = vmatpush1.msra.mxu0 0.0
    %4853 = vmatprep.subr.mxu0 0.0
    %4854 = vmatpush1.msra.mxu0 0.0
    %4855 = vmatprep.subr.mxu0 0.0
    %4856 = vmatpush1.msra.mxu0 0.0
    %4857 = vmatprep.subr.mxu0 0.0
    %4858 = vmatpush1.msra.mxu0 0.0
    %4859 = vmatprep.subr.mxu0 0.0
    %4860 = vmatpush1.msra.mxu0 0.0
    %4861 = vmatprep.subr.mxu0 0.0
    %4862 = vmatpush1.msra.mxu0 0.0
    %4863 = vmatprep.subr.mxu0 0.0
    %4864 = vmatpush1.msra.mxu0 0.0
    %4865 = vmatprep.subr.mxu0 0.0
    %4866 = vmatpush1.msra.mxu0 0.0
    %4867 = vmatprep.subr.mxu0 0.0
    %4868 = vmatpush1.msra.mxu0 0.0
    %4869 = vmatprep.subr.mxu0 0.0
    %4870 = vmatpush1.msra.mxu0 0.0
    %4871 = vmatprep.subr.mxu0 0.0
    %4872 = vmatpush1.msra.mxu0 0.0
    %4873 = vmatprep.mubr.f32.mxu0 0.0
    %4874 = vmatmul.mubr.f32.gmra.mrb[0].mxu0 %v4615
    %v4875 = vpop.f32.mrb[0].mxu0
    %v4876 = vadd.f32 0.0, %v4875
    %v4877 = vpop.f32.mrb[0].mxu0
    %4878 = vdwg.mxu0
    %v4879 = vadd.f32 %v1571, %v4876
    %4880 = vmatprep.subr.mxu0 0.0
    %4881 = vmatpush1.msra.mxu0 %v1578
    %4882 = vmatprep.subr.mxu0 0.0
    %4883 = vmatpush1.msra.mxu0 %v1579
    %4884 = vmatprep.subr.mxu0 0.0
    %4885 = vmatpush1.msra.mxu0 %v1580
    %4886 = vmatprep.subr.mxu0 0.0
    %4887 = vmatpush1.msra.mxu0 %v1581
    %4888 = vmatprep.subr.mxu0 0.0
    %4889 = vmatpush1.msra.mxu0 0.0
    %4890 = vmatprep.subr.mxu0 0.0
    %4891 = vmatpush1.msra.mxu0 0.0
    %4892 = vmatprep.subr.mxu0 0.0
    %4893 = vmatpush1.msra.mxu0 0.0
    %4894 = vmatprep.subr.mxu0 0.0
    %4895 = vmatpush1.msra.mxu0 0.0
    %4896 = vmatprep.subr.mxu0 0.0
    %4897 = vmatpush1.msra.mxu0 0.0
    %4898 = vmatprep.subr.mxu0 0.0
    %4899 = vmatpush1.msra.mxu0 0.0
    %4900 = vmatprep.subr.mxu0 0.0
    %4901 = vmatpush1.msra.mxu0 0.0
    %4902 = vmatprep.subr.mxu0 0.0
    %4903 = vmatpush1.msra.mxu0 0.0
    %4904 = vmatprep.subr.mxu0 0.0
    %4905 = vmatpush1.msra.mxu0 0.0
    %4906 = vmatprep.subr.mxu0 0.0
    %4907 = vmatpush1.msra.mxu0 0.0
    %4908 = vmatprep.subr.mxu0 0.0
    %4909 = vmatpush1.msra.mxu0 0.0
    %4910 = vmatprep.subr.mxu0 0.0
    %4911 = vmatpush1.msra.mxu0 0.0
    %4912 = vmatprep.subr.mxu0 0.0
    %4913 = vmatpush1.msra.mxu0 0.0
    %4914 = vmatprep.subr.mxu0 0.0
    %4915 = vmatpush1.msra.mxu0 0.0
    %4916 = vmatprep.subr.mxu0 0.0
    %4917 = vmatpush1.msra.mxu0 0.0
    %4918 = vmatprep.subr.mxu0 0.0
    %4919 = vmatpush1.msra.mxu0 0.0
    %4920 = vmatprep.subr.mxu0 0.0
    %4921 = vmatpush1.msra.mxu0 0.0
    %4922 = vmatprep.subr.mxu0 0.0
    %4923 = vmatpush1.msra.mxu0 0.0
    %4924 = vmatprep.subr.mxu0 0.0
    %4925 = vmatpush1.msra.mxu0 0.0
    %4926 = vmatprep.subr.mxu0 0.0
    %4927 = vmatpush1.msra.mxu0 0.0
    %4928 = vmatprep.subr.mxu0 0.0
    %4929 = vmatpush1.msra.mxu0 0.0
    %4930 = vmatprep.subr.mxu0 0.0
    %4931 = vmatpush1.msra.mxu0 0.0
    %4932 = vmatprep.subr.mxu0 0.0
    %4933 = vmatpush1.msra.mxu0 0.0
    %4934 = vmatprep.subr.mxu0 0.0
    %4935 = vmatpush1.msra.mxu0 0.0
    %4936 = vmatprep.subr.mxu0 0.0
    %4937 = vmatpush1.msra.mxu0 0.0
    %4938 = vmatprep.subr.mxu0 0.0
    %4939 = vmatpush1.msra.mxu0 0.0
    %4940 = vmatprep.subr.mxu0 0.0
    %4941 = vmatpush1.msra.mxu0 0.0
    %4942 = vmatprep.subr.mxu0 0.0
    %4943 = vmatpush1.msra.mxu0 0.0
    %4944 = vmatprep.mubr.f32.mxu0 0.0
    %4945 = vmatmul.mubr.f32.gmra.mrb[0].mxu0 %v4539
    %v4946 = vpop.f32.mrb[0].mxu0
    %v4947 = vadd.f32 0.0, %v4946
    %v4948 = vpop.f32.mrb[0].mxu0
    %4949 = vdwg.mxu0
    %v4950 = vadd.f32 %v4879, %v4947
    %v4951 = vxor.u32 %v4950, 2147483648
    %v4952 = vmul.f32 %v4951, 1.442695
    %v4953 = vpow.pop %v4952
    %v4954 = vadd.f32 %v4953, 1.0
    %v4955 = vrcp.pop %v4954
    %v4956 = vmul.f32 1.0, %v4955
    %v4957 = vtanh.pop %v4950
    %v4959 = vrot.slane %v4179, 6
    %v4961 = vmul.f32 %v4956, %v4959
    %4963 = vrot.lane.b32.xlu0 %v4957, 64
    %v4964 = vpop.permute.xlu0 %4963
    %v4966 = vmul.f32 %v4956, %v4964
    %4968 = vrot.lane.b32.xlu0 %v4966, 32
    %v4969 = vpop.permute.xlu0 %4968
    %v4971 = vadd.f32 %v4961, %v4969
    %v4972 = vtanh.pop %v4971
    %4974 = vrot.lane.b32.xlu0 %v4972, 64
    %v4975 = vpop.permute.xlu0 %4974
    %v4977 = vmul.f32 %v4956, %v4975
    %v4980 = vunpack.c.l.s4 1966171168
    %v4981 = vunpack.c.0.s8 %v4980
    %v4982 = vlaneseq
    %v4983 = vshrl.u32 %v4982, 7
    %v4984 = vsub.s32 %v4981, %v4983
    %v4985 = vrot.slane %v4977, %v4984
    %v4986 = vcombine.high %v4985, %v4985
    %v4988 = vunpack.c.l.s4 1966171168
    %v4989 = vunpack.c.0.s8 %v4988
    %v4990 = vlaneseq
    %v4991 = vshrl.u32 %v4990, 7
    %v4992 = vsub.s32 %v4989, %v4991
    %v4993 = vrot.slane %v4985, %v4992
    %v4995 = vunpack.c.l.s4 1966171168
    %v4996 = vunpack.c.0.s8 %v4995
    %v4997 = vlaneseq
    %v4998 = vshrl.u32 %v4997, 7
    %v4999 = vsub.s32 %v4996, %v4998
    %v5000 = vrot.slane %v4986, %v4999
    %v5001 = vlaneseq
    %v5002 = vshrl.u32 %v5001, 7
    %v5003 = vsub.s32 0, %v5002
    %v5004 = vrot.slane %v4993, %v5003
    %5005 = vrot.lane.b32.xlu0 %v5004, 32
    %v5006 = vpop.permute.xlu0 %5005
    %v5007 = vsel %vm1596, %v5006, 0
    %5009 = vmatprep.subr.mxu0 0.0
    %5010 = vmatpush1.xpose.msra.mxu0 %v1808
    %5011 = vmatprep.subr.mxu0 0.0
    %5012 = vmatpush1.xpose.msra.mxu0 0.0
    %5013 = vmatprep.subr.mxu0 0.0
    %5014 = vmatpush1.xpose.msra.mxu0 0.0
    %5015 = vmatprep.subr.mxu0 0.0
    %5016 = vmatpush1.xpose.msra.mxu0 0.0
    %5017 = vmatprep.subr.mxu0 0.0
    %5018 = vmatpush1.xpose.msra.mxu0 0.0
    %5019 = vmatprep.subr.mxu0 0.0
    %5020 = vmatpush1.xpose.msra.mxu0 0.0
    %5021 = vmatprep.subr.mxu0 0.0
    %5022 = vmatpush1.xpose.msra.mxu0 0.0
    %5023 = vmatprep.subr.mxu0 0.0
    %5024 = vmatpush1.xpose.msra.mxu0 0.0
    %5025 = vmatprep.subr.mxu0 0.0
    %5026 = vmatpush1.xpose.msra.mxu0 0.0
    %5027 = vmatprep.subr.mxu0 0.0
    %5028 = vmatpush1.xpose.msra.mxu0 0.0
    %5029 = vmatprep.subr.mxu0 0.0
    %5030 = vmatpush1.xpose.msra.mxu0 0.0
    %5031 = vmatprep.subr.mxu0 0.0
    %5032 = vmatpush1.xpose.msra.mxu0 0.0
    %5033 = vmatprep.subr.mxu0 0.0
    %5034 = vmatpush1.xpose.msra.mxu0 0.0
    %5035 = vmatprep.subr.mxu0 0.0
    %5036 = vmatpush1.xpose.msra.mxu0 0.0
    %5037 = vmatprep.subr.mxu0 0.0
    %5038 = vmatpush1.xpose.msra.mxu0 0.0
    %5039 = vmatprep.subr.mxu0 0.0
    %5040 = vmatpush1.xpose.msra.mxu0 0.0
    %5041 = vmatprep.subr.mxu0 0.0
    %5042 = vmatpush1.xpose.msra.mxu0 0.0
    %5043 = vmatprep.subr.mxu0 0.0
    %5044 = vmatpush1.xpose.msra.mxu0 0.0
    %5045 = vmatprep.subr.mxu0 0.0
    %5046 = vmatpush1.xpose.msra.mxu0 0.0
    %5047 = vmatprep.subr.mxu0 0.0
    %5048 = vmatpush1.xpose.msra.mxu0 0.0
    %5049 = vmatprep.subr.mxu0 0.0
    %5050 = vmatpush1.xpose.msra.mxu0 0.0
    %5051 = vmatprep.subr.mxu0 0.0
    %5052 = vmatpush1.xpose.msra.mxu0 0.0
    %5053 = vmatprep.subr.mxu0 0.0
    %5054 = vmatpush1.xpose.msra.mxu0 0.0
    %5055 = vmatprep.subr.mxu0 0.0
    %5056 = vmatpush1.xpose.msra.mxu0 0.0
    %5057 = vmatprep.subr.mxu0 0.0
    %5058 = vmatpush1.xpose.msra.mxu0 0.0
    %5059 = vmatprep.subr.mxu0 0.0
    %5060 = vmatpush1.xpose.msra.mxu0 0.0
    %5061 = vmatprep.subr.mxu0 0.0
    %5062 = vmatpush1.xpose.msra.mxu0 0.0
    %5063 = vmatprep.subr.mxu0 0.0
    %5064 = vmatpush1.xpose.msra.mxu0 0.0
    %5065 = vmatprep.subr.mxu0 0.0
    %5066 = vmatpush1.xpose.msra.mxu0 0.0
    %5067 = vmatprep.subr.mxu0 0.0
    %5068 = vmatpush1.xpose.msra.mxu0 0.0
    %5069 = vmatprep.subr.mxu0 0.0
    %5070 = vmatpush1.xpose.msra.mxu0 0.0
    %5071 = vmatprep.subr.mxu0 0.0
    %5072 = vmatpush1.xpose.msra.mxu0 0.0
    %5073 = vmatprep.mubr.f32.mxu0 0.0
    %5074 = vmatmul.mubr.f32.gmra.mrb[0].mxu0 %v5007
    %v5075 = vpop.f32.mrb[0].mxu0
    %v5076 = vadd.f32 0.0, %v5075
    %v5077 = vpop.f32.mrb[0].mxu0
    %5078 = vdwg.mxu0
    %v5079 = vlaneseq
    %v5080 = vshrl.u32 %v5079, 7
    %v5081 = vsub.s32 0, %v5080
    %v5082 = vrot.slane %v5000, %v5081
    %5083 = vrot.lane.b32.xlu0 %v5082, 32
    %v5084 = vpop.permute.xlu0 %5083
    %v5085 = vsel %vm1596, %v5084, 0
    %5087 = vmatprep.subr.mxu0 0.0
    %5088 = vmatpush1.xpose.msra.mxu0 %v1889
    %5089 = vmatprep.subr.mxu0 0.0
    %5090 = vmatpush1.xpose.msra.mxu0 0.0
    %5091 = vmatprep.subr.mxu0 0.0
    %5092 = vmatpush1.xpose.msra.mxu0 0.0
    %5093 = vmatprep.subr.mxu0 0.0
    %5094 = vmatpush1.xpose.msra.mxu0 0.0
    %5095 = vmatprep.subr.mxu0 0.0
    %5096 = vmatpush1.xpose.msra.mxu0 0.0
    %5097 = vmatprep.subr.mxu0 0.0
    %5098 = vmatpush1.xpose.msra.mxu0 0.0
    %5099 = vmatprep.subr.mxu0 0.0
    %5100 = vmatpush1.xpose.msra.mxu0 0.0
    %5101 = vmatprep.subr.mxu0 0.0
    %5102 = vmatpush1.xpose.msra.mxu0 0.0
    %5103 = vmatprep.subr.mxu0 0.0
    %5104 = vmatpush1.xpose.msra.mxu0 0.0
    %5105 = vmatprep.subr.mxu0 0.0
    %5106 = vmatpush1.xpose.msra.mxu0 0.0
    %5107 = vmatprep.subr.mxu0 0.0
    %5108 = vmatpush1.xpose.msra.mxu0 0.0
    %5109 = vmatprep.subr.mxu0 0.0
    %5110 = vmatpush1.xpose.msra.mxu0 0.0
    %5111 = vmatprep.subr.mxu0 0.0
    %5112 = vmatpush1.xpose.msra.mxu0 0.0
    %5113 = vmatprep.subr.mxu0 0.0
    %5114 = vmatpush1.xpose.msra.mxu0 0.0
    %5115 = vmatprep.subr.mxu0 0.0
    %5116 = vmatpush1.xpose.msra.mxu0 0.0
    %5117 = vmatprep.subr.mxu0 0.0
    %5118 = vmatpush1.xpose.msra.mxu0 0.0
    %5119 = vmatprep.subr.mxu0 0.0
    %5120 = vmatpush1.xpose.msra.mxu0 0.0
    %5121 = vmatprep.subr.mxu0 0.0
    %5122 = vmatpush1.xpose.msra.mxu0 0.0
    %5123 = vmatprep.subr.mxu0 0.0
    %5124 = vmatpush1.xpose.msra.mxu0 0.0
    %5125 = vmatprep.subr.mxu0 0.0
    %5126 = vmatpush1.xpose.msra.mxu0 0.0
    %5127 = vmatprep.subr.mxu0 0.0
    %5128 = vmatpush1.xpose.msra.mxu0 0.0
    %5129 = vmatprep.subr.mxu0 0.0
    %5130 = vmatpush1.xpose.msra.mxu0 0.0
    %5131 = vmatprep.subr.mxu0 0.0
    %5132 = vmatpush1.xpose.msra.mxu0 0.0
    %5133 = vmatprep.subr.mxu0 0.0
    %5134 = vmatpush1.xpose.msra.mxu0 0.0
    %5135 = vmatprep.subr.mxu0 0.0
    %5136 = vmatpush1.xpose.msra.mxu0 0.0
    %5137 = vmatprep.subr.mxu0 0.0
    %5138 = vmatpush1.xpose.msra.mxu0 0.0
    %5139 = vmatprep.subr.mxu0 0.0
    %5140 = vmatpush1.xpose.msra.mxu0 0.0
    %5141 = vmatprep.subr.mxu0 0.0
    %5142 = vmatpush1.xpose.msra.mxu0 0.0
    %5143 = vmatprep.subr.mxu0 0.0
    %5144 = vmatpush1.xpose.msra.mxu0 0.0
    %5145 = vmatprep.subr.mxu0 0.0
    %5146 = vmatpush1.xpose.msra.mxu0 0.0
    %5147 = vmatprep.subr.mxu0 0.0
    %5148 = vmatpush1.xpose.msra.mxu0 0.0
    %5149 = vmatprep.subr.mxu0 0.0
    %5150 = vmatpush1.xpose.msra.mxu0 0.0
    %5151 = vmatprep.mubr.f32.mxu0 0.0
    %5152 = vmatmul.mubr.f32.gmra.mrb[0].mxu0 %v5085
    %v5153 = vpop.f32.mrb[0].mxu0
    %v5154 = vadd.f32 0.0, %v5153
    %v5155 = vpop.f32.mrb[0].mxu0
    %5156 = vdwg.mxu0
    %v5157 = vsel %vm1961, %v5076, -inf
    %5158 = vmax.xlane.f32.xlu0 %v5157
    %v5159 = vpop.xlane.xlu0 %5158
    %v5160 = vsel %vm1961, %v5154, -inf
    %5161 = vmax.xlane.f32.xlu0 %v5160
    %v5162 = vpop.xlane.xlu0 %5161
    %v5163 = vsub.f32 %v5076, %v5159
    %v5164 = vsub.f32 %v5154, %v5162
    %v5165 = vmul.f32 %v5163, 1.442695
    %v5166 = vpow.pop %v5165
    %v5167 = vmul.f32 %v5164, 1.442695
    %v5168 = vpow.pop %v5167
    %v5169 = vsel %vm1961, %v5166, 0.0
    %5170 = vadd.xlane.f32.xlu0 %v5169
    %v5171 = vpop.xlane.xlu0 %5170
    %v5172 = vsel %vm1961, %v5168, 0.0
    %5173 = vadd.xlane.f32.xlu0 %v5172
    %v5174 = vpop.xlane.xlu0 %5173
    %v5175 = vrcp.pop %v5171
    %v5176 = vrcp.pop %v5174
    %v5177 = vmul.f32 %v5166, %v5175
    %v5178 = vmul.f32 %v5168, %v5176
    %v5180 = vsel %vm1984, %v5177, 0
    %5182 = vmatprep.subr.mxu0 0.0
    %5183 = vmatpush1.msra.mxu0 %v1469
    %5184 = vmatprep.subr.mxu0 0.0
    %5185 = vmatpush1.msra.mxu0 0.0
    %5186 = vmatprep.subr.mxu0 0.0
    %5187 = vmatpush1.msra.mxu0 0.0
    %5188 = vmatprep.subr.mxu0 0.0
    %5189 = vmatpush1.msra.mxu0 0.0
    %5190 = vmatprep.subr.mxu0 0.0
    %5191 = vmatpush1.msra.mxu0 0.0
    %5192 = vmatprep.subr.mxu0 0.0
    %5193 = vmatpush1.msra.mxu0 0.0
    %5194 = vmatprep.subr.mxu0 0.0
    %5195 = vmatpush1.msra.mxu0 0.0
    %5196 = vmatprep.subr.mxu0 0.0
    %5197 = vmatpush1.msra.mxu0 0.0
    %5198 = vmatprep.subr.mxu0 0.0
    %5199 = vmatpush1.msra.mxu0 0.0
    %5200 = vmatprep.subr.mxu0 0.0
    %5201 = vmatpush1.msra.mxu0 0.0
    %5202 = vmatprep.subr.mxu0 0.0
    %5203 = vmatpush1.msra.mxu0 0.0
    %5204 = vmatprep.subr.mxu0 0.0
    %5205 = vmatpush1.msra.mxu0 0.0
    %5206 = vmatprep.subr.mxu0 0.0
    %5207 = vmatpush1.msra.mxu0 0.0
    %5208 = vmatprep.subr.mxu0 0.0
    %5209 = vmatpush1.msra.mxu0 0.0
    %5210 = vmatprep.subr.mxu0 0.0
    %5211 = vmatpush1.msra.mxu0 0.0
    %5212 = vmatprep.subr.mxu0 0.0
    %5213 = vmatpush1.msra.mxu0 0.0
    %5214 = vmatprep.subr.mxu0 0.0
    %5215 = vmatpush1.msra.mxu0 0.0
    %5216 = vmatprep.subr.mxu0 0.0
    %5217 = vmatpush1.msra.mxu0 0.0
    %5218 = vmatprep.subr.mxu0 0.0
    %5219 = vmatpush1.msra.mxu0 0.0
    %5220 = vmatprep.subr.mxu0 0.0
    %5221 = vmatpush1.msra.mxu0 0.0
    %5222 = vmatprep.subr.mxu0 0.0
    %5223 = vmatpush1.msra.mxu0 0.0
    %5224 = vmatprep.subr.mxu0 0.0
    %5225 = vmatpush1.msra.mxu0 0.0
    %5226 = vmatprep.subr.mxu0 0.0
    %5227 = vmatpush1.msra.mxu0 0.0
    %5228 = vmatprep.subr.mxu0 0.0
    %5229 = vmatpush1.msra.mxu0 0.0
    %5230 = vmatprep.subr.mxu0 0.0
    %5231 = vmatpush1.msra.mxu0 0.0
    %5232 = vmatprep.subr.mxu0 0.0
    %5233 = vmatpush1.msra.mxu0 0.0
    %5234 = vmatprep.subr.mxu0 0.0
    %5235 = vmatpush1.msra.mxu0 0.0
    %5236 = vmatprep.subr.mxu0 0.0
    %5237 = vmatpush1.msra.mxu0 0.0
    %5238 = vmatprep.subr.mxu0 0.0
    %5239 = vmatpush1.msra.mxu0 0.0
    %5240 = vmatprep.subr.mxu0 0.0
    %5241 = vmatpush1.msra.mxu0 0.0
    %5242 = vmatprep.subr.mxu0 0.0
    %5243 = vmatpush1.msra.mxu0 0.0
    %5244 = vmatprep.subr.mxu0 0.0
    %5245 = vmatpush1.msra.mxu0 0.0
    %5246 = vmatprep.mubr.f32.mxu0 0.0
    %5247 = vmatmul.mubr.f32.gmra.mrb[0].mxu0 %v5180
    %v5248 = vpop.f32.mrb[0].mxu0
    %v5249 = vadd.f32 0.0, %v5248
    %v5250 = vpop.f32.mrb[0].mxu0
    %5251 = vdwg.mxu0
    %v5253 = vsel %vm1984, %v5178, 0
    %5255 = vmatprep.subr.mxu0 0.0
    %5256 = vmatpush1.msra.mxu0 %v1470
    %5257 = vmatprep.subr.mxu0 0.0
    %5258 = vmatpush1.msra.mxu0 0.0
    %5259 = vmatprep.subr.mxu0 0.0
    %5260 = vmatpush1.msra.mxu0 0.0
    %5261 = vmatprep.subr.mxu0 0.0
    %5262 = vmatpush1.msra.mxu0 0.0
    %5263 = vmatprep.subr.mxu0 0.0
    %5264 = vmatpush1.msra.mxu0 0.0
    %5265 = vmatprep.subr.mxu0 0.0
    %5266 = vmatpush1.msra.mxu0 0.0
    %5267 = vmatprep.subr.mxu0 0.0
    %5268 = vmatpush1.msra.mxu0 0.0
    %5269 = vmatprep.subr.mxu0 0.0
    %5270 = vmatpush1.msra.mxu0 0.0
    %5271 = vmatprep.subr.mxu0 0.0
    %5272 = vmatpush1.msra.mxu0 0.0
    %5273 = vmatprep.subr.mxu0 0.0
    %5274 = vmatpush1.msra.mxu0 0.0
    %5275 = vmatprep.subr.mxu0 0.0
    %5276 = vmatpush1.msra.mxu0 0.0
    %5277 = vmatprep.subr.mxu0 0.0
    %5278 = vmatpush1.msra.mxu0 0.0
    %5279 = vmatprep.subr.mxu0 0.0
    %5280 = vmatpush1.msra.mxu0 0.0
    %5281 = vmatprep.subr.mxu0 0.0
    %5282 = vmatpush1.msra.mxu0 0.0
    %5283 = vmatprep.subr.mxu0 0.0
    %5284 = vmatpush1.msra.mxu0 0.0
    %5285 = vmatprep.subr.mxu0 0.0
    %5286 = vmatpush1.msra.mxu0 0.0
    %5287 = vmatprep.subr.mxu0 0.0
    %5288 = vmatpush1.msra.mxu0 0.0
    %5289 = vmatprep.subr.mxu0 0.0
    %5290 = vmatpush1.msra.mxu0 0.0
    %5291 = vmatprep.subr.mxu0 0.0
    %5292 = vmatpush1.msra.mxu0 0.0
    %5293 = vmatprep.subr.mxu0 0.0
    %5294 = vmatpush1.msra.mxu0 0.0
    %5295 = vmatprep.subr.mxu0 0.0
    %5296 = vmatpush1.msra.mxu0 0.0
    %5297 = vmatprep.subr.mxu0 0.0
    %5298 = vmatpush1.msra.mxu0 0.0
    %5299 = vmatprep.subr.mxu0 0.0
    %5300 = vmatpush1.msra.mxu0 0.0
    %5301 = vmatprep.subr.mxu0 0.0
    %5302 = vmatpush1.msra.mxu0 0.0
    %5303 = vmatprep.subr.mxu0 0.0
    %5304 = vmatpush1.msra.mxu0 0.0
    %5305 = vmatprep.subr.mxu0 0.0
    %5306 = vmatpush1.msra.mxu0 0.0
    %5307 = vmatprep.subr.mxu0 0.0
    %5308 = vmatpush1.msra.mxu0 0.0
    %5309 = vmatprep.subr.mxu0 0.0
    %5310 = vmatpush1.msra.mxu0 0.0
    %5311 = vmatprep.subr.mxu0 0.0
    %5312 = vmatpush1.msra.mxu0 0.0
    %5313 = vmatprep.subr.mxu0 0.0
    %5314 = vmatpush1.msra.mxu0 0.0
    %5315 = vmatprep.subr.mxu0 0.0
    %5316 = vmatpush1.msra.mxu0 0.0
    %5317 = vmatprep.subr.mxu0 0.0
    %5318 = vmatpush1.msra.mxu0 0.0
    %5319 = vmatprep.mubr.f32.mxu0 0.0
    %5320 = vmatmul.mubr.f32.gmra.mrb[0].mxu0 %v5253
    %v5321 = vpop.f32.mrb[0].mxu0
    %v5322 = vadd.f32 0.0, %v5321
    %v5323 = vpop.f32.mrb[0].mxu0
    %5324 = vdwg.mxu0
    %5325 = vrot.lane.b32.xlu0 %v4977, 32
    %v5326 = vpop.permute.xlu0 %5325
    %v5327 = vsel %vm1596, %v5326, 0
    %5329 = vmatprep.subr.mxu0 0.0
    %5330 = vmatpush1.msra.mxu0 %v1586
    %5331 = vmatprep.subr.mxu0 0.0
    %5332 = vmatpush1.msra.mxu0 %v1587
    %5333 = vmatprep.subr.mxu0 0.0
    %5334 = vmatpush1.msra.mxu0 %v1588
    %5335 = vmatprep.subr.mxu0 0.0
    %5336 = vmatpush1.msra.mxu0 %v1589
    %5337 = vmatprep.subr.mxu0 0.0
    %5338 = vmatpush1.msra.mxu0 0.0
    %5339 = vmatprep.subr.mxu0 0.0
    %5340 = vmatpush1.msra.mxu0 0.0
    %5341 = vmatprep.subr.mxu0 0.0
    %5342 = vmatpush1.msra.mxu0 0.0
    %5343 = vmatprep.subr.mxu0 0.0
    %5344 = vmatpush1.msra.mxu0 0.0
    %5345 = vmatprep.subr.mxu0 0.0
    %5346 = vmatpush1.msra.mxu0 0.0
    %5347 = vmatprep.subr.mxu0 0.0
    %5348 = vmatpush1.msra.mxu0 0.0
    %5349 = vmatprep.subr.mxu0 0.0
    %5350 = vmatpush1.msra.mxu0 0.0
    %5351 = vmatprep.subr.mxu0 0.0
    %5352 = vmatpush1.msra.mxu0 0.0
    %5353 = vmatprep.subr.mxu0 0.0
    %5354 = vmatpush1.msra.mxu0 0.0
    %5355 = vmatprep.subr.mxu0 0.0
    %5356 = vmatpush1.msra.mxu0 0.0
    %5357 = vmatprep.subr.mxu0 0.0
    %5358 = vmatpush1.msra.mxu0 0.0
    %5359 = vmatprep.subr.mxu0 0.0
    %5360 = vmatpush1.msra.mxu0 0.0
    %5361 = vmatprep.subr.mxu0 0.0
    %5362 = vmatpush1.msra.mxu0 0.0
    %5363 = vmatprep.subr.mxu0 0.0
    %5364 = vmatpush1.msra.mxu0 0.0
    %5365 = vmatprep.subr.mxu0 0.0
    %5366 = vmatpush1.msra.mxu0 0.0
    %5367 = vmatprep.subr.mxu0 0.0
    %5368 = vmatpush1.msra.mxu0 0.0
    %5369 = vmatprep.subr.mxu0 0.0
    %5370 = vmatpush1.msra.mxu0 0.0
    %5371 = vmatprep.subr.mxu0 0.0
    %5372 = vmatpush1.msra.mxu0 0.0
    %5373 = vmatprep.subr.mxu0 0.0
    %5374 = vmatpush1.msra.mxu0 0.0
    %5375 = vmatprep.subr.mxu0 0.0
    %5376 = vmatpush1.msra.mxu0 0.0
    %5377 = vmatprep.subr.mxu0 0.0
    %5378 = vmatpush1.msra.mxu0 0.0
    %5379 = vmatprep.subr.mxu0 0.0
    %5380 = vmatpush1.msra.mxu0 0.0
    %5381 = vmatprep.subr.mxu0 0.0
    %5382 = vmatpush1.msra.mxu0 0.0
    %5383 = vmatprep.subr.mxu0 0.0
    %5384 = vmatpush1.msra.mxu0 0.0
    %5385 = vmatprep.subr.mxu0 0.0
    %5386 = vmatpush1.msra.mxu0 0.0
    %5387 = vmatprep.subr.mxu0 0.0
    %5388 = vmatpush1.msra.mxu0 0.0
    %5389 = vmatprep.subr.mxu0 0.0
    %5390 = vmatpush1.msra.mxu0 0.0
    %5391 = vmatprep.subr.mxu0 0.0
    %5392 = vmatpush1.msra.mxu0 0.0
    %5393 = vmatprep.mubr.f32.mxu0 0.0
    %5394 = vmatmul.mubr.f32.gmra.mrb[0].mxu0 %v5327
    %v5395 = vpop.f32.mrb[0].mxu0
    %v5396 = vadd.f32 0.0, %v5395
    %v5397 = vpop.f32.mrb[0].mxu0
    %5398 = vdwg.mxu0
    %v5401 = vrot.slane %v5322, 7
    %v5402 = vsel %vm2208, %v5401, %v5249
    %v5403 = vsel %vm1596, %v5402, 0
    %5405 = vmatprep.subr.mxu0 0.0
    %5406 = vmatpush1.msra.mxu0 %v1582
    %5407 = vmatprep.subr.mxu0 0.0
    %5408 = vmatpush1.msra.mxu0 %v1583
    %5409 = vmatprep.subr.mxu0 0.0
    %5410 = vmatpush1.msra.mxu0 %v1584
    %5411 = vmatprep.subr.mxu0 0.0
    %5412 = vmatpush1.msra.mxu0 %v1585
    %5413 = vmatprep.subr.mxu0 0.0
    %5414 = vmatpush1.msra.mxu0 0.0
    %5415 = vmatprep.subr.mxu0 0.0
    %5416 = vmatpush1.msra.mxu0 0.0
    %5417 = vmatprep.subr.mxu0 0.0
    %5418 = vmatpush1.msra.mxu0 0.0
    %5419 = vmatprep.subr.mxu0 0.0
    %5420 = vmatpush1.msra.mxu0 0.0
    %5421 = vmatprep.subr.mxu0 0.0
    %5422 = vmatpush1.msra.mxu0 0.0
    %5423 = vmatprep.subr.mxu0 0.0
    %5424 = vmatpush1.msra.mxu0 0.0
    %5425 = vmatprep.subr.mxu0 0.0
    %5426 = vmatpush1.msra.mxu0 0.0
    %5427 = vmatprep.subr.mxu0 0.0
    %5428 = vmatpush1.msra.mxu0 0.0
    %5429 = vmatprep.subr.mxu0 0.0
    %5430 = vmatpush1.msra.mxu0 0.0
    %5431 = vmatprep.subr.mxu0 0.0
    %5432 = vmatpush1.msra.mxu0 0.0
    %5433 = vmatprep.subr.mxu0 0.0
    %5434 = vmatpush1.msra.mxu0 0.0
    %5435 = vmatprep.subr.mxu0 0.0
    %5436 = vmatpush1.msra.mxu0 0.0
    %5437 = vmatprep.subr.mxu0 0.0
    %5438 = vmatpush1.msra.mxu0 0.0
    %5439 = vmatprep.subr.mxu0 0.0
    %5440 = vmatpush1.msra.mxu0 0.0
    %5441 = vmatprep.subr.mxu0 0.0
    %5442 = vmatpush1.msra.mxu0 0.0
    %5443 = vmatprep.subr.mxu0 0.0
    %5444 = vmatpush1.msra.mxu0 0.0
    %5445 = vmatprep.subr.mxu0 0.0
    %5446 = vmatpush1.msra.mxu0 0.0
    %5447 = vmatprep.subr.mxu0 0.0
    %5448 = vmatpush1.msra.mxu0 0.0
    %5449 = vmatprep.subr.mxu0 0.0
    %5450 = vmatpush1.msra.mxu0 0.0
    %5451 = vmatprep.subr.mxu0 0.0
    %5452 = vmatpush1.msra.mxu0 0.0
    %5453 = vmatprep.subr.mxu0 0.0
    %5454 = vmatpush1.msra.mxu0 0.0
    %5455 = vmatprep.subr.mxu0 0.0
    %5456 = vmatpush1.msra.mxu0 0.0
    %5457 = vmatprep.subr.mxu0 0.0
    %5458 = vmatpush1.msra.mxu0 0.0
    %5459 = vmatprep.subr.mxu0 0.0
    %5460 = vmatpush1.msra.mxu0 0.0
    %5461 = vmatprep.subr.mxu0 0.0
    %5462 = vmatpush1.msra.mxu0 0.0
    %5463 = vmatprep.subr.mxu0 0.0
    %5464 = vmatpush1.msra.mxu0 0.0
    %5465 = vmatprep.subr.mxu0 0.0
    %5466 = vmatpush1.msra.mxu0 0.0
    %5467 = vmatprep.subr.mxu0 0.0
    %5468 = vmatpush1.msra.mxu0 0.0
    %5469 = vmatprep.mubr.f32.mxu0 0.0
    %5470 = vmatmul.mubr.f32.gmra.mrb[0].mxu0 %v5403
    %v5471 = vpop.f32.mrb[0].mxu0
    %v5472 = vadd.f32 %v5396, %v5471
    %v5473 = vpop.f32.mrb[0].mxu0
    %5474 = vdwg.mxu0
    %v5475 = vadd.f32 %v5472, %v2286
    %v5476 = vtanh.pop %v5475
    %v5478 = vsel %vm1596, %v5476, 0
    %5480 = vmatprep.subr.mxu0 0.0
    %5481 = vmatpush1.msra.mxu0 %v1591
    %5482 = vmatprep.subr.mxu0 0.0
    %5483 = vmatpush1.msra.mxu0 %v1592
    %5484 = vmatprep.subr.mxu0 0.0
    %5485 = vmatpush1.msra.mxu0 %v1593
    %5486 = vmatprep.subr.mxu0 0.0
    %5487 = vmatpush1.msra.mxu0 %v1594
    %5488 = vmatprep.subr.mxu0 0.0
    %5489 = vmatpush1.msra.mxu0 0.0
    %5490 = vmatprep.subr.mxu0 0.0
    %5491 = vmatpush1.msra.mxu0 0.0
    %5492 = vmatprep.subr.mxu0 0.0
    %5493 = vmatpush1.msra.mxu0 0.0
    %5494 = vmatprep.subr.mxu0 0.0
    %5495 = vmatpush1.msra.mxu0 0.0
    %5496 = vmatprep.subr.mxu0 0.0
    %5497 = vmatpush1.msra.mxu0 0.0
    %5498 = vmatprep.subr.mxu0 0.0
    %5499 = vmatpush1.msra.mxu0 0.0
    %5500 = vmatprep.subr.mxu0 0.0
    %5501 = vmatpush1.msra.mxu0 0.0
    %5502 = vmatprep.subr.mxu0 0.0
    %5503 = vmatpush1.msra.mxu0 0.0
    %5504 = vmatprep.subr.mxu0 0.0
    %5505 = vmatpush1.msra.mxu0 0.0
    %5506 = vmatprep.subr.mxu0 0.0
    %5507 = vmatpush1.msra.mxu0 0.0
    %5508 = vmatprep.subr.mxu0 0.0
    %5509 = vmatpush1.msra.mxu0 0.0
    %5510 = vmatprep.subr.mxu0 0.0
    %5511 = vmatpush1.msra.mxu0 0.0
    %5512 = vmatprep.subr.mxu0 0.0
    %5513 = vmatpush1.msra.mxu0 0.0
    %5514 = vmatprep.subr.mxu0 0.0
    %5515 = vmatpush1.msra.mxu0 0.0
    %5516 = vmatprep.subr.mxu0 0.0
    %5517 = vmatpush1.msra.mxu0 0.0
    %5518 = vmatprep.subr.mxu0 0.0
    %5519 = vmatpush1.msra.mxu0 0.0
    %5520 = vmatprep.subr.mxu0 0.0
    %5521 = vmatpush1.msra.mxu0 0.0
    %5522 = vmatprep.subr.mxu0 0.0
    %5523 = vmatpush1.msra.mxu0 0.0
    %5524 = vmatprep.subr.mxu0 0.0
    %5525 = vmatpush1.msra.mxu0 0.0
    %5526 = vmatprep.subr.mxu0 0.0
    %5527 = vmatpush1.msra.mxu0 0.0
    %5528 = vmatprep.subr.mxu0 0.0
    %5529 = vmatpush1.msra.mxu0 0.0
    %5530 = vmatprep.subr.mxu0 0.0
    %5531 = vmatpush1.msra.mxu0 0.0
    %5532 = vmatprep.subr.mxu0 0.0
    %5533 = vmatpush1.msra.mxu0 0.0
    %5534 = vmatprep.subr.mxu0 0.0
    %5535 = vmatpush1.msra.mxu0 0.0
    %5536 = vmatprep.subr.mxu0 0.0
    %5537 = vmatpush1.msra.mxu0 0.0
    %5538 = vmatprep.subr.mxu0 0.0
    %5539 = vmatpush1.msra.mxu0 0.0
    %5540 = vmatprep.subr.mxu0 0.0
    %5541 = vmatpush1.msra.mxu0 0.0
    %5542 = vmatprep.subr.mxu0 0.0
    %5543 = vmatpush1.msra.mxu0 0.0
    %5544 = vmatprep.mubr.f32.mxu0 0.0
    %5545 = vmatmul.mubr.f32.gmra.mrb[0].mxu0 %v5478
    %v5546 = vpop.f32.mrb[0].mxu0
    %v5547 = vadd.f32 %v2294, %v5546
    %v5548 = vpop.f32.mrb[0].mxu0
    %5549 = vdwg.mxu0
    %v5550 = vsel %vm2369, %v5547, -inf
    %5551 = vmax.xlane.f32.xlu0 %v5550
    %v5552 = vpop.xlane.xlu0 %5551
    %v5553 = vsub.f32 %v5547, %v5552
    %v5554 = vmul.f32 %v5553, 1.442695
    %v5555 = vpow.pop %v5554
    %v5556 = vsel %vm2369, %v5555, 0.0
    %5557 = vadd.xlane.f32.xlu0 %v5556
    %v5558 = vpop.xlane.xlu0 %5557
    %v5559 = vlog2.pop %v5558
    %v5560 = vmul.f32 %v5559, 0.6931472
    %v5561 = vadd.f32 %v5552, %v5560
    %v5562 = vsub.f32 %v5547, %v5561
    %v5563 = vld [vmem:[%s2 + $0x8] sm:$0x3]
    %v5564 = vmul.f32 %v5562, %v5563
    %v5565 = vsel %vm2369, %v5564, 0.0
    %5566 = vadd.xlane.f32.xlu0 %v5565
    %v5567 = vpop.xlane.xlu0 %5566
    %v5568 = vld [vmem:[%s3 + $0x8] sm:$0x3]
    %v5569 = vsub.f32 0.0, %v5567
    %v5570 = vmul.f32 %v5569, %v5568
    %v5571 = vsel %vm2391, %v5570, 0.0
    %5572 = vadd.xlane.f32.xlu0 %v5571
    %v5573 = vpop.xlane.xlu0 %5572
    %v5574 = vrot.slane %v5573, 4
    %v5575 = vadd.f32 %v5573, %v5574
    %v5576 = vrot.slane %v5575, 2
    %v5577 = vadd.f32 %v5575, %v5576
    %v5578 = vrot.slane %v5577, 1
    %v5579 = vadd.f32 %v5577, %v5578
    %s5580 = vtos %v5579
    %v5581 = vstv %s5580
    %v5582 = vsel %vm2391, %v5568, 0.0
    %5583 = vadd.xlane.f32.xlu0 %v5582
    %v5584 = vpop.xlane.xlu0 %5583
    %v5585 = vrot.slane %v5584, 4
    %v5586 = vadd.f32 %v5584, %v5585
    %v5587 = vrot.slane %v5586, 2
    %v5588 = vadd.f32 %v5586, %v5587
    %v5589 = vrot.slane %v5588, 1
    %v5590 = vadd.f32 %v5588, %v5589
    %s5591 = vtos %v5590
    %v5592 = vstv %s5591
    %v5593 = vmax.f32 %v5592, 1.0
    %v5594 = vrcp.pop %v5593
    %v5595 = vmul.f32 %v5581, %v5594
    %v5596 = vadd.f32 %v4808, %v5595
    %vm5597 = vcmask 0
    %5598 = vst.msk [vmem:[#allocation3] sm:$0x1] %vm5597, %v5596
    // Predicated region
    $region70: #{seq2seq_forward.1} parent=1 // pred_check
      _
    $region71: #{seq2seq_forward.1} parent=1 // pred_check_branch
      %5600 = sbr.rel (0) target = $region73
    $region72: #{seq2seq_forward.1} parent=1 // pred_region
      %s5602 = ssub.s32 16, 16
      %5603 = vsyncadd [#allocation4], %s5602
      %s5605 = sshll.u32 [#allocation3], 4
      %s5606 = int_to_ptr.vmem [resolvable:$true] %s5605
      %5608 = dma.vmem_to_hbm [thread:$0]  %s5606, 16, %s17, [#allocation4]
    $region73: #{seq2seq_forward.1} parent=1 // pred_fallthru
      _
    // Predicated region
    $region74: #{seq2seq_forward.1} parent=1 // pred_check
      _
    $region75: #{seq2seq_forward.1} parent=1 // pred_check_branch
      %5610 = sbr.rel (0) target = $region77
    $region76: #{seq2seq_forward.1} parent=1 // pred_region
      %5611 = dma.done [#allocation4], 16
    $region77: #{seq2seq_forward.1} parent=1 // pred_fallthru
      _
    %5612 = vsyncpa [#allocation4], 1

</llo_original>
